<compile_context>
chip_gen: v7x
topology: tpu7x:2x2x1
jax: 0.10.0
libtpu: 0.0.40
codegen_flags: <defaults>
</compile_context>

<pallas_src>
import functools

import jax
import jax.numpy as jnp
from jax.experimental import pallas as pl
from jax.experimental.pallas import tpu as pltpu


def _round_up(x, m):
    return (x + m - 1) // m * m


def _choose_tile_m(m_pad):
    # Prefer >=2 grid steps (lets v7x's second TensorCore take half the work) while
    # keeping the sublane dim a multiple of 16 (bf16 packing), unless the tile has
    # to cover the full (already tiny) M extent.
    for t in (128, 64, 32, 16):
        if m_pad % t == 0 and m_pad // t >= 2:
            return t
    return m_pad


# ----------------------------------------------------------------------------
# Pallas kernel: fused matmul (+ optional bias, + optional residual) + activation
# ----------------------------------------------------------------------------
def _fused_kernel(*refs, act, has_bias, has_residual):
    it = iter(refs)
    a_ref = next(it)
    b_ref = next(it)
    bias_ref = next(it) if has_bias else None
    r_ref = next(it) if has_residual else None
    o_ref = next(it)

    y = jnp.dot(a_ref[...], b_ref[...], preferred_element_type=jnp.float32)
    if has_bias:
        y = y + bias_ref[...]
    if has_residual:
        y = y + r_ref[...]
    if act == "relu":
        y = jnp.maximum(y, 0.0)
    elif act == "sigmoid":
        # exp + approximate reciprocal both ride the EUP slot; clamp guards the
        # tiny approximation error above 1.0.
        y = jnp.minimum(pl.reciprocal(1.0 + jnp.exp(-y), approx=True), 1.0)
    o_ref[...] = y


def fused_matmul(a, b, bias=None, residual=None, act="none"):
    """a:(M,K), b:(K,Cout) bf16, bias:(Cout,)|None, residual:(M,Cout)|None -> (M,Cout) f32."""
    M, K = a.shape
    Kb, Cout = b.shape
    assert K == Kb

    a = a.astype(jnp.bfloat16)

    M_pad = _round_up(M, 8)                       # sublane alignment only
    if M_pad != M:
        a = jnp.pad(a, ((0, M_pad - M), (0, 0)))
        if residual is not None:
            residual = jnp.pad(residual, ((0, M_pad - M), (0, 0)))

    tile_m = _choose_tile_m(M_pad)
    grid = (M_pad // tile_m,)

    has_bias = bias is not None
    has_residual = residual is not None

    in_specs = [
        pl.BlockSpec((tile_m, K), lambda i: (i, 0)),   # K unpadded, full-extent block
        pl.BlockSpec((K, Cout), lambda i: (0, 0)),     # weights resident across grid
    ]
    operands = [a, b]
    if has_bias:
        in_specs.append(pl.BlockSpec((1, Cout), lambda i: (0, 0)))
        operands.append(bias.reshape(1, Cout).astype(jnp.float32))
    if has_residual:
        in_specs.append(pl.BlockSpec((tile_m, Cout), lambda i: (i, 0)))
        operands.append(residual.astype(jnp.float32))

    out = pl.pallas_call(
        functools.partial(_fused_kernel, act=act,
                          has_bias=has_bias, has_residual=has_residual),
        out_shape=jax.ShapeDtypeStruct((M_pad, Cout), jnp.float32),
        grid=grid,
        in_specs=in_specs,
        out_specs=pl.BlockSpec((tile_m, Cout), lambda i: (i, 0)),
        compiler_params=pltpu.CompilerParams(dimension_semantics=("parallel",)),
    )(*operands)
    return out if M_pad == M else out[:M]


# ----------------------------------------------------------------------------
# Conv / ConvTranspose wrappers (im2col glue around the Pallas kernel)
# ----------------------------------------------------------------------------
def _im2col(x, kh, kw, stride, pad):
    # TODO(synk): the kh*kw shifted copies could be fused into the kernel with an
    #             'arbitrary' tap grid axis + f32 VMEM accumulator; kept as glue here.
    x = x.astype(jnp.bfloat16)          # halve HBM traffic of pad/concat and A DMA
    N, H, W, C = x.shape
    if pad > 0:
        x = jnp.pad(x, ((0, 0), (pad, pad), (pad, pad), (0, 0)))
    Ho = (H + 2 * pad - kh) // stride + 1
    Wo = (W + 2 * pad - kw) // stride + 1
    cols = []
    for i in range(kh):
        for j in range(kw):
            cols.append(
                x[:, i:i + stride * (Ho - 1) + 1:stride,
                  j:j + stride * (Wo - 1) + 1:stride, :])
    patches = jnp.concatenate(cols, axis=-1)
    return patches.reshape(N * Ho * Wo, kh * kw * C), (N, Ho, Wo)


def conv2d_fused(x, layer, residual=None, act="none"):
    """x: NHWC, layer: prepared dict with BN-folded matmul weight."""
    k, stride, pad = layer["k"], layer["stride"], layer["pad"]
    patches, (N, Ho, Wo) = _im2col(x, k, k, stride, pad)
    cout = layer["wmat"].shape[1]
    res = None if residual is None else residual.reshape(N * Ho * Wo, cout)
    out = fused_matmul(patches, layer["wmat"], layer.get("bias"), res, act)
    return out.reshape(N, Ho, Wo, cout)


def conv_transpose2d_fused(x, layer, residual=None, act="none"):
    """Realized as: zero-dilate by stride, pad by (k-1-p, k-1-p+out_pad), then a
    stride-1 conv with the (pre-flipped, pre-transposed) kernel."""
    k, stride, pad, out_pad = layer["k"], layer["stride"], layer["pad"], layer["out_pad"]
    N, H, W, C = x.shape
    if stride > 1:
        # TODO(synk): a phase (sub-pixel) decomposition would avoid multiplying the
        #             75% structurally-zero rows this dilation introduces.
        xd = jnp.zeros((N, (H - 1) * stride + 1, (W - 1) * stride + 1, C), x.dtype)
        xd = xd.at[:, ::stride, ::stride, :].set(x)
    else:
        xd = x
    lo = k - 1 - pad
    hi = k - 1 - pad + out_pad
    xp = jnp.pad(xd, ((0, 0), (lo, hi), (lo, hi), (0, 0)))
    conv_layer = {"wmat": layer["wmat"], "bias": layer.get("bias"),
                  "k": k, "stride": 1, "pad": 0}
    return conv2d_fused(xp, conv_layer, residual, act)


# ----------------------------------------------------------------------------
# Parameters: deterministic init, weights pre-transposed to matmul form (bf16),
# inference-form BatchNorm folded into the weight columns at init time.
# ----------------------------------------------------------------------------
def _fold_bn(C, eps=1e-5):
    gamma = jnp.ones((C,), jnp.float32)
    beta = jnp.zeros((C,), jnp.float32)
    mean = jnp.zeros((C,), jnp.float32)
    var = jnp.ones((C,), jnp.float32)
    scale = gamma / jnp.sqrt(var + eps)
    bias = beta - mean * scale
    return scale, bias


def _kaiming(key, shape):
    # mode='fan_out' (matches PyTorch's calculation for both Conv2d and
    # ConvTranspose2d weight layouts).
    fan_out = shape[0] * shape[2] * shape[3]
    std = (2.0 / fan_out) ** 0.5
    return std * jax.random.normal(key, shape, jnp.float32)


def _conv_layer(w, stride, pad, bn=True):
    """w: (Cout, Cin, kh, kw) PyTorch Conv2d layout -> prepared matmul layer."""
    cout, cin, kh, kw = w.shape
    wmat = jnp.transpose(w, (2, 3, 1, 0)).reshape(kh * kw * cin, cout)
    bias = None
    if bn:
        scale, b = _fold_bn(cout)
        wmat = wmat * scale[None, :]
        if bool(jnp.any(b != 0)):       # identically zero for identity running stats
            bias = b
    return {"wmat": wmat.astype(jnp.bfloat16), "bias": bias,
            "k": kh, "stride": stride, "pad": pad}


def _deconv_layer(w, stride, pad, out_pad, bn=True):
    """w: (Cin, Cout, kh, kw) PyTorch ConvTranspose2d layout -> conv-form matmul layer."""
    cin, cout, kh, kw = w.shape
    w_flip = jnp.flip(w, axis=(2, 3))
    wmat = jnp.transpose(w_flip, (2, 3, 0, 1)).reshape(kh * kw * cin, cout)
    bias = None
    if bn:
        scale, b = _fold_bn(cout)
        wmat = wmat * scale[None, :]
        if bool(jnp.any(b != 0)):
            bias = b
    return {"wmat": wmat.astype(jnp.bfloat16), "bias": bias,
            "k": kh, "stride": stride, "pad": pad, "out_pad": out_pad}


def init_params(key, in_channels, factor=8):
    ip = 64 // factor                                         # 8
    widths = [64 // factor, 128 // factor, 256 // factor, 512 // factor]  # 8,16,32,64
    keys = iter(jax.random.split(key, 128))

    def conv(cout, cin, k, stride, pad, bn=True):
        return _conv_layer(_kaiming(next(keys), (cout, cin, k, k)), stride, pad, bn)

    def deconv(cin, cout, k, stride, pad, out_pad, bn=True):
        return _deconv_layer(_kaiming(next(keys), (cin, cout, k, k)),
                             stride, pad, out_pad, bn)

    p = {"conv1": conv(ip, in_channels, 3, 2, 1)}

    # encoder: layer1..4, each with 2 BasicBlocks
    enc, inpl = [], ip
    for li, planes in enumerate(widths):
        stride = 1 if li == 0 else 2
        blocks = []
        for b in range(2):
            s = stride if b == 0 else 1
            blk = {"conv1": conv(planes, inpl, 3, s, 1),
                   "conv2": conv(planes, planes, 3, 1, 1)}
            if s != 1 or inpl != planes:
                blk["down"] = conv(planes, inpl, 1, s, 0)
            blocks.append(blk)
            inpl = planes
        enc.append(blocks)
    p["enc"] = enc

    # decoder: up_layer4..1, each with 2 UpBasicBlocks
    dec = []
    up_specs = [(widths[3], widths[2]), (widths[2], widths[1]),
                (widths[1], widths[0]), (widths[0], widths[0])]
    for cin, planes in up_specs:
        blocks, inpl2 = [], cin
        for b in range(2):
            s = 2 if b == 0 else 1
            blk = {"ct1": deconv(inpl2, planes, 3, s, 1, s - 1),
                   "ct2": deconv(planes, planes, 3, 1, 1, 0)}
            if s != 1 or inpl2 != planes:
                blk["up"] = deconv(inpl2, planes, 1, s, 0, s - 1)
            blocks.append(blk)
            inpl2 = planes
        dec.append(blocks)
    p["dec"] = dec

    p["upconv"] = deconv(ip, in_channels, 3, 1, 1, 0, bn=False)
    return p


# ----------------------------------------------------------------------------
# Forward pass (glue composing fused Pallas conv calls)
# ----------------------------------------------------------------------------
def basic_block(x, blk, act):
    out = conv2d_fused(x, blk["conv1"], None, act)
    if "down" in blk:
        # TODO(synk): conv1 + 1x1 downsample consume the same input and could share
        #             one matmul by concatenating weight columns (lane filling).
        identity = conv2d_fused(x, blk["down"], None, "none")
    else:
        identity = x
    # conv2 + (folded) bn2 + residual + activation fused in one kernel call
    return conv2d_fused(out, blk["conv2"], identity, act)


def up_basic_block(x, blk, act):
    out = conv_transpose2d_fused(x, blk["ct1"], None, act)
    if "up" in blk:
        identity = conv_transpose2d_fused(x, blk["up"], None, "none")
    else:
        identity = x
    return conv_transpose2d_fused(out, blk["ct2"], identity, act)


def forward(params, x_nhwc, act="relu"):
    # dropout layers are nn.Identity (use_dropout=False); maxpool is Identity.
    x = conv2d_fused(x_nhwc, params["conv1"], None, act)      # stem conv + bn + relu

    for blocks in params["enc"]:
        for blk in blocks:
            x = basic_block(x, blk, act)

    for blocks in params["dec"]:
        for blk in blocks:
            x = up_basic_block(x, blk, act)

    # final ConvTranspose2d (no BN) + sigmoid fused into the kernel epilogue
    x = conv_transpose2d_fused(x, params["upconv"], None, "sigmoid")
    return x


if __name__ == "__main__":
    key = jax.random.PRNGKey(0)
    pkey, xkey = jax.random.split(key)

    N, C, H, W = 2, 4, 16, 16
    x_nchw = jax.random.normal(xkey, (N, C, H, W), jnp.float32)
    x_nhwc = jnp.transpose(x_nchw, (0, 2, 3, 1))  # NCHW -> NHWC

    params = init_params(pkey, C)
    fwd = jax.jit(lambda xx: forward(params, xx))
    y = fwd(x_nhwc)
    jax.block_until_ready(y)

    assert y.shape == (N, H, W, C), y.shape
    assert bool(jnp.all(jnp.isfinite(y)))
    assert bool(jnp.all((y >= 0.0) & (y <= 1.0)))  # sigmoid output range
    print("KERNEL_OK")
</pallas_src>

<mosaic_0001>
module attributes {stable_mosaic.version = 11 : i64} {
  func.func @_fused_kernel(%arg0: i32, %arg1: memref<64x36xbf16, #tpu.memory_space<vmem>>, %arg2: memref<36x8xbf16, #tpu.memory_space<vmem>>, %arg3: memref<64x8xf32, #tpu.memory_space<vmem>>) attributes {dimension_semantics = [#tpu.dimension_semantics<parallel>], iteration_bounds = array<i64: 2>, scalar_prefetch = 0 : i64, scratch_operands = 0 : i64, tpu.core_type = #tpu.core_type<tc>, window_params = [{transform_indices = @transform_0, window_bounds = array<i64: 64, 36>}, {pipeline_mode = #tpu.pipeline_mode<synchronous>, transform_indices = @transform_1, window_bounds = array<i64: 36, 8>}, {transform_indices = @transform_2, window_bounds = array<i64: 64, 8>}]} {
    %c0 = arith.constant 0 : index
    %c0_0 = arith.constant 0 : index
    %0 = vector.load %arg1[%c0, %c0_0] : memref<64x36xbf16, #tpu.memory_space<vmem>>, vector<64x36xbf16>
    %c0_1 = arith.constant 0 : index
    %c0_2 = arith.constant 0 : index
    %1 = vector.load %arg2[%c0_1, %c0_2] : memref<36x8xbf16, #tpu.memory_space<vmem>>, vector<36x8xbf16>
    %cst = arith.constant dense<0.000000e+00> : vector<64x8xf32>
    %2 = tpu.matmul %0, %1, %cst {dimension_numbers = #tpu.dot_dimension_numbers<[1], [0], [0], [1], [0, 0, 1, 1], [], []>} : vector<64x36xbf16>, vector<36x8xbf16>, vector<64x8xf32> -> vector<64x8xf32>
    %cst_3 = arith.constant 0.000000e+00 : f32
    %3 = vector.broadcast %cst_3 : f32 to vector<64x8xf32>
    %4 = arith.maximumf %2, %3 : vector<64x8xf32>
    %c0_4 = arith.constant 0 : index
    %c0_5 = arith.constant 0 : index
    %5 = vector.load %arg3[%c0_4, %c0_5] : memref<64x8xf32, #tpu.memory_space<vmem>>, vector<64x8xf32>
    tpu.vector_store %arg3[%c0_4, %c0_5], %4 {strides = array<i32>} : memref<64x8xf32, #tpu.memory_space<vmem>>, vector<64x8xf32>,
    return
  }
  func.func @transform_0(%arg0: i32) -> (i32, i32) {
    %c0_i32 = arith.constant 0 : i32
    %c0_i32_0 = arith.constant 0 : i32
    return %arg0, %c0_i32 : i32, i32
  }
  func.func @transform_1(%arg0: i32) -> (i32, i32) {
    %c0_i32 = arith.constant 0 : i32
    %c0_i32_0 = arith.constant 0 : i32
    %c0_i32_1 = arith.constant 0 : i32
    return %c0_i32, %c0_i32_0 : i32, i32
  }
  func.func @transform_2(%arg0: i32) -> (i32, i32) {
    %c0_i32 = arith.constant 0 : i32
    %c0_i32_0 = arith.constant 0 : i32
    return %arg0, %c0_i32 : i32, i32
  }
}

module attributes {stable_mosaic.version = 11 : i64} {
  func.func @_fused_kernel(%arg0: i32, %arg1: memref<64x72xbf16, #tpu.memory_space<vmem>>, %arg2: memref<72x8xbf16, #tpu.memory_space<vmem>>, %arg3: memref<64x8xf32, #tpu.memory_space<vmem>>) attributes {dimension_semantics = [#tpu.dimension_semantics<parallel>], iteration_bounds = array<i64: 2>, scalar_prefetch = 0 : i64, scratch_operands = 0 : i64, tpu.core_type = #tpu.core_type<tc>, window_params = [{transform_indices = @transform_0, window_bounds = array<i64: 64, 72>}, {pipeline_mode = #tpu.pipeline_mode<synchronous>, transform_indices = @transform_1, window_bounds = array<i64: 72, 8>}, {transform_indices = @transform_2, window_bounds = array<i64: 64, 8>}]} {
    %c0 = arith.constant 0 : index
    %c0_0 = arith.constant 0 : index
    %0 = vector.load %arg1[%c0, %c0_0] : memref<64x72xbf16, #tpu.memory_space<vmem>>, vector<64x72xbf16>
    %c0_1 = arith.constant 0 : index
    %c0_2 = arith.constant 0 : index
    %1 = vector.load %arg2[%c0_1, %c0_2] : memref<72x8xbf16, #tpu.memory_space<vmem>>, vector<72x8xbf16>
    %cst = arith.constant dense<0.000000e+00> : vector<64x8xf32>
    %2 = tpu.matmul %0, %1, %cst {dimension_numbers = #tpu.dot_dimension_numbers<[1], [0], [0], [1], [0, 0, 1, 1], [], []>} : vector<64x72xbf16>, vector<72x8xbf16>, vector<64x8xf32> -> vector<64x8xf32>
    %cst_3 = arith.constant 0.000000e+00 : f32
    %3 = vector.broadcast %cst_3 : f32 to vector<64x8xf32>
    %4 = arith.maximumf %2, %3 : vector<64x8xf32>
    %c0_4 = arith.constant 0 : index
    %c0_5 = arith.constant 0 : index
    %5 = vector.load %arg3[%c0_4, %c0_5] : memref<64x8xf32, #tpu.memory_space<vmem>>, vector<64x8xf32>
    tpu.vector_store %arg3[%c0_4, %c0_5], %4 {strides = array<i32>} : memref<64x8xf32, #tpu.memory_space<vmem>>, vector<64x8xf32>,
    return
  }
  func.func @transform_0(%arg0: i32) -> (i32, i32) {
    %c0_i32 = arith.constant 0 : i32
    %c0_i32_0 = arith.constant 0 : i32
    return %arg0, %c0_i32 : i32, i32
  }
  func.func @transform_1(%arg0: i32) -> (i32, i32) {
    %c0_i32 = arith.constant 0 : i32
    %c0_i32_0 = arith.constant 0 : i32
    %c0_i32_1 = arith.constant 0 : i32
    return %c0_i32, %c0_i32_0 : i32, i32
  }
  func.func @transform_2(%arg0: i32) -> (i32, i32) {
    %c0_i32 = arith.constant 0 : i32
    %c0_i32_0 = arith.constant 0 : i32
    return %arg0, %c0_i32 : i32, i32
  }
}

module attributes {stable_mosaic.version = 11 : i64} {
  func.func @_fused_kernel(%arg0: i32, %arg1: memref<64x72xbf16, #tpu.memory_space<vmem>>, %arg2: memref<72x8xbf16, #tpu.memory_space<vmem>>, %arg3: memref<64x8xf32, #tpu.memory_space<vmem>>, %arg4: memref<64x8xf32, #tpu.memory_space<vmem>>) attributes {dimension_semantics = [#tpu.dimension_semantics<parallel>], iteration_bounds = array<i64: 2>, scalar_prefetch = 0 : i64, scratch_operands = 0 : i64, tpu.core_type = #tpu.core_type<tc>, window_params = [{transform_indices = @transform_0, window_bounds = array<i64: 64, 72>}, {pipeline_mode = #tpu.pipeline_mode<synchronous>, transform_indices = @transform_1, window_bounds = array<i64: 72, 8>}, {transform_indices = @transform_2, window_bounds = array<i64: 64, 8>}, {transform_indices = @transform_3, window_bounds = array<i64: 64, 8>}]} {
    %c0 = arith.constant 0 : index
    %c0_0 = arith.constant 0 : index
    %0 = vector.load %arg1[%c0, %c0_0] : memref<64x72xbf16, #tpu.memory_space<vmem>>, vector<64x72xbf16>
    %c0_1 = arith.constant 0 : index
    %c0_2 = arith.constant 0 : index
    %1 = vector.load %arg2[%c0_1, %c0_2] : memref<72x8xbf16, #tpu.memory_space<vmem>>, vector<72x8xbf16>
    %cst = arith.constant dense<0.000000e+00> : vector<64x8xf32>
    %2 = tpu.matmul %0, %1, %cst {dimension_numbers = #tpu.dot_dimension_numbers<[1], [0], [0], [1], [0, 0, 1, 1], [], []>} : vector<64x72xbf16>, vector<72x8xbf16>, vector<64x8xf32> -> vector<64x8xf32>
    %c0_3 = arith.constant 0 : index
    %c0_4 = arith.constant 0 : index
    %3 = vector.load %arg3[%c0_3, %c0_4] : memref<64x8xf32, #tpu.memory_space<vmem>>, vector<64x8xf32>
    %4 = arith.addf %2, %3 : vector<64x8xf32>
    %cst_5 = arith.constant 0.000000e+00 : f32
    %5 = vector.broadcast %cst_5 : f32 to vector<64x8xf32>
    %6 = arith.maximumf %4, %5 : vector<64x8xf32>
    %c0_6 = arith.constant 0 : index
    %c0_7 = arith.constant 0 : index
    %7 = vector.load %arg4[%c0_6, %c0_7] : memref<64x8xf32, #tpu.memory_space<vmem>>, vector<64x8xf32>
    tpu.vector_store %arg4[%c0_6, %c0_7], %6 {strides = array<i32>} : memref<64x8xf32, #tpu.memory_space<vmem>>, vector<64x8xf32>,
    return
  }
  func.func @transform_0(%arg0: i32) -> (i32, i32) {
    %c0_i32 = arith.constant 0 : i32
    %c0_i32_0 = arith.constant 0 : i32
    return %arg0, %c0_i32 : i32, i32
  }
  func.func @transform_1(%arg0: i32) -> (i32, i32) {
    %c0_i32 = arith.constant 0 : i32
    %c0_i32_0 = arith.constant 0 : i32
    %c0_i32_1 = arith.constant 0 : i32
    return %c0_i32, %c0_i32_0 : i32, i32
  }
  func.func @transform_2(%arg0: i32) -> (i32, i32) {
    %c0_i32 = arith.constant 0 : i32
    %c0_i32_0 = arith.constant 0 : i32
    return %arg0, %c0_i32 : i32, i32
  }
  func.func @transform_3(%arg0: i32) -> (i32, i32) {
    %c0_i32 = arith.constant 0 : i32
    %c0_i32_0 = arith.constant 0 : i32
    return %arg0, %c0_i32 : i32, i32
  }
}

module attributes {stable_mosaic.version = 11 : i64} {
  func.func @_fused_kernel(%arg0: i32, %arg1: memref<16x8xbf16, #tpu.memory_space<vmem>>, %arg2: memref<8x16xbf16, #tpu.memory_space<vmem>>, %arg3: memref<16x16xf32, #tpu.memory_space<vmem>>) attributes {dimension_semantics = [#tpu.dimension_semantics<parallel>], iteration_bounds = array<i64: 2>, scalar_prefetch = 0 : i64, scratch_operands = 0 : i64, tpu.core_type = #tpu.core_type<tc>, window_params = [{transform_indices = @transform_0, window_bounds = array<i64: 16, 8>}, {pipeline_mode = #tpu.pipeline_mode<synchronous>, transform_indices = @transform_1, window_bounds = array<i64: 8, 16>}, {transform_indices = @transform_2, window_bounds = array<i64: 16, 16>}]} {
    %c0 = arith.constant 0 : index
    %c0_0 = arith.constant 0 : index
    %0 = vector.load %arg1[%c0, %c0_0] : memref<16x8xbf16, #tpu.memory_space<vmem>>, vector<16x8xbf16>
    %c0_1 = arith.constant 0 : index
    %c0_2 = arith.constant 0 : index
    %1 = vector.load %arg2[%c0_1, %c0_2] : memref<8x16xbf16, #tpu.memory_space<vmem>>, vector<8x16xbf16>
    %cst = arith.constant dense<0.000000e+00> : vector<16x16xf32>
    %2 = tpu.matmul %0, %1, %cst {dimension_numbers = #tpu.dot_dimension_numbers<[1], [0], [0], [1], [0, 0, 1, 1], [], []>} : vector<16x8xbf16>, vector<8x16xbf16>, vector<16x16xf32> -> vector<16x16xf32>
    %c0_3 = arith.constant 0 : index
    %c0_4 = arith.constant 0 : index
    %3 = vector.load %arg3[%c0_3, %c0_4] : memref<16x16xf32, #tpu.memory_space<vmem>>, vector<16x16xf32>
    tpu.vector_store %arg3[%c0_3, %c0_4], %2 {strides = array<i32>} : memref<16x16xf32, #tpu.memory_space<vmem>>, vector<16x16xf32>,
    return
  }
  func.func @transform_0(%arg0: i32) -> (i32, i32) {
    %c0_i32 = arith.constant 0 : i32
    %c0_i32_0 = arith.constant 0 : i32
    return %arg0, %c0_i32 : i32, i32
  }
  func.func @transform_1(%arg0: i32) -> (i32, i32) {
    %c0_i32 = arith.constant 0 : i32
    %c0_i32_0 = arith.constant 0 : i32
    %c0_i32_1 = arith.constant 0 : i32
    return %c0_i32, %c0_i32_0 : i32, i32
  }
  func.func @transform_2(%arg0: i32) -> (i32, i32) {
    %c0_i32 = arith.constant 0 : i32
    %c0_i32_0 = arith.constant 0 : i32
    return %arg0, %c0_i32 : i32, i32
  }
}

module attributes {stable_mosaic.version = 11 : i64} {
  func.func @_fused_kernel(%arg0: i32, %arg1: memref<16x72xbf16, #tpu.memory_space<vmem>>, %arg2: memref<72x16xbf16, #tpu.memory_space<vmem>>, %arg3: memref<16x16xf32, #tpu.memory_space<vmem>>) attributes {dimension_semantics = [#tpu.dimension_semantics<parallel>], iteration_bounds = array<i64: 2>, scalar_prefetch = 0 : i64, scratch_operands = 0 : i64, tpu.core_type = #tpu.core_type<tc>, window_params = [{transform_indices = @transform_0, window_bounds = array<i64: 16, 72>}, {pipeline_mode = #tpu.pipeline_mode<synchronous>, transform_indices = @transform_1, window_bounds = array<i64: 72, 16>}, {transform_indices = @transform_2, window_bounds = array<i64: 16, 16>}]} {
    %c0 = arith.constant 0 : index
    %c0_0 = arith.constant 0 : index
    %0 = vector.load %arg1[%c0, %c0_0] : memref<16x72xbf16, #tpu.memory_space<vmem>>, vector<16x72xbf16>
    %c0_1 = arith.constant 0 : index
    %c0_2 = arith.constant 0 : index
    %1 = vector.load %arg2[%c0_1, %c0_2] : memref<72x16xbf16, #tpu.memory_space<vmem>>, vector<72x16xbf16>
    %cst = arith.constant dense<0.000000e+00> : vector<16x16xf32>
    %2 = tpu.matmul %0, %1, %cst {dimension_numbers = #tpu.dot_dimension_numbers<[1], [0], [0], [1], [0, 0, 1, 1], [], []>} : vector<16x72xbf16>, vector<72x16xbf16>, vector<16x16xf32> -> vector<16x16xf32>
    %cst_3 = arith.constant 0.000000e+00 : f32
    %3 = vector.broadcast %cst_3 : f32 to vector<16x16xf32>
    %4 = arith.maximumf %2, %3 : vector<16x16xf32>
    %c0_4 = arith.constant 0 : index
    %c0_5 = arith.constant 0 : index
    %5 = vector.load %arg3[%c0_4, %c0_5] : memref<16x16xf32, #tpu.memory_space<vmem>>, vector<16x16xf32>
    tpu.vector_store %arg3[%c0_4, %c0_5], %4 {strides = array<i32>} : memref<16x16xf32, #tpu.memory_space<vmem>>, vector<16x16xf32>,
    return
  }
  func.func @transform_0(%arg0: i32) -> (i32, i32) {
    %c0_i32 = arith.constant 0 : i32
    %c0_i32_0 = arith.constant 0 : i32
    return %arg0, %c0_i32 : i32, i32
  }
  func.func @transform_1(%arg0: i32) -> (i32, i32) {
    %c0_i32 = arith.constant 0 : i32
    %c0_i32_0 = arith.constant 0 : i32
    %c0_i32_1 = arith.constant 0 : i32
    return %c0_i32, %c0_i32_0 : i32, i32
  }
  func.func @transform_2(%arg0: i32) -> (i32, i32) {
    %c0_i32 = arith.constant 0 : i32
    %c0_i32_0 = arith.constant 0 : i32
    return %arg0, %c0_i32 : i32, i32
  }
}

module attributes {stable_mosaic.version = 11 : i64} {
  func.func @_fused_kernel(%arg0: i32, %arg1: memref<16x144xbf16, #tpu.memory_space<vmem>>, %arg2: memref<144x16xbf16, #tpu.memory_space<vmem>>, %arg3: memref<16x16xf32, #tpu.memory_space<vmem>>) attributes {dimension_semantics = [#tpu.dimension_semantics<parallel>], iteration_bounds = array<i64: 2>, scalar_prefetch = 0 : i64, scratch_operands = 0 : i64, tpu.core_type = #tpu.core_type<tc>, window_params = [{transform_indices = @transform_0, window_bounds = array<i64: 16, 144>}, {pipeline_mode = #tpu.pipeline_mode<synchronous>, transform_indices = @transform_1, window_bounds = array<i64: 144, 16>}, {transform_indices = @transform_2, window_bounds = array<i64: 16, 16>}]} {
    %c0 = arith.constant 0 : index
    %c0_0 = arith.constant 0 : index
    %0 = vector.load %arg1[%c0, %c0_0] : memref<16x144xbf16, #tpu.memory_space<vmem>>, vector<16x144xbf16>
    %c0_1 = arith.constant 0 : index
    %c0_2 = arith.constant 0 : index
    %1 = vector.load %arg2[%c0_1, %c0_2] : memref<144x16xbf16, #tpu.memory_space<vmem>>, vector<144x16xbf16>
    %cst = arith.constant dense<0.000000e+00> : vector<16x16xf32>
    %2 = tpu.matmul %0, %1, %cst {dimension_numbers = #tpu.dot_dimension_numbers<[1], [0], [0], [1], [0, 0, 1, 1], [], []>} : vector<16x144xbf16>, vector<144x16xbf16>, vector<16x16xf32> -> vector<16x16xf32>
    %cst_3 = arith.constant 0.000000e+00 : f32
    %3 = vector.broadcast %cst_3 : f32 to vector<16x16xf32>
    %4 = arith.maximumf %2, %3 : vector<16x16xf32>
    %c0_4 = arith.constant 0 : index
    %c0_5 = arith.constant 0 : index
    %5 = vector.load %arg3[%c0_4, %c0_5] : memref<16x16xf32, #tpu.memory_space<vmem>>, vector<16x16xf32>
    tpu.vector_store %arg3[%c0_4, %c0_5], %4 {strides = array<i32>} : memref<16x16xf32, #tpu.memory_space<vmem>>, vector<16x16xf32>,
    return
  }
  func.func @transform_0(%arg0: i32) -> (i32, i32) {
    %c0_i32 = arith.constant 0 : i32
    %c0_i32_0 = arith.constant 0 : i32
    return %arg0, %c0_i32 : i32, i32
  }
  func.func @transform_1(%arg0: i32) -> (i32, i32) {
    %c0_i32 = arith.constant 0 : i32
    %c0_i32_0 = arith.constant 0 : i32
    %c0_i32_1 = arith.constant 0 : i32
    return %c0_i32, %c0_i32_0 : i32, i32
  }
  func.func @transform_2(%arg0: i32) -> (i32, i32) {
    %c0_i32 = arith.constant 0 : i32
    %c0_i32_0 = arith.constant 0 : i32
    return %arg0, %c0_i32 : i32, i32
  }
}

module attributes {stable_mosaic.version = 11 : i64} {
  func.func @_fused_kernel(%arg0: i32, %arg1: memref<16x144xbf16, #tpu.memory_space<vmem>>, %arg2: memref<144x16xbf16, #tpu.memory_space<vmem>>, %arg3: memref<16x16xf32, #tpu.memory_space<vmem>>, %arg4: memref<16x16xf32, #tpu.memory_space<vmem>>) attributes {dimension_semantics = [#tpu.dimension_semantics<parallel>], iteration_bounds = array<i64: 2>, scalar_prefetch = 0 : i64, scratch_operands = 0 : i64, tpu.core_type = #tpu.core_type<tc>, window_params = [{transform_indices = @transform_0, window_bounds = array<i64: 16, 144>}, {pipeline_mode = #tpu.pipeline_mode<synchronous>, transform_indices = @transform_1, window_bounds = array<i64: 144, 16>}, {transform_indices = @transform_2, window_bounds = array<i64: 16, 16>}, {transform_indices = @transform_3, window_bounds = array<i64: 16, 16>}]} {
    %c0 = arith.constant 0 : index
    %c0_0 = arith.constant 0 : index
    %0 = vector.load %arg1[%c0, %c0_0] : memref<16x144xbf16, #tpu.memory_space<vmem>>, vector<16x144xbf16>
    %c0_1 = arith.constant 0 : index
    %c0_2 = arith.constant 0 : index
    %1 = vector.load %arg2[%c0_1, %c0_2] : memref<144x16xbf16, #tpu.memory_space<vmem>>, vector<144x16xbf16>
    %cst = arith.constant dense<0.000000e+00> : vector<16x16xf32>
    %2 = tpu.matmul %0, %1, %cst {dimension_numbers = #tpu.dot_dimension_numbers<[1], [0], [0], [1], [0, 0, 1, 1], [], []>} : vector<16x144xbf16>, vector<144x16xbf16>, vector<16x16xf32> -> vector<16x16xf32>
    %c0_3 = arith.constant 0 : index
    %c0_4 = arith.constant 0 : index
    %3 = vector.load %arg3[%c0_3, %c0_4] : memref<16x16xf32, #tpu.memory_space<vmem>>, vector<16x16xf32>
    %4 = arith.addf %2, %3 : vector<16x16xf32>
    %cst_5 = arith.constant 0.000000e+00 : f32
    %5 = vector.broadcast %cst_5 : f32 to vector<16x16xf32>
    %6 = arith.maximumf %4, %5 : vector<16x16xf32>
    %c0_6 = arith.constant 0 : index
    %c0_7 = arith.constant 0 : index
    %7 = vector.load %arg4[%c0_6, %c0_7] : memref<16x16xf32, #tpu.memory_space<vmem>>, vector<16x16xf32>
    tpu.vector_store %arg4[%c0_6, %c0_7], %6 {strides = array<i32>} : memref<16x16xf32, #tpu.memory_space<vmem>>, vector<16x16xf32>,
    return
  }
  func.func @transform_0(%arg0: i32) -> (i32, i32) {
    %c0_i32 = arith.constant 0 : i32
    %c0_i32_0 = arith.constant 0 : i32
    return %arg0, %c0_i32 : i32, i32
  }
  func.func @transform_1(%arg0: i32) -> (i32, i32) {
    %c0_i32 = arith.constant 0 : i32
    %c0_i32_0 = arith.constant 0 : i32
    %c0_i32_1 = arith.constant 0 : i32
    return %c0_i32, %c0_i32_0 : i32, i32
  }
  func.func @transform_2(%arg0: i32) -> (i32, i32) {
    %c0_i32 = arith.constant 0 : i32
    %c0_i32_0 = arith.constant 0 : i32
    return %arg0, %c0_i32 : i32, i32
  }
  func.func @transform_3(%arg0: i32) -> (i32, i32) {
    %c0_i32 = arith.constant 0 : i32
    %c0_i32_0 = arith.constant 0 : i32
    return %arg0, %c0_i32 : i32, i32
  }
}

module attributes {stable_mosaic.version = 11 : i64} {
  func.func @_fused_kernel(%arg0: i32, %arg1: memref<8x16xbf16, #tpu.memory_space<vmem>>, %arg2: memref<16x32xbf16, #tpu.memory_space<vmem>>, %arg3: memref<8x32xf32, #tpu.memory_space<vmem>>) attributes {dimension_semantics = [#tpu.dimension_semantics<parallel>], iteration_bounds = array<i64: 1>, scalar_prefetch = 0 : i64, scratch_operands = 0 : i64, tpu.core_type = #tpu.core_type<tc>, window_params = [{transform_indices = @transform_0, window_bounds = array<i64: 8, 16>}, {pipeline_mode = #tpu.pipeline_mode<synchronous>, transform_indices = @transform_1, window_bounds = array<i64: 16, 32>}, {transform_indices = @transform_2, window_bounds = array<i64: 8, 32>}]} {
    %c0 = arith.constant 0 : index
    %c0_0 = arith.constant 0 : index
    %0 = vector.load %arg1[%c0, %c0_0] : memref<8x16xbf16, #tpu.memory_space<vmem>>, vector<8x16xbf16>
    %c0_1 = arith.constant 0 : index
    %c0_2 = arith.constant 0 : index
    %1 = vector.load %arg2[%c0_1, %c0_2] : memref<16x32xbf16, #tpu.memory_space<vmem>>, vector<16x32xbf16>
    %cst = arith.constant dense<0.000000e+00> : vector<8x32xf32>
    %2 = tpu.matmul %0, %1, %cst {dimension_numbers = #tpu.dot_dimension_numbers<[1], [0], [0], [1], [0, 0, 1, 1], [], []>} : vector<8x16xbf16>, vector<16x32xbf16>, vector<8x32xf32> -> vector<8x32xf32>
    %c0_3 = arith.constant 0 : index
    %c0_4 = arith.constant 0 : index
    %3 = vector.load %arg3[%c0_3, %c0_4] : memref<8x32xf32, #tpu.memory_space<vmem>>, vector<8x32xf32>
    tpu.vector_store %arg3[%c0_3, %c0_4], %2 {strides = array<i32>} : memref<8x32xf32, #tpu.memory_space<vmem>>, vector<8x32xf32>,
    return
  }
  func.func @transform_0(%arg0: i32) -> (i32, i32) {
    %c0_i32 = arith.constant 0 : i32
    %c0_i32_0 = arith.constant 0 : i32
    return %arg0, %c0_i32 : i32, i32
  }
  func.func @transform_1(%arg0: i32) -> (i32, i32) {
    %c0_i32 = arith.constant 0 : i32
    %c0_i32_0 = arith.constant 0 : i32
    %c0_i32_1 = arith.constant 0 : i32
    return %c0_i32, %c0_i32_0 : i32, i32
  }
  func.func @transform_2(%arg0: i32) -> (i32, i32) {
    %c0_i32 = arith.constant 0 : i32
    %c0_i32_0 = arith.constant 0 : i32
    return %arg0, %c0_i32 : i32, i32
  }
}

module attributes {stable_mosaic.version = 11 : i64} {
  func.func @_fused_kernel(%arg0: i32, %arg1: memref<8x144xbf16, #tpu.memory_space<vmem>>, %arg2: memref<144x32xbf16, #tpu.memory_space<vmem>>, %arg3: memref<8x32xf32, #tpu.memory_space<vmem>>) attributes {dimension_semantics = [#tpu.dimension_semantics<parallel>], iteration_bounds = array<i64: 1>, scalar_prefetch = 0 : i64, scratch_operands = 0 : i64, tpu.core_type = #tpu.core_type<tc>, window_params = [{transform_indices = @transform_0, window_bounds = array<i64: 8, 144>}, {pipeline_mode = #tpu.pipeline_mode<synchronous>, transform_indices = @transform_1, window_bounds = array<i64: 144, 32>}, {transform_indices = @transform_2, window_bounds = array<i64: 8, 32>}]} {
    %c0 = arith.constant 0 : index
    %c0_0 = arith.constant 0 : index
    %0 = vector.load %arg1[%c0, %c0_0] : memref<8x144xbf16, #tpu.memory_space<vmem>>, vector<8x144xbf16>
    %c0_1 = arith.constant 0 : index
    %c0_2 = arith.constant 0 : index
    %1 = vector.load %arg2[%c0_1, %c0_2] : memref<144x32xbf16, #tpu.memory_space<vmem>>, vector<144x32xbf16>
    %cst = arith.constant dense<0.000000e+00> : vector<8x32xf32>
    %2 = tpu.matmul %0, %1, %cst {dimension_numbers = #tpu.dot_dimension_numbers<[1], [0], [0], [1], [0, 0, 1, 1], [], []>} : vector<8x144xbf16>, vector<144x32xbf16>, vector<8x32xf32> -> vector<8x32xf32>
    %cst_3 = arith.constant 0.000000e+00 : f32
    %3 = vector.broadcast %cst_3 : f32 to vector<8x32xf32>
    %4 = arith.maximumf %2, %3 : vector<8x32xf32>
    %c0_4 = arith.constant 0 : index
    %c0_5 = arith.constant 0 : index
    %5 = vector.load %arg3[%c0_4, %c0_5] : memref<8x32xf32, #tpu.memory_space<vmem>>, vector<8x32xf32>
    tpu.vector_store %arg3[%c0_4, %c0_5], %4 {strides = array<i32>} : memref<8x32xf32, #tpu.memory_space<vmem>>, vector<8x32xf32>,
    return
  }
  func.func @transform_0(%arg0: i32) -> (i32, i32) {
    %c0_i32 = arith.constant 0 : i32
    %c0_i32_0 = arith.constant 0 : i32
    return %arg0, %c0_i32 : i32, i32
  }
  func.func @transform_1(%arg0: i32) -> (i32, i32) {
    %c0_i32 = arith.constant 0 : i32
    %c0_i32_0 = arith.constant 0 : i32
    %c0_i32_1 = arith.constant 0 : i32
    return %c0_i32, %c0_i32_0 : i32, i32
  }
  func.func @transform_2(%arg0: i32) -> (i32, i32) {
    %c0_i32 = arith.constant 0 : i32
    %c0_i32_0 = arith.constant 0 : i32
    return %arg0, %c0_i32 : i32, i32
  }
}

module attributes {stable_mosaic.version = 11 : i64} {
  func.func @_fused_kernel(%arg0: i32, %arg1: memref<8x288xbf16, #tpu.memory_space<vmem>>, %arg2: memref<288x32xbf16, #tpu.memory_space<vmem>>, %arg3: memref<8x32xf32, #tpu.memory_space<vmem>>) attributes {dimension_semantics = [#tpu.dimension_semantics<parallel>], iteration_bounds = array<i64: 1>, scalar_prefetch = 0 : i64, scratch_operands = 0 : i64, tpu.core_type = #tpu.core_type<tc>, window_params = [{transform_indices = @transform_0, window_bounds = array<i64: 8, 288>}, {pipeline_mode = #tpu.pipeline_mode<synchronous>, transform_indices = @transform_1, window_bounds = array<i64: 288, 32>}, {transform_indices = @transform_2, window_bounds = array<i64: 8, 32>}]} {
    %c0 = arith.constant 0 : index
    %c0_0 = arith.constant 0 : index
    %0 = vector.load %arg1[%c0, %c0_0] : memref<8x288xbf16, #tpu.memory_space<vmem>>, vector<8x288xbf16>
    %c0_1 = arith.constant 0 : index
    %c0_2 = arith.constant 0 : index
    %1 = vector.load %arg2[%c0_1, %c0_2] : memref<288x32xbf16, #tpu.memory_space<vmem>>, vector<288x32xbf16>
    %cst = arith.constant dense<0.000000e+00> : vector<8x32xf32>
    %2 = tpu.matmul %0, %1, %cst {dimension_numbers = #tpu.dot_dimension_numbers<[1], [0], [0], [1], [0, 0, 1, 1], [], []>} : vector<8x288xbf16>, vector<288x32xbf16>, vector<8x32xf32> -> vector<8x32xf32>
    %cst_3 = arith.constant 0.000000e+00 : f32
    %3 = vector.broadcast %cst_3 : f32 to vector<8x32xf32>
    %4 = arith.maximumf %2, %3 : vector<8x32xf32>
    %c0_4 = arith.constant 0 : index
    %c0_5 = arith.constant 0 : index
    %5 = vector.load %arg3[%c0_4, %c0_5] : memref<8x32xf32, #tpu.memory_space<vmem>>, vector<8x32xf32>
    tpu.vector_store %arg3[%c0_4, %c0_5], %4 {strides = array<i32>} : memref<8x32xf32, #tpu.memory_space<vmem>>, vector<8x32xf32>,
    return
  }
  func.func @transform_0(%arg0: i32) -> (i32, i32) {
    %c0_i32 = arith.constant 0 : i32
    %c0_i32_0 = arith.constant 0 : i32
    return %arg0, %c0_i32 : i32, i32
  }
  func.func @transform_1(%arg0: i32) -> (i32, i32) {
    %c0_i32 = arith.constant 0 : i32
    %c0_i32_0 = arith.constant 0 : i32
    %c0_i32_1 = arith.constant 0 : i32
    return %c0_i32, %c0_i32_0 : i32, i32
  }
  func.func @transform_2(%arg0: i32) -> (i32, i32) {
    %c0_i32 = arith.constant 0 : i32
    %c0_i32_0 = arith.constant 0 : i32
    return %arg0, %c0_i32 : i32, i32
  }
}

module attributes {stable_mosaic.version = 11 : i64} {
  func.func @_fused_kernel(%arg0: i32, %arg1: memref<8x288xbf16, #tpu.memory_space<vmem>>, %arg2: memref<288x32xbf16, #tpu.memory_space<vmem>>, %arg3: memref<8x32xf32, #tpu.memory_space<vmem>>, %arg4: memref<8x32xf32, #tpu.memory_space<vmem>>) attributes {dimension_semantics = [#tpu.dimension_semantics<parallel>], iteration_bounds = array<i64: 1>, scalar_prefetch = 0 : i64, scratch_operands = 0 : i64, tpu.core_type = #tpu.core_type<tc>, window_params = [{transform_indices = @transform_0, window_bounds = array<i64: 8, 288>}, {pipeline_mode = #tpu.pipeline_mode<synchronous>, transform_indices = @transform_1, window_bounds = array<i64: 288, 32>}, {transform_indices = @transform_2, window_bounds = array<i64: 8, 32>}, {transform_indices = @transform_3, window_bounds = array<i64: 8, 32>}]} {
    %c0 = arith.constant 0 : index
    %c0_0 = arith.constant 0 : index
    %0 = vector.load %arg1[%c0, %c0_0] : memref<8x288xbf16, #tpu.memory_space<vmem>>, vector<8x288xbf16>
    %c0_1 = arith.constant 0 : index
    %c0_2 = arith.constant 0 : index
    %1 = vector.load %arg2[%c0_1, %c0_2] : memref<288x32xbf16, #tpu.memory_space<vmem>>, vector<288x32xbf16>
    %cst = arith.constant dense<0.000000e+00> : vector<8x32xf32>
    %2 = tpu.matmul %0, %1, %cst {dimension_numbers = #tpu.dot_dimension_numbers<[1], [0], [0], [1], [0, 0, 1, 1], [], []>} : vector<8x288xbf16>, vector<288x32xbf16>, vector<8x32xf32> -> vector<8x32xf32>
    %c0_3 = arith.constant 0 : index
    %c0_4 = arith.constant 0 : index
    %3 = vector.load %arg3[%c0_3, %c0_4] : memref<8x32xf32, #tpu.memory_space<vmem>>, vector<8x32xf32>
    %4 = arith.addf %2, %3 : vector<8x32xf32>
    %cst_5 = arith.constant 0.000000e+00 : f32
    %5 = vector.broadcast %cst_5 : f32 to vector<8x32xf32>
    %6 = arith.maximumf %4, %5 : vector<8x32xf32>
    %c0_6 = arith.constant 0 : index
    %c0_7 = arith.constant 0 : index
    %7 = vector.load %arg4[%c0_6, %c0_7] : memref<8x32xf32, #tpu.memory_space<vmem>>, vector<8x32xf32>
    tpu.vector_store %arg4[%c0_6, %c0_7], %6 {strides = array<i32>} : memref<8x32xf32, #tpu.memory_space<vmem>>, vector<8x32xf32>,
    return
  }
  func.func @transform_0(%arg0: i32) -> (i32, i32) {
    %c0_i32 = arith.constant 0 : i32
    %c0_i32_0 = arith.constant 0 : i32
    return %arg0, %c0_i32 : i32, i32
  }
  func.func @transform_1(%arg0: i32) -> (i32, i32) {
    %c0_i32 = arith.constant 0 : i32
    %c0_i32_0 = arith.constant 0 : i32
    %c0_i32_1 = arith.constant 0 : i32
    return %c0_i32, %c0_i32_0 : i32, i32
  }
  func.func @transform_2(%arg0: i32) -> (i32, i32) {
    %c0_i32 = arith.constant 0 : i32
    %c0_i32_0 = arith.constant 0 : i32
    return %arg0, %c0_i32 : i32, i32
  }
  func.func @transform_3(%arg0: i32) -> (i32, i32) {
    %c0_i32 = arith.constant 0 : i32
    %c0_i32_0 = arith.constant 0 : i32
    return %arg0, %c0_i32 : i32, i32
  }
}

module attributes {stable_mosaic.version = 11 : i64} {
  func.func @_fused_kernel(%arg0: i32, %arg1: memref<8x32xbf16, #tpu.memory_space<vmem>>, %arg2: memref<32x64xbf16, #tpu.memory_space<vmem>>, %arg3: memref<8x64xf32, #tpu.memory_space<vmem>>) attributes {dimension_semantics = [#tpu.dimension_semantics<parallel>], iteration_bounds = array<i64: 1>, scalar_prefetch = 0 : i64, scratch_operands = 0 : i64, tpu.core_type = #tpu.core_type<tc>, window_params = [{transform_indices = @transform_0, window_bounds = array<i64: 8, 32>}, {pipeline_mode = #tpu.pipeline_mode<synchronous>, transform_indices = @transform_1, window_bounds = array<i64: 32, 64>}, {transform_indices = @transform_2, window_bounds = array<i64: 8, 64>}]} {
    %c0 = arith.constant 0 : index
    %c0_0 = arith.constant 0 : index
    %0 = vector.load %arg1[%c0, %c0_0] : memref<8x32xbf16, #tpu.memory_space<vmem>>, vector<8x32xbf16>
    %c0_1 = arith.constant 0 : index
    %c0_2 = arith.constant 0 : index
    %1 = vector.load %arg2[%c0_1, %c0_2] : memref<32x64xbf16, #tpu.memory_space<vmem>>, vector<32x64xbf16>
    %cst = arith.constant dense<0.000000e+00> : vector<8x64xf32>
    %2 = tpu.matmul %0, %1, %cst {dimension_numbers = #tpu.dot_dimension_numbers<[1], [0], [0], [1], [0, 0, 1, 1], [], []>} : vector<8x32xbf16>, vector<32x64xbf16>, vector<8x64xf32> -> vector<8x64xf32>
    %c0_3 = arith.constant 0 : index
    %c0_4 = arith.constant 0 : index
    %3 = vector.load %arg3[%c0_3, %c0_4] : memref<8x64xf32, #tpu.memory_space<vmem>>, vector<8x64xf32>
    tpu.vector_store %arg3[%c0_3, %c0_4], %2 {strides = array<i32>} : memref<8x64xf32, #tpu.memory_space<vmem>>, vector<8x64xf32>,
    return
  }
  func.func @transform_0(%arg0: i32) -> (i32, i32) {
    %c0_i32 = arith.constant 0 : i32
    %c0_i32_0 = arith.constant 0 : i32
    return %arg0, %c0_i32 : i32, i32
  }
  func.func @transform_1(%arg0: i32) -> (i32, i32) {
    %c0_i32 = arith.constant 0 : i32
    %c0_i32_0 = arith.constant 0 : i32
    %c0_i32_1 = arith.constant 0 : i32
    return %c0_i32, %c0_i32_0 : i32, i32
  }
  func.func @transform_2(%arg0: i32) -> (i32, i32) {
    %c0_i32 = arith.constant 0 : i32
    %c0_i32_0 = arith.constant 0 : i32
    return %arg0, %c0_i32 : i32, i32
  }
}

module attributes {stable_mosaic.version = 11 : i64} {
  func.func @_fused_kernel(%arg0: i32, %arg1: memref<8x288xbf16, #tpu.memory_space<vmem>>, %arg2: memref<288x64xbf16, #tpu.memory_space<vmem>>, %arg3: memref<8x64xf32, #tpu.memory_space<vmem>>) attributes {dimension_semantics = [#tpu.dimension_semantics<parallel>], iteration_bounds = array<i64: 1>, scalar_prefetch = 0 : i64, scratch_operands = 0 : i64, tpu.core_type = #tpu.core_type<tc>, window_params = [{transform_indices = @transform_0, window_bounds = array<i64: 8, 288>}, {pipeline_mode = #tpu.pipeline_mode<synchronous>, transform_indices = @transform_1, window_bounds = array<i64: 288, 64>}, {transform_indices = @transform_2, window_bounds = array<i64: 8, 64>}]} {
    %c0 = arith.constant 0 : index
    %c0_0 = arith.constant 0 : index
    %0 = vector.load %arg1[%c0, %c0_0] : memref<8x288xbf16, #tpu.memory_space<vmem>>, vector<8x288xbf16>
    %c0_1 = arith.constant 0 : index
    %c0_2 = arith.constant 0 : index
    %1 = vector.load %arg2[%c0_1, %c0_2] : memref<288x64xbf16, #tpu.memory_space<vmem>>, vector<288x64xbf16>
    %cst = arith.constant dense<0.000000e+00> : vector<8x64xf32>
    %2 = tpu.matmul %0, %1, %cst {dimension_numbers = #tpu.dot_dimension_numbers<[1], [0], [0], [1], [0, 0, 1, 1], [], []>} : vector<8x288xbf16>, vector<288x64xbf16>, vector<8x64xf32> -> vector<8x64xf32>
    %cst_3 = arith.constant 0.000000e+00 : f32
    %3 = vector.broadcast %cst_3 : f32 to vector<8x64xf32>
    %4 = arith.maximumf %2, %3 : vector<8x64xf32>
    %c0_4 = arith.constant 0 : index
    %c0_5 = arith.constant 0 : index
    %5 = vector.load %arg3[%c0_4, %c0_5] : memref<8x64xf32, #tpu.memory_space<vmem>>, vector<8x64xf32>
    tpu.vector_store %arg3[%c0_4, %c0_5], %4 {strides = array<i32>} : memref<8x64xf32, #tpu.memory_space<vmem>>, vector<8x64xf32>,
    return
  }
  func.func @transform_0(%arg0: i32) -> (i32, i32) {
    %c0_i32 = arith.constant 0 : i32
    %c0_i32_0 = arith.constant 0 : i32
    return %arg0, %c0_i32 : i32, i32
  }
  func.func @transform_1(%arg0: i32) -> (i32, i32) {
    %c0_i32 = arith.constant 0 : i32
    %c0_i32_0 = arith.constant 0 : i32
    %c0_i32_1 = arith.constant 0 : i32
    return %c0_i32, %c0_i32_0 : i32, i32
  }
  func.func @transform_2(%arg0: i32) -> (i32, i32) {
    %c0_i32 = arith.constant 0 : i32
    %c0_i32_0 = arith.constant 0 : i32
    return %arg0, %c0_i32 : i32, i32
  }
}

module attributes {stable_mosaic.version = 11 : i64} {
  func.func @_fused_kernel(%arg0: i32, %arg1: memref<8x576xbf16, #tpu.memory_space<vmem>>, %arg2: memref<576x64xbf16, #tpu.memory_space<vmem>>, %arg3: memref<8x64xf32, #tpu.memory_space<vmem>>, %arg4: memref<8x64xf32, #tpu.memory_space<vmem>>) attributes {dimension_semantics = [#tpu.dimension_semantics<parallel>], iteration_bounds = array<i64: 1>, scalar_prefetch = 0 : i64, scratch_operands = 0 : i64, tpu.core_type = #tpu.core_type<tc>, window_params = [{transform_indices = @transform_0, window_bounds = array<i64: 8, 576>}, {pipeline_mode = #tpu.pipeline_mode<synchronous>, transform_indices = @transform_1, window_bounds = array<i64: 576, 64>}, {transform_indices = @transform_2, window_bounds = array<i64: 8, 64>}, {transform_indices = @transform_3, window_bounds = array<i64: 8, 64>}]} {
    %c0 = arith.constant 0 : index
    %c0_0 = arith.constant 0 : index
    %0 = vector.load %arg1[%c0, %c0_0] : memref<8x576xbf16, #tpu.memory_space<vmem>>, vector<8x576xbf16>
    %c0_1 = arith.constant 0 : index
    %c0_2 = arith.constant 0 : index
    %1 = vector.load %arg2[%c0_1, %c0_2] : memref<576x64xbf16, #tpu.memory_space<vmem>>, vector<576x64xbf16>
    %cst = arith.constant dense<0.000000e+00> : vector<8x64xf32>
    %2 = tpu.matmul %0, %1, %cst {dimension_numbers = #tpu.dot_dimension_numbers<[1], [0], [0], [1], [0, 0, 1, 1], [], []>} : vector<8x576xbf16>, vector<576x64xbf16>, vector<8x64xf32> -> vector<8x64xf32>
    %c0_3 = arith.constant 0 : index
    %c0_4 = arith.constant 0 : index
    %3 = vector.load %arg3[%c0_3, %c0_4] : memref<8x64xf32, #tpu.memory_space<vmem>>, vector<8x64xf32>
    %4 = arith.addf %2, %3 : vector<8x64xf32>
    %cst_5 = arith.constant 0.000000e+00 : f32
    %5 = vector.broadcast %cst_5 : f32 to vector<8x64xf32>
    %6 = arith.maximumf %4, %5 : vector<8x64xf32>
    %c0_6 = arith.constant 0 : index
    %c0_7 = arith.constant 0 : index
    %7 = vector.load %arg4[%c0_6, %c0_7] : memref<8x64xf32, #tpu.memory_space<vmem>>, vector<8x64xf32>
    tpu.vector_store %arg4[%c0_6, %c0_7], %6 {strides = array<i32>} : memref<8x64xf32, #tpu.memory_space<vmem>>, vector<8x64xf32>,
    return
  }
  func.func @transform_0(%arg0: i32) -> (i32, i32) {
    %c0_i32 = arith.constant 0 : i32
    %c0_i32_0 = arith.constant 0 : i32
    return %arg0, %c0_i32 : i32, i32
  }
  func.func @transform_1(%arg0: i32) -> (i32, i32) {
    %c0_i32 = arith.constant 0 : i32
    %c0_i32_0 = arith.constant 0 : i32
    %c0_i32_1 = arith.constant 0 : i32
    return %c0_i32, %c0_i32_0 : i32, i32
  }
  func.func @transform_2(%arg0: i32) -> (i32, i32) {
    %c0_i32 = arith.constant 0 : i32
    %c0_i32_0 = arith.constant 0 : i32
    return %arg0, %c0_i32 : i32, i32
  }
  func.func @transform_3(%arg0: i32) -> (i32, i32) {
    %c0_i32 = arith.constant 0 : i32
    %c0_i32_0 = arith.constant 0 : i32
    return %arg0, %c0_i32 : i32, i32
  }
}

module attributes {stable_mosaic.version = 11 : i64} {
  func.func @_fused_kernel(%arg0: i32, %arg1: memref<8x576xbf16, #tpu.memory_space<vmem>>, %arg2: memref<576x64xbf16, #tpu.memory_space<vmem>>, %arg3: memref<8x64xf32, #tpu.memory_space<vmem>>) attributes {dimension_semantics = [#tpu.dimension_semantics<parallel>], iteration_bounds = array<i64: 1>, scalar_prefetch = 0 : i64, scratch_operands = 0 : i64, tpu.core_type = #tpu.core_type<tc>, window_params = [{transform_indices = @transform_0, window_bounds = array<i64: 8, 576>}, {pipeline_mode = #tpu.pipeline_mode<synchronous>, transform_indices = @transform_1, window_bounds = array<i64: 576, 64>}, {transform_indices = @transform_2, window_bounds = array<i64: 8, 64>}]} {
    %c0 = arith.constant 0 : index
    %c0_0 = arith.constant 0 : index
    %0 = vector.load %arg1[%c0, %c0_0] : memref<8x576xbf16, #tpu.memory_space<vmem>>, vector<8x576xbf16>
    %c0_1 = arith.constant 0 : index
    %c0_2 = arith.constant 0 : index
    %1 = vector.load %arg2[%c0_1, %c0_2] : memref<576x64xbf16, #tpu.memory_space<vmem>>, vector<576x64xbf16>
    %cst = arith.constant dense<0.000000e+00> : vector<8x64xf32>
    %2 = tpu.matmul %0, %1, %cst {dimension_numbers = #tpu.dot_dimension_numbers<[1], [0], [0], [1], [0, 0, 1, 1], [], []>} : vector<8x576xbf16>, vector<576x64xbf16>, vector<8x64xf32> -> vector<8x64xf32>
    %cst_3 = arith.constant 0.000000e+00 : f32
    %3 = vector.broadcast %cst_3 : f32 to vector<8x64xf32>
    %4 = arith.maximumf %2, %3 : vector<8x64xf32>
    %c0_4 = arith.constant 0 : index
    %c0_5 = arith.constant 0 : index
    %5 = vector.load %arg3[%c0_4, %c0_5] : memref<8x64xf32, #tpu.memory_space<vmem>>, vector<8x64xf32>
    tpu.vector_store %arg3[%c0_4, %c0_5], %4 {strides = array<i32>} : memref<8x64xf32, #tpu.memory_space<vmem>>, vector<8x64xf32>,
    return
  }
  func.func @transform_0(%arg0: i32) -> (i32, i32) {
    %c0_i32 = arith.constant 0 : i32
    %c0_i32_0 = arith.constant 0 : i32
    return %arg0, %c0_i32 : i32, i32
  }
  func.func @transform_1(%arg0: i32) -> (i32, i32) {
    %c0_i32 = arith.constant 0 : i32
    %c0_i32_0 = arith.constant 0 : i32
    %c0_i32_1 = arith.constant 0 : i32
    return %c0_i32, %c0_i32_0 : i32, i32
  }
  func.func @transform_2(%arg0: i32) -> (i32, i32) {
    %c0_i32 = arith.constant 0 : i32
    %c0_i32_0 = arith.constant 0 : i32
    return %arg0, %c0_i32 : i32, i32
  }
}

module attributes {stable_mosaic.version = 11 : i64} {
  func.func @_fused_kernel(%arg0: i32, %arg1: memref<8x64xbf16, #tpu.memory_space<vmem>>, %arg2: memref<64x32xbf16, #tpu.memory_space<vmem>>, %arg3: memref<8x32xf32, #tpu.memory_space<vmem>>) attributes {dimension_semantics = [#tpu.dimension_semantics<parallel>], iteration_bounds = array<i64: 1>, scalar_prefetch = 0 : i64, scratch_operands = 0 : i64, tpu.core_type = #tpu.core_type<tc>, window_params = [{transform_indices = @transform_0, window_bounds = array<i64: 8, 64>}, {pipeline_mode = #tpu.pipeline_mode<synchronous>, transform_indices = @transform_1, window_bounds = array<i64: 64, 32>}, {transform_indices = @transform_2, window_bounds = array<i64: 8, 32>}]} {
    %c0 = arith.constant 0 : index
    %c0_0 = arith.constant 0 : index
    %0 = vector.load %arg1[%c0, %c0_0] : memref<8x64xbf16, #tpu.memory_space<vmem>>, vector<8x64xbf16>
    %c0_1 = arith.constant 0 : index
    %c0_2 = arith.constant 0 : index
    %1 = vector.load %arg2[%c0_1, %c0_2] : memref<64x32xbf16, #tpu.memory_space<vmem>>, vector<64x32xbf16>
    %cst = arith.constant dense<0.000000e+00> : vector<8x32xf32>
    %2 = tpu.matmul %0, %1, %cst {dimension_numbers = #tpu.dot_dimension_numbers<[1], [0], [0], [1], [0, 0, 1, 1], [], []>} : vector<8x64xbf16>, vector<64x32xbf16>, vector<8x32xf32> -> vector<8x32xf32>
    %c0_3 = arith.constant 0 : index
    %c0_4 = arith.constant 0 : index
    %3 = vector.load %arg3[%c0_3, %c0_4] : memref<8x32xf32, #tpu.memory_space<vmem>>, vector<8x32xf32>
    tpu.vector_store %arg3[%c0_3, %c0_4], %2 {strides = array<i32>} : memref<8x32xf32, #tpu.memory_space<vmem>>, vector<8x32xf32>,
    return
  }
  func.func @transform_0(%arg0: i32) -> (i32, i32) {
    %c0_i32 = arith.constant 0 : i32
    %c0_i32_0 = arith.constant 0 : i32
    return %arg0, %c0_i32 : i32, i32
  }
  func.func @transform_1(%arg0: i32) -> (i32, i32) {
    %c0_i32 = arith.constant 0 : i32
    %c0_i32_0 = arith.constant 0 : i32
    %c0_i32_1 = arith.constant 0 : i32
    return %c0_i32, %c0_i32_0 : i32, i32
  }
  func.func @transform_2(%arg0: i32) -> (i32, i32) {
    %c0_i32 = arith.constant 0 : i32
    %c0_i32_0 = arith.constant 0 : i32
    return %arg0, %c0_i32 : i32, i32
  }
}

module attributes {stable_mosaic.version = 11 : i64} {
  func.func @_fused_kernel(%arg0: i32, %arg1: memref<8x576xbf16, #tpu.memory_space<vmem>>, %arg2: memref<576x32xbf16, #tpu.memory_space<vmem>>, %arg3: memref<8x32xf32, #tpu.memory_space<vmem>>) attributes {dimension_semantics = [#tpu.dimension_semantics<parallel>], iteration_bounds = array<i64: 1>, scalar_prefetch = 0 : i64, scratch_operands = 0 : i64, tpu.core_type = #tpu.core_type<tc>, window_params = [{transform_indices = @transform_0, window_bounds = array<i64: 8, 576>}, {pipeline_mode = #tpu.pipeline_mode<synchronous>, transform_indices = @transform_1, window_bounds = array<i64: 576, 32>}, {transform_indices = @transform_2, window_bounds = array<i64: 8, 32>}]} {
    %c0 = arith.constant 0 : index
    %c0_0 = arith.constant 0 : index
    %0 = vector.load %arg1[%c0, %c0_0] : memref<8x576xbf16, #tpu.memory_space<vmem>>, vector<8x576xbf16>
    %c0_1 = arith.constant 0 : index
    %c0_2 = arith.constant 0 : index
    %1 = vector.load %arg2[%c0_1, %c0_2] : memref<576x32xbf16, #tpu.memory_space<vmem>>, vector<576x32xbf16>
    %cst = arith.constant dense<0.000000e+00> : vector<8x32xf32>
    %2 = tpu.matmul %0, %1, %cst {dimension_numbers = #tpu.dot_dimension_numbers<[1], [0], [0], [1], [0, 0, 1, 1], [], []>} : vector<8x576xbf16>, vector<576x32xbf16>, vector<8x32xf32> -> vector<8x32xf32>
    %cst_3 = arith.constant 0.000000e+00 : f32
    %3 = vector.broadcast %cst_3 : f32 to vector<8x32xf32>
    %4 = arith.maximumf %2, %3 : vector<8x32xf32>
    %c0_4 = arith.constant 0 : index
    %c0_5 = arith.constant 0 : index
    %5 = vector.load %arg3[%c0_4, %c0_5] : memref<8x32xf32, #tpu.memory_space<vmem>>, vector<8x32xf32>
    tpu.vector_store %arg3[%c0_4, %c0_5], %4 {strides = array<i32>} : memref<8x32xf32, #tpu.memory_space<vmem>>, vector<8x32xf32>,
    return
  }
  func.func @transform_0(%arg0: i32) -> (i32, i32) {
    %c0_i32 = arith.constant 0 : i32
    %c0_i32_0 = arith.constant 0 : i32
    return %arg0, %c0_i32 : i32, i32
  }
  func.func @transform_1(%arg0: i32) -> (i32, i32) {
    %c0_i32 = arith.constant 0 : i32
    %c0_i32_0 = arith.constant 0 : i32
    %c0_i32_1 = arith.constant 0 : i32
    return %c0_i32, %c0_i32_0 : i32, i32
  }
  func.func @transform_2(%arg0: i32) -> (i32, i32) {
    %c0_i32 = arith.constant 0 : i32
    %c0_i32_0 = arith.constant 0 : i32
    return %arg0, %c0_i32 : i32, i32
  }
}

module attributes {stable_mosaic.version = 11 : i64} {
  func.func @_fused_kernel(%arg0: i32, %arg1: memref<16x32xbf16, #tpu.memory_space<vmem>>, %arg2: memref<32x16xbf16, #tpu.memory_space<vmem>>, %arg3: memref<16x16xf32, #tpu.memory_space<vmem>>) attributes {dimension_semantics = [#tpu.dimension_semantics<parallel>], iteration_bounds = array<i64: 2>, scalar_prefetch = 0 : i64, scratch_operands = 0 : i64, tpu.core_type = #tpu.core_type<tc>, window_params = [{transform_indices = @transform_0, window_bounds = array<i64: 16, 32>}, {pipeline_mode = #tpu.pipeline_mode<synchronous>, transform_indices = @transform_1, window_bounds = array<i64: 32, 16>}, {transform_indices = @transform_2, window_bounds = array<i64: 16, 16>}]} {
    %c0 = arith.constant 0 : index
    %c0_0 = arith.constant 0 : index
    %0 = vector.load %arg1[%c0, %c0_0] : memref<16x32xbf16, #tpu.memory_space<vmem>>, vector<16x32xbf16>
    %c0_1 = arith.constant 0 : index
    %c0_2 = arith.constant 0 : index
    %1 = vector.load %arg2[%c0_1, %c0_2] : memref<32x16xbf16, #tpu.memory_space<vmem>>, vector<32x16xbf16>
    %cst = arith.constant dense<0.000000e+00> : vector<16x16xf32>
    %2 = tpu.matmul %0, %1, %cst {dimension_numbers = #tpu.dot_dimension_numbers<[1], [0], [0], [1], [0, 0, 1, 1], [], []>} : vector<16x32xbf16>, vector<32x16xbf16>, vector<16x16xf32> -> vector<16x16xf32>
    %c0_3 = arith.constant 0 : index
    %c0_4 = arith.constant 0 : index
    %3 = vector.load %arg3[%c0_3, %c0_4] : memref<16x16xf32, #tpu.memory_space<vmem>>, vector<16x16xf32>
    tpu.vector_store %arg3[%c0_3, %c0_4], %2 {strides = array<i32>} : memref<16x16xf32, #tpu.memory_space<vmem>>, vector<16x16xf32>,
    return
  }
  func.func @transform_0(%arg0: i32) -> (i32, i32) {
    %c0_i32 = arith.constant 0 : i32
    %c0_i32_0 = arith.constant 0 : i32
    return %arg0, %c0_i32 : i32, i32
  }
  func.func @transform_1(%arg0: i32) -> (i32, i32) {
    %c0_i32 = arith.constant 0 : i32
    %c0_i32_0 = arith.constant 0 : i32
    %c0_i32_1 = arith.constant 0 : i32
    return %c0_i32, %c0_i32_0 : i32, i32
  }
  func.func @transform_2(%arg0: i32) -> (i32, i32) {
    %c0_i32 = arith.constant 0 : i32
    %c0_i32_0 = arith.constant 0 : i32
    return %arg0, %c0_i32 : i32, i32
  }
}

module attributes {stable_mosaic.version = 11 : i64} {
  func.func @_fused_kernel(%arg0: i32, %arg1: memref<16x288xbf16, #tpu.memory_space<vmem>>, %arg2: memref<288x16xbf16, #tpu.memory_space<vmem>>, %arg3: memref<16x16xf32, #tpu.memory_space<vmem>>) attributes {dimension_semantics = [#tpu.dimension_semantics<parallel>], iteration_bounds = array<i64: 2>, scalar_prefetch = 0 : i64, scratch_operands = 0 : i64, tpu.core_type = #tpu.core_type<tc>, window_params = [{transform_indices = @transform_0, window_bounds = array<i64: 16, 288>}, {pipeline_mode = #tpu.pipeline_mode<synchronous>, transform_indices = @transform_1, window_bounds = array<i64: 288, 16>}, {transform_indices = @transform_2, window_bounds = array<i64: 16, 16>}]} {
    %c0 = arith.constant 0 : index
    %c0_0 = arith.constant 0 : index
    %0 = vector.load %arg1[%c0, %c0_0] : memref<16x288xbf16, #tpu.memory_space<vmem>>, vector<16x288xbf16>
    %c0_1 = arith.constant 0 : index
    %c0_2 = arith.constant 0 : index
    %1 = vector.load %arg2[%c0_1, %c0_2] : memref<288x16xbf16, #tpu.memory_space<vmem>>, vector<288x16xbf16>
    %cst = arith.constant dense<0.000000e+00> : vector<16x16xf32>
    %2 = tpu.matmul %0, %1, %cst {dimension_numbers = #tpu.dot_dimension_numbers<[1], [0], [0], [1], [0, 0, 1, 1], [], []>} : vector<16x288xbf16>, vector<288x16xbf16>, vector<16x16xf32> -> vector<16x16xf32>
    %cst_3 = arith.constant 0.000000e+00 : f32
    %3 = vector.broadcast %cst_3 : f32 to vector<16x16xf32>
    %4 = arith.maximumf %2, %3 : vector<16x16xf32>
    %c0_4 = arith.constant 0 : index
    %c0_5 = arith.constant 0 : index
    %5 = vector.load %arg3[%c0_4, %c0_5] : memref<16x16xf32, #tpu.memory_space<vmem>>, vector<16x16xf32>
    tpu.vector_store %arg3[%c0_4, %c0_5], %4 {strides = array<i32>} : memref<16x16xf32, #tpu.memory_space<vmem>>, vector<16x16xf32>,
    return
  }
  func.func @transform_0(%arg0: i32) -> (i32, i32) {
    %c0_i32 = arith.constant 0 : i32
    %c0_i32_0 = arith.constant 0 : i32
    return %arg0, %c0_i32 : i32, i32
  }
  func.func @transform_1(%arg0: i32) -> (i32, i32) {
    %c0_i32 = arith.constant 0 : i32
    %c0_i32_0 = arith.constant 0 : i32
    %c0_i32_1 = arith.constant 0 : i32
    return %c0_i32, %c0_i32_0 : i32, i32
  }
  func.func @transform_2(%arg0: i32) -> (i32, i32) {
    %c0_i32 = arith.constant 0 : i32
    %c0_i32_0 = arith.constant 0 : i32
    return %arg0, %c0_i32 : i32, i32
  }
}

module attributes {stable_mosaic.version = 11 : i64} {
  func.func @_fused_kernel(%arg0: i32, %arg1: memref<64x16xbf16, #tpu.memory_space<vmem>>, %arg2: memref<16x8xbf16, #tpu.memory_space<vmem>>, %arg3: memref<64x8xf32, #tpu.memory_space<vmem>>) attributes {dimension_semantics = [#tpu.dimension_semantics<parallel>], iteration_bounds = array<i64: 2>, scalar_prefetch = 0 : i64, scratch_operands = 0 : i64, tpu.core_type = #tpu.core_type<tc>, window_params = [{transform_indices = @transform_0, window_bounds = array<i64: 64, 16>}, {pipeline_mode = #tpu.pipeline_mode<synchronous>, transform_indices = @transform_1, window_bounds = array<i64: 16, 8>}, {transform_indices = @transform_2, window_bounds = array<i64: 64, 8>}]} {
    %c0 = arith.constant 0 : index
    %c0_0 = arith.constant 0 : index
    %0 = vector.load %arg1[%c0, %c0_0] : memref<64x16xbf16, #tpu.memory_space<vmem>>, vector<64x16xbf16>
    %c0_1 = arith.constant 0 : index
    %c0_2 = arith.constant 0 : index
    %1 = vector.load %arg2[%c0_1, %c0_2] : memref<16x8xbf16, #tpu.memory_space<vmem>>, vector<16x8xbf16>
    %cst = arith.constant dense<0.000000e+00> : vector<64x8xf32>
    %2 = tpu.matmul %0, %1, %cst {dimension_numbers = #tpu.dot_dimension_numbers<[1], [0], [0], [1], [0, 0, 1, 1], [], []>} : vector<64x16xbf16>, vector<16x8xbf16>, vector<64x8xf32> -> vector<64x8xf32>
    %c0_3 = arith.constant 0 : index
    %c0_4 = arith.constant 0 : index
    %3 = vector.load %arg3[%c0_3, %c0_4] : memref<64x8xf32, #tpu.memory_space<vmem>>, vector<64x8xf32>
    tpu.vector_store %arg3[%c0_3, %c0_4], %2 {strides = array<i32>} : memref<64x8xf32, #tpu.memory_space<vmem>>, vector<64x8xf32>,
    return
  }
  func.func @transform_0(%arg0: i32) -> (i32, i32) {
    %c0_i32 = arith.constant 0 : i32
    %c0_i32_0 = arith.constant 0 : i32
    return %arg0, %c0_i32 : i32, i32
  }
  func.func @transform_1(%arg0: i32) -> (i32, i32) {
    %c0_i32 = arith.constant 0 : i32
    %c0_i32_0 = arith.constant 0 : i32
    %c0_i32_1 = arith.constant 0 : i32
    return %c0_i32, %c0_i32_0 : i32, i32
  }
  func.func @transform_2(%arg0: i32) -> (i32, i32) {
    %c0_i32 = arith.constant 0 : i32
    %c0_i32_0 = arith.constant 0 : i32
    return %arg0, %c0_i32 : i32, i32
  }
}

module attributes {stable_mosaic.version = 11 : i64} {
  func.func @_fused_kernel(%arg0: i32, %arg1: memref<64x144xbf16, #tpu.memory_space<vmem>>, %arg2: memref<144x8xbf16, #tpu.memory_space<vmem>>, %arg3: memref<64x8xf32, #tpu.memory_space<vmem>>) attributes {dimension_semantics = [#tpu.dimension_semantics<parallel>], iteration_bounds = array<i64: 2>, scalar_prefetch = 0 : i64, scratch_operands = 0 : i64, tpu.core_type = #tpu.core_type<tc>, window_params = [{transform_indices = @transform_0, window_bounds = array<i64: 64, 144>}, {pipeline_mode = #tpu.pipeline_mode<synchronous>, transform_indices = @transform_1, window_bounds = array<i64: 144, 8>}, {transform_indices = @transform_2, window_bounds = array<i64: 64, 8>}]} {
    %c0 = arith.constant 0 : index
    %c0_0 = arith.constant 0 : index
    %0 = vector.load %arg1[%c0, %c0_0] : memref<64x144xbf16, #tpu.memory_space<vmem>>, vector<64x144xbf16>
    %c0_1 = arith.constant 0 : index
    %c0_2 = arith.constant 0 : index
    %1 = vector.load %arg2[%c0_1, %c0_2] : memref<144x8xbf16, #tpu.memory_space<vmem>>, vector<144x8xbf16>
    %cst = arith.constant dense<0.000000e+00> : vector<64x8xf32>
    %2 = tpu.matmul %0, %1, %cst {dimension_numbers = #tpu.dot_dimension_numbers<[1], [0], [0], [1], [0, 0, 1, 1], [], []>} : vector<64x144xbf16>, vector<144x8xbf16>, vector<64x8xf32> -> vector<64x8xf32>
    %cst_3 = arith.constant 0.000000e+00 : f32
    %3 = vector.broadcast %cst_3 : f32 to vector<64x8xf32>
    %4 = arith.maximumf %2, %3 : vector<64x8xf32>
    %c0_4 = arith.constant 0 : index
    %c0_5 = arith.constant 0 : index
    %5 = vector.load %arg3[%c0_4, %c0_5] : memref<64x8xf32, #tpu.memory_space<vmem>>, vector<64x8xf32>
    tpu.vector_store %arg3[%c0_4, %c0_5], %4 {strides = array<i32>} : memref<64x8xf32, #tpu.memory_space<vmem>>, vector<64x8xf32>,
    return
  }
  func.func @transform_0(%arg0: i32) -> (i32, i32) {
    %c0_i32 = arith.constant 0 : i32
    %c0_i32_0 = arith.constant 0 : i32
    return %arg0, %c0_i32 : i32, i32
  }
  func.func @transform_1(%arg0: i32) -> (i32, i32) {
    %c0_i32 = arith.constant 0 : i32
    %c0_i32_0 = arith.constant 0 : i32
    %c0_i32_1 = arith.constant 0 : i32
    return %c0_i32, %c0_i32_0 : i32, i32
  }
  func.func @transform_2(%arg0: i32) -> (i32, i32) {
    %c0_i32 = arith.constant 0 : i32
    %c0_i32_0 = arith.constant 0 : i32
    return %arg0, %c0_i32 : i32, i32
  }
}

module attributes {stable_mosaic.version = 11 : i64} {
  func.func @_fused_kernel(%arg0: i32, %arg1: memref<128x8xbf16, #tpu.memory_space<vmem>>, %arg2: memref<8x8xbf16, #tpu.memory_space<vmem>>, %arg3: memref<128x8xf32, #tpu.memory_space<vmem>>) attributes {dimension_semantics = [#tpu.dimension_semantics<parallel>], iteration_bounds = array<i64: 4>, scalar_prefetch = 0 : i64, scratch_operands = 0 : i64, tpu.core_type = #tpu.core_type<tc>, window_params = [{transform_indices = @transform_0, window_bounds = array<i64: 128, 8>}, {pipeline_mode = #tpu.pipeline_mode<synchronous>, transform_indices = @transform_1, window_bounds = array<i64: 8, 8>}, {transform_indices = @transform_2, window_bounds = array<i64: 128, 8>}]} {
    %c0 = arith.constant 0 : index
    %c0_0 = arith.constant 0 : index
    %0 = vector.load %arg1[%c0, %c0_0] : memref<128x8xbf16, #tpu.memory_space<vmem>>, vector<128x8xbf16>
    %c0_1 = arith.constant 0 : index
    %c0_2 = arith.constant 0 : index
    %1 = vector.load %arg2[%c0_1, %c0_2] : memref<8x8xbf16, #tpu.memory_space<vmem>>, vector<8x8xbf16>
    %cst = arith.constant dense<0.000000e+00> : vector<128x8xf32>
    %2 = tpu.matmul %0, %1, %cst {dimension_numbers = #tpu.dot_dimension_numbers<[1], [0], [0], [1], [0, 0, 1, 1], [], []>} : vector<128x8xbf16>, vector<8x8xbf16>, vector<128x8xf32> -> vector<128x8xf32>
    %c0_3 = arith.constant 0 : index
    %c0_4 = arith.constant 0 : index
    %3 = vector.load %arg3[%c0_3, %c0_4] : memref<128x8xf32, #tpu.memory_space<vmem>>, vector<128x8xf32>
    tpu.vector_store %arg3[%c0_3, %c0_4], %2 {strides = array<i32>} : memref<128x8xf32, #tpu.memory_space<vmem>>, vector<128x8xf32>,
    return
  }
  func.func @transform_0(%arg0: i32) -> (i32, i32) {
    %c0_i32 = arith.constant 0 : i32
    %c0_i32_0 = arith.constant 0 : i32
    return %arg0, %c0_i32 : i32, i32
  }
  func.func @transform_1(%arg0: i32) -> (i32, i32) {
    %c0_i32 = arith.constant 0 : i32
    %c0_i32_0 = arith.constant 0 : i32
    %c0_i32_1 = arith.constant 0 : i32
    return %c0_i32, %c0_i32_0 : i32, i32
  }
  func.func @transform_2(%arg0: i32) -> (i32, i32) {
    %c0_i32 = arith.constant 0 : i32
    %c0_i32_0 = arith.constant 0 : i32
    return %arg0, %c0_i32 : i32, i32
  }
}

module attributes {stable_mosaic.version = 11 : i64} {
  func.func @_fused_kernel(%arg0: i32, %arg1: memref<128x72xbf16, #tpu.memory_space<vmem>>, %arg2: memref<72x8xbf16, #tpu.memory_space<vmem>>, %arg3: memref<128x8xf32, #tpu.memory_space<vmem>>) attributes {dimension_semantics = [#tpu.dimension_semantics<parallel>], iteration_bounds = array<i64: 4>, scalar_prefetch = 0 : i64, scratch_operands = 0 : i64, tpu.core_type = #tpu.core_type<tc>, window_params = [{transform_indices = @transform_0, window_bounds = array<i64: 128, 72>}, {pipeline_mode = #tpu.pipeline_mode<synchronous>, transform_indices = @transform_1, window_bounds = array<i64: 72, 8>}, {transform_indices = @transform_2, window_bounds = array<i64: 128, 8>}]} {
    %c0 = arith.constant 0 : index
    %c0_0 = arith.constant 0 : index
    %0 = vector.load %arg1[%c0, %c0_0] : memref<128x72xbf16, #tpu.memory_space<vmem>>, vector<128x72xbf16>
    %c0_1 = arith.constant 0 : index
    %c0_2 = arith.constant 0 : index
    %1 = vector.load %arg2[%c0_1, %c0_2] : memref<72x8xbf16, #tpu.memory_space<vmem>>, vector<72x8xbf16>
    %cst = arith.constant dense<0.000000e+00> : vector<128x8xf32>
    %2 = tpu.matmul %0, %1, %cst {dimension_numbers = #tpu.dot_dimension_numbers<[1], [0], [0], [1], [0, 0, 1, 1], [], []>} : vector<128x72xbf16>, vector<72x8xbf16>, vector<128x8xf32> -> vector<128x8xf32>
    %cst_3 = arith.constant 0.000000e+00 : f32
    %3 = vector.broadcast %cst_3 : f32 to vector<128x8xf32>
    %4 = arith.maximumf %2, %3 : vector<128x8xf32>
    %c0_4 = arith.constant 0 : index
    %c0_5 = arith.constant 0 : index
    %5 = vector.load %arg3[%c0_4, %c0_5] : memref<128x8xf32, #tpu.memory_space<vmem>>, vector<128x8xf32>
    tpu.vector_store %arg3[%c0_4, %c0_5], %4 {strides = array<i32>} : memref<128x8xf32, #tpu.memory_space<vmem>>, vector<128x8xf32>,
    return
  }
  func.func @transform_0(%arg0: i32) -> (i32, i32) {
    %c0_i32 = arith.constant 0 : i32
    %c0_i32_0 = arith.constant 0 : i32
    return %arg0, %c0_i32 : i32, i32
  }
  func.func @transform_1(%arg0: i32) -> (i32, i32) {
    %c0_i32 = arith.constant 0 : i32
    %c0_i32_0 = arith.constant 0 : i32
    %c0_i32_1 = arith.constant 0 : i32
    return %c0_i32, %c0_i32_0 : i32, i32
  }
  func.func @transform_2(%arg0: i32) -> (i32, i32) {
    %c0_i32 = arith.constant 0 : i32
    %c0_i32_0 = arith.constant 0 : i32
    return %arg0, %c0_i32 : i32, i32
  }
}

module attributes {stable_mosaic.version = 11 : i64} {
  func.func @_fused_kernel(%arg0: i32, %arg1: memref<128x72xbf16, #tpu.memory_space<vmem>>, %arg2: memref<72x8xbf16, #tpu.memory_space<vmem>>, %arg3: memref<128x8xf32, #tpu.memory_space<vmem>>, %arg4: memref<128x8xf32, #tpu.memory_space<vmem>>) attributes {dimension_semantics = [#tpu.dimension_semantics<parallel>], iteration_bounds = array<i64: 4>, scalar_prefetch = 0 : i64, scratch_operands = 0 : i64, tpu.core_type = #tpu.core_type<tc>, window_params = [{transform_indices = @transform_0, window_bounds = array<i64: 128, 72>}, {pipeline_mode = #tpu.pipeline_mode<synchronous>, transform_indices = @transform_1, window_bounds = array<i64: 72, 8>}, {transform_indices = @transform_2, window_bounds = array<i64: 128, 8>}, {transform_indices = @transform_3, window_bounds = array<i64: 128, 8>}]} {
    %c0 = arith.constant 0 : index
    %c0_0 = arith.constant 0 : index
    %0 = vector.load %arg1[%c0, %c0_0] : memref<128x72xbf16, #tpu.memory_space<vmem>>, vector<128x72xbf16>
    %c0_1 = arith.constant 0 : index
    %c0_2 = arith.constant 0 : index
    %1 = vector.load %arg2[%c0_1, %c0_2] : memref<72x8xbf16, #tpu.memory_space<vmem>>, vector<72x8xbf16>
    %cst = arith.constant dense<0.000000e+00> : vector<128x8xf32>
    %2 = tpu.matmul %0, %1, %cst {dimension_numbers = #tpu.dot_dimension_numbers<[1], [0], [0], [1], [0, 0, 1, 1], [], []>} : vector<128x72xbf16>, vector<72x8xbf16>, vector<128x8xf32> -> vector<128x8xf32>
    %c0_3 = arith.constant 0 : index
    %c0_4 = arith.constant 0 : index
    %3 = vector.load %arg3[%c0_3, %c0_4] : memref<128x8xf32, #tpu.memory_space<vmem>>, vector<128x8xf32>
    %4 = arith.addf %2, %3 : vector<128x8xf32>
    %cst_5 = arith.constant 0.000000e+00 : f32
    %5 = vector.broadcast %cst_5 : f32 to vector<128x8xf32>
    %6 = arith.maximumf %4, %5 : vector<128x8xf32>
    %c0_6 = arith.constant 0 : index
    %c0_7 = arith.constant 0 : index
    %7 = vector.load %arg4[%c0_6, %c0_7] : memref<128x8xf32, #tpu.memory_space<vmem>>, vector<128x8xf32>
    tpu.vector_store %arg4[%c0_6, %c0_7], %6 {strides = array<i32>} : memref<128x8xf32, #tpu.memory_space<vmem>>, vector<128x8xf32>,
    return
  }
  func.func @transform_0(%arg0: i32) -> (i32, i32) {
    %c0_i32 = arith.constant 0 : i32
    %c0_i32_0 = arith.constant 0 : i32
    return %arg0, %c0_i32 : i32, i32
  }
  func.func @transform_1(%arg0: i32) -> (i32, i32) {
    %c0_i32 = arith.constant 0 : i32
    %c0_i32_0 = arith.constant 0 : i32
    %c0_i32_1 = arith.constant 0 : i32
    return %c0_i32, %c0_i32_0 : i32, i32
  }
  func.func @transform_2(%arg0: i32) -> (i32, i32) {
    %c0_i32 = arith.constant 0 : i32
    %c0_i32_0 = arith.constant 0 : i32
    return %arg0, %c0_i32 : i32, i32
  }
  func.func @transform_3(%arg0: i32) -> (i32, i32) {
    %c0_i32 = arith.constant 0 : i32
    %c0_i32_0 = arith.constant 0 : i32
    return %arg0, %c0_i32 : i32, i32
  }
}

module attributes {stable_mosaic.version = 11 : i64} {
  func.func @_fused_kernel(%arg0: i32, %arg1: memref<128x72xbf16, #tpu.memory_space<vmem>>, %arg2: memref<72x4xbf16, #tpu.memory_space<vmem>>, %arg3: memref<128x4xf32, #tpu.memory_space<vmem>>) attributes {dimension_semantics = [#tpu.dimension_semantics<parallel>], iteration_bounds = array<i64: 4>, scalar_prefetch = 0 : i64, scratch_operands = 0 : i64, tpu.core_type = #tpu.core_type<tc>, window_params = [{transform_indices = @transform_0, window_bounds = array<i64: 128, 72>}, {pipeline_mode = #tpu.pipeline_mode<synchronous>, transform_indices = @transform_1, window_bounds = array<i64: 72, 4>}, {transform_indices = @transform_2, window_bounds = array<i64: 128, 4>}]} {
    %c0 = arith.constant 0 : index
    %c0_0 = arith.constant 0 : index
    %0 = vector.load %arg1[%c0, %c0_0] : memref<128x72xbf16, #tpu.memory_space<vmem>>, vector<128x72xbf16>
    %c0_1 = arith.constant 0 : index
    %c0_2 = arith.constant 0 : index
    %1 = vector.load %arg2[%c0_1, %c0_2] : memref<72x4xbf16, #tpu.memory_space<vmem>>, vector<72x4xbf16>
    %cst = arith.constant dense<0.000000e+00> : vector<128x4xf32>
    %2 = tpu.matmul %0, %1, %cst {dimension_numbers = #tpu.dot_dimension_numbers<[1], [0], [0], [1], [0, 0, 1, 1], [], []>} : vector<128x72xbf16>, vector<72x4xbf16>, vector<128x4xf32> -> vector<128x4xf32>
    %cst_3 = arith.constant 0.000000e+00 : f32
    %3 = vector.broadcast %cst_3 : f32 to vector<128x4xf32>
    %4 = arith.subf %3, %2 : vector<128x4xf32>
    %5 = math.exp %4 : vector<128x4xf32>
    %cst_4 = arith.constant 1.000000e+00 : f32
    %6 = vector.broadcast %cst_4 : f32 to vector<128x4xf32>
    %7 = arith.addf %6, %5 : vector<128x4xf32>
    %8 = tpu.reciprocal %7 {approx = true} : vector<128x4xf32> -> vector<128x4xf32>
    %cst_5 = arith.constant 1.000000e+00 : f32
    %9 = vector.broadcast %cst_5 : f32 to vector<128x4xf32>
    %10 = arith.minimumf %8, %9 : vector<128x4xf32>
    %c0_6 = arith.constant 0 : index
    %c0_7 = arith.constant 0 : index
    %11 = vector.load %arg3[%c0_6, %c0_7] : memref<128x4xf32, #tpu.memory_space<vmem>>, vector<128x4xf32>
    tpu.vector_store %arg3[%c0_6, %c0_7], %10 {strides = array<i32>} : memref<128x4xf32, #tpu.memory_space<vmem>>, vector<128x4xf32>,
    return
  }
  func.func @transform_0(%arg0: i32) -> (i32, i32) {
    %c0_i32 = arith.constant 0 : i32
    %c0_i32_0 = arith.constant 0 : i32
    return %arg0, %c0_i32 : i32, i32
  }
  func.func @transform_1(%arg0: i32) -> (i32, i32) {
    %c0_i32 = arith.constant 0 : i32
    %c0_i32_0 = arith.constant 0 : i32
    %c0_i32_1 = arith.constant 0 : i32
    return %c0_i32, %c0_i32_0 : i32, i32
  }
  func.func @transform_2(%arg0: i32) -> (i32, i32) {
    %c0_i32 = arith.constant 0 : i32
    %c0_i32_0 = arith.constant 0 : i32
    return %arg0, %c0_i32 : i32, i32
  }
}

</mosaic_0001>

<llo_original>
// kernel: _lambda_.41
$region0: #{_lambda_.41}
  #allocation0 [shape = 'u32[]', space=smem, size = 0x4, offset = 0x4, fixed_abs, tag = 'smem constant byte address 0x4 - core index']
  #allocation1 [shape = 'u32[144,128]{1,0:T(1,128)}', space=vmem, size = 0x12000, scoped, tag = 'internal scratch']
  %s0 = inlined_call_operand.vmem [shape: bf16[128,36], index: 0, kind: input, shape index: {}]
  %s1 = inlined_call_operand.vmem [shape: bf16[36,8], index: 1, kind: input, shape index: {}]
  %s2 = inlined_call_operand.vmem [shape: f32[128,8], index: 2, kind: output, shape index: {}]
  %s3 = sld [smem:[#allocation0]]
  $region41: #{_lambda_.41} parent=0
    _
  %s5 = ssub.s32 1, %s3
  %s6 = scalar_select 0, %s5, %s3
  loop: start=0, step=1, limit=4
  $region2: #{_lambda_.41} parent=0 // loop_pre_header
    _
  $region3: #{_lambda_.41} parent=0 // loop_header
    %s8 = sphi 0, %s12
    %p9 = scmp.ge.s32.totalorder %s8, 4
    %s18 = sphi 0, %s20
    %s21 = sphi 0, %s18
    %s22 = sphi 0, %s21
    %s38 = sphi 0, %s22
    %s42 = sphi 0, %s42
    %s44 = sphi 0, %s42
    %s45 = sphi 0, %s44
    %s59 = sphi 0, %s45
    %s65 = sphi 0, %s67
    %s68 = sphi 0, %s65
    %s69 = sphi 0, %s68
    %s85 = sphi 0, %s69
  $region4: #{_lambda_.41} parent=0 // loop_header_branch
    %11 = sbr.rel (%p9) target = $region8
  $region5: #{_lambda_.41} parent=0 // loop_body
    %s13 = ssub.s32 %s8, 1
    %s14 = ssub.s32 %s8, 2
    %s15 = sadd.s32 %s8, 1
    %s16 = ssub.s32 %s8, %s15
    %p17 = scmp.eq.s32.totalorder %s16, 0
    %s19 = sadd.s32 %s18, 1
    %s20 = scalar_select %p17, %s18, %s19
    %p23 = pneg %p17
    %p24 = scmp.eq.s32.totalorder %s8, 1
    %p25 = por %p23, %p24
    %p26 = scmp.ne.s32.totalorder %s18, %s21
    %p27 = scmp.eq.s32.totalorder %s8, 0
    %p28 = por %p26, %p27
    %p29 = scmp.ne.s32.totalorder %s18, %s21
    %p30 = scmp.eq.s32.totalorder %s13, 1
    %p31 = por %p29, %p30
    %p32 = scmp.ne.s32.totalorder %s21, %s22
    %p33 = scmp.eq.s32.totalorder %s13, 0
    %p34 = por %p32, %p33
    %p35 = scmp.ne.s32.totalorder %s21, %s22
    %p36 = scmp.eq.s32.totalorder %s14, 1
    %p37 = por %p35, %p36
    %p39 = scmp.ne.s32.totalorder %s22, %s38
    %p40 = scmp.eq.s32.totalorder %s14, 0
    %p41 = por %p39, %p40
    %s43 = sadd.s32 %s42, 1
    %p46 = scmp.eq.s32.totalorder %s8, 1
    %p47 = scmp.ne.s32.totalorder %s42, %s44
    %p48 = scmp.eq.s32.totalorder %s8, 0
    %p49 = por %p47, %p48
    %p50 = scmp.ne.s32.totalorder %s42, %s44
    %p51 = scmp.eq.s32.totalorder %s13, 1
    %p52 = por %p50, %p51
    %p53 = scmp.ne.s32.totalorder %s44, %s45
    %p54 = scmp.eq.s32.totalorder %s13, 0
    %p55 = por %p53, %p54
    %p56 = scmp.ne.s32.totalorder %s44, %s45
    %p57 = scmp.eq.s32.totalorder %s14, 1
    %p58 = por %p56, %p57
    %p60 = scmp.ne.s32.totalorder %s45, %s59
    %p61 = scmp.eq.s32.totalorder %s14, 0
    %p62 = por %p60, %p61
    %s63 = ssub.s32 %s8, %s15
    %p64 = scmp.eq.s32.totalorder %s63, 0
    %s66 = sadd.s32 %s65, 1
    %s67 = scalar_select %p64, %s65, %s66
    %p70 = pneg %p64
    %p71 = scmp.eq.s32.totalorder %s8, 1
    %p72 = por %p70, %p71
    %p73 = scmp.ne.s32.totalorder %s65, %s68
    %p74 = scmp.eq.s32.totalorder %s8, 0
    %p75 = por %p73, %p74
    %p76 = scmp.ne.s32.totalorder %s65, %s68
    %p77 = scmp.eq.s32.totalorder %s13, 1
    %p78 = por %p76, %p77
    %p79 = scmp.ne.s32.totalorder %s68, %s69
    %p80 = scmp.eq.s32.totalorder %s13, 0
    %p81 = por %p79, %p80
    %p82 = scmp.ne.s32.totalorder %s68, %s69
    %p83 = scmp.eq.s32.totalorder %s14, 1
    %p84 = por %p82, %p83
    %p86 = scmp.ne.s32.totalorder %s69, %s85
    %p87 = scmp.eq.s32.totalorder %s14, 0
    %p88 = por %p86, %p87
    %p89 = scmp.le.s32.totalorder 1, %s8
    %p90 = scmp.lt.s32.totalorder %s8, 3
    %p91 = pnand %p89, %p90
    %p92 = pneg %p91
    // Predicated region
    $region9: #{_lambda_.41} parent=5 // pred_check
      _
    $region10: #{_lambda_.41} parent=5 // pred_check_branch
      %94 = sbr.rel (%p91) target = $region12
    $region11: #{_lambda_.41} parent=5 // pred_region
      %s95 = ssub.s32 %s8, 1
      // Predicated region
      $region13: #{_lambda_.41} parent=11 // pred_check
        %p96 = pneg %p55
      $region14: #{_lambda_.41} parent=11 // pred_check_branch
        %98 = sbr.rel (%p96) target = $region16
      $region15: #{_lambda_.41} parent=11 // pred_region
        _
      $region16: #{_lambda_.41} parent=11 // pred_fallthru
        _
    $region12: #{_lambda_.41} parent=5 // pred_fallthru
      _
    %p99 = scmp.lt.s32.totalorder %s8, 2
    // Predicated region
    $region17: #{_lambda_.41} parent=5 // pred_check
      %p100 = pneg %p99
    $region18: #{_lambda_.41} parent=5 // pred_check_branch
      %102 = sbr.rel (%p100) target = $region20
    $region19: #{_lambda_.41} parent=5 // pred_region
      // Predicated region
      $region21: #{_lambda_.41} parent=19 // pred_check
        %p103 = pneg %p28
      $region22: #{_lambda_.41} parent=19 // pred_check_branch
        %105 = sbr.rel (%p103) target = $region24
      $region23: #{_lambda_.41} parent=19 // pred_region
        %s106 = smul.u32 8, %s8
        %p107 = scmp.lt.s32.totalorder %s106, 15
        %s108 = scalar_select %p107, %s106, 15
        %s109 = smul.addr %s108, 4
        %s110 = scalar_lea.vmem %s0, %s109
        %s111 = smul.u32 8, %s8
      $region24: #{_lambda_.41} parent=19 // pred_fallthru
        _
    $region20: #{_lambda_.41} parent=5 // pred_fallthru
      _
    %p112 = scmp.le.s32.totalorder 1, %s8
    %p113 = scmp.lt.s32.totalorder %s8, 3
    %p114 = pnand %p112, %p113
    %p115 = pneg %p114
    // Predicated region
    $region25: #{_lambda_.41} parent=5 // pred_check
      _
    $region26: #{_lambda_.41} parent=5 // pred_check_branch
      %117 = sbr.rel (%p114) target = $region28
    $region27: #{_lambda_.41} parent=5 // pred_region
      %s118 = ssub.s32 %s8, 1
      %s119 = smul.u32 8, %s13
      %p120 = scmp.lt.s32.totalorder %s119, 15
      %s121 = scalar_select %p120, %s119, 15
      %s122 = smul.addr %s121, 4
      %s123 = scalar_lea.vmem %s0, %s122
      %p124 = pneg %p34
      %p125 = pneg %p31
      %p126 = pneg %p55
      %p127 = pneg %p52
      %p128 = pneg %p81
      %p129 = pneg %p78
      %s130 = smul.u32 8, %s13
      %p131 = scmp.lt.s32.totalorder %s130, 15
      %s132 = scalar_select %p131, %s130, 15
      %s133 = smul.addr %s132, 8
      %s134 = scalar_lea.vmem %s2, %s133
      %s135 = smul.u32 8, %s13
      %p136 = scmp.lt.s32.totalorder %s135, 15
      %s137 = scalar_select %p136, %s135, 15
      %s138 = smul.addr %s137, 4
      %s139 = scalar_lea.vmem %s0, %s138
      %s140 = smul.u32 8, %s13
      %s141 = smul.u32 8, %s13
      %p142 = scmp.lt.s32.totalorder %s141, 15
      %s143 = scalar_select %p142, %s141, 15
      %s144 = smul.addr %s143, 8
      %s145 = scalar_lea.vmem %s2, %s144
      %s146 = smul.u32 8, %s13
      %v148 = vld [vmem:[%s139] sm:$0xf]
      %v149 = vld [vmem:[%s139 + $0x4] sm:$0xf]
      %v150 = vld [vmem:[%s139 + $0x8] sm:$0xf]
      %v151 = vld [vmem:[%s139 + $0xc] sm:$0xf]
      %v152 = vld [vmem:[%s139 + $0x10] sm:$0xf]
      %v153 = vld [vmem:[%s139 + $0x14] sm:$0xf]
      %v154 = vld [vmem:[%s139 + $0x18] sm:$0xf]
      %v155 = vld [vmem:[%s139 + $0x1c] sm:$0xf]
      %v156 = vld [vmem:[%s1] sm:$0xf]
      %v157 = vld [vmem:[%s1 + $0x4] sm:$0xf]
      %v158 = vld [vmem:[%s1 + $0x8] sm:$0xf]
      %v159 = vld [vmem:[%s1 + $0xc] sm:$0xf]
      %v160 = vld [vmem:[%s1 + $0x10] sm:$0x3]
      %v169 = vunpack.c.l.b16 %v148
      %v170 = vunpack.c.l.b16 %v149
      %v171 = vunpack.c.l.b16 %v150
      %v172 = vunpack.c.l.b16 %v151
      %v173 = vunpack.c.l.b16 %v152
      %v174 = vunpack.c.l.b16 %v153
      %v175 = vunpack.c.l.b16 %v154
      %v176 = vunpack.c.l.b16 %v155
      %v177 = vpack.c.b16 %v170, %v169
      %v178 = vpack.c.b16 %v172, %v171
      %v179 = vpack.c.b16 %v174, %v173
      %v180 = vpack.c.b16 %v176, %v175
      %v186 = vunpack.c.l.b16 %v156
      %v187 = vunpack.c.l.b16 %v157
      %v188 = vunpack.c.l.b16 %v158
      %v189 = vunpack.c.l.b16 %v159
      %v190 = vunpack.c.l.b16 %v160
      %v191 = vpack.c.b16 %v187, %v186
      %v192 = vpack.c.b16 %v189, %v188
      %v193 = vpack.c.b16 %v190, %v190
      %vm196 = vcmask 293888
      %v198 = vsel %vm196, %v177, 0
      %v201 = vsel %vm196, %v178, 0
      %v204 = vsel %vm196, %v179, 0
      %v207 = vsel %vm196, %v180, 0
      %vm209 = vcmask 1041408
      %v211 = vsel %vm209, %v193, 0
      %213 = vmatprep.subr.bf16.mxu0 0
      %214 = vmatpush1.bf16.msra.mxu0 %v191
      %215 = vmatprep.subr.bf16.mxu0 0
      %216 = vmatpush1.bf16.msra.mxu0 %v192
      %217 = vmatprep.subr.bf16.mxu0 0
      %218 = vmatpush1.bf16.msra.mxu0 %v211
      %219 = vmatprep.subr.bf16.mxu0 0
      %220 = vmatpush1.bf16.msra.mxu0 0
      %221 = vmatprep.subr.bf16.mxu0 0
      %222 = vmatpush1.bf16.msra.mxu0 0
      %223 = vmatprep.subr.bf16.mxu0 0
      %224 = vmatpush1.bf16.msra.mxu0 0
      %225 = vmatprep.subr.bf16.mxu0 0
      %226 = vmatpush1.bf16.msra.mxu0 0
      %227 = vmatprep.subr.bf16.mxu0 0
      %228 = vmatpush1.bf16.msra.mxu0 0
      %229 = vmatprep.subr.bf16.mxu0 0
      %230 = vmatpush1.bf16.msra.mxu0 0
      %231 = vmatprep.subr.bf16.mxu0 0
      %232 = vmatpush1.bf16.msra.mxu0 0
      %233 = vmatprep.subr.bf16.mxu0 0
      %234 = vmatpush1.bf16.msra.mxu0 0
      %235 = vmatprep.subr.bf16.mxu0 0
      %236 = vmatpush1.bf16.msra.mxu0 0
      %237 = vmatprep.subr.bf16.mxu0 0
      %238 = vmatpush1.bf16.msra.mxu0 0
      %239 = vmatprep.subr.bf16.mxu0 0
      %240 = vmatpush1.bf16.msra.mxu0 0
      %241 = vmatprep.subr.bf16.mxu0 0
      %242 = vmatpush1.bf16.msra.mxu0 0
      %243 = vmatprep.subr.bf16.mxu0 0
      %244 = vmatpush1.bf16.msra.mxu0 0
      %245 = vmatprep.mubr.bf16.mxu0 0
      %246 = vmatmul.mubr.bf16.gmra.mrb[0].mxu0 %v198
      %v247 = vpop.f32.mrb[0].mxu0
      %v248 = vadd.f32 0.0, %v247
      %v249 = vpop.f32.mrb[0].mxu0
      %v250 = vpop.f32.mrb[0].mxu0
      %v251 = vadd.f32 0.0, %v250
      %v252 = vpop.f32.mrb[0].mxu0
      %253 = vmatprep.mubr.bf16.mxu0 0
      %254 = vmatmul.mubr.bf16.gmra.mrb[0].mxu0 %v201
      %v255 = vpop.f32.mrb[0].mxu0
      %v256 = vadd.f32 0.0, %v255
      %v257 = vpop.f32.mrb[0].mxu0
      %v258 = vpop.f32.mrb[0].mxu0
      %v259 = vadd.f32 0.0, %v258
      %v260 = vpop.f32.mrb[0].mxu0
      %261 = vmatprep.mubr.bf16.mxu0 0
      %262 = vmatmul.mubr.bf16.gmra.mrb[0].mxu0 %v204
      %v263 = vpop.f32.mrb[0].mxu0
      %v264 = vadd.f32 0.0, %v263
      %v265 = vpop.f32.mrb[0].mxu0
      %v266 = vpop.f32.mrb[0].mxu0
      %v267 = vadd.f32 0.0, %v266
      %v268 = vpop.f32.mrb[0].mxu0
      %269 = vmatprep.mubr.bf16.mxu0 0
      %270 = vmatmul.mubr.bf16.gmra.mrb[0].mxu0 %v207
      %v271 = vpop.f32.mrb[0].mxu0
      %v272 = vadd.f32 0.0, %v271
      %v273 = vpop.f32.mrb[0].mxu0
      %v274 = vpop.f32.mrb[0].mxu0
      %v275 = vadd.f32 0.0, %v274
      %v276 = vpop.f32.mrb[0].mxu0
      %277 = vdwg.mxu0
      %v278 = vmax.f32 %v248, 0.0
      %v279 = vmax.f32 %v251, 0.0
      %v280 = vmax.f32 %v256, 0.0
      %v281 = vmax.f32 %v259, 0.0
      %v282 = vmax.f32 %v264, 0.0
      %v283 = vmax.f32 %v267, 0.0
      %v284 = vmax.f32 %v272, 0.0
      %v285 = vmax.f32 %v275, 0.0
      %vm286 = vcmask 64512
      %287 = vst.msk [vmem:[%s145] sm:$0xff] %vm286, %v278
      %288 = vst.msk [vmem:[%s145 + $0x8] sm:$0xff] %vm286, %v279
      %289 = vst.msk [vmem:[%s145 + $0x10] sm:$0xff] %vm286, %v280
      %290 = vst.msk [vmem:[%s145 + $0x18] sm:$0xff] %vm286, %v281
      %291 = vst.msk [vmem:[%s145 + $0x20] sm:$0xff] %vm286, %v282
      %292 = vst.msk [vmem:[%s145 + $0x28] sm:$0xff] %vm286, %v283
      %293 = vst.msk [vmem:[%s145 + $0x30] sm:$0xff] %vm286, %v284
      %294 = vst.msk [vmem:[%s145 + $0x38] sm:$0xff] %vm286, %v285
      %s295 = smul.u32 8, %s13
      %p296 = scmp.lt.s32.totalorder %s295, 15
      %s297 = scalar_select %p296, %s295, 15
      %s298 = smul.addr %s297, 8
      %s299 = scalar_lea.vmem %s2, %s298
      // Predicated region
      $region29: #{_lambda_.41} parent=27 // pred_check
        %p300 = pneg %p78
      $region30: #{_lambda_.41} parent=27 // pred_check_branch
        %302 = sbr.rel (%p300) target = $region32
      $region31: #{_lambda_.41} parent=27 // pred_region
        %s303 = smul.u32 8, %s13
      $region32: #{_lambda_.41} parent=27 // pred_fallthru
        _
    $region28: #{_lambda_.41} parent=5 // pred_fallthru
      _
    %p304 = scmp.le.s32.totalorder 2, %s8
    // Predicated region
    $region33: #{_lambda_.41} parent=5 // pred_check
      %p305 = pneg %p304
    $region34: #{_lambda_.41} parent=5 // pred_check_branch
      %307 = sbr.rel (%p305) target = $region36
    $region35: #{_lambda_.41} parent=5 // pred_region
      %s308 = ssub.s32 %s8, 2
      // Predicated region
      $region37: #{_lambda_.41} parent=35 // pred_check
        %p309 = pneg %p84
      $region38: #{_lambda_.41} parent=35 // pred_check_branch
        %311 = sbr.rel (%p309) target = $region40
      $region39: #{_lambda_.41} parent=35 // pred_region
        %s312 = smul.u32 8, %s14
        %p313 = scmp.lt.s32.totalorder %s312, 15
        %s314 = scalar_select %p313, %s312, 15
        %s315 = smul.addr %s314, 8
        %s316 = scalar_lea.vmem %s2, %s315
      $region40: #{_lambda_.41} parent=35 // pred_fallthru
        _
    $region36: #{_lambda_.41} parent=5 // pred_fallthru
      _
  $region6: #{_lambda_.41} parent=0 // loop_footer
    %s12 = sadd.s32 1, %s8
  $region7: #{_lambda_.41} parent=0 // loop_footer_branch
    %7 = sbr.rel target = $region3
  $region8: #{_lambda_.41} parent=0 // loop_exit
    _

// kernel: _lambda_.42
$region0: #{_lambda_.42}
  #allocation0 [shape = 'u32[]', space=smem, size = 0x4, offset = 0x4, fixed_abs, tag = 'smem constant byte address 0x4 - core index']
  #allocation1 [shape = 'u32[144,128]{1,0:T(1,128)}', space=vmem, size = 0x12000, scoped, tag = 'internal scratch']
  %s0 = inlined_call_operand.vmem [shape: bf16[128,72], index: 0, kind: input, shape index: {}]
  %s1 = inlined_call_operand.vmem [shape: bf16[72,8], index: 1, kind: input, shape index: {}]
  %s2 = inlined_call_operand.vmem [shape: f32[128,8], index: 2, kind: output, shape index: {}]
  %s3 = sld [smem:[#allocation0]]
  $region41: #{_lambda_.42} parent=0
    _
  %s5 = ssub.s32 1, %s3
  %s6 = scalar_select 0, %s5, %s3
  loop: start=0, step=1, limit=4
  $region2: #{_lambda_.42} parent=0 // loop_pre_header
    _
  $region3: #{_lambda_.42} parent=0 // loop_header
    %s8 = sphi 0, %s12
    %p9 = scmp.ge.s32.totalorder %s8, 4
    %s18 = sphi 0, %s20
    %s21 = sphi 0, %s18
    %s22 = sphi 0, %s21
    %s38 = sphi 0, %s22
    %s42 = sphi 0, %s42
    %s44 = sphi 0, %s42
    %s45 = sphi 0, %s44
    %s59 = sphi 0, %s45
    %s65 = sphi 0, %s67
    %s68 = sphi 0, %s65
    %s69 = sphi 0, %s68
    %s85 = sphi 0, %s69
  $region4: #{_lambda_.42} parent=0 // loop_header_branch
    %11 = sbr.rel (%p9) target = $region8
  $region5: #{_lambda_.42} parent=0 // loop_body
    %s13 = ssub.s32 %s8, 1
    %s14 = ssub.s32 %s8, 2
    %s15 = sadd.s32 %s8, 1
    %s16 = ssub.s32 %s8, %s15
    %p17 = scmp.eq.s32.totalorder %s16, 0
    %s19 = sadd.s32 %s18, 1
    %s20 = scalar_select %p17, %s18, %s19
    %p23 = pneg %p17
    %p24 = scmp.eq.s32.totalorder %s8, 1
    %p25 = por %p23, %p24
    %p26 = scmp.ne.s32.totalorder %s18, %s21
    %p27 = scmp.eq.s32.totalorder %s8, 0
    %p28 = por %p26, %p27
    %p29 = scmp.ne.s32.totalorder %s18, %s21
    %p30 = scmp.eq.s32.totalorder %s13, 1
    %p31 = por %p29, %p30
    %p32 = scmp.ne.s32.totalorder %s21, %s22
    %p33 = scmp.eq.s32.totalorder %s13, 0
    %p34 = por %p32, %p33
    %p35 = scmp.ne.s32.totalorder %s21, %s22
    %p36 = scmp.eq.s32.totalorder %s14, 1
    %p37 = por %p35, %p36
    %p39 = scmp.ne.s32.totalorder %s22, %s38
    %p40 = scmp.eq.s32.totalorder %s14, 0
    %p41 = por %p39, %p40
    %s43 = sadd.s32 %s42, 1
    %p46 = scmp.eq.s32.totalorder %s8, 1
    %p47 = scmp.ne.s32.totalorder %s42, %s44
    %p48 = scmp.eq.s32.totalorder %s8, 0
    %p49 = por %p47, %p48
    %p50 = scmp.ne.s32.totalorder %s42, %s44
    %p51 = scmp.eq.s32.totalorder %s13, 1
    %p52 = por %p50, %p51
    %p53 = scmp.ne.s32.totalorder %s44, %s45
    %p54 = scmp.eq.s32.totalorder %s13, 0
    %p55 = por %p53, %p54
    %p56 = scmp.ne.s32.totalorder %s44, %s45
    %p57 = scmp.eq.s32.totalorder %s14, 1
    %p58 = por %p56, %p57
    %p60 = scmp.ne.s32.totalorder %s45, %s59
    %p61 = scmp.eq.s32.totalorder %s14, 0
    %p62 = por %p60, %p61
    %s63 = ssub.s32 %s8, %s15
    %p64 = scmp.eq.s32.totalorder %s63, 0
    %s66 = sadd.s32 %s65, 1
    %s67 = scalar_select %p64, %s65, %s66
    %p70 = pneg %p64
    %p71 = scmp.eq.s32.totalorder %s8, 1
    %p72 = por %p70, %p71
    %p73 = scmp.ne.s32.totalorder %s65, %s68
    %p74 = scmp.eq.s32.totalorder %s8, 0
    %p75 = por %p73, %p74
    %p76 = scmp.ne.s32.totalorder %s65, %s68
    %p77 = scmp.eq.s32.totalorder %s13, 1
    %p78 = por %p76, %p77
    %p79 = scmp.ne.s32.totalorder %s68, %s69
    %p80 = scmp.eq.s32.totalorder %s13, 0
    %p81 = por %p79, %p80
    %p82 = scmp.ne.s32.totalorder %s68, %s69
    %p83 = scmp.eq.s32.totalorder %s14, 1
    %p84 = por %p82, %p83
    %p86 = scmp.ne.s32.totalorder %s69, %s85
    %p87 = scmp.eq.s32.totalorder %s14, 0
    %p88 = por %p86, %p87
    %p89 = scmp.le.s32.totalorder 1, %s8
    %p90 = scmp.lt.s32.totalorder %s8, 3
    %p91 = pnand %p89, %p90
    %p92 = pneg %p91
    // Predicated region
    $region9: #{_lambda_.42} parent=5 // pred_check
      _
    $region10: #{_lambda_.42} parent=5 // pred_check_branch
      %94 = sbr.rel (%p91) target = $region12
    $region11: #{_lambda_.42} parent=5 // pred_region
      %s95 = ssub.s32 %s8, 1
      // Predicated region
      $region13: #{_lambda_.42} parent=11 // pred_check
        %p96 = pneg %p55
      $region14: #{_lambda_.42} parent=11 // pred_check_branch
        %98 = sbr.rel (%p96) target = $region16
      $region15: #{_lambda_.42} parent=11 // pred_region
        _
      $region16: #{_lambda_.42} parent=11 // pred_fallthru
        _
    $region12: #{_lambda_.42} parent=5 // pred_fallthru
      _
    %p99 = scmp.lt.s32.totalorder %s8, 2
    // Predicated region
    $region17: #{_lambda_.42} parent=5 // pred_check
      %p100 = pneg %p99
    $region18: #{_lambda_.42} parent=5 // pred_check_branch
      %102 = sbr.rel (%p100) target = $region20
    $region19: #{_lambda_.42} parent=5 // pred_region
      // Predicated region
      $region21: #{_lambda_.42} parent=19 // pred_check
        %p103 = pneg %p28
      $region22: #{_lambda_.42} parent=19 // pred_check_branch
        %105 = sbr.rel (%p103) target = $region24
      $region23: #{_lambda_.42} parent=19 // pred_region
        %s106 = smul.u32 8, %s8
        %p107 = scmp.lt.s32.totalorder %s106, 15
        %s108 = scalar_select %p107, %s106, 15
        %s109 = smul.addr %s108, 4
        %s110 = scalar_lea.vmem %s0, %s109
        %s111 = smul.u32 8, %s8
      $region24: #{_lambda_.42} parent=19 // pred_fallthru
        _
    $region20: #{_lambda_.42} parent=5 // pred_fallthru
      _
    %p112 = scmp.le.s32.totalorder 1, %s8
    %p113 = scmp.lt.s32.totalorder %s8, 3
    %p114 = pnand %p112, %p113
    %p115 = pneg %p114
    // Predicated region
    $region25: #{_lambda_.42} parent=5 // pred_check
      _
    $region26: #{_lambda_.42} parent=5 // pred_check_branch
      %117 = sbr.rel (%p114) target = $region28
    $region27: #{_lambda_.42} parent=5 // pred_region
      %s118 = ssub.s32 %s8, 1
      %s119 = smul.u32 8, %s13
      %p120 = scmp.lt.s32.totalorder %s119, 15
      %s121 = scalar_select %p120, %s119, 15
      %s122 = smul.addr %s121, 4
      %s123 = scalar_lea.vmem %s0, %s122
      %p124 = pneg %p34
      %p125 = pneg %p31
      %p126 = pneg %p55
      %p127 = pneg %p52
      %p128 = pneg %p81
      %p129 = pneg %p78
      %s130 = smul.u32 8, %s13
      %p131 = scmp.lt.s32.totalorder %s130, 15
      %s132 = scalar_select %p131, %s130, 15
      %s133 = smul.addr %s132, 8
      %s134 = scalar_lea.vmem %s2, %s133
      %s135 = smul.u32 8, %s13
      %p136 = scmp.lt.s32.totalorder %s135, 15
      %s137 = scalar_select %p136, %s135, 15
      %s138 = smul.addr %s137, 4
      %s139 = scalar_lea.vmem %s0, %s138
      %s140 = smul.u32 8, %s13
      %s141 = smul.u32 8, %s13
      %p142 = scmp.lt.s32.totalorder %s141, 15
      %s143 = scalar_select %p142, %s141, 15
      %s144 = smul.addr %s143, 8
      %s145 = scalar_lea.vmem %s2, %s144
      %s146 = smul.u32 8, %s13
      %v148 = vld [vmem:[%s139] sm:$0xf]
      %v149 = vld [vmem:[%s139 + $0x4] sm:$0xf]
      %v150 = vld [vmem:[%s139 + $0x8] sm:$0xf]
      %v151 = vld [vmem:[%s139 + $0xc] sm:$0xf]
      %v152 = vld [vmem:[%s139 + $0x10] sm:$0xf]
      %v153 = vld [vmem:[%s139 + $0x14] sm:$0xf]
      %v154 = vld [vmem:[%s139 + $0x18] sm:$0xf]
      %v155 = vld [vmem:[%s139 + $0x1c] sm:$0xf]
      %v156 = vld [vmem:[%s1] sm:$0xf]
      %v157 = vld [vmem:[%s1 + $0x4] sm:$0xf]
      %v158 = vld [vmem:[%s1 + $0x8] sm:$0xf]
      %v159 = vld [vmem:[%s1 + $0xc] sm:$0xf]
      %v160 = vld [vmem:[%s1 + $0x10] sm:$0xf]
      %v161 = vld [vmem:[%s1 + $0x14] sm:$0xf]
      %v162 = vld [vmem:[%s1 + $0x18] sm:$0xf]
      %v163 = vld [vmem:[%s1 + $0x1c] sm:$0xf]
      %v164 = vld [vmem:[%s1 + $0x20] sm:$0xf]
      %v173 = vunpack.c.l.b16 %v148
      %v174 = vunpack.c.l.b16 %v149
      %v175 = vunpack.c.l.b16 %v150
      %v176 = vunpack.c.l.b16 %v151
      %v177 = vunpack.c.l.b16 %v152
      %v178 = vunpack.c.l.b16 %v153
      %v179 = vunpack.c.l.b16 %v154
      %v180 = vunpack.c.l.b16 %v155
      %v181 = vpack.c.b16 %v174, %v173
      %v182 = vpack.c.b16 %v176, %v175
      %v183 = vpack.c.b16 %v178, %v177
      %v184 = vpack.c.b16 %v180, %v179
      %v194 = vunpack.c.l.b16 %v156
      %v195 = vunpack.c.l.b16 %v157
      %v196 = vunpack.c.l.b16 %v158
      %v197 = vunpack.c.l.b16 %v159
      %v198 = vunpack.c.l.b16 %v160
      %v199 = vunpack.c.l.b16 %v161
      %v200 = vunpack.c.l.b16 %v162
      %v201 = vunpack.c.l.b16 %v163
      %v202 = vunpack.c.l.b16 %v164
      %v203 = vpack.c.b16 %v195, %v194
      %v204 = vpack.c.b16 %v197, %v196
      %v205 = vpack.c.b16 %v199, %v198
      %v206 = vpack.c.b16 %v201, %v200
      %v207 = vpack.c.b16 %v202, %v202
      %vm212 = vcmask 588800
      %v214 = vsel %vm212, %v181, 0
      %v217 = vsel %vm212, %v182, 0
      %v220 = vsel %vm212, %v183, 0
      %v223 = vsel %vm212, %v184, 0
      %vm225 = vcmask 1043456
      %v227 = vsel %vm225, %v207, 0
      %229 = vmatprep.subr.bf16.mxu0 0
      %230 = vmatpush1.bf16.msra.mxu0 %v203
      %231 = vmatprep.subr.bf16.mxu0 0
      %232 = vmatpush1.bf16.msra.mxu0 %v204
      %233 = vmatprep.subr.bf16.mxu0 0
      %234 = vmatpush1.bf16.msra.mxu0 %v205
      %235 = vmatprep.subr.bf16.mxu0 0
      %236 = vmatpush1.bf16.msra.mxu0 %v206
      %237 = vmatprep.subr.bf16.mxu0 0
      %238 = vmatpush1.bf16.msra.mxu0 %v227
      %239 = vmatprep.subr.bf16.mxu0 0
      %240 = vmatpush1.bf16.msra.mxu0 0
      %241 = vmatprep.subr.bf16.mxu0 0
      %242 = vmatpush1.bf16.msra.mxu0 0
      %243 = vmatprep.subr.bf16.mxu0 0
      %244 = vmatpush1.bf16.msra.mxu0 0
      %245 = vmatprep.subr.bf16.mxu0 0
      %246 = vmatpush1.bf16.msra.mxu0 0
      %247 = vmatprep.subr.bf16.mxu0 0
      %248 = vmatpush1.bf16.msra.mxu0 0
      %249 = vmatprep.subr.bf16.mxu0 0
      %250 = vmatpush1.bf16.msra.mxu0 0
      %251 = vmatprep.subr.bf16.mxu0 0
      %252 = vmatpush1.bf16.msra.mxu0 0
      %253 = vmatprep.subr.bf16.mxu0 0
      %254 = vmatpush1.bf16.msra.mxu0 0
      %255 = vmatprep.subr.bf16.mxu0 0
      %256 = vmatpush1.bf16.msra.mxu0 0
      %257 = vmatprep.subr.bf16.mxu0 0
      %258 = vmatpush1.bf16.msra.mxu0 0
      %259 = vmatprep.subr.bf16.mxu0 0
      %260 = vmatpush1.bf16.msra.mxu0 0
      %261 = vmatprep.mubr.bf16.mxu0 0
      %262 = vmatmul.mubr.bf16.gmra.mrb[0].mxu0 %v214
      %v263 = vpop.f32.mrb[0].mxu0
      %v264 = vadd.f32 0.0, %v263
      %v265 = vpop.f32.mrb[0].mxu0
      %v266 = vpop.f32.mrb[0].mxu0
      %v267 = vadd.f32 0.0, %v266
      %v268 = vpop.f32.mrb[0].mxu0
      %269 = vmatprep.mubr.bf16.mxu0 0
      %270 = vmatmul.mubr.bf16.gmra.mrb[0].mxu0 %v217
      %v271 = vpop.f32.mrb[0].mxu0
      %v272 = vadd.f32 0.0, %v271
      %v273 = vpop.f32.mrb[0].mxu0
      %v274 = vpop.f32.mrb[0].mxu0
      %v275 = vadd.f32 0.0, %v274
      %v276 = vpop.f32.mrb[0].mxu0
      %277 = vmatprep.mubr.bf16.mxu0 0
      %278 = vmatmul.mubr.bf16.gmra.mrb[0].mxu0 %v220
      %v279 = vpop.f32.mrb[0].mxu0
      %v280 = vadd.f32 0.0, %v279
      %v281 = vpop.f32.mrb[0].mxu0
      %v282 = vpop.f32.mrb[0].mxu0
      %v283 = vadd.f32 0.0, %v282
      %v284 = vpop.f32.mrb[0].mxu0
      %285 = vmatprep.mubr.bf16.mxu0 0
      %286 = vmatmul.mubr.bf16.gmra.mrb[0].mxu0 %v223
      %v287 = vpop.f32.mrb[0].mxu0
      %v288 = vadd.f32 0.0, %v287
      %v289 = vpop.f32.mrb[0].mxu0
      %v290 = vpop.f32.mrb[0].mxu0
      %v291 = vadd.f32 0.0, %v290
      %v292 = vpop.f32.mrb[0].mxu0
      %293 = vdwg.mxu0
      %v294 = vmax.f32 %v264, 0.0
      %v295 = vmax.f32 %v267, 0.0
      %v296 = vmax.f32 %v272, 0.0
      %v297 = vmax.f32 %v275, 0.0
      %v298 = vmax.f32 %v280, 0.0
      %v299 = vmax.f32 %v283, 0.0
      %v300 = vmax.f32 %v288, 0.0
      %v301 = vmax.f32 %v291, 0.0
      %vm302 = vcmask 64512
      %303 = vst.msk [vmem:[%s145] sm:$0xff] %vm302, %v294
      %304 = vst.msk [vmem:[%s145 + $0x8] sm:$0xff] %vm302, %v295
      %305 = vst.msk [vmem:[%s145 + $0x10] sm:$0xff] %vm302, %v296
      %306 = vst.msk [vmem:[%s145 + $0x18] sm:$0xff] %vm302, %v297
      %307 = vst.msk [vmem:[%s145 + $0x20] sm:$0xff] %vm302, %v298
      %308 = vst.msk [vmem:[%s145 + $0x28] sm:$0xff] %vm302, %v299
      %309 = vst.msk [vmem:[%s145 + $0x30] sm:$0xff] %vm302, %v300
      %310 = vst.msk [vmem:[%s145 + $0x38] sm:$0xff] %vm302, %v301
      %s311 = smul.u32 8, %s13
      %p312 = scmp.lt.s32.totalorder %s311, 15
      %s313 = scalar_select %p312, %s311, 15
      %s314 = smul.addr %s313, 8
      %s315 = scalar_lea.vmem %s2, %s314
      // Predicated region
      $region29: #{_lambda_.42} parent=27 // pred_check
        %p316 = pneg %p78
      $region30: #{_lambda_.42} parent=27 // pred_check_branch
        %318 = sbr.rel (%p316) target = $region32
      $region31: #{_lambda_.42} parent=27 // pred_region
        %s319 = smul.u32 8, %s13
      $region32: #{_lambda_.42} parent=27 // pred_fallthru
        _
    $region28: #{_lambda_.42} parent=5 // pred_fallthru
      _
    %p320 = scmp.le.s32.totalorder 2, %s8
    // Predicated region
    $region33: #{_lambda_.42} parent=5 // pred_check
      %p321 = pneg %p320
    $region34: #{_lambda_.42} parent=5 // pred_check_branch
      %323 = sbr.rel (%p321) target = $region36
    $region35: #{_lambda_.42} parent=5 // pred_region
      %s324 = ssub.s32 %s8, 2
      // Predicated region
      $region37: #{_lambda_.42} parent=35 // pred_check
        %p325 = pneg %p84
      $region38: #{_lambda_.42} parent=35 // pred_check_branch
        %327 = sbr.rel (%p325) target = $region40
      $region39: #{_lambda_.42} parent=35 // pred_region
        %s328 = smul.u32 8, %s14
        %p329 = scmp.lt.s32.totalorder %s328, 15
        %s330 = scalar_select %p329, %s328, 15
        %s331 = smul.addr %s330, 8
        %s332 = scalar_lea.vmem %s2, %s331
      $region40: #{_lambda_.42} parent=35 // pred_fallthru
        _
    $region36: #{_lambda_.42} parent=5 // pred_fallthru
      _
  $region6: #{_lambda_.42} parent=0 // loop_footer
    %s12 = sadd.s32 1, %s8
  $region7: #{_lambda_.42} parent=0 // loop_footer_branch
    %7 = sbr.rel target = $region3
  $region8: #{_lambda_.42} parent=0 // loop_exit
    _

// kernel: _lambda_.43
$region0: #{_lambda_.43}
  #allocation0 [shape = 'u32[]', space=smem, size = 0x4, offset = 0x4, fixed_abs, tag = 'smem constant byte address 0x4 - core index']
  #allocation1 [shape = 'u32[144,128]{1,0:T(1,128)}', space=vmem, size = 0x12000, scoped, tag = 'internal scratch']
  %s0 = inlined_call_operand.vmem [shape: bf16[128,72], index: 0, kind: input, shape index: {}]
  %s1 = inlined_call_operand.vmem [shape: bf16[72,8], index: 1, kind: input, shape index: {}]
  %s2 = inlined_call_operand.vmem [shape: f32[128,8], index: 2, kind: input, shape index: {}]
  %s3 = inlined_call_operand.vmem [shape: f32[128,8], index: 3, kind: output, shape index: {}]
  %s4 = sld [smem:[#allocation0]]
  $region45: #{_lambda_.43} parent=0
    _
  %s6 = ssub.s32 1, %s4
  %s7 = scalar_select 0, %s6, %s4
  loop: start=0, step=1, limit=4
  $region2: #{_lambda_.43} parent=0 // loop_pre_header
    _
  $region3: #{_lambda_.43} parent=0 // loop_header
    %s9 = sphi 0, %s13
    %p10 = scmp.ge.s32.totalorder %s9, 4
    %s19 = sphi 0, %s21
    %s22 = sphi 0, %s19
    %s23 = sphi 0, %s22
    %s39 = sphi 0, %s23
    %s43 = sphi 0, %s43
    %s45 = sphi 0, %s43
    %s46 = sphi 0, %s45
    %s60 = sphi 0, %s46
    %s66 = sphi 0, %s68
    %s69 = sphi 0, %s66
    %s70 = sphi 0, %s69
    %s86 = sphi 0, %s70
    %s92 = sphi 0, %s94
    %s95 = sphi 0, %s92
    %s96 = sphi 0, %s95
    %s112 = sphi 0, %s96
  $region4: #{_lambda_.43} parent=0 // loop_header_branch
    %12 = sbr.rel (%p10) target = $region8
  $region5: #{_lambda_.43} parent=0 // loop_body
    %s14 = ssub.s32 %s9, 1
    %s15 = ssub.s32 %s9, 2
    %s16 = sadd.s32 %s9, 1
    %s17 = ssub.s32 %s9, %s16
    %p18 = scmp.eq.s32.totalorder %s17, 0
    %s20 = sadd.s32 %s19, 1
    %s21 = scalar_select %p18, %s19, %s20
    %p24 = pneg %p18
    %p25 = scmp.eq.s32.totalorder %s9, 1
    %p26 = por %p24, %p25
    %p27 = scmp.ne.s32.totalorder %s19, %s22
    %p28 = scmp.eq.s32.totalorder %s9, 0
    %p29 = por %p27, %p28
    %p30 = scmp.ne.s32.totalorder %s19, %s22
    %p31 = scmp.eq.s32.totalorder %s14, 1
    %p32 = por %p30, %p31
    %p33 = scmp.ne.s32.totalorder %s22, %s23
    %p34 = scmp.eq.s32.totalorder %s14, 0
    %p35 = por %p33, %p34
    %p36 = scmp.ne.s32.totalorder %s22, %s23
    %p37 = scmp.eq.s32.totalorder %s15, 1
    %p38 = por %p36, %p37
    %p40 = scmp.ne.s32.totalorder %s23, %s39
    %p41 = scmp.eq.s32.totalorder %s15, 0
    %p42 = por %p40, %p41
    %s44 = sadd.s32 %s43, 1
    %p47 = scmp.eq.s32.totalorder %s9, 1
    %p48 = scmp.ne.s32.totalorder %s43, %s45
    %p49 = scmp.eq.s32.totalorder %s9, 0
    %p50 = por %p48, %p49
    %p51 = scmp.ne.s32.totalorder %s43, %s45
    %p52 = scmp.eq.s32.totalorder %s14, 1
    %p53 = por %p51, %p52
    %p54 = scmp.ne.s32.totalorder %s45, %s46
    %p55 = scmp.eq.s32.totalorder %s14, 0
    %p56 = por %p54, %p55
    %p57 = scmp.ne.s32.totalorder %s45, %s46
    %p58 = scmp.eq.s32.totalorder %s15, 1
    %p59 = por %p57, %p58
    %p61 = scmp.ne.s32.totalorder %s46, %s60
    %p62 = scmp.eq.s32.totalorder %s15, 0
    %p63 = por %p61, %p62
    %s64 = ssub.s32 %s9, %s16
    %p65 = scmp.eq.s32.totalorder %s64, 0
    %s67 = sadd.s32 %s66, 1
    %s68 = scalar_select %p65, %s66, %s67
    %p71 = pneg %p65
    %p72 = scmp.eq.s32.totalorder %s9, 1
    %p73 = por %p71, %p72
    %p74 = scmp.ne.s32.totalorder %s66, %s69
    %p75 = scmp.eq.s32.totalorder %s9, 0
    %p76 = por %p74, %p75
    %p77 = scmp.ne.s32.totalorder %s66, %s69
    %p78 = scmp.eq.s32.totalorder %s14, 1
    %p79 = por %p77, %p78
    %p80 = scmp.ne.s32.totalorder %s69, %s70
    %p81 = scmp.eq.s32.totalorder %s14, 0
    %p82 = por %p80, %p81
    %p83 = scmp.ne.s32.totalorder %s69, %s70
    %p84 = scmp.eq.s32.totalorder %s15, 1
    %p85 = por %p83, %p84
    %p87 = scmp.ne.s32.totalorder %s70, %s86
    %p88 = scmp.eq.s32.totalorder %s15, 0
    %p89 = por %p87, %p88
    %s90 = ssub.s32 %s9, %s16
    %p91 = scmp.eq.s32.totalorder %s90, 0
    %s93 = sadd.s32 %s92, 1
    %s94 = scalar_select %p91, %s92, %s93
    %p97 = pneg %p91
    %p98 = scmp.eq.s32.totalorder %s9, 1
    %p99 = por %p97, %p98
    %p100 = scmp.ne.s32.totalorder %s92, %s95
    %p101 = scmp.eq.s32.totalorder %s9, 0
    %p102 = por %p100, %p101
    %p103 = scmp.ne.s32.totalorder %s92, %s95
    %p104 = scmp.eq.s32.totalorder %s14, 1
    %p105 = por %p103, %p104
    %p106 = scmp.ne.s32.totalorder %s95, %s96
    %p107 = scmp.eq.s32.totalorder %s14, 0
    %p108 = por %p106, %p107
    %p109 = scmp.ne.s32.totalorder %s95, %s96
    %p110 = scmp.eq.s32.totalorder %s15, 1
    %p111 = por %p109, %p110
    %p113 = scmp.ne.s32.totalorder %s96, %s112
    %p114 = scmp.eq.s32.totalorder %s15, 0
    %p115 = por %p113, %p114
    %p116 = scmp.le.s32.totalorder 1, %s9
    %p117 = scmp.lt.s32.totalorder %s9, 3
    %p118 = pnand %p116, %p117
    %p119 = pneg %p118
    // Predicated region
    $region9: #{_lambda_.43} parent=5 // pred_check
      _
    $region10: #{_lambda_.43} parent=5 // pred_check_branch
      %121 = sbr.rel (%p118) target = $region12
    $region11: #{_lambda_.43} parent=5 // pred_region
      %s122 = ssub.s32 %s9, 1
      // Predicated region
      $region13: #{_lambda_.43} parent=11 // pred_check
        %p123 = pneg %p56
      $region14: #{_lambda_.43} parent=11 // pred_check_branch
        %125 = sbr.rel (%p123) target = $region16
      $region15: #{_lambda_.43} parent=11 // pred_region
        _
      $region16: #{_lambda_.43} parent=11 // pred_fallthru
        _
    $region12: #{_lambda_.43} parent=5 // pred_fallthru
      _
    %p126 = scmp.lt.s32.totalorder %s9, 2
    // Predicated region
    $region17: #{_lambda_.43} parent=5 // pred_check
      %p127 = pneg %p126
    $region18: #{_lambda_.43} parent=5 // pred_check_branch
      %129 = sbr.rel (%p127) target = $region20
    $region19: #{_lambda_.43} parent=5 // pred_region
      // Predicated region
      $region21: #{_lambda_.43} parent=19 // pred_check
        %p130 = pneg %p29
      $region22: #{_lambda_.43} parent=19 // pred_check_branch
        %132 = sbr.rel (%p130) target = $region24
      $region23: #{_lambda_.43} parent=19 // pred_region
        %s133 = smul.u32 8, %s9
        %p134 = scmp.lt.s32.totalorder %s133, 15
        %s135 = scalar_select %p134, %s133, 15
        %s136 = smul.addr %s135, 4
        %s137 = scalar_lea.vmem %s0, %s136
        %s138 = smul.u32 8, %s9
      $region24: #{_lambda_.43} parent=19 // pred_fallthru
        _
      // Predicated region
      $region25: #{_lambda_.43} parent=19 // pred_check
        %p139 = pneg %p76
      $region26: #{_lambda_.43} parent=19 // pred_check_branch
        %141 = sbr.rel (%p139) target = $region28
      $region27: #{_lambda_.43} parent=19 // pred_region
        %s142 = smul.u32 8, %s9
        %p143 = scmp.lt.s32.totalorder %s142, 15
        %s144 = scalar_select %p143, %s142, 15
        %s145 = smul.addr %s144, 8
        %s146 = scalar_lea.vmem %s2, %s145
        %s147 = smul.u32 8, %s9
      $region28: #{_lambda_.43} parent=19 // pred_fallthru
        _
    $region20: #{_lambda_.43} parent=5 // pred_fallthru
      _
    %p148 = scmp.le.s32.totalorder 1, %s9
    %p149 = scmp.lt.s32.totalorder %s9, 3
    %p150 = pnand %p148, %p149
    %p151 = pneg %p150
    // Predicated region
    $region29: #{_lambda_.43} parent=5 // pred_check
      _
    $region30: #{_lambda_.43} parent=5 // pred_check_branch
      %153 = sbr.rel (%p150) target = $region32
    $region31: #{_lambda_.43} parent=5 // pred_region
      %s154 = ssub.s32 %s9, 1
      %s155 = smul.u32 8, %s14
      %p156 = scmp.lt.s32.totalorder %s155, 15
      %s157 = scalar_select %p156, %s155, 15
      %s158 = smul.addr %s157, 4
      %s159 = scalar_lea.vmem %s0, %s158
      %p160 = pneg %p35
      %p161 = pneg %p32
      %p162 = pneg %p56
      %p163 = pneg %p53
      %s164 = smul.u32 8, %s14
      %p165 = scmp.lt.s32.totalorder %s164, 15
      %s166 = scalar_select %p165, %s164, 15
      %s167 = smul.addr %s166, 8
      %s168 = scalar_lea.vmem %s2, %s167
      %p169 = pneg %p82
      %p170 = pneg %p79
      %p171 = pneg %p108
      %p172 = pneg %p105
      %s173 = smul.u32 8, %s14
      %p174 = scmp.lt.s32.totalorder %s173, 15
      %s175 = scalar_select %p174, %s173, 15
      %s176 = smul.addr %s175, 8
      %s177 = scalar_lea.vmem %s3, %s176
      %s178 = smul.u32 8, %s14
      %p179 = scmp.lt.s32.totalorder %s178, 15
      %s180 = scalar_select %p179, %s178, 15
      %s181 = smul.addr %s180, 4
      %s182 = scalar_lea.vmem %s0, %s181
      %s183 = smul.u32 8, %s14
      %s184 = smul.u32 8, %s14
      %p185 = scmp.lt.s32.totalorder %s184, 15
      %s186 = scalar_select %p185, %s184, 15
      %s187 = smul.addr %s186, 8
      %s188 = scalar_lea.vmem %s2, %s187
      %s189 = smul.u32 8, %s14
      %s190 = smul.u32 8, %s14
      %p191 = scmp.lt.s32.totalorder %s190, 15
      %s192 = scalar_select %p191, %s190, 15
      %s193 = smul.addr %s192, 8
      %s194 = scalar_lea.vmem %s3, %s193
      %s195 = smul.u32 8, %s14
      %v197 = vld [vmem:[%s182] sm:$0xf]
      %v198 = vld [vmem:[%s182 + $0x4] sm:$0xf]
      %v199 = vld [vmem:[%s182 + $0x8] sm:$0xf]
      %v200 = vld [vmem:[%s182 + $0xc] sm:$0xf]
      %v201 = vld [vmem:[%s182 + $0x10] sm:$0xf]
      %v202 = vld [vmem:[%s182 + $0x14] sm:$0xf]
      %v203 = vld [vmem:[%s182 + $0x18] sm:$0xf]
      %v204 = vld [vmem:[%s182 + $0x1c] sm:$0xf]
      %v205 = vld [vmem:[%s1] sm:$0xf]
      %v206 = vld [vmem:[%s1 + $0x4] sm:$0xf]
      %v207 = vld [vmem:[%s1 + $0x8] sm:$0xf]
      %v208 = vld [vmem:[%s1 + $0xc] sm:$0xf]
      %v209 = vld [vmem:[%s1 + $0x10] sm:$0xf]
      %v210 = vld [vmem:[%s1 + $0x14] sm:$0xf]
      %v211 = vld [vmem:[%s1 + $0x18] sm:$0xf]
      %v212 = vld [vmem:[%s1 + $0x1c] sm:$0xf]
      %v213 = vld [vmem:[%s1 + $0x20] sm:$0xf]
      %v214 = vld [vmem:[%s188] sm:$0xff]
      %v215 = vld [vmem:[%s188 + $0x8] sm:$0xff]
      %v216 = vld [vmem:[%s188 + $0x10] sm:$0xff]
      %v217 = vld [vmem:[%s188 + $0x18] sm:$0xff]
      %v218 = vld [vmem:[%s188 + $0x20] sm:$0xff]
      %v219 = vld [vmem:[%s188 + $0x28] sm:$0xff]
      %v220 = vld [vmem:[%s188 + $0x30] sm:$0xff]
      %v221 = vld [vmem:[%s188 + $0x38] sm:$0xff]
      %v230 = vunpack.c.l.b16 %v197
      %v231 = vunpack.c.l.b16 %v198
      %v232 = vunpack.c.l.b16 %v199
      %v233 = vunpack.c.l.b16 %v200
      %v234 = vunpack.c.l.b16 %v201
      %v235 = vunpack.c.l.b16 %v202
      %v236 = vunpack.c.l.b16 %v203
      %v237 = vunpack.c.l.b16 %v204
      %v238 = vpack.c.b16 %v231, %v230
      %v239 = vpack.c.b16 %v233, %v232
      %v240 = vpack.c.b16 %v235, %v234
      %v241 = vpack.c.b16 %v237, %v236
      %v251 = vunpack.c.l.b16 %v205
      %v252 = vunpack.c.l.b16 %v206
      %v253 = vunpack.c.l.b16 %v207
      %v254 = vunpack.c.l.b16 %v208
      %v255 = vunpack.c.l.b16 %v209
      %v256 = vunpack.c.l.b16 %v210
      %v257 = vunpack.c.l.b16 %v211
      %v258 = vunpack.c.l.b16 %v212
      %v259 = vunpack.c.l.b16 %v213
      %v260 = vpack.c.b16 %v252, %v251
      %v261 = vpack.c.b16 %v254, %v253
      %v262 = vpack.c.b16 %v256, %v255
      %v263 = vpack.c.b16 %v258, %v257
      %v264 = vpack.c.b16 %v259, %v259
      %vm269 = vcmask 588800
      %v271 = vsel %vm269, %v238, 0
      %v274 = vsel %vm269, %v239, 0
      %v277 = vsel %vm269, %v240, 0
      %v280 = vsel %vm269, %v241, 0
      %vm282 = vcmask 1043456
      %v284 = vsel %vm282, %v264, 0
      %286 = vmatprep.subr.bf16.mxu0 0
      %287 = vmatpush1.bf16.msra.mxu0 %v260
      %288 = vmatprep.subr.bf16.mxu0 0
      %289 = vmatpush1.bf16.msra.mxu0 %v261
      %290 = vmatprep.subr.bf16.mxu0 0
      %291 = vmatpush1.bf16.msra.mxu0 %v262
      %292 = vmatprep.subr.bf16.mxu0 0
      %293 = vmatpush1.bf16.msra.mxu0 %v263
      %294 = vmatprep.subr.bf16.mxu0 0
      %295 = vmatpush1.bf16.msra.mxu0 %v284
      %296 = vmatprep.subr.bf16.mxu0 0
      %297 = vmatpush1.bf16.msra.mxu0 0
      %298 = vmatprep.subr.bf16.mxu0 0
      %299 = vmatpush1.bf16.msra.mxu0 0
      %300 = vmatprep.subr.bf16.mxu0 0
      %301 = vmatpush1.bf16.msra.mxu0 0
      %302 = vmatprep.subr.bf16.mxu0 0
      %303 = vmatpush1.bf16.msra.mxu0 0
      %304 = vmatprep.subr.bf16.mxu0 0
      %305 = vmatpush1.bf16.msra.mxu0 0
      %306 = vmatprep.subr.bf16.mxu0 0
      %307 = vmatpush1.bf16.msra.mxu0 0
      %308 = vmatprep.subr.bf16.mxu0 0
      %309 = vmatpush1.bf16.msra.mxu0 0
      %310 = vmatprep.subr.bf16.mxu0 0
      %311 = vmatpush1.bf16.msra.mxu0 0
      %312 = vmatprep.subr.bf16.mxu0 0
      %313 = vmatpush1.bf16.msra.mxu0 0
      %314 = vmatprep.subr.bf16.mxu0 0
      %315 = vmatpush1.bf16.msra.mxu0 0
      %316 = vmatprep.subr.bf16.mxu0 0
      %317 = vmatpush1.bf16.msra.mxu0 0
      %318 = vmatprep.mubr.bf16.mxu0 0
      %319 = vmatmul.mubr.bf16.gmra.mrb[0].mxu0 %v271
      %v320 = vpop.f32.mrb[0].mxu0
      %v321 = vadd.f32 %v214, %v320
      %v322 = vpop.f32.mrb[0].mxu0
      %v323 = vpop.f32.mrb[0].mxu0
      %v324 = vadd.f32 %v215, %v323
      %v325 = vpop.f32.mrb[0].mxu0
      %326 = vmatprep.mubr.bf16.mxu0 0
      %327 = vmatmul.mubr.bf16.gmra.mrb[0].mxu0 %v274
      %v328 = vpop.f32.mrb[0].mxu0
      %v329 = vadd.f32 %v216, %v328
      %v330 = vpop.f32.mrb[0].mxu0
      %v331 = vpop.f32.mrb[0].mxu0
      %v332 = vadd.f32 %v217, %v331
      %v333 = vpop.f32.mrb[0].mxu0
      %334 = vmatprep.mubr.bf16.mxu0 0
      %335 = vmatmul.mubr.bf16.gmra.mrb[0].mxu0 %v277
      %v336 = vpop.f32.mrb[0].mxu0
      %v337 = vadd.f32 %v218, %v336
      %v338 = vpop.f32.mrb[0].mxu0
      %v339 = vpop.f32.mrb[0].mxu0
      %v340 = vadd.f32 %v219, %v339
      %v341 = vpop.f32.mrb[0].mxu0
      %342 = vmatprep.mubr.bf16.mxu0 0
      %343 = vmatmul.mubr.bf16.gmra.mrb[0].mxu0 %v280
      %v344 = vpop.f32.mrb[0].mxu0
      %v345 = vadd.f32 %v220, %v344
      %v346 = vpop.f32.mrb[0].mxu0
      %v347 = vpop.f32.mrb[0].mxu0
      %v348 = vadd.f32 %v221, %v347
      %v349 = vpop.f32.mrb[0].mxu0
      %350 = vdwg.mxu0
      %v351 = vmax.f32 %v321, 0.0
      %v352 = vmax.f32 %v324, 0.0
      %v353 = vmax.f32 %v329, 0.0
      %v354 = vmax.f32 %v332, 0.0
      %v355 = vmax.f32 %v337, 0.0
      %v356 = vmax.f32 %v340, 0.0
      %v357 = vmax.f32 %v345, 0.0
      %v358 = vmax.f32 %v348, 0.0
      %vm359 = vcmask 64512
      %360 = vst.msk [vmem:[%s194] sm:$0xff] %vm359, %v351
      %361 = vst.msk [vmem:[%s194 + $0x8] sm:$0xff] %vm359, %v352
      %362 = vst.msk [vmem:[%s194 + $0x10] sm:$0xff] %vm359, %v353
      %363 = vst.msk [vmem:[%s194 + $0x18] sm:$0xff] %vm359, %v354
      %364 = vst.msk [vmem:[%s194 + $0x20] sm:$0xff] %vm359, %v355
      %365 = vst.msk [vmem:[%s194 + $0x28] sm:$0xff] %vm359, %v356
      %366 = vst.msk [vmem:[%s194 + $0x30] sm:$0xff] %vm359, %v357
      %367 = vst.msk [vmem:[%s194 + $0x38] sm:$0xff] %vm359, %v358
      %s368 = smul.u32 8, %s14
      %p369 = scmp.lt.s32.totalorder %s368, 15
      %s370 = scalar_select %p369, %s368, 15
      %s371 = smul.addr %s370, 8
      %s372 = scalar_lea.vmem %s3, %s371
      // Predicated region
      $region33: #{_lambda_.43} parent=31 // pred_check
        %p373 = pneg %p105
      $region34: #{_lambda_.43} parent=31 // pred_check_branch
        %375 = sbr.rel (%p373) target = $region36
      $region35: #{_lambda_.43} parent=31 // pred_region
        %s376 = smul.u32 8, %s14
      $region36: #{_lambda_.43} parent=31 // pred_fallthru
        _
    $region32: #{_lambda_.43} parent=5 // pred_fallthru
      _
    %p377 = scmp.le.s32.totalorder 2, %s9
    // Predicated region
    $region37: #{_lambda_.43} parent=5 // pred_check
      %p378 = pneg %p377
    $region38: #{_lambda_.43} parent=5 // pred_check_branch
      %380 = sbr.rel (%p378) target = $region40
    $region39: #{_lambda_.43} parent=5 // pred_region
      %s381 = ssub.s32 %s9, 2
      // Predicated region
      $region41: #{_lambda_.43} parent=39 // pred_check
        %p382 = pneg %p111
      $region42: #{_lambda_.43} parent=39 // pred_check_branch
        %384 = sbr.rel (%p382) target = $region44
      $region43: #{_lambda_.43} parent=39 // pred_region
        %s385 = smul.u32 8, %s15
        %p386 = scmp.lt.s32.totalorder %s385, 15
        %s387 = scalar_select %p386, %s385, 15
        %s388 = smul.addr %s387, 8
        %s389 = scalar_lea.vmem %s3, %s388
      $region44: #{_lambda_.43} parent=39 // pred_fallthru
        _
    $region40: #{_lambda_.43} parent=5 // pred_fallthru
      _
  $region6: #{_lambda_.43} parent=0 // loop_footer
    %s13 = sadd.s32 1, %s9
  $region7: #{_lambda_.43} parent=0 // loop_footer_branch
    %8 = sbr.rel target = $region3
  $region8: #{_lambda_.43} parent=0 // loop_exit
    _

// kernel: _lambda_.47
$region0: #{_lambda_.47}
  #allocation0 [shape = 'u32[]', space=smem, size = 0x4, offset = 0x4, fixed_abs, tag = 'smem constant byte address 0x4 - core index']
  #allocation1 [shape = 'u32[144,128]{1,0:T(1,128)}', space=vmem, size = 0x12000, scoped, tag = 'internal scratch']
  %s0 = inlined_call_operand.vmem [shape: bf16[32,8], index: 0, kind: input, shape index: {}]
  %s1 = inlined_call_operand.vmem [shape: bf16[8,16], index: 1, kind: input, shape index: {}]
  %s2 = inlined_call_operand.vmem [shape: f32[32,16], index: 2, kind: output, shape index: {}]
  %s3 = sld [smem:[#allocation0]]
  $region41: #{_lambda_.47} parent=0
    _
  %s5 = ssub.s32 1, %s3
  %s6 = scalar_select 0, %s5, %s3
  loop: start=0, step=1, limit=4
  $region2: #{_lambda_.47} parent=0 // loop_pre_header
    _
  $region3: #{_lambda_.47} parent=0 // loop_header
    %s8 = sphi 0, %s12
    %p9 = scmp.ge.s32.totalorder %s8, 4
    %s18 = sphi 0, %s20
    %s21 = sphi 0, %s18
    %s22 = sphi 0, %s21
    %s38 = sphi 0, %s22
    %s42 = sphi 0, %s42
    %s44 = sphi 0, %s42
    %s45 = sphi 0, %s44
    %s59 = sphi 0, %s45
    %s65 = sphi 0, %s67
    %s68 = sphi 0, %s65
    %s69 = sphi 0, %s68
    %s85 = sphi 0, %s69
  $region4: #{_lambda_.47} parent=0 // loop_header_branch
    %11 = sbr.rel (%p9) target = $region8
  $region5: #{_lambda_.47} parent=0 // loop_body
    %s13 = ssub.s32 %s8, 1
    %s14 = ssub.s32 %s8, 2
    %s15 = sadd.s32 %s8, 1
    %s16 = ssub.s32 %s8, %s15
    %p17 = scmp.eq.s32.totalorder %s16, 0
    %s19 = sadd.s32 %s18, 1
    %s20 = scalar_select %p17, %s18, %s19
    %p23 = pneg %p17
    %p24 = scmp.eq.s32.totalorder %s8, 1
    %p25 = por %p23, %p24
    %p26 = scmp.ne.s32.totalorder %s18, %s21
    %p27 = scmp.eq.s32.totalorder %s8, 0
    %p28 = por %p26, %p27
    %p29 = scmp.ne.s32.totalorder %s18, %s21
    %p30 = scmp.eq.s32.totalorder %s13, 1
    %p31 = por %p29, %p30
    %p32 = scmp.ne.s32.totalorder %s21, %s22
    %p33 = scmp.eq.s32.totalorder %s13, 0
    %p34 = por %p32, %p33
    %p35 = scmp.ne.s32.totalorder %s21, %s22
    %p36 = scmp.eq.s32.totalorder %s14, 1
    %p37 = por %p35, %p36
    %p39 = scmp.ne.s32.totalorder %s22, %s38
    %p40 = scmp.eq.s32.totalorder %s14, 0
    %p41 = por %p39, %p40
    %s43 = sadd.s32 %s42, 1
    %p46 = scmp.eq.s32.totalorder %s8, 1
    %p47 = scmp.ne.s32.totalorder %s42, %s44
    %p48 = scmp.eq.s32.totalorder %s8, 0
    %p49 = por %p47, %p48
    %p50 = scmp.ne.s32.totalorder %s42, %s44
    %p51 = scmp.eq.s32.totalorder %s13, 1
    %p52 = por %p50, %p51
    %p53 = scmp.ne.s32.totalorder %s44, %s45
    %p54 = scmp.eq.s32.totalorder %s13, 0
    %p55 = por %p53, %p54
    %p56 = scmp.ne.s32.totalorder %s44, %s45
    %p57 = scmp.eq.s32.totalorder %s14, 1
    %p58 = por %p56, %p57
    %p60 = scmp.ne.s32.totalorder %s45, %s59
    %p61 = scmp.eq.s32.totalorder %s14, 0
    %p62 = por %p60, %p61
    %s63 = ssub.s32 %s8, %s15
    %p64 = scmp.eq.s32.totalorder %s63, 0
    %s66 = sadd.s32 %s65, 1
    %s67 = scalar_select %p64, %s65, %s66
    %p70 = pneg %p64
    %p71 = scmp.eq.s32.totalorder %s8, 1
    %p72 = por %p70, %p71
    %p73 = scmp.ne.s32.totalorder %s65, %s68
    %p74 = scmp.eq.s32.totalorder %s8, 0
    %p75 = por %p73, %p74
    %p76 = scmp.ne.s32.totalorder %s65, %s68
    %p77 = scmp.eq.s32.totalorder %s13, 1
    %p78 = por %p76, %p77
    %p79 = scmp.ne.s32.totalorder %s68, %s69
    %p80 = scmp.eq.s32.totalorder %s13, 0
    %p81 = por %p79, %p80
    %p82 = scmp.ne.s32.totalorder %s68, %s69
    %p83 = scmp.eq.s32.totalorder %s14, 1
    %p84 = por %p82, %p83
    %p86 = scmp.ne.s32.totalorder %s69, %s85
    %p87 = scmp.eq.s32.totalorder %s14, 0
    %p88 = por %p86, %p87
    %p89 = scmp.le.s32.totalorder 1, %s8
    %p90 = scmp.lt.s32.totalorder %s8, 3
    %p91 = pnand %p89, %p90
    %p92 = pneg %p91
    // Predicated region
    $region9: #{_lambda_.47} parent=5 // pred_check
      _
    $region10: #{_lambda_.47} parent=5 // pred_check_branch
      %94 = sbr.rel (%p91) target = $region12
    $region11: #{_lambda_.47} parent=5 // pred_region
      %s95 = ssub.s32 %s8, 1
      // Predicated region
      $region13: #{_lambda_.47} parent=11 // pred_check
        %p96 = pneg %p55
      $region14: #{_lambda_.47} parent=11 // pred_check_branch
        %98 = sbr.rel (%p96) target = $region16
      $region15: #{_lambda_.47} parent=11 // pred_region
        _
      $region16: #{_lambda_.47} parent=11 // pred_fallthru
        _
    $region12: #{_lambda_.47} parent=5 // pred_fallthru
      _
    %p99 = scmp.lt.s32.totalorder %s8, 2
    // Predicated region
    $region17: #{_lambda_.47} parent=5 // pred_check
      %p100 = pneg %p99
    $region18: #{_lambda_.47} parent=5 // pred_check_branch
      %102 = sbr.rel (%p100) target = $region20
    $region19: #{_lambda_.47} parent=5 // pred_region
      // Predicated region
      $region21: #{_lambda_.47} parent=19 // pred_check
        %p103 = pneg %p28
      $region22: #{_lambda_.47} parent=19 // pred_check_branch
        %105 = sbr.rel (%p103) target = $region24
      $region23: #{_lambda_.47} parent=19 // pred_region
        %s106 = smul.u32 2, %s8
        %p107 = scmp.lt.s32.totalorder %s106, 3
        %s108 = scalar_select %p107, %s106, 3
        %s109 = smul.addr %s108, 4
        %s110 = scalar_lea.vmem %s0, %s109
        %s111 = smul.u32 2, %s8
      $region24: #{_lambda_.47} parent=19 // pred_fallthru
        _
    $region20: #{_lambda_.47} parent=5 // pred_fallthru
      _
    %p112 = scmp.le.s32.totalorder 1, %s8
    %p113 = scmp.lt.s32.totalorder %s8, 3
    %p114 = pnand %p112, %p113
    %p115 = pneg %p114
    // Predicated region
    $region25: #{_lambda_.47} parent=5 // pred_check
      _
    $region26: #{_lambda_.47} parent=5 // pred_check_branch
      %117 = sbr.rel (%p114) target = $region28
    $region27: #{_lambda_.47} parent=5 // pred_region
      %s118 = ssub.s32 %s8, 1
      %s119 = smul.u32 2, %s13
      %p120 = scmp.lt.s32.totalorder %s119, 3
      %s121 = scalar_select %p120, %s119, 3
      %s122 = smul.addr %s121, 4
      %s123 = scalar_lea.vmem %s0, %s122
      %p124 = pneg %p34
      %p125 = pneg %p31
      %p126 = pneg %p55
      %p127 = pneg %p52
      %p128 = pneg %p81
      %p129 = pneg %p78
      %s130 = smul.u32 2, %s13
      %p131 = scmp.lt.s32.totalorder %s130, 3
      %s132 = scalar_select %p131, %s130, 3
      %s133 = smul.addr %s132, 8
      %s134 = scalar_lea.vmem %s2, %s133
      %s135 = smul.u32 2, %s13
      %p136 = scmp.lt.s32.totalorder %s135, 3
      %s137 = scalar_select %p136, %s135, 3
      %s138 = smul.addr %s137, 4
      %s139 = scalar_lea.vmem %s0, %s138
      %s140 = smul.u32 2, %s13
      %s141 = smul.u32 2, %s13
      %p142 = scmp.lt.s32.totalorder %s141, 3
      %s143 = scalar_select %p142, %s141, 3
      %s144 = smul.addr %s143, 8
      %s145 = scalar_lea.vmem %s2, %s144
      %s146 = smul.u32 2, %s13
      %v148 = vld [vmem:[%s139] sm:$0xf]
      %v149 = vld [vmem:[%s139 + $0x4] sm:$0xf]
      %v150 = vld [vmem:[%s1] sm:$0xf]
      %v153 = vunpack.c.l.b16 %v148
      %v154 = vunpack.c.l.b16 %v149
      %v155 = vpack.c.b16 %v154, %v153
      %vm156 = vcmask 64512
      %v158 = vsel %vm156, %v155, 0
      %vm160 = vcmask 1043456
      %v162 = vsel %vm160, %v150, 0
      %164 = vmatprep.subr.bf16.mxu0 0
      %165 = vmatpush1.bf16.msra.mxu0 %v162
      %166 = vmatprep.subr.bf16.mxu0 0
      %167 = vmatpush1.bf16.msra.mxu0 0
      %168 = vmatprep.subr.bf16.mxu0 0
      %169 = vmatpush1.bf16.msra.mxu0 0
      %170 = vmatprep.subr.bf16.mxu0 0
      %171 = vmatpush1.bf16.msra.mxu0 0
      %172 = vmatprep.subr.bf16.mxu0 0
      %173 = vmatpush1.bf16.msra.mxu0 0
      %174 = vmatprep.subr.bf16.mxu0 0
      %175 = vmatpush1.bf16.msra.mxu0 0
      %176 = vmatprep.subr.bf16.mxu0 0
      %177 = vmatpush1.bf16.msra.mxu0 0
      %178 = vmatprep.subr.bf16.mxu0 0
      %179 = vmatpush1.bf16.msra.mxu0 0
      %180 = vmatprep.subr.bf16.mxu0 0
      %181 = vmatpush1.bf16.msra.mxu0 0
      %182 = vmatprep.subr.bf16.mxu0 0
      %183 = vmatpush1.bf16.msra.mxu0 0
      %184 = vmatprep.subr.bf16.mxu0 0
      %185 = vmatpush1.bf16.msra.mxu0 0
      %186 = vmatprep.subr.bf16.mxu0 0
      %187 = vmatpush1.bf16.msra.mxu0 0
      %188 = vmatprep.subr.bf16.mxu0 0
      %189 = vmatpush1.bf16.msra.mxu0 0
      %190 = vmatprep.subr.bf16.mxu0 0
      %191 = vmatpush1.bf16.msra.mxu0 0
      %192 = vmatprep.subr.bf16.mxu0 0
      %193 = vmatpush1.bf16.msra.mxu0 0
      %194 = vmatprep.subr.bf16.mxu0 0
      %195 = vmatpush1.bf16.msra.mxu0 0
      %196 = vmatprep.mubr.bf16.mxu0 0
      %197 = vmatmul.mubr.bf16.gmra.mrb[0].mxu0 %v158
      %v198 = vpop.f32.mrb[0].mxu0
      %v199 = vadd.f32 0.0, %v198
      %v200 = vpop.f32.mrb[0].mxu0
      %v201 = vpop.f32.mrb[0].mxu0
      %v202 = vadd.f32 0.0, %v201
      %v203 = vpop.f32.mrb[0].mxu0
      %204 = vdwg.mxu0
      %vm205 = vcmask 130048
      %206 = vst.msk [vmem:[%s145] sm:$0xff] %vm205, %v199
      %207 = vst.msk [vmem:[%s145 + $0x8] sm:$0xff] %vm205, %v202
      %s208 = smul.u32 2, %s13
      %p209 = scmp.lt.s32.totalorder %s208, 3
      %s210 = scalar_select %p209, %s208, 3
      %s211 = smul.addr %s210, 8
      %s212 = scalar_lea.vmem %s2, %s211
      // Predicated region
      $region29: #{_lambda_.47} parent=27 // pred_check
        %p213 = pneg %p78
      $region30: #{_lambda_.47} parent=27 // pred_check_branch
        %215 = sbr.rel (%p213) target = $region32
      $region31: #{_lambda_.47} parent=27 // pred_region
        %s216 = smul.u32 2, %s13
      $region32: #{_lambda_.47} parent=27 // pred_fallthru
        _
    $region28: #{_lambda_.47} parent=5 // pred_fallthru
      _
    %p217 = scmp.le.s32.totalorder 2, %s8
    // Predicated region
    $region33: #{_lambda_.47} parent=5 // pred_check
      %p218 = pneg %p217
    $region34: #{_lambda_.47} parent=5 // pred_check_branch
      %220 = sbr.rel (%p218) target = $region36
    $region35: #{_lambda_.47} parent=5 // pred_region
      %s221 = ssub.s32 %s8, 2
      // Predicated region
      $region37: #{_lambda_.47} parent=35 // pred_check
        %p222 = pneg %p84
      $region38: #{_lambda_.47} parent=35 // pred_check_branch
        %224 = sbr.rel (%p222) target = $region40
      $region39: #{_lambda_.47} parent=35 // pred_region
        %s225 = smul.u32 2, %s14
        %p226 = scmp.lt.s32.totalorder %s225, 3
        %s227 = scalar_select %p226, %s225, 3
        %s228 = smul.addr %s227, 8
        %s229 = scalar_lea.vmem %s2, %s228
      $region40: #{_lambda_.47} parent=35 // pred_fallthru
        _
    $region36: #{_lambda_.47} parent=5 // pred_fallthru
      _
  $region6: #{_lambda_.47} parent=0 // loop_footer
    %s12 = sadd.s32 1, %s8
  $region7: #{_lambda_.47} parent=0 // loop_footer_branch
    %7 = sbr.rel target = $region3
  $region8: #{_lambda_.47} parent=0 // loop_exit
    _

// kernel: _lambda_.46
$region0: #{_lambda_.46}
  #allocation0 [shape = 'u32[]', space=smem, size = 0x4, offset = 0x4, fixed_abs, tag = 'smem constant byte address 0x4 - core index']
  #allocation1 [shape = 'u32[144,128]{1,0:T(1,128)}', space=vmem, size = 0x12000, scoped, tag = 'internal scratch']
  %s0 = inlined_call_operand.vmem [shape: bf16[32,72], index: 0, kind: input, shape index: {}]
  %s1 = inlined_call_operand.vmem [shape: bf16[72,16], index: 1, kind: input, shape index: {}]
  %s2 = inlined_call_operand.vmem [shape: f32[32,16], index: 2, kind: output, shape index: {}]
  %s3 = sld [smem:[#allocation0]]
  $region41: #{_lambda_.46} parent=0
    _
  %s5 = ssub.s32 1, %s3
  %s6 = scalar_select 0, %s5, %s3
  loop: start=0, step=1, limit=4
  $region2: #{_lambda_.46} parent=0 // loop_pre_header
    _
  $region3: #{_lambda_.46} parent=0 // loop_header
    %s8 = sphi 0, %s12
    %p9 = scmp.ge.s32.totalorder %s8, 4
    %s18 = sphi 0, %s20
    %s21 = sphi 0, %s18
    %s22 = sphi 0, %s21
    %s38 = sphi 0, %s22
    %s42 = sphi 0, %s42
    %s44 = sphi 0, %s42
    %s45 = sphi 0, %s44
    %s59 = sphi 0, %s45
    %s65 = sphi 0, %s67
    %s68 = sphi 0, %s65
    %s69 = sphi 0, %s68
    %s85 = sphi 0, %s69
  $region4: #{_lambda_.46} parent=0 // loop_header_branch
    %11 = sbr.rel (%p9) target = $region8
  $region5: #{_lambda_.46} parent=0 // loop_body
    %s13 = ssub.s32 %s8, 1
    %s14 = ssub.s32 %s8, 2
    %s15 = sadd.s32 %s8, 1
    %s16 = ssub.s32 %s8, %s15
    %p17 = scmp.eq.s32.totalorder %s16, 0
    %s19 = sadd.s32 %s18, 1
    %s20 = scalar_select %p17, %s18, %s19
    %p23 = pneg %p17
    %p24 = scmp.eq.s32.totalorder %s8, 1
    %p25 = por %p23, %p24
    %p26 = scmp.ne.s32.totalorder %s18, %s21
    %p27 = scmp.eq.s32.totalorder %s8, 0
    %p28 = por %p26, %p27
    %p29 = scmp.ne.s32.totalorder %s18, %s21
    %p30 = scmp.eq.s32.totalorder %s13, 1
    %p31 = por %p29, %p30
    %p32 = scmp.ne.s32.totalorder %s21, %s22
    %p33 = scmp.eq.s32.totalorder %s13, 0
    %p34 = por %p32, %p33
    %p35 = scmp.ne.s32.totalorder %s21, %s22
    %p36 = scmp.eq.s32.totalorder %s14, 1
    %p37 = por %p35, %p36
    %p39 = scmp.ne.s32.totalorder %s22, %s38
    %p40 = scmp.eq.s32.totalorder %s14, 0
    %p41 = por %p39, %p40
    %s43 = sadd.s32 %s42, 1
    %p46 = scmp.eq.s32.totalorder %s8, 1
    %p47 = scmp.ne.s32.totalorder %s42, %s44
    %p48 = scmp.eq.s32.totalorder %s8, 0
    %p49 = por %p47, %p48
    %p50 = scmp.ne.s32.totalorder %s42, %s44
    %p51 = scmp.eq.s32.totalorder %s13, 1
    %p52 = por %p50, %p51
    %p53 = scmp.ne.s32.totalorder %s44, %s45
    %p54 = scmp.eq.s32.totalorder %s13, 0
    %p55 = por %p53, %p54
    %p56 = scmp.ne.s32.totalorder %s44, %s45
    %p57 = scmp.eq.s32.totalorder %s14, 1
    %p58 = por %p56, %p57
    %p60 = scmp.ne.s32.totalorder %s45, %s59
    %p61 = scmp.eq.s32.totalorder %s14, 0
    %p62 = por %p60, %p61
    %s63 = ssub.s32 %s8, %s15
    %p64 = scmp.eq.s32.totalorder %s63, 0
    %s66 = sadd.s32 %s65, 1
    %s67 = scalar_select %p64, %s65, %s66
    %p70 = pneg %p64
    %p71 = scmp.eq.s32.totalorder %s8, 1
    %p72 = por %p70, %p71
    %p73 = scmp.ne.s32.totalorder %s65, %s68
    %p74 = scmp.eq.s32.totalorder %s8, 0
    %p75 = por %p73, %p74
    %p76 = scmp.ne.s32.totalorder %s65, %s68
    %p77 = scmp.eq.s32.totalorder %s13, 1
    %p78 = por %p76, %p77
    %p79 = scmp.ne.s32.totalorder %s68, %s69
    %p80 = scmp.eq.s32.totalorder %s13, 0
    %p81 = por %p79, %p80
    %p82 = scmp.ne.s32.totalorder %s68, %s69
    %p83 = scmp.eq.s32.totalorder %s14, 1
    %p84 = por %p82, %p83
    %p86 = scmp.ne.s32.totalorder %s69, %s85
    %p87 = scmp.eq.s32.totalorder %s14, 0
    %p88 = por %p86, %p87
    %p89 = scmp.le.s32.totalorder 1, %s8
    %p90 = scmp.lt.s32.totalorder %s8, 3
    %p91 = pnand %p89, %p90
    %p92 = pneg %p91
    // Predicated region
    $region9: #{_lambda_.46} parent=5 // pred_check
      _
    $region10: #{_lambda_.46} parent=5 // pred_check_branch
      %94 = sbr.rel (%p91) target = $region12
    $region11: #{_lambda_.46} parent=5 // pred_region
      %s95 = ssub.s32 %s8, 1
      // Predicated region
      $region13: #{_lambda_.46} parent=11 // pred_check
        %p96 = pneg %p55
      $region14: #{_lambda_.46} parent=11 // pred_check_branch
        %98 = sbr.rel (%p96) target = $region16
      $region15: #{_lambda_.46} parent=11 // pred_region
        _
      $region16: #{_lambda_.46} parent=11 // pred_fallthru
        _
    $region12: #{_lambda_.46} parent=5 // pred_fallthru
      _
    %p99 = scmp.lt.s32.totalorder %s8, 2
    // Predicated region
    $region17: #{_lambda_.46} parent=5 // pred_check
      %p100 = pneg %p99
    $region18: #{_lambda_.46} parent=5 // pred_check_branch
      %102 = sbr.rel (%p100) target = $region20
    $region19: #{_lambda_.46} parent=5 // pred_region
      // Predicated region
      $region21: #{_lambda_.46} parent=19 // pred_check
        %p103 = pneg %p28
      $region22: #{_lambda_.46} parent=19 // pred_check_branch
        %105 = sbr.rel (%p103) target = $region24
      $region23: #{_lambda_.46} parent=19 // pred_region
        %s106 = smul.u32 2, %s8
        %p107 = scmp.lt.s32.totalorder %s106, 3
        %s108 = scalar_select %p107, %s106, 3
        %s109 = smul.addr %s108, 4
        %s110 = scalar_lea.vmem %s0, %s109
        %s111 = smul.u32 2, %s8
      $region24: #{_lambda_.46} parent=19 // pred_fallthru
        _
    $region20: #{_lambda_.46} parent=5 // pred_fallthru
      _
    %p112 = scmp.le.s32.totalorder 1, %s8
    %p113 = scmp.lt.s32.totalorder %s8, 3
    %p114 = pnand %p112, %p113
    %p115 = pneg %p114
    // Predicated region
    $region25: #{_lambda_.46} parent=5 // pred_check
      _
    $region26: #{_lambda_.46} parent=5 // pred_check_branch
      %117 = sbr.rel (%p114) target = $region28
    $region27: #{_lambda_.46} parent=5 // pred_region
      %s118 = ssub.s32 %s8, 1
      %s119 = smul.u32 2, %s13
      %p120 = scmp.lt.s32.totalorder %s119, 3
      %s121 = scalar_select %p120, %s119, 3
      %s122 = smul.addr %s121, 4
      %s123 = scalar_lea.vmem %s0, %s122
      %p124 = pneg %p34
      %p125 = pneg %p31
      %p126 = pneg %p55
      %p127 = pneg %p52
      %p128 = pneg %p81
      %p129 = pneg %p78
      %s130 = smul.u32 2, %s13
      %p131 = scmp.lt.s32.totalorder %s130, 3
      %s132 = scalar_select %p131, %s130, 3
      %s133 = smul.addr %s132, 8
      %s134 = scalar_lea.vmem %s2, %s133
      %s135 = smul.u32 2, %s13
      %p136 = scmp.lt.s32.totalorder %s135, 3
      %s137 = scalar_select %p136, %s135, 3
      %s138 = smul.addr %s137, 4
      %s139 = scalar_lea.vmem %s0, %s138
      %s140 = smul.u32 2, %s13
      %s141 = smul.u32 2, %s13
      %p142 = scmp.lt.s32.totalorder %s141, 3
      %s143 = scalar_select %p142, %s141, 3
      %s144 = smul.addr %s143, 8
      %s145 = scalar_lea.vmem %s2, %s144
      %s146 = smul.u32 2, %s13
      %v148 = vld [vmem:[%s139] sm:$0xf]
      %v149 = vld [vmem:[%s139 + $0x4] sm:$0xf]
      %v150 = vld [vmem:[%s1] sm:$0xf]
      %v151 = vld [vmem:[%s1 + $0x4] sm:$0xf]
      %v152 = vld [vmem:[%s1 + $0x8] sm:$0xf]
      %v153 = vld [vmem:[%s1 + $0xc] sm:$0xf]
      %v154 = vld [vmem:[%s1 + $0x10] sm:$0xf]
      %v155 = vld [vmem:[%s1 + $0x14] sm:$0xf]
      %v156 = vld [vmem:[%s1 + $0x18] sm:$0xf]
      %v157 = vld [vmem:[%s1 + $0x1c] sm:$0xf]
      %v158 = vld [vmem:[%s1 + $0x20] sm:$0xf]
      %v161 = vunpack.c.l.b16 %v148
      %v162 = vunpack.c.l.b16 %v149
      %v163 = vpack.c.b16 %v162, %v161
      %v173 = vunpack.c.l.b16 %v150
      %v174 = vunpack.c.l.b16 %v151
      %v175 = vunpack.c.l.b16 %v152
      %v176 = vunpack.c.l.b16 %v153
      %v177 = vunpack.c.l.b16 %v154
      %v178 = vunpack.c.l.b16 %v155
      %v179 = vunpack.c.l.b16 %v156
      %v180 = vunpack.c.l.b16 %v157
      %v181 = vunpack.c.l.b16 %v158
      %v182 = vpack.c.b16 %v174, %v173
      %v183 = vpack.c.b16 %v176, %v175
      %v184 = vpack.c.b16 %v178, %v177
      %v185 = vpack.c.b16 %v180, %v179
      %v186 = vpack.c.b16 %v181, %v181
      %vm191 = vcmask 588800
      %v193 = vsel %vm191, %v163, 0
      %vm195 = vcmask 1043456
      %v197 = vsel %vm195, %v186, 0
      %199 = vmatprep.subr.bf16.mxu0 0
      %200 = vmatpush1.bf16.msra.mxu0 %v182
      %201 = vmatprep.subr.bf16.mxu0 0
      %202 = vmatpush1.bf16.msra.mxu0 %v183
      %203 = vmatprep.subr.bf16.mxu0 0
      %204 = vmatpush1.bf16.msra.mxu0 %v184
      %205 = vmatprep.subr.bf16.mxu0 0
      %206 = vmatpush1.bf16.msra.mxu0 %v185
      %207 = vmatprep.subr.bf16.mxu0 0
      %208 = vmatpush1.bf16.msra.mxu0 %v197
      %209 = vmatprep.subr.bf16.mxu0 0
      %210 = vmatpush1.bf16.msra.mxu0 0
      %211 = vmatprep.subr.bf16.mxu0 0
      %212 = vmatpush1.bf16.msra.mxu0 0
      %213 = vmatprep.subr.bf16.mxu0 0
      %214 = vmatpush1.bf16.msra.mxu0 0
      %215 = vmatprep.subr.bf16.mxu0 0
      %216 = vmatpush1.bf16.msra.mxu0 0
      %217 = vmatprep.subr.bf16.mxu0 0
      %218 = vmatpush1.bf16.msra.mxu0 0
      %219 = vmatprep.subr.bf16.mxu0 0
      %220 = vmatpush1.bf16.msra.mxu0 0
      %221 = vmatprep.subr.bf16.mxu0 0
      %222 = vmatpush1.bf16.msra.mxu0 0
      %223 = vmatprep.subr.bf16.mxu0 0
      %224 = vmatpush1.bf16.msra.mxu0 0
      %225 = vmatprep.subr.bf16.mxu0 0
      %226 = vmatpush1.bf16.msra.mxu0 0
      %227 = vmatprep.subr.bf16.mxu0 0
      %228 = vmatpush1.bf16.msra.mxu0 0
      %229 = vmatprep.subr.bf16.mxu0 0
      %230 = vmatpush1.bf16.msra.mxu0 0
      %231 = vmatprep.mubr.bf16.mxu0 0
      %232 = vmatmul.mubr.bf16.gmra.mrb[0].mxu0 %v193
      %v233 = vpop.f32.mrb[0].mxu0
      %v234 = vadd.f32 0.0, %v233
      %v235 = vpop.f32.mrb[0].mxu0
      %v236 = vpop.f32.mrb[0].mxu0
      %v237 = vadd.f32 0.0, %v236
      %v238 = vpop.f32.mrb[0].mxu0
      %239 = vdwg.mxu0
      %v240 = vmax.f32 %v234, 0.0
      %v241 = vmax.f32 %v237, 0.0
      %vm242 = vcmask 130048
      %243 = vst.msk [vmem:[%s145] sm:$0xff] %vm242, %v240
      %244 = vst.msk [vmem:[%s145 + $0x8] sm:$0xff] %vm242, %v241
      %s245 = smul.u32 2, %s13
      %p246 = scmp.lt.s32.totalorder %s245, 3
      %s247 = scalar_select %p246, %s245, 3
      %s248 = smul.addr %s247, 8
      %s249 = scalar_lea.vmem %s2, %s248
      // Predicated region
      $region29: #{_lambda_.46} parent=27 // pred_check
        %p250 = pneg %p78
      $region30: #{_lambda_.46} parent=27 // pred_check_branch
        %252 = sbr.rel (%p250) target = $region32
      $region31: #{_lambda_.46} parent=27 // pred_region
        %s253 = smul.u32 2, %s13
      $region32: #{_lambda_.46} parent=27 // pred_fallthru
        _
    $region28: #{_lambda_.46} parent=5 // pred_fallthru
      _
    %p254 = scmp.le.s32.totalorder 2, %s8
    // Predicated region
    $region33: #{_lambda_.46} parent=5 // pred_check
      %p255 = pneg %p254
    $region34: #{_lambda_.46} parent=5 // pred_check_branch
      %257 = sbr.rel (%p255) target = $region36
    $region35: #{_lambda_.46} parent=5 // pred_region
      %s258 = ssub.s32 %s8, 2
      // Predicated region
      $region37: #{_lambda_.46} parent=35 // pred_check
        %p259 = pneg %p84
      $region38: #{_lambda_.46} parent=35 // pred_check_branch
        %261 = sbr.rel (%p259) target = $region40
      $region39: #{_lambda_.46} parent=35 // pred_region
        %s262 = smul.u32 2, %s14
        %p263 = scmp.lt.s32.totalorder %s262, 3
        %s264 = scalar_select %p263, %s262, 3
        %s265 = smul.addr %s264, 8
        %s266 = scalar_lea.vmem %s2, %s265
      $region40: #{_lambda_.46} parent=35 // pred_fallthru
        _
    $region36: #{_lambda_.46} parent=5 // pred_fallthru
      _
  $region6: #{_lambda_.46} parent=0 // loop_footer
    %s12 = sadd.s32 1, %s8
  $region7: #{_lambda_.46} parent=0 // loop_footer_branch
    %7 = sbr.rel target = $region3
  $region8: #{_lambda_.46} parent=0 // loop_exit
    _

// kernel: _lambda_.49
$region0: #{_lambda_.49}
  #allocation0 [shape = 'u32[]', space=smem, size = 0x4, offset = 0x4, fixed_abs, tag = 'smem constant byte address 0x4 - core index']
  #allocation1 [shape = 'u32[144,128]{1,0:T(1,128)}', space=vmem, size = 0x12000, scoped, tag = 'internal scratch']
  %s0 = inlined_call_operand.vmem [shape: bf16[32,144], index: 0, kind: input, shape index: {}]
  %s1 = inlined_call_operand.vmem [shape: bf16[144,16], index: 1, kind: input, shape index: {}]
  %s2 = inlined_call_operand.vmem [shape: f32[32,16], index: 2, kind: output, shape index: {}]
  %s3 = sld [smem:[#allocation0]]
  $region41: #{_lambda_.49} parent=0
    _
  %s5 = ssub.s32 1, %s3
  %s6 = scalar_select 0, %s5, %s3
  loop: start=0, step=1, limit=4
  $region2: #{_lambda_.49} parent=0 // loop_pre_header
    _
  $region3: #{_lambda_.49} parent=0 // loop_header
    %s8 = sphi 0, %s12
    %p9 = scmp.ge.s32.totalorder %s8, 4
    %s18 = sphi 0, %s20
    %s21 = sphi 0, %s18
    %s22 = sphi 0, %s21
    %s38 = sphi 0, %s22
    %s42 = sphi 0, %s42
    %s44 = sphi 0, %s42
    %s45 = sphi 0, %s44
    %s59 = sphi 0, %s45
    %s65 = sphi 0, %s67
    %s68 = sphi 0, %s65
    %s69 = sphi 0, %s68
    %s85 = sphi 0, %s69
  $region4: #{_lambda_.49} parent=0 // loop_header_branch
    %11 = sbr.rel (%p9) target = $region8
  $region5: #{_lambda_.49} parent=0 // loop_body
    %s13 = ssub.s32 %s8, 1
    %s14 = ssub.s32 %s8, 2
    %s15 = sadd.s32 %s8, 1
    %s16 = ssub.s32 %s8, %s15
    %p17 = scmp.eq.s32.totalorder %s16, 0
    %s19 = sadd.s32 %s18, 1
    %s20 = scalar_select %p17, %s18, %s19
    %p23 = pneg %p17
    %p24 = scmp.eq.s32.totalorder %s8, 1
    %p25 = por %p23, %p24
    %p26 = scmp.ne.s32.totalorder %s18, %s21
    %p27 = scmp.eq.s32.totalorder %s8, 0
    %p28 = por %p26, %p27
    %p29 = scmp.ne.s32.totalorder %s18, %s21
    %p30 = scmp.eq.s32.totalorder %s13, 1
    %p31 = por %p29, %p30
    %p32 = scmp.ne.s32.totalorder %s21, %s22
    %p33 = scmp.eq.s32.totalorder %s13, 0
    %p34 = por %p32, %p33
    %p35 = scmp.ne.s32.totalorder %s21, %s22
    %p36 = scmp.eq.s32.totalorder %s14, 1
    %p37 = por %p35, %p36
    %p39 = scmp.ne.s32.totalorder %s22, %s38
    %p40 = scmp.eq.s32.totalorder %s14, 0
    %p41 = por %p39, %p40
    %s43 = sadd.s32 %s42, 1
    %p46 = scmp.eq.s32.totalorder %s8, 1
    %p47 = scmp.ne.s32.totalorder %s42, %s44
    %p48 = scmp.eq.s32.totalorder %s8, 0
    %p49 = por %p47, %p48
    %p50 = scmp.ne.s32.totalorder %s42, %s44
    %p51 = scmp.eq.s32.totalorder %s13, 1
    %p52 = por %p50, %p51
    %p53 = scmp.ne.s32.totalorder %s44, %s45
    %p54 = scmp.eq.s32.totalorder %s13, 0
    %p55 = por %p53, %p54
    %p56 = scmp.ne.s32.totalorder %s44, %s45
    %p57 = scmp.eq.s32.totalorder %s14, 1
    %p58 = por %p56, %p57
    %p60 = scmp.ne.s32.totalorder %s45, %s59
    %p61 = scmp.eq.s32.totalorder %s14, 0
    %p62 = por %p60, %p61
    %s63 = ssub.s32 %s8, %s15
    %p64 = scmp.eq.s32.totalorder %s63, 0
    %s66 = sadd.s32 %s65, 1
    %s67 = scalar_select %p64, %s65, %s66
    %p70 = pneg %p64
    %p71 = scmp.eq.s32.totalorder %s8, 1
    %p72 = por %p70, %p71
    %p73 = scmp.ne.s32.totalorder %s65, %s68
    %p74 = scmp.eq.s32.totalorder %s8, 0
    %p75 = por %p73, %p74
    %p76 = scmp.ne.s32.totalorder %s65, %s68
    %p77 = scmp.eq.s32.totalorder %s13, 1
    %p78 = por %p76, %p77
    %p79 = scmp.ne.s32.totalorder %s68, %s69
    %p80 = scmp.eq.s32.totalorder %s13, 0
    %p81 = por %p79, %p80
    %p82 = scmp.ne.s32.totalorder %s68, %s69
    %p83 = scmp.eq.s32.totalorder %s14, 1
    %p84 = por %p82, %p83
    %p86 = scmp.ne.s32.totalorder %s69, %s85
    %p87 = scmp.eq.s32.totalorder %s14, 0
    %p88 = por %p86, %p87
    %p89 = scmp.le.s32.totalorder 1, %s8
    %p90 = scmp.lt.s32.totalorder %s8, 3
    %p91 = pnand %p89, %p90
    %p92 = pneg %p91
    // Predicated region
    $region9: #{_lambda_.49} parent=5 // pred_check
      _
    $region10: #{_lambda_.49} parent=5 // pred_check_branch
      %94 = sbr.rel (%p91) target = $region12
    $region11: #{_lambda_.49} parent=5 // pred_region
      %s95 = ssub.s32 %s8, 1
      // Predicated region
      $region13: #{_lambda_.49} parent=11 // pred_check
        %p96 = pneg %p55
      $region14: #{_lambda_.49} parent=11 // pred_check_branch
        %98 = sbr.rel (%p96) target = $region16
      $region15: #{_lambda_.49} parent=11 // pred_region
        _
      $region16: #{_lambda_.49} parent=11 // pred_fallthru
        _
    $region12: #{_lambda_.49} parent=5 // pred_fallthru
      _
    %p99 = scmp.lt.s32.totalorder %s8, 2
    // Predicated region
    $region17: #{_lambda_.49} parent=5 // pred_check
      %p100 = pneg %p99
    $region18: #{_lambda_.49} parent=5 // pred_check_branch
      %102 = sbr.rel (%p100) target = $region20
    $region19: #{_lambda_.49} parent=5 // pred_region
      // Predicated region
      $region21: #{_lambda_.49} parent=19 // pred_check
        %p103 = pneg %p28
      $region22: #{_lambda_.49} parent=19 // pred_check_branch
        %105 = sbr.rel (%p103) target = $region24
      $region23: #{_lambda_.49} parent=19 // pred_region
        %s106 = smul.u32 2, %s8
        %p107 = scmp.lt.s32.totalorder %s106, 3
        %s108 = scalar_select %p107, %s106, 3
        %s109 = smul.addr %s108, 2
        %s110 = smul.addr %s109, 4
        %s111 = scalar_lea.vmem %s0, %s110
        %s112 = smul.u32 2, %s8
      $region24: #{_lambda_.49} parent=19 // pred_fallthru
        _
    $region20: #{_lambda_.49} parent=5 // pred_fallthru
      _
    %p113 = scmp.le.s32.totalorder 1, %s8
    %p114 = scmp.lt.s32.totalorder %s8, 3
    %p115 = pnand %p113, %p114
    %p116 = pneg %p115
    // Predicated region
    $region25: #{_lambda_.49} parent=5 // pred_check
      _
    $region26: #{_lambda_.49} parent=5 // pred_check_branch
      %118 = sbr.rel (%p115) target = $region28
    $region27: #{_lambda_.49} parent=5 // pred_region
      %s119 = ssub.s32 %s8, 1
      %s120 = smul.u32 2, %s13
      %p121 = scmp.lt.s32.totalorder %s120, 3
      %s122 = scalar_select %p121, %s120, 3
      %s123 = smul.addr %s122, 2
      %s124 = smul.addr %s123, 4
      %s125 = scalar_lea.vmem %s0, %s124
      %p126 = pneg %p34
      %p127 = pneg %p31
      %p128 = pneg %p55
      %p129 = pneg %p52
      %p130 = pneg %p81
      %p131 = pneg %p78
      %s132 = smul.u32 2, %s13
      %p133 = scmp.lt.s32.totalorder %s132, 3
      %s134 = scalar_select %p133, %s132, 3
      %s135 = smul.addr %s134, 8
      %s136 = scalar_lea.vmem %s2, %s135
      %s137 = smul.u32 2, %s13
      %p138 = scmp.lt.s32.totalorder %s137, 3
      %s139 = scalar_select %p138, %s137, 3
      %s140 = smul.addr %s139, 2
      %s141 = smul.addr %s140, 4
      %s142 = scalar_lea.vmem %s0, %s141
      %s143 = smul.u32 2, %s13
      %s144 = smul.u32 2, %s13
      %p145 = scmp.lt.s32.totalorder %s144, 3
      %s146 = scalar_select %p145, %s144, 3
      %s147 = smul.addr %s146, 8
      %s148 = scalar_lea.vmem %s2, %s147
      %s149 = smul.u32 2, %s13
      %v151 = vld [vmem:[%s142] sm:$0xff]
      %v152 = vld [vmem:[%s142 + $0x8] sm:$0xff]
      %v153 = vld [vmem:[%s1] sm:$0xf]
      %v154 = vld [vmem:[%s1 + $0x4] sm:$0xf]
      %v155 = vld [vmem:[%s1 + $0x8] sm:$0xf]
      %v156 = vld [vmem:[%s1 + $0xc] sm:$0xf]
      %v157 = vld [vmem:[%s1 + $0x10] sm:$0xf]
      %v158 = vld [vmem:[%s1 + $0x14] sm:$0xf]
      %v159 = vld [vmem:[%s1 + $0x18] sm:$0xf]
      %v160 = vld [vmem:[%s1 + $0x1c] sm:$0xf]
      %v161 = vld [vmem:[%s1 + $0x20] sm:$0xf]
      %v162 = vld [vmem:[%s1 + $0x24] sm:$0xf]
      %v163 = vld [vmem:[%s1 + $0x28] sm:$0xf]
      %v164 = vld [vmem:[%s1 + $0x2c] sm:$0xf]
      %v165 = vld [vmem:[%s1 + $0x30] sm:$0xf]
      %v166 = vld [vmem:[%s1 + $0x34] sm:$0xf]
      %v167 = vld [vmem:[%s1 + $0x38] sm:$0xf]
      %v168 = vld [vmem:[%s1 + $0x3c] sm:$0xf]
      %v169 = vld [vmem:[%s1 + $0x40] sm:$0xf]
      %v170 = vld [vmem:[%s1 + $0x44] sm:$0xf]
      %v173 = vunpack.c.l.b16 %v151
      %v174 = vunpack.c.h.b16 %v151
      %v175 = vunpack.c.l.b16 %v152
      %v176 = vunpack.c.h.b16 %v152
      %v177 = vpack.c.b16 %v175, %v173
      %v178 = vpack.c.b16 %v176, %v174
      %v198 = vunpack.c.l.b16 %v153
      %v199 = vunpack.c.l.b16 %v154
      %v200 = vunpack.c.l.b16 %v155
      %v201 = vunpack.c.l.b16 %v156
      %v202 = vunpack.c.l.b16 %v157
      %v203 = vunpack.c.l.b16 %v158
      %v204 = vunpack.c.l.b16 %v159
      %v205 = vunpack.c.l.b16 %v160
      %v206 = vunpack.c.l.b16 %v161
      %v207 = vunpack.c.l.b16 %v162
      %v208 = vunpack.c.l.b16 %v163
      %v209 = vunpack.c.l.b16 %v164
      %v210 = vunpack.c.l.b16 %v165
      %v211 = vunpack.c.l.b16 %v166
      %v212 = vunpack.c.l.b16 %v167
      %v213 = vunpack.c.l.b16 %v168
      %v214 = vunpack.c.l.b16 %v169
      %v215 = vunpack.c.l.b16 %v170
      %v216 = vpack.c.b16 %v199, %v198
      %v217 = vpack.c.b16 %v201, %v200
      %v218 = vpack.c.b16 %v203, %v202
      %v219 = vpack.c.b16 %v205, %v204
      %v220 = vpack.c.b16 %v207, %v206
      %v221 = vpack.c.b16 %v209, %v208
      %v222 = vpack.c.b16 %v211, %v210
      %v223 = vpack.c.b16 %v213, %v212
      %v224 = vpack.c.b16 %v215, %v214
      %vm234 = vcmask 130048
      %v236 = vsel %vm234, %v178, 0
      %238 = vmatprep.subr.bf16.mxu0 0
      %239 = vmatpush1.bf16.msra.mxu0 %v216
      %240 = vmatprep.subr.bf16.mxu0 0
      %241 = vmatpush1.bf16.msra.mxu0 %v217
      %242 = vmatprep.subr.bf16.mxu0 0
      %243 = vmatpush1.bf16.msra.mxu0 %v218
      %244 = vmatprep.subr.bf16.mxu0 0
      %245 = vmatpush1.bf16.msra.mxu0 %v219
      %246 = vmatprep.subr.bf16.mxu0 0
      %247 = vmatpush1.bf16.msra.mxu0 %v220
      %248 = vmatprep.subr.bf16.mxu0 0
      %249 = vmatpush1.bf16.msra.mxu0 %v221
      %250 = vmatprep.subr.bf16.mxu0 0
      %251 = vmatpush1.bf16.msra.mxu0 %v222
      %252 = vmatprep.subr.bf16.mxu0 0
      %253 = vmatpush1.bf16.msra.mxu0 %v223
      %254 = vmatprep.subr.bf16.mxu0 0
      %255 = vmatpush1.bf16.msra.mxu0 %v224
      %256 = vmatprep.subr.bf16.mxu0 0
      %257 = vmatpush1.bf16.msra.mxu0 0
      %258 = vmatprep.subr.bf16.mxu0 0
      %259 = vmatpush1.bf16.msra.mxu0 0
      %260 = vmatprep.subr.bf16.mxu0 0
      %261 = vmatpush1.bf16.msra.mxu0 0
      %262 = vmatprep.subr.bf16.mxu0 0
      %263 = vmatpush1.bf16.msra.mxu0 0
      %264 = vmatprep.subr.bf16.mxu0 0
      %265 = vmatpush1.bf16.msra.mxu0 0
      %266 = vmatprep.subr.bf16.mxu0 0
      %267 = vmatpush1.bf16.msra.mxu0 0
      %268 = vmatprep.subr.bf16.mxu0 0
      %269 = vmatpush1.bf16.msra.mxu0 0
      %270 = vmatprep.mubr.bf16.mxu0 %v236
      %271 = vmatmul.mubr.bf16.gmra.mrb[0].mxu0 %v177
      %v272 = vpop.f32.mrb[0].mxu0
      %v273 = vadd.f32 0.0, %v272
      %v274 = vpop.f32.mrb[0].mxu0
      %v275 = vpop.f32.mrb[0].mxu0
      %v276 = vadd.f32 0.0, %v275
      %v277 = vpop.f32.mrb[0].mxu0
      %278 = vdwg.mxu0
      %v279 = vmax.f32 %v273, 0.0
      %v280 = vmax.f32 %v276, 0.0
      %281 = vst.msk [vmem:[%s148] sm:$0xff] %vm234, %v279
      %282 = vst.msk [vmem:[%s148 + $0x8] sm:$0xff] %vm234, %v280
      %s283 = smul.u32 2, %s13
      %p284 = scmp.lt.s32.totalorder %s283, 3
      %s285 = scalar_select %p284, %s283, 3
      %s286 = smul.addr %s285, 8
      %s287 = scalar_lea.vmem %s2, %s286
      // Predicated region
      $region29: #{_lambda_.49} parent=27 // pred_check
        %p288 = pneg %p78
      $region30: #{_lambda_.49} parent=27 // pred_check_branch
        %290 = sbr.rel (%p288) target = $region32
      $region31: #{_lambda_.49} parent=27 // pred_region
        %s291 = smul.u32 2, %s13
      $region32: #{_lambda_.49} parent=27 // pred_fallthru
        _
    $region28: #{_lambda_.49} parent=5 // pred_fallthru
      _
    %p292 = scmp.le.s32.totalorder 2, %s8
    // Predicated region
    $region33: #{_lambda_.49} parent=5 // pred_check
      %p293 = pneg %p292
    $region34: #{_lambda_.49} parent=5 // pred_check_branch
      %295 = sbr.rel (%p293) target = $region36
    $region35: #{_lambda_.49} parent=5 // pred_region
      %s296 = ssub.s32 %s8, 2
      // Predicated region
      $region37: #{_lambda_.49} parent=35 // pred_check
        %p297 = pneg %p84
      $region38: #{_lambda_.49} parent=35 // pred_check_branch
        %299 = sbr.rel (%p297) target = $region40
      $region39: #{_lambda_.49} parent=35 // pred_region
        %s300 = smul.u32 2, %s14
        %p301 = scmp.lt.s32.totalorder %s300, 3
        %s302 = scalar_select %p301, %s300, 3
        %s303 = smul.addr %s302, 8
        %s304 = scalar_lea.vmem %s2, %s303
      $region40: #{_lambda_.49} parent=35 // pred_fallthru
        _
    $region36: #{_lambda_.49} parent=5 // pred_fallthru
      _
  $region6: #{_lambda_.49} parent=0 // loop_footer
    %s12 = sadd.s32 1, %s8
  $region7: #{_lambda_.49} parent=0 // loop_footer_branch
    %7 = sbr.rel target = $region3
  $region8: #{_lambda_.49} parent=0 // loop_exit
    _

// kernel: _lambda_.48
$region0: #{_lambda_.48}
  #allocation0 [shape = 'u32[]', space=smem, size = 0x4, offset = 0x4, fixed_abs, tag = 'smem constant byte address 0x4 - core index']
  #allocation1 [shape = 'u32[144,128]{1,0:T(1,128)}', space=vmem, size = 0x12000, scoped, tag = 'internal scratch']
  %s0 = inlined_call_operand.vmem [shape: bf16[32,144], index: 0, kind: input, shape index: {}]
  %s1 = inlined_call_operand.vmem [shape: bf16[144,16], index: 1, kind: input, shape index: {}]
  %s2 = inlined_call_operand.vmem [shape: f32[32,16], index: 2, kind: input, shape index: {}]
  %s3 = inlined_call_operand.vmem [shape: f32[32,16], index: 3, kind: output, shape index: {}]
  %s4 = sld [smem:[#allocation0]]
  $region45: #{_lambda_.48} parent=0
    _
  %s6 = ssub.s32 1, %s4
  %s7 = scalar_select 0, %s6, %s4
  loop: start=0, step=1, limit=4
  $region2: #{_lambda_.48} parent=0 // loop_pre_header
    _
  $region3: #{_lambda_.48} parent=0 // loop_header
    %s9 = sphi 0, %s13
    %p10 = scmp.ge.s32.totalorder %s9, 4
    %s19 = sphi 0, %s21
    %s22 = sphi 0, %s19
    %s23 = sphi 0, %s22
    %s39 = sphi 0, %s23
    %s43 = sphi 0, %s43
    %s45 = sphi 0, %s43
    %s46 = sphi 0, %s45
    %s60 = sphi 0, %s46
    %s66 = sphi 0, %s68
    %s69 = sphi 0, %s66
    %s70 = sphi 0, %s69
    %s86 = sphi 0, %s70
    %s92 = sphi 0, %s94
    %s95 = sphi 0, %s92
    %s96 = sphi 0, %s95
    %s112 = sphi 0, %s96
  $region4: #{_lambda_.48} parent=0 // loop_header_branch
    %12 = sbr.rel (%p10) target = $region8
  $region5: #{_lambda_.48} parent=0 // loop_body
    %s14 = ssub.s32 %s9, 1
    %s15 = ssub.s32 %s9, 2
    %s16 = sadd.s32 %s9, 1
    %s17 = ssub.s32 %s9, %s16
    %p18 = scmp.eq.s32.totalorder %s17, 0
    %s20 = sadd.s32 %s19, 1
    %s21 = scalar_select %p18, %s19, %s20
    %p24 = pneg %p18
    %p25 = scmp.eq.s32.totalorder %s9, 1
    %p26 = por %p24, %p25
    %p27 = scmp.ne.s32.totalorder %s19, %s22
    %p28 = scmp.eq.s32.totalorder %s9, 0
    %p29 = por %p27, %p28
    %p30 = scmp.ne.s32.totalorder %s19, %s22
    %p31 = scmp.eq.s32.totalorder %s14, 1
    %p32 = por %p30, %p31
    %p33 = scmp.ne.s32.totalorder %s22, %s23
    %p34 = scmp.eq.s32.totalorder %s14, 0
    %p35 = por %p33, %p34
    %p36 = scmp.ne.s32.totalorder %s22, %s23
    %p37 = scmp.eq.s32.totalorder %s15, 1
    %p38 = por %p36, %p37
    %p40 = scmp.ne.s32.totalorder %s23, %s39
    %p41 = scmp.eq.s32.totalorder %s15, 0
    %p42 = por %p40, %p41
    %s44 = sadd.s32 %s43, 1
    %p47 = scmp.eq.s32.totalorder %s9, 1
    %p48 = scmp.ne.s32.totalorder %s43, %s45
    %p49 = scmp.eq.s32.totalorder %s9, 0
    %p50 = por %p48, %p49
    %p51 = scmp.ne.s32.totalorder %s43, %s45
    %p52 = scmp.eq.s32.totalorder %s14, 1
    %p53 = por %p51, %p52
    %p54 = scmp.ne.s32.totalorder %s45, %s46
    %p55 = scmp.eq.s32.totalorder %s14, 0
    %p56 = por %p54, %p55
    %p57 = scmp.ne.s32.totalorder %s45, %s46
    %p58 = scmp.eq.s32.totalorder %s15, 1
    %p59 = por %p57, %p58
    %p61 = scmp.ne.s32.totalorder %s46, %s60
    %p62 = scmp.eq.s32.totalorder %s15, 0
    %p63 = por %p61, %p62
    %s64 = ssub.s32 %s9, %s16
    %p65 = scmp.eq.s32.totalorder %s64, 0
    %s67 = sadd.s32 %s66, 1
    %s68 = scalar_select %p65, %s66, %s67
    %p71 = pneg %p65
    %p72 = scmp.eq.s32.totalorder %s9, 1
    %p73 = por %p71, %p72
    %p74 = scmp.ne.s32.totalorder %s66, %s69
    %p75 = scmp.eq.s32.totalorder %s9, 0
    %p76 = por %p74, %p75
    %p77 = scmp.ne.s32.totalorder %s66, %s69
    %p78 = scmp.eq.s32.totalorder %s14, 1
    %p79 = por %p77, %p78
    %p80 = scmp.ne.s32.totalorder %s69, %s70
    %p81 = scmp.eq.s32.totalorder %s14, 0
    %p82 = por %p80, %p81
    %p83 = scmp.ne.s32.totalorder %s69, %s70
    %p84 = scmp.eq.s32.totalorder %s15, 1
    %p85 = por %p83, %p84
    %p87 = scmp.ne.s32.totalorder %s70, %s86
    %p88 = scmp.eq.s32.totalorder %s15, 0
    %p89 = por %p87, %p88
    %s90 = ssub.s32 %s9, %s16
    %p91 = scmp.eq.s32.totalorder %s90, 0
    %s93 = sadd.s32 %s92, 1
    %s94 = scalar_select %p91, %s92, %s93
    %p97 = pneg %p91
    %p98 = scmp.eq.s32.totalorder %s9, 1
    %p99 = por %p97, %p98
    %p100 = scmp.ne.s32.totalorder %s92, %s95
    %p101 = scmp.eq.s32.totalorder %s9, 0
    %p102 = por %p100, %p101
    %p103 = scmp.ne.s32.totalorder %s92, %s95
    %p104 = scmp.eq.s32.totalorder %s14, 1
    %p105 = por %p103, %p104
    %p106 = scmp.ne.s32.totalorder %s95, %s96
    %p107 = scmp.eq.s32.totalorder %s14, 0
    %p108 = por %p106, %p107
    %p109 = scmp.ne.s32.totalorder %s95, %s96
    %p110 = scmp.eq.s32.totalorder %s15, 1
    %p111 = por %p109, %p110
    %p113 = scmp.ne.s32.totalorder %s96, %s112
    %p114 = scmp.eq.s32.totalorder %s15, 0
    %p115 = por %p113, %p114
    %p116 = scmp.le.s32.totalorder 1, %s9
    %p117 = scmp.lt.s32.totalorder %s9, 3
    %p118 = pnand %p116, %p117
    %p119 = pneg %p118
    // Predicated region
    $region9: #{_lambda_.48} parent=5 // pred_check
      _
    $region10: #{_lambda_.48} parent=5 // pred_check_branch
      %121 = sbr.rel (%p118) target = $region12
    $region11: #{_lambda_.48} parent=5 // pred_region
      %s122 = ssub.s32 %s9, 1
      // Predicated region
      $region13: #{_lambda_.48} parent=11 // pred_check
        %p123 = pneg %p56
      $region14: #{_lambda_.48} parent=11 // pred_check_branch
        %125 = sbr.rel (%p123) target = $region16
      $region15: #{_lambda_.48} parent=11 // pred_region
        _
      $region16: #{_lambda_.48} parent=11 // pred_fallthru
        _
    $region12: #{_lambda_.48} parent=5 // pred_fallthru
      _
    %p126 = scmp.lt.s32.totalorder %s9, 2
    // Predicated region
    $region17: #{_lambda_.48} parent=5 // pred_check
      %p127 = pneg %p126
    $region18: #{_lambda_.48} parent=5 // pred_check_branch
      %129 = sbr.rel (%p127) target = $region20
    $region19: #{_lambda_.48} parent=5 // pred_region
      // Predicated region
      $region21: #{_lambda_.48} parent=19 // pred_check
        %p130 = pneg %p29
      $region22: #{_lambda_.48} parent=19 // pred_check_branch
        %132 = sbr.rel (%p130) target = $region24
      $region23: #{_lambda_.48} parent=19 // pred_region
        %s133 = smul.u32 2, %s9
        %p134 = scmp.lt.s32.totalorder %s133, 3
        %s135 = scalar_select %p134, %s133, 3
        %s136 = smul.addr %s135, 2
        %s137 = smul.addr %s136, 4
        %s138 = scalar_lea.vmem %s0, %s137
        %s139 = smul.u32 2, %s9
      $region24: #{_lambda_.48} parent=19 // pred_fallthru
        _
      // Predicated region
      $region25: #{_lambda_.48} parent=19 // pred_check
        %p140 = pneg %p76
      $region26: #{_lambda_.48} parent=19 // pred_check_branch
        %142 = sbr.rel (%p140) target = $region28
      $region27: #{_lambda_.48} parent=19 // pred_region
        %s143 = smul.u32 2, %s9
        %p144 = scmp.lt.s32.totalorder %s143, 3
        %s145 = scalar_select %p144, %s143, 3
        %s146 = smul.addr %s145, 8
        %s147 = scalar_lea.vmem %s2, %s146
        %s148 = smul.u32 2, %s9
      $region28: #{_lambda_.48} parent=19 // pred_fallthru
        _
    $region20: #{_lambda_.48} parent=5 // pred_fallthru
      _
    %p149 = scmp.le.s32.totalorder 1, %s9
    %p150 = scmp.lt.s32.totalorder %s9, 3
    %p151 = pnand %p149, %p150
    %p152 = pneg %p151
    // Predicated region
    $region29: #{_lambda_.48} parent=5 // pred_check
      _
    $region30: #{_lambda_.48} parent=5 // pred_check_branch
      %154 = sbr.rel (%p151) target = $region32
    $region31: #{_lambda_.48} parent=5 // pred_region
      %s155 = ssub.s32 %s9, 1
      %s156 = smul.u32 2, %s14
      %p157 = scmp.lt.s32.totalorder %s156, 3
      %s158 = scalar_select %p157, %s156, 3
      %s159 = smul.addr %s158, 2
      %s160 = smul.addr %s159, 4
      %s161 = scalar_lea.vmem %s0, %s160
      %p162 = pneg %p35
      %p163 = pneg %p32
      %p164 = pneg %p56
      %p165 = pneg %p53
      %s166 = smul.u32 2, %s14
      %p167 = scmp.lt.s32.totalorder %s166, 3
      %s168 = scalar_select %p167, %s166, 3
      %s169 = smul.addr %s168, 8
      %s170 = scalar_lea.vmem %s2, %s169
      %p171 = pneg %p82
      %p172 = pneg %p79
      %p173 = pneg %p108
      %p174 = pneg %p105
      %s175 = smul.u32 2, %s14
      %p176 = scmp.lt.s32.totalorder %s175, 3
      %s177 = scalar_select %p176, %s175, 3
      %s178 = smul.addr %s177, 8
      %s179 = scalar_lea.vmem %s3, %s178
      %s180 = smul.u32 2, %s14
      %p181 = scmp.lt.s32.totalorder %s180, 3
      %s182 = scalar_select %p181, %s180, 3
      %s183 = smul.addr %s182, 2
      %s184 = smul.addr %s183, 4
      %s185 = scalar_lea.vmem %s0, %s184
      %s186 = smul.u32 2, %s14
      %s187 = smul.u32 2, %s14
      %p188 = scmp.lt.s32.totalorder %s187, 3
      %s189 = scalar_select %p188, %s187, 3
      %s190 = smul.addr %s189, 8
      %s191 = scalar_lea.vmem %s2, %s190
      %s192 = smul.u32 2, %s14
      %s193 = smul.u32 2, %s14
      %p194 = scmp.lt.s32.totalorder %s193, 3
      %s195 = scalar_select %p194, %s193, 3
      %s196 = smul.addr %s195, 8
      %s197 = scalar_lea.vmem %s3, %s196
      %s198 = smul.u32 2, %s14
      %v200 = vld [vmem:[%s185] sm:$0xff]
      %v201 = vld [vmem:[%s185 + $0x8] sm:$0xff]
      %v202 = vld [vmem:[%s1] sm:$0xf]
      %v203 = vld [vmem:[%s1 + $0x4] sm:$0xf]
      %v204 = vld [vmem:[%s1 + $0x8] sm:$0xf]
      %v205 = vld [vmem:[%s1 + $0xc] sm:$0xf]
      %v206 = vld [vmem:[%s1 + $0x10] sm:$0xf]
      %v207 = vld [vmem:[%s1 + $0x14] sm:$0xf]
      %v208 = vld [vmem:[%s1 + $0x18] sm:$0xf]
      %v209 = vld [vmem:[%s1 + $0x1c] sm:$0xf]
      %v210 = vld [vmem:[%s1 + $0x20] sm:$0xf]
      %v211 = vld [vmem:[%s1 + $0x24] sm:$0xf]
      %v212 = vld [vmem:[%s1 + $0x28] sm:$0xf]
      %v213 = vld [vmem:[%s1 + $0x2c] sm:$0xf]
      %v214 = vld [vmem:[%s1 + $0x30] sm:$0xf]
      %v215 = vld [vmem:[%s1 + $0x34] sm:$0xf]
      %v216 = vld [vmem:[%s1 + $0x38] sm:$0xf]
      %v217 = vld [vmem:[%s1 + $0x3c] sm:$0xf]
      %v218 = vld [vmem:[%s1 + $0x40] sm:$0xf]
      %v219 = vld [vmem:[%s1 + $0x44] sm:$0xf]
      %v220 = vld [vmem:[%s191] sm:$0xff]
      %v221 = vld [vmem:[%s191 + $0x8] sm:$0xff]
      %v224 = vunpack.c.l.b16 %v200
      %v225 = vunpack.c.h.b16 %v200
      %v226 = vunpack.c.l.b16 %v201
      %v227 = vunpack.c.h.b16 %v201
      %v228 = vpack.c.b16 %v226, %v224
      %v229 = vpack.c.b16 %v227, %v225
      %v249 = vunpack.c.l.b16 %v202
      %v250 = vunpack.c.l.b16 %v203
      %v251 = vunpack.c.l.b16 %v204
      %v252 = vunpack.c.l.b16 %v205
      %v253 = vunpack.c.l.b16 %v206
      %v254 = vunpack.c.l.b16 %v207
      %v255 = vunpack.c.l.b16 %v208
      %v256 = vunpack.c.l.b16 %v209
      %v257 = vunpack.c.l.b16 %v210
      %v258 = vunpack.c.l.b16 %v211
      %v259 = vunpack.c.l.b16 %v212
      %v260 = vunpack.c.l.b16 %v213
      %v261 = vunpack.c.l.b16 %v214
      %v262 = vunpack.c.l.b16 %v215
      %v263 = vunpack.c.l.b16 %v216
      %v264 = vunpack.c.l.b16 %v217
      %v265 = vunpack.c.l.b16 %v218
      %v266 = vunpack.c.l.b16 %v219
      %v267 = vpack.c.b16 %v250, %v249
      %v268 = vpack.c.b16 %v252, %v251
      %v269 = vpack.c.b16 %v254, %v253
      %v270 = vpack.c.b16 %v256, %v255
      %v271 = vpack.c.b16 %v258, %v257
      %v272 = vpack.c.b16 %v260, %v259
      %v273 = vpack.c.b16 %v262, %v261
      %v274 = vpack.c.b16 %v264, %v263
      %v275 = vpack.c.b16 %v266, %v265
      %vm285 = vcmask 130048
      %v287 = vsel %vm285, %v229, 0
      %289 = vmatprep.subr.bf16.mxu0 0
      %290 = vmatpush1.bf16.msra.mxu0 %v267
      %291 = vmatprep.subr.bf16.mxu0 0
      %292 = vmatpush1.bf16.msra.mxu0 %v268
      %293 = vmatprep.subr.bf16.mxu0 0
      %294 = vmatpush1.bf16.msra.mxu0 %v269
      %295 = vmatprep.subr.bf16.mxu0 0
      %296 = vmatpush1.bf16.msra.mxu0 %v270
      %297 = vmatprep.subr.bf16.mxu0 0
      %298 = vmatpush1.bf16.msra.mxu0 %v271
      %299 = vmatprep.subr.bf16.mxu0 0
      %300 = vmatpush1.bf16.msra.mxu0 %v272
      %301 = vmatprep.subr.bf16.mxu0 0
      %302 = vmatpush1.bf16.msra.mxu0 %v273
      %303 = vmatprep.subr.bf16.mxu0 0
      %304 = vmatpush1.bf16.msra.mxu0 %v274
      %305 = vmatprep.subr.bf16.mxu0 0
      %306 = vmatpush1.bf16.msra.mxu0 %v275
      %307 = vmatprep.subr.bf16.mxu0 0
      %308 = vmatpush1.bf16.msra.mxu0 0
      %309 = vmatprep.subr.bf16.mxu0 0
      %310 = vmatpush1.bf16.msra.mxu0 0
      %311 = vmatprep.subr.bf16.mxu0 0
      %312 = vmatpush1.bf16.msra.mxu0 0
      %313 = vmatprep.subr.bf16.mxu0 0
      %314 = vmatpush1.bf16.msra.mxu0 0
      %315 = vmatprep.subr.bf16.mxu0 0
      %316 = vmatpush1.bf16.msra.mxu0 0
      %317 = vmatprep.subr.bf16.mxu0 0
      %318 = vmatpush1.bf16.msra.mxu0 0
      %319 = vmatprep.subr.bf16.mxu0 0
      %320 = vmatpush1.bf16.msra.mxu0 0
      %321 = vmatprep.mubr.bf16.mxu0 %v287
      %322 = vmatmul.mubr.bf16.gmra.mrb[0].mxu0 %v228
      %v323 = vpop.f32.mrb[0].mxu0
      %v324 = vadd.f32 %v220, %v323
      %v325 = vpop.f32.mrb[0].mxu0
      %v326 = vpop.f32.mrb[0].mxu0
      %v327 = vadd.f32 %v221, %v326
      %v328 = vpop.f32.mrb[0].mxu0
      %329 = vdwg.mxu0
      %v330 = vmax.f32 %v324, 0.0
      %v331 = vmax.f32 %v327, 0.0
      %332 = vst.msk [vmem:[%s197] sm:$0xff] %vm285, %v330
      %333 = vst.msk [vmem:[%s197 + $0x8] sm:$0xff] %vm285, %v331
      %s334 = smul.u32 2, %s14
      %p335 = scmp.lt.s32.totalorder %s334, 3
      %s336 = scalar_select %p335, %s334, 3
      %s337 = smul.addr %s336, 8
      %s338 = scalar_lea.vmem %s3, %s337
      // Predicated region
      $region33: #{_lambda_.48} parent=31 // pred_check
        %p339 = pneg %p105
      $region34: #{_lambda_.48} parent=31 // pred_check_branch
        %341 = sbr.rel (%p339) target = $region36
      $region35: #{_lambda_.48} parent=31 // pred_region
        %s342 = smul.u32 2, %s14
      $region36: #{_lambda_.48} parent=31 // pred_fallthru
        _
    $region32: #{_lambda_.48} parent=5 // pred_fallthru
      _
    %p343 = scmp.le.s32.totalorder 2, %s9
    // Predicated region
    $region37: #{_lambda_.48} parent=5 // pred_check
      %p344 = pneg %p343
    $region38: #{_lambda_.48} parent=5 // pred_check_branch
      %346 = sbr.rel (%p344) target = $region40
    $region39: #{_lambda_.48} parent=5 // pred_region
      %s347 = ssub.s32 %s9, 2
      // Predicated region
      $region41: #{_lambda_.48} parent=39 // pred_check
        %p348 = pneg %p111
      $region42: #{_lambda_.48} parent=39 // pred_check_branch
        %350 = sbr.rel (%p348) target = $region44
      $region43: #{_lambda_.48} parent=39 // pred_region
        %s351 = smul.u32 2, %s15
        %p352 = scmp.lt.s32.totalorder %s351, 3
        %s353 = scalar_select %p352, %s351, 3
        %s354 = smul.addr %s353, 8
        %s355 = scalar_lea.vmem %s3, %s354
      $region44: #{_lambda_.48} parent=39 // pred_fallthru
        _
    $region40: #{_lambda_.48} parent=5 // pred_fallthru
      _
  $region6: #{_lambda_.48} parent=0 // loop_footer
    %s13 = sadd.s32 1, %s9
  $region7: #{_lambda_.48} parent=0 // loop_footer_branch
    %8 = sbr.rel target = $region3
  $region8: #{_lambda_.48} parent=0 // loop_exit
    _

// kernel: _lambda_.52
$region0: #{_lambda_.52}
  #allocation0 [shape = 'u32[]', space=smem, size = 0x4, offset = 0x4, fixed_abs, tag = 'smem constant byte address 0x4 - core index']
  #allocation1 [shape = 'u32[144,128]{1,0:T(1,128)}', space=vmem, size = 0x12000, scoped, tag = 'internal scratch']
  %s0 = inlined_call_operand.vmem [shape: bf16[8,16], index: 0, kind: input, shape index: {}]
  %s1 = inlined_call_operand.vmem [shape: bf16[16,32], index: 1, kind: input, shape index: {}]
  %s2 = inlined_call_operand.vmem [shape: f32[8,32], index: 2, kind: output, shape index: {}]
  %s3 = sld [smem:[#allocation0]]
  $region18: #{_lambda_.52} parent=0
    _
  %s5 = ssub.s32 1, %s3
  %s6 = scalar_select 0, %s5, %s3
  // Predicated region
  $region2: #{_lambda_.52} parent=0 // pred_check
    _
  $region3: #{_lambda_.52} parent=0 // pred_check_branch
    %8 = sbr.rel (0) target = $region5
  $region4: #{_lambda_.52} parent=0 // pred_region
    _
  $region5: #{_lambda_.52} parent=0 // pred_fallthru
    _
  // Predicated region
  $region6: #{_lambda_.52} parent=0 // pred_check
    _
  $region7: #{_lambda_.52} parent=0 // pred_check_branch
    %10 = sbr.rel (0) target = $region9
  $region8: #{_lambda_.52} parent=0 // pred_region
    _
  $region9: #{_lambda_.52} parent=0 // pred_fallthru
    _
  %v12 = vld [vmem:[%s0] sm:$0xf]
  %v13 = vld [vmem:[%s1] sm:$0xf]
  %v14 = vld [vmem:[%s1 + $0x4] sm:$0xf]
  %v17 = vunpack.c.l.b16 %v13
  %v18 = vunpack.c.l.b16 %v14
  %v19 = vpack.c.b16 %v18, %v17
  %vm21 = vcmask 130048
  %v23 = vsel %vm21, %v12, 0
  %25 = vmatprep.subr.bf16.mxu0 0
  %26 = vmatpush1.bf16.msra.mxu0 %v19
  %27 = vmatprep.subr.bf16.mxu0 0
  %28 = vmatpush1.bf16.msra.mxu0 0
  %29 = vmatprep.subr.bf16.mxu0 0
  %30 = vmatpush1.bf16.msra.mxu0 0
  %31 = vmatprep.subr.bf16.mxu0 0
  %32 = vmatpush1.bf16.msra.mxu0 0
  %33 = vmatprep.subr.bf16.mxu0 0
  %34 = vmatpush1.bf16.msra.mxu0 0
  %35 = vmatprep.subr.bf16.mxu0 0
  %36 = vmatpush1.bf16.msra.mxu0 0
  %37 = vmatprep.subr.bf16.mxu0 0
  %38 = vmatpush1.bf16.msra.mxu0 0
  %39 = vmatprep.subr.bf16.mxu0 0
  %40 = vmatpush1.bf16.msra.mxu0 0
  %41 = vmatprep.subr.bf16.mxu0 0
  %42 = vmatpush1.bf16.msra.mxu0 0
  %43 = vmatprep.subr.bf16.mxu0 0
  %44 = vmatpush1.bf16.msra.mxu0 0
  %45 = vmatprep.subr.bf16.mxu0 0
  %46 = vmatpush1.bf16.msra.mxu0 0
  %47 = vmatprep.subr.bf16.mxu0 0
  %48 = vmatpush1.bf16.msra.mxu0 0
  %49 = vmatprep.subr.bf16.mxu0 0
  %50 = vmatpush1.bf16.msra.mxu0 0
  %51 = vmatprep.subr.bf16.mxu0 0
  %52 = vmatpush1.bf16.msra.mxu0 0
  %53 = vmatprep.subr.bf16.mxu0 0
  %54 = vmatpush1.bf16.msra.mxu0 0
  %55 = vmatprep.subr.bf16.mxu0 0
  %56 = vmatpush1.bf16.msra.mxu0 0
  %57 = vmatprep.mubr.bf16.mxu0 0
  %58 = vmatmul.mubr.bf16.gmra.mrb[0].mxu0 %v23
  %v59 = vpop.f32.mrb[0].mxu0
  %v60 = vadd.f32 0.0, %v59
  %v61 = vpop.f32.mrb[0].mxu0
  %v62 = vpop.f32.mrb[0].mxu0
  %v63 = vpop.f32.mrb[0].mxu0
  %64 = vdwg.mxu0
  %vm65 = vcmask 261120
  %66 = vst.msk [vmem:[%s2] sm:$0xff] %vm65, %v60
  // Predicated region
  $region10: #{_lambda_.52} parent=0 // pred_check
    _
  $region11: #{_lambda_.52} parent=0 // pred_check_branch
    %68 = sbr.rel (0) target = $region13
  $region12: #{_lambda_.52} parent=0 // pred_region
    _
  $region13: #{_lambda_.52} parent=0 // pred_fallthru
    _
  // Predicated region
  $region14: #{_lambda_.52} parent=0 // pred_check
    _
  $region15: #{_lambda_.52} parent=0 // pred_check_branch
    %70 = sbr.rel (0) target = $region17
  $region16: #{_lambda_.52} parent=0 // pred_region
    _
  $region17: #{_lambda_.52} parent=0 // pred_fallthru
    _

// kernel: _lambda_.51
$region0: #{_lambda_.51}
  #allocation0 [shape = 'u32[]', space=smem, size = 0x4, offset = 0x4, fixed_abs, tag = 'smem constant byte address 0x4 - core index']
  #allocation1 [shape = 'u32[144,128]{1,0:T(1,128)}', space=vmem, size = 0x12000, scoped, tag = 'internal scratch']
  %s0 = inlined_call_operand.vmem [shape: bf16[8,144], index: 0, kind: input, shape index: {}]
  %s1 = inlined_call_operand.vmem [shape: bf16[144,32], index: 1, kind: input, shape index: {}]
  %s2 = inlined_call_operand.vmem [shape: f32[8,32], index: 2, kind: output, shape index: {}]
  %s3 = sld [smem:[#allocation0]]
  $region18: #{_lambda_.51} parent=0
    _
  %s5 = ssub.s32 1, %s3
  %s6 = scalar_select 0, %s5, %s3
  // Predicated region
  $region2: #{_lambda_.51} parent=0 // pred_check
    _
  $region3: #{_lambda_.51} parent=0 // pred_check_branch
    %8 = sbr.rel (0) target = $region5
  $region4: #{_lambda_.51} parent=0 // pred_region
    _
  $region5: #{_lambda_.51} parent=0 // pred_fallthru
    _
  // Predicated region
  $region6: #{_lambda_.51} parent=0 // pred_check
    _
  $region7: #{_lambda_.51} parent=0 // pred_check_branch
    %10 = sbr.rel (0) target = $region9
  $region8: #{_lambda_.51} parent=0 // pred_region
    _
  $region9: #{_lambda_.51} parent=0 // pred_fallthru
    _
  %v12 = vld [vmem:[%s0] sm:$0xff]
  %v13 = vld [vmem:[%s1] sm:$0xf]
  %v14 = vld [vmem:[%s1 + $0x4] sm:$0xf]
  %v15 = vld [vmem:[%s1 + $0x8] sm:$0xf]
  %v16 = vld [vmem:[%s1 + $0xc] sm:$0xf]
  %v17 = vld [vmem:[%s1 + $0x10] sm:$0xf]
  %v18 = vld [vmem:[%s1 + $0x14] sm:$0xf]
  %v19 = vld [vmem:[%s1 + $0x18] sm:$0xf]
  %v20 = vld [vmem:[%s1 + $0x1c] sm:$0xf]
  %v21 = vld [vmem:[%s1 + $0x20] sm:$0xf]
  %v22 = vld [vmem:[%s1 + $0x24] sm:$0xf]
  %v23 = vld [vmem:[%s1 + $0x28] sm:$0xf]
  %v24 = vld [vmem:[%s1 + $0x2c] sm:$0xf]
  %v25 = vld [vmem:[%s1 + $0x30] sm:$0xf]
  %v26 = vld [vmem:[%s1 + $0x34] sm:$0xf]
  %v27 = vld [vmem:[%s1 + $0x38] sm:$0xf]
  %v28 = vld [vmem:[%s1 + $0x3c] sm:$0xf]
  %v29 = vld [vmem:[%s1 + $0x40] sm:$0xf]
  %v30 = vld [vmem:[%s1 + $0x44] sm:$0xf]
  %v32 = vunpack.c.l.b16 %v12
  %v33 = vunpack.c.h.b16 %v12
  %v34 = vpack.c.b16 %v32, %v32
  %v35 = vpack.c.b16 %v33, %v33
  %v55 = vunpack.c.l.b16 %v13
  %v56 = vunpack.c.l.b16 %v14
  %v57 = vunpack.c.l.b16 %v15
  %v58 = vunpack.c.l.b16 %v16
  %v59 = vunpack.c.l.b16 %v17
  %v60 = vunpack.c.l.b16 %v18
  %v61 = vunpack.c.l.b16 %v19
  %v62 = vunpack.c.l.b16 %v20
  %v63 = vunpack.c.l.b16 %v21
  %v64 = vunpack.c.l.b16 %v22
  %v65 = vunpack.c.l.b16 %v23
  %v66 = vunpack.c.l.b16 %v24
  %v67 = vunpack.c.l.b16 %v25
  %v68 = vunpack.c.l.b16 %v26
  %v69 = vunpack.c.l.b16 %v27
  %v70 = vunpack.c.l.b16 %v28
  %v71 = vunpack.c.l.b16 %v29
  %v72 = vunpack.c.l.b16 %v30
  %v73 = vpack.c.b16 %v56, %v55
  %v74 = vpack.c.b16 %v58, %v57
  %v75 = vpack.c.b16 %v60, %v59
  %v76 = vpack.c.b16 %v62, %v61
  %v77 = vpack.c.b16 %v64, %v63
  %v78 = vpack.c.b16 %v66, %v65
  %v79 = vpack.c.b16 %v68, %v67
  %v80 = vpack.c.b16 %v70, %v69
  %v81 = vpack.c.b16 %v72, %v71
  %vm91 = vcmask 130048
  %v93 = vsel %vm91, %v35, 0
  %95 = vmatprep.subr.bf16.mxu0 0
  %96 = vmatpush1.bf16.msra.mxu0 %v73
  %97 = vmatprep.subr.bf16.mxu0 0
  %98 = vmatpush1.bf16.msra.mxu0 %v74
  %99 = vmatprep.subr.bf16.mxu0 0
  %100 = vmatpush1.bf16.msra.mxu0 %v75
  %101 = vmatprep.subr.bf16.mxu0 0
  %102 = vmatpush1.bf16.msra.mxu0 %v76
  %103 = vmatprep.subr.bf16.mxu0 0
  %104 = vmatpush1.bf16.msra.mxu0 %v77
  %105 = vmatprep.subr.bf16.mxu0 0
  %106 = vmatpush1.bf16.msra.mxu0 %v78
  %107 = vmatprep.subr.bf16.mxu0 0
  %108 = vmatpush1.bf16.msra.mxu0 %v79
  %109 = vmatprep.subr.bf16.mxu0 0
  %110 = vmatpush1.bf16.msra.mxu0 %v80
  %111 = vmatprep.subr.bf16.mxu0 0
  %112 = vmatpush1.bf16.msra.mxu0 %v81
  %113 = vmatprep.subr.bf16.mxu0 0
  %114 = vmatpush1.bf16.msra.mxu0 0
  %115 = vmatprep.subr.bf16.mxu0 0
  %116 = vmatpush1.bf16.msra.mxu0 0
  %117 = vmatprep.subr.bf16.mxu0 0
  %118 = vmatpush1.bf16.msra.mxu0 0
  %119 = vmatprep.subr.bf16.mxu0 0
  %120 = vmatpush1.bf16.msra.mxu0 0
  %121 = vmatprep.subr.bf16.mxu0 0
  %122 = vmatpush1.bf16.msra.mxu0 0
  %123 = vmatprep.subr.bf16.mxu0 0
  %124 = vmatpush1.bf16.msra.mxu0 0
  %125 = vmatprep.subr.bf16.mxu0 0
  %126 = vmatpush1.bf16.msra.mxu0 0
  %127 = vmatprep.mubr.bf16.mxu0 %v93
  %128 = vmatmul.mubr.bf16.gmra.mrb[0].mxu0 %v34
  %v129 = vpop.f32.mrb[0].mxu0
  %v130 = vadd.f32 0.0, %v129
  %v131 = vpop.f32.mrb[0].mxu0
  %v132 = vpop.f32.mrb[0].mxu0
  %v133 = vpop.f32.mrb[0].mxu0
  %134 = vdwg.mxu0
  %v135 = vmax.f32 %v130, 0.0
  %vm136 = vcmask 261120
  %137 = vst.msk [vmem:[%s2] sm:$0xff] %vm136, %v135
  // Predicated region
  $region10: #{_lambda_.51} parent=0 // pred_check
    _
  $region11: #{_lambda_.51} parent=0 // pred_check_branch
    %139 = sbr.rel (0) target = $region13
  $region12: #{_lambda_.51} parent=0 // pred_region
    _
  $region13: #{_lambda_.51} parent=0 // pred_fallthru
    _
  // Predicated region
  $region14: #{_lambda_.51} parent=0 // pred_check
    _
  $region15: #{_lambda_.51} parent=0 // pred_check_branch
    %141 = sbr.rel (0) target = $region17
  $region16: #{_lambda_.51} parent=0 // pred_region
    _
  $region17: #{_lambda_.51} parent=0 // pred_fallthru
    _

// kernel: _lambda_.54
$region0: #{_lambda_.54}
  #allocation0 [shape = 'u32[]', space=smem, size = 0x4, offset = 0x4, fixed_abs, tag = 'smem constant byte address 0x4 - core index']
  #allocation1 [shape = 'u32[144,128]{1,0:T(1,128)}', space=vmem, size = 0x12000, scoped, tag = 'internal scratch']
  %s0 = inlined_call_operand.vmem [shape: bf16[8,288], index: 0, kind: input, shape index: {}]
  %s1 = inlined_call_operand.vmem [shape: bf16[288,32], index: 1, kind: input, shape index: {}]
  %s2 = inlined_call_operand.vmem [shape: f32[8,32], index: 2, kind: output, shape index: {}]
  %s3 = sld [smem:[#allocation0]]
  $region18: #{_lambda_.54} parent=0
    _
  %s5 = ssub.s32 1, %s3
  %s6 = scalar_select 0, %s5, %s3
  // Predicated region
  $region2: #{_lambda_.54} parent=0 // pred_check
    _
  $region3: #{_lambda_.54} parent=0 // pred_check_branch
    %8 = sbr.rel (0) target = $region5
  $region4: #{_lambda_.54} parent=0 // pred_region
    _
  $region5: #{_lambda_.54} parent=0 // pred_fallthru
    _
  // Predicated region
  $region6: #{_lambda_.54} parent=0 // pred_check
    _
  $region7: #{_lambda_.54} parent=0 // pred_check_branch
    %10 = sbr.rel (0) target = $region9
  $region8: #{_lambda_.54} parent=0 // pred_region
    _
  $region9: #{_lambda_.54} parent=0 // pred_fallthru
    _
  %v12 = vld [vmem:[%s0] sm:$0xff]
  %v13 = vld [vmem:[%s0 + $0x8] sm:$0xf]
  %v14 = vld [vmem:[%s1] sm:$0xf]
  %v15 = vld [vmem:[%s1 + $0x4] sm:$0xf]
  %v16 = vld [vmem:[%s1 + $0x8] sm:$0xf]
  %v17 = vld [vmem:[%s1 + $0xc] sm:$0xf]
  %v18 = vld [vmem:[%s1 + $0x10] sm:$0xf]
  %v19 = vld [vmem:[%s1 + $0x14] sm:$0xf]
  %v20 = vld [vmem:[%s1 + $0x18] sm:$0xf]
  %v21 = vld [vmem:[%s1 + $0x1c] sm:$0xf]
  %v22 = vld [vmem:[%s1 + $0x20] sm:$0xf]
  %v23 = vld [vmem:[%s1 + $0x24] sm:$0xf]
  %v24 = vld [vmem:[%s1 + $0x28] sm:$0xf]
  %v25 = vld [vmem:[%s1 + $0x2c] sm:$0xf]
  %v26 = vld [vmem:[%s1 + $0x30] sm:$0xf]
  %v27 = vld [vmem:[%s1 + $0x34] sm:$0xf]
  %v28 = vld [vmem:[%s1 + $0x38] sm:$0xf]
  %v29 = vld [vmem:[%s1 + $0x3c] sm:$0xf]
  %v30 = vld [vmem:[%s1 + $0x40] sm:$0xf]
  %v31 = vld [vmem:[%s1 + $0x44] sm:$0xf]
  %v32 = vld [vmem:[%s1 + $0x48] sm:$0xf]
  %v33 = vld [vmem:[%s1 + $0x4c] sm:$0xf]
  %v34 = vld [vmem:[%s1 + $0x50] sm:$0xf]
  %v35 = vld [vmem:[%s1 + $0x54] sm:$0xf]
  %v36 = vld [vmem:[%s1 + $0x58] sm:$0xf]
  %v37 = vld [vmem:[%s1 + $0x5c] sm:$0xf]
  %v38 = vld [vmem:[%s1 + $0x60] sm:$0xf]
  %v39 = vld [vmem:[%s1 + $0x64] sm:$0xf]
  %v40 = vld [vmem:[%s1 + $0x68] sm:$0xf]
  %v41 = vld [vmem:[%s1 + $0x6c] sm:$0xf]
  %v42 = vld [vmem:[%s1 + $0x70] sm:$0xf]
  %v43 = vld [vmem:[%s1 + $0x74] sm:$0xf]
  %v44 = vld [vmem:[%s1 + $0x78] sm:$0xf]
  %v45 = vld [vmem:[%s1 + $0x7c] sm:$0xf]
  %v46 = vld [vmem:[%s1 + $0x80] sm:$0xf]
  %v47 = vld [vmem:[%s1 + $0x84] sm:$0xf]
  %v48 = vld [vmem:[%s1 + $0x88] sm:$0xf]
  %v49 = vld [vmem:[%s1 + $0x8c] sm:$0xf]
  %v52 = vunpack.c.l.b16 %v12
  %v53 = vunpack.c.h.b16 %v12
  %v54 = vunpack.c.l.b16 %v13
  %v55 = vpack.c.b16 %v52, %v52
  %v56 = vpack.c.b16 %v53, %v53
  %v57 = vpack.c.b16 %v54, %v54
  %v96 = vunpack.c.l.b16 %v14
  %v97 = vunpack.c.l.b16 %v15
  %v98 = vunpack.c.l.b16 %v16
  %v99 = vunpack.c.l.b16 %v17
  %v100 = vunpack.c.l.b16 %v18
  %v101 = vunpack.c.l.b16 %v19
  %v102 = vunpack.c.l.b16 %v20
  %v103 = vunpack.c.l.b16 %v21
  %v104 = vunpack.c.l.b16 %v22
  %v105 = vunpack.c.l.b16 %v23
  %v106 = vunpack.c.l.b16 %v24
  %v107 = vunpack.c.l.b16 %v25
  %v108 = vunpack.c.l.b16 %v26
  %v109 = vunpack.c.l.b16 %v27
  %v110 = vunpack.c.l.b16 %v28
  %v111 = vunpack.c.l.b16 %v29
  %v112 = vunpack.c.l.b16 %v30
  %v113 = vunpack.c.l.b16 %v31
  %v114 = vunpack.c.l.b16 %v32
  %v115 = vunpack.c.l.b16 %v33
  %v116 = vunpack.c.l.b16 %v34
  %v117 = vunpack.c.l.b16 %v35
  %v118 = vunpack.c.l.b16 %v36
  %v119 = vunpack.c.l.b16 %v37
  %v120 = vunpack.c.l.b16 %v38
  %v121 = vunpack.c.l.b16 %v39
  %v122 = vunpack.c.l.b16 %v40
  %v123 = vunpack.c.l.b16 %v41
  %v124 = vunpack.c.l.b16 %v42
  %v125 = vunpack.c.l.b16 %v43
  %v126 = vunpack.c.l.b16 %v44
  %v127 = vunpack.c.l.b16 %v45
  %v128 = vunpack.c.l.b16 %v46
  %v129 = vunpack.c.l.b16 %v47
  %v130 = vunpack.c.l.b16 %v48
  %v131 = vunpack.c.l.b16 %v49
  %v132 = vpack.c.b16 %v97, %v96
  %v133 = vpack.c.b16 %v99, %v98
  %v134 = vpack.c.b16 %v101, %v100
  %v135 = vpack.c.b16 %v103, %v102
  %v136 = vpack.c.b16 %v105, %v104
  %v137 = vpack.c.b16 %v107, %v106
  %v138 = vpack.c.b16 %v109, %v108
  %v139 = vpack.c.b16 %v111, %v110
  %v140 = vpack.c.b16 %v113, %v112
  %v141 = vpack.c.b16 %v115, %v114
  %v142 = vpack.c.b16 %v117, %v116
  %v143 = vpack.c.b16 %v119, %v118
  %v144 = vpack.c.b16 %v121, %v120
  %v145 = vpack.c.b16 %v123, %v122
  %v146 = vpack.c.b16 %v125, %v124
  %v147 = vpack.c.b16 %v127, %v126
  %v148 = vpack.c.b16 %v129, %v128
  %v149 = vpack.c.b16 %v131, %v130
  %vm168 = vcmask 261120
  %v170 = vsel %vm168, %v57, 0
  %172 = vmatprep.subr.bf16.mxu0 0
  %173 = vmatpush1.bf16.msra.mxu0 %v132
  %174 = vmatprep.subr.bf16.mxu0 0
  %175 = vmatpush1.bf16.msra.mxu0 %v133
  %176 = vmatprep.subr.bf16.mxu0 0
  %177 = vmatpush1.bf16.msra.mxu0 %v134
  %178 = vmatprep.subr.bf16.mxu0 0
  %179 = vmatpush1.bf16.msra.mxu0 %v135
  %180 = vmatprep.subr.bf16.mxu0 0
  %181 = vmatpush1.bf16.msra.mxu0 %v136
  %182 = vmatprep.subr.bf16.mxu0 0
  %183 = vmatpush1.bf16.msra.mxu0 %v137
  %184 = vmatprep.subr.bf16.mxu0 0
  %185 = vmatpush1.bf16.msra.mxu0 %v138
  %186 = vmatprep.subr.bf16.mxu0 0
  %187 = vmatpush1.bf16.msra.mxu0 %v139
  %188 = vmatprep.subr.bf16.mxu0 0
  %189 = vmatpush1.bf16.msra.mxu0 %v140
  %190 = vmatprep.subr.bf16.mxu0 0
  %191 = vmatpush1.bf16.msra.mxu0 %v141
  %192 = vmatprep.subr.bf16.mxu0 0
  %193 = vmatpush1.bf16.msra.mxu0 %v142
  %194 = vmatprep.subr.bf16.mxu0 0
  %195 = vmatpush1.bf16.msra.mxu0 %v143
  %196 = vmatprep.subr.bf16.mxu0 0
  %197 = vmatpush1.bf16.msra.mxu0 %v144
  %198 = vmatprep.subr.bf16.mxu0 0
  %199 = vmatpush1.bf16.msra.mxu0 %v145
  %200 = vmatprep.subr.bf16.mxu0 0
  %201 = vmatpush1.bf16.msra.mxu0 %v146
  %202 = vmatprep.subr.bf16.mxu0 0
  %203 = vmatpush1.bf16.msra.mxu0 %v147
  %204 = vmatprep.mubr.bf16.mxu0 %v56
  %205 = vmatmul.mubr.bf16.gmra.mrb[0].mxu0 %v55
  %v206 = vpop.f32.mrb[0].mxu0
  %v207 = vadd.f32 0.0, %v206
  %v208 = vpop.f32.mrb[0].mxu0
  %v209 = vpop.f32.mrb[0].mxu0
  %v210 = vpop.f32.mrb[0].mxu0
  %211 = vdwg.mxu0
  %212 = vmatprep.subr.bf16.mxu0 0
  %213 = vmatpush1.bf16.msra.mxu0 %v148
  %214 = vmatprep.subr.bf16.mxu0 0
  %215 = vmatpush1.bf16.msra.mxu0 %v149
  %216 = vmatprep.subr.bf16.mxu0 0
  %217 = vmatpush1.bf16.msra.mxu0 0
  %218 = vmatprep.subr.bf16.mxu0 0
  %219 = vmatpush1.bf16.msra.mxu0 0
  %220 = vmatprep.subr.bf16.mxu0 0
  %221 = vmatpush1.bf16.msra.mxu0 0
  %222 = vmatprep.subr.bf16.mxu0 0
  %223 = vmatpush1.bf16.msra.mxu0 0
  %224 = vmatprep.subr.bf16.mxu0 0
  %225 = vmatpush1.bf16.msra.mxu0 0
  %226 = vmatprep.subr.bf16.mxu0 0
  %227 = vmatpush1.bf16.msra.mxu0 0
  %228 = vmatprep.subr.bf16.mxu0 0
  %229 = vmatpush1.bf16.msra.mxu0 0
  %230 = vmatprep.subr.bf16.mxu0 0
  %231 = vmatpush1.bf16.msra.mxu0 0
  %232 = vmatprep.subr.bf16.mxu0 0
  %233 = vmatpush1.bf16.msra.mxu0 0
  %234 = vmatprep.subr.bf16.mxu0 0
  %235 = vmatpush1.bf16.msra.mxu0 0
  %236 = vmatprep.subr.bf16.mxu0 0
  %237 = vmatpush1.bf16.msra.mxu0 0
  %238 = vmatprep.subr.bf16.mxu0 0
  %239 = vmatpush1.bf16.msra.mxu0 0
  %240 = vmatprep.subr.bf16.mxu0 0
  %241 = vmatpush1.bf16.msra.mxu0 0
  %242 = vmatprep.subr.bf16.mxu0 0
  %243 = vmatpush1.bf16.msra.mxu0 0
  %244 = vmatprep.mubr.bf16.mxu0 0
  %245 = vmatmul.mubr.bf16.gmra.mrb[0].mxu0 %v170
  %v246 = vpop.f32.mrb[0].mxu0
  %v247 = vadd.f32 %v207, %v246
  %v248 = vpop.f32.mrb[0].mxu0
  %v249 = vpop.f32.mrb[0].mxu0
  %v250 = vpop.f32.mrb[0].mxu0
  %251 = vdwg.mxu0
  %v252 = vmax.f32 %v247, 0.0
  %253 = vst.msk [vmem:[%s2] sm:$0xff] %vm168, %v252
  // Predicated region
  $region10: #{_lambda_.54} parent=0 // pred_check
    _
  $region11: #{_lambda_.54} parent=0 // pred_check_branch
    %255 = sbr.rel (0) target = $region13
  $region12: #{_lambda_.54} parent=0 // pred_region
    _
  $region13: #{_lambda_.54} parent=0 // pred_fallthru
    _
  // Predicated region
  $region14: #{_lambda_.54} parent=0 // pred_check
    _
  $region15: #{_lambda_.54} parent=0 // pred_check_branch
    %257 = sbr.rel (0) target = $region17
  $region16: #{_lambda_.54} parent=0 // pred_region
    _
  $region17: #{_lambda_.54} parent=0 // pred_fallthru
    _

// kernel: _lambda_.53
$region0: #{_lambda_.53}
  #allocation0 [shape = 'u32[]', space=smem, size = 0x4, offset = 0x4, fixed_abs, tag = 'smem constant byte address 0x4 - core index']
  #allocation1 [shape = 'u32[144,128]{1,0:T(1,128)}', space=vmem, size = 0x12000, scoped, tag = 'internal scratch']
  %s0 = inlined_call_operand.vmem [shape: bf16[8,288], index: 0, kind: input, shape index: {}]
  %s1 = inlined_call_operand.vmem [shape: bf16[288,32], index: 1, kind: input, shape index: {}]
  %s2 = inlined_call_operand.vmem [shape: f32[8,32], index: 2, kind: input, shape index: {}]
  %s3 = inlined_call_operand.vmem [shape: f32[8,32], index: 3, kind: output, shape index: {}]
  %s4 = sld [smem:[#allocation0]]
  $region22: #{_lambda_.53} parent=0
    _
  %s6 = ssub.s32 1, %s4
  %s7 = scalar_select 0, %s6, %s4
  // Predicated region
  $region2: #{_lambda_.53} parent=0 // pred_check
    _
  $region3: #{_lambda_.53} parent=0 // pred_check_branch
    %9 = sbr.rel (0) target = $region5
  $region4: #{_lambda_.53} parent=0 // pred_region
    _
  $region5: #{_lambda_.53} parent=0 // pred_fallthru
    _
  // Predicated region
  $region6: #{_lambda_.53} parent=0 // pred_check
    _
  $region7: #{_lambda_.53} parent=0 // pred_check_branch
    %11 = sbr.rel (0) target = $region9
  $region8: #{_lambda_.53} parent=0 // pred_region
    _
  $region9: #{_lambda_.53} parent=0 // pred_fallthru
    _
  // Predicated region
  $region10: #{_lambda_.53} parent=0 // pred_check
    _
  $region11: #{_lambda_.53} parent=0 // pred_check_branch
    %13 = sbr.rel (0) target = $region13
  $region12: #{_lambda_.53} parent=0 // pred_region
    _
  $region13: #{_lambda_.53} parent=0 // pred_fallthru
    _
  %v15 = vld [vmem:[%s0] sm:$0xff]
  %v16 = vld [vmem:[%s0 + $0x8] sm:$0xf]
  %v17 = vld [vmem:[%s1] sm:$0xf]
  %v18 = vld [vmem:[%s1 + $0x4] sm:$0xf]
  %v19 = vld [vmem:[%s1 + $0x8] sm:$0xf]
  %v20 = vld [vmem:[%s1 + $0xc] sm:$0xf]
  %v21 = vld [vmem:[%s1 + $0x10] sm:$0xf]
  %v22 = vld [vmem:[%s1 + $0x14] sm:$0xf]
  %v23 = vld [vmem:[%s1 + $0x18] sm:$0xf]
  %v24 = vld [vmem:[%s1 + $0x1c] sm:$0xf]
  %v25 = vld [vmem:[%s1 + $0x20] sm:$0xf]
  %v26 = vld [vmem:[%s1 + $0x24] sm:$0xf]
  %v27 = vld [vmem:[%s1 + $0x28] sm:$0xf]
  %v28 = vld [vmem:[%s1 + $0x2c] sm:$0xf]
  %v29 = vld [vmem:[%s1 + $0x30] sm:$0xf]
  %v30 = vld [vmem:[%s1 + $0x34] sm:$0xf]
  %v31 = vld [vmem:[%s1 + $0x38] sm:$0xf]
  %v32 = vld [vmem:[%s1 + $0x3c] sm:$0xf]
  %v33 = vld [vmem:[%s1 + $0x40] sm:$0xf]
  %v34 = vld [vmem:[%s1 + $0x44] sm:$0xf]
  %v35 = vld [vmem:[%s1 + $0x48] sm:$0xf]
  %v36 = vld [vmem:[%s1 + $0x4c] sm:$0xf]
  %v37 = vld [vmem:[%s1 + $0x50] sm:$0xf]
  %v38 = vld [vmem:[%s1 + $0x54] sm:$0xf]
  %v39 = vld [vmem:[%s1 + $0x58] sm:$0xf]
  %v40 = vld [vmem:[%s1 + $0x5c] sm:$0xf]
  %v41 = vld [vmem:[%s1 + $0x60] sm:$0xf]
  %v42 = vld [vmem:[%s1 + $0x64] sm:$0xf]
  %v43 = vld [vmem:[%s1 + $0x68] sm:$0xf]
  %v44 = vld [vmem:[%s1 + $0x6c] sm:$0xf]
  %v45 = vld [vmem:[%s1 + $0x70] sm:$0xf]
  %v46 = vld [vmem:[%s1 + $0x74] sm:$0xf]
  %v47 = vld [vmem:[%s1 + $0x78] sm:$0xf]
  %v48 = vld [vmem:[%s1 + $0x7c] sm:$0xf]
  %v49 = vld [vmem:[%s1 + $0x80] sm:$0xf]
  %v50 = vld [vmem:[%s1 + $0x84] sm:$0xf]
  %v51 = vld [vmem:[%s1 + $0x88] sm:$0xf]
  %v52 = vld [vmem:[%s1 + $0x8c] sm:$0xf]
  %v53 = vld [vmem:[%s2] sm:$0xff]
  %v56 = vunpack.c.l.b16 %v15
  %v57 = vunpack.c.h.b16 %v15
  %v58 = vunpack.c.l.b16 %v16
  %v59 = vpack.c.b16 %v56, %v56
  %v60 = vpack.c.b16 %v57, %v57
  %v61 = vpack.c.b16 %v58, %v58
  %v100 = vunpack.c.l.b16 %v17
  %v101 = vunpack.c.l.b16 %v18
  %v102 = vunpack.c.l.b16 %v19
  %v103 = vunpack.c.l.b16 %v20
  %v104 = vunpack.c.l.b16 %v21
  %v105 = vunpack.c.l.b16 %v22
  %v106 = vunpack.c.l.b16 %v23
  %v107 = vunpack.c.l.b16 %v24
  %v108 = vunpack.c.l.b16 %v25
  %v109 = vunpack.c.l.b16 %v26
  %v110 = vunpack.c.l.b16 %v27
  %v111 = vunpack.c.l.b16 %v28
  %v112 = vunpack.c.l.b16 %v29
  %v113 = vunpack.c.l.b16 %v30
  %v114 = vunpack.c.l.b16 %v31
  %v115 = vunpack.c.l.b16 %v32
  %v116 = vunpack.c.l.b16 %v33
  %v117 = vunpack.c.l.b16 %v34
  %v118 = vunpack.c.l.b16 %v35
  %v119 = vunpack.c.l.b16 %v36
  %v120 = vunpack.c.l.b16 %v37
  %v121 = vunpack.c.l.b16 %v38
  %v122 = vunpack.c.l.b16 %v39
  %v123 = vunpack.c.l.b16 %v40
  %v124 = vunpack.c.l.b16 %v41
  %v125 = vunpack.c.l.b16 %v42
  %v126 = vunpack.c.l.b16 %v43
  %v127 = vunpack.c.l.b16 %v44
  %v128 = vunpack.c.l.b16 %v45
  %v129 = vunpack.c.l.b16 %v46
  %v130 = vunpack.c.l.b16 %v47
  %v131 = vunpack.c.l.b16 %v48
  %v132 = vunpack.c.l.b16 %v49
  %v133 = vunpack.c.l.b16 %v50
  %v134 = vunpack.c.l.b16 %v51
  %v135 = vunpack.c.l.b16 %v52
  %v136 = vpack.c.b16 %v101, %v100
  %v137 = vpack.c.b16 %v103, %v102
  %v138 = vpack.c.b16 %v105, %v104
  %v139 = vpack.c.b16 %v107, %v106
  %v140 = vpack.c.b16 %v109, %v108
  %v141 = vpack.c.b16 %v111, %v110
  %v142 = vpack.c.b16 %v113, %v112
  %v143 = vpack.c.b16 %v115, %v114
  %v144 = vpack.c.b16 %v117, %v116
  %v145 = vpack.c.b16 %v119, %v118
  %v146 = vpack.c.b16 %v121, %v120
  %v147 = vpack.c.b16 %v123, %v122
  %v148 = vpack.c.b16 %v125, %v124
  %v149 = vpack.c.b16 %v127, %v126
  %v150 = vpack.c.b16 %v129, %v128
  %v151 = vpack.c.b16 %v131, %v130
  %v152 = vpack.c.b16 %v133, %v132
  %v153 = vpack.c.b16 %v135, %v134
  %vm172 = vcmask 261120
  %v174 = vsel %vm172, %v61, 0
  %176 = vmatprep.subr.bf16.mxu0 0
  %177 = vmatpush1.bf16.msra.mxu0 %v136
  %178 = vmatprep.subr.bf16.mxu0 0
  %179 = vmatpush1.bf16.msra.mxu0 %v137
  %180 = vmatprep.subr.bf16.mxu0 0
  %181 = vmatpush1.bf16.msra.mxu0 %v138
  %182 = vmatprep.subr.bf16.mxu0 0
  %183 = vmatpush1.bf16.msra.mxu0 %v139
  %184 = vmatprep.subr.bf16.mxu0 0
  %185 = vmatpush1.bf16.msra.mxu0 %v140
  %186 = vmatprep.subr.bf16.mxu0 0
  %187 = vmatpush1.bf16.msra.mxu0 %v141
  %188 = vmatprep.subr.bf16.mxu0 0
  %189 = vmatpush1.bf16.msra.mxu0 %v142
  %190 = vmatprep.subr.bf16.mxu0 0
  %191 = vmatpush1.bf16.msra.mxu0 %v143
  %192 = vmatprep.subr.bf16.mxu0 0
  %193 = vmatpush1.bf16.msra.mxu0 %v144
  %194 = vmatprep.subr.bf16.mxu0 0
  %195 = vmatpush1.bf16.msra.mxu0 %v145
  %196 = vmatprep.subr.bf16.mxu0 0
  %197 = vmatpush1.bf16.msra.mxu0 %v146
  %198 = vmatprep.subr.bf16.mxu0 0
  %199 = vmatpush1.bf16.msra.mxu0 %v147
  %200 = vmatprep.subr.bf16.mxu0 0
  %201 = vmatpush1.bf16.msra.mxu0 %v148
  %202 = vmatprep.subr.bf16.mxu0 0
  %203 = vmatpush1.bf16.msra.mxu0 %v149
  %204 = vmatprep.subr.bf16.mxu0 0
  %205 = vmatpush1.bf16.msra.mxu0 %v150
  %206 = vmatprep.subr.bf16.mxu0 0
  %207 = vmatpush1.bf16.msra.mxu0 %v151
  %208 = vmatprep.mubr.bf16.mxu0 %v60
  %209 = vmatmul.mubr.bf16.gmra.mrb[0].mxu0 %v59
  %v210 = vpop.f32.mrb[0].mxu0
  %v211 = vadd.f32 %v53, %v210
  %v212 = vpop.f32.mrb[0].mxu0
  %v213 = vpop.f32.mrb[0].mxu0
  %v214 = vpop.f32.mrb[0].mxu0
  %215 = vdwg.mxu0
  %216 = vmatprep.subr.bf16.mxu0 0
  %217 = vmatpush1.bf16.msra.mxu0 %v152
  %218 = vmatprep.subr.bf16.mxu0 0
  %219 = vmatpush1.bf16.msra.mxu0 %v153
  %220 = vmatprep.subr.bf16.mxu0 0
  %221 = vmatpush1.bf16.msra.mxu0 0
  %222 = vmatprep.subr.bf16.mxu0 0
  %223 = vmatpush1.bf16.msra.mxu0 0
  %224 = vmatprep.subr.bf16.mxu0 0
  %225 = vmatpush1.bf16.msra.mxu0 0
  %226 = vmatprep.subr.bf16.mxu0 0
  %227 = vmatpush1.bf16.msra.mxu0 0
  %228 = vmatprep.subr.bf16.mxu0 0
  %229 = vmatpush1.bf16.msra.mxu0 0
  %230 = vmatprep.subr.bf16.mxu0 0
  %231 = vmatpush1.bf16.msra.mxu0 0
  %232 = vmatprep.subr.bf16.mxu0 0
  %233 = vmatpush1.bf16.msra.mxu0 0
  %234 = vmatprep.subr.bf16.mxu0 0
  %235 = vmatpush1.bf16.msra.mxu0 0
  %236 = vmatprep.subr.bf16.mxu0 0
  %237 = vmatpush1.bf16.msra.mxu0 0
  %238 = vmatprep.subr.bf16.mxu0 0
  %239 = vmatpush1.bf16.msra.mxu0 0
  %240 = vmatprep.subr.bf16.mxu0 0
  %241 = vmatpush1.bf16.msra.mxu0 0
  %242 = vmatprep.subr.bf16.mxu0 0
  %243 = vmatpush1.bf16.msra.mxu0 0
  %244 = vmatprep.subr.bf16.mxu0 0
  %245 = vmatpush1.bf16.msra.mxu0 0
  %246 = vmatprep.subr.bf16.mxu0 0
  %247 = vmatpush1.bf16.msra.mxu0 0
  %248 = vmatprep.mubr.bf16.mxu0 0
  %249 = vmatmul.mubr.bf16.gmra.mrb[0].mxu0 %v174
  %v250 = vpop.f32.mrb[0].mxu0
  %v251 = vadd.f32 %v211, %v250
  %v252 = vpop.f32.mrb[0].mxu0
  %v253 = vpop.f32.mrb[0].mxu0
  %v254 = vpop.f32.mrb[0].mxu0
  %255 = vdwg.mxu0
  %v256 = vmax.f32 %v251, 0.0
  %257 = vst.msk [vmem:[%s3] sm:$0xff] %vm172, %v256
  // Predicated region
  $region14: #{_lambda_.53} parent=0 // pred_check
    _
  $region15: #{_lambda_.53} parent=0 // pred_check_branch
    %259 = sbr.rel (0) target = $region17
  $region16: #{_lambda_.53} parent=0 // pred_region
    _
  $region17: #{_lambda_.53} parent=0 // pred_fallthru
    _
  // Predicated region
  $region18: #{_lambda_.53} parent=0 // pred_check
    _
  $region19: #{_lambda_.53} parent=0 // pred_check_branch
    %261 = sbr.rel (0) target = $region21
  $region20: #{_lambda_.53} parent=0 // pred_region
    _
  $region21: #{_lambda_.53} parent=0 // pred_fallthru
    _

// kernel: _lambda_.57
$region0: #{_lambda_.57}
  #allocation0 [shape = 'u32[]', space=smem, size = 0x4, offset = 0x4, fixed_abs, tag = 'smem constant byte address 0x4 - core index']
  #allocation1 [shape = 'u32[144,128]{1,0:T(1,128)}', space=vmem, size = 0x12000, scoped, tag = 'internal scratch']
  %s0 = inlined_call_operand.vmem [shape: bf16[8,32], index: 0, kind: input, shape index: {}]
  %s1 = inlined_call_operand.vmem [shape: bf16[32,64], index: 1, kind: input, shape index: {}]
  %s2 = inlined_call_operand.vmem [shape: f32[8,64], index: 2, kind: output, shape index: {}]
  %s3 = sld [smem:[#allocation0]]
  $region18: #{_lambda_.57} parent=0
    _
  %s5 = ssub.s32 1, %s3
  %s6 = scalar_select 0, %s5, %s3
  // Predicated region
  $region2: #{_lambda_.57} parent=0 // pred_check
    _
  $region3: #{_lambda_.57} parent=0 // pred_check_branch
    %8 = sbr.rel (0) target = $region5
  $region4: #{_lambda_.57} parent=0 // pred_region
    _
  $region5: #{_lambda_.57} parent=0 // pred_fallthru
    _
  // Predicated region
  $region6: #{_lambda_.57} parent=0 // pred_check
    _
  $region7: #{_lambda_.57} parent=0 // pred_check_branch
    %10 = sbr.rel (0) target = $region9
  $region8: #{_lambda_.57} parent=0 // pred_region
    _
  $region9: #{_lambda_.57} parent=0 // pred_fallthru
    _
  %v12 = vld [vmem:[%s0] sm:$0xf]
  %v13 = vld [vmem:[%s1] sm:$0xf]
  %v14 = vld [vmem:[%s1 + $0x4] sm:$0xf]
  %v15 = vld [vmem:[%s1 + $0x8] sm:$0xf]
  %v16 = vld [vmem:[%s1 + $0xc] sm:$0xf]
  %v21 = vunpack.c.l.b16 %v13
  %v22 = vunpack.c.l.b16 %v14
  %v23 = vunpack.c.l.b16 %v15
  %v24 = vunpack.c.l.b16 %v16
  %v25 = vpack.c.b16 %v22, %v21
  %v26 = vpack.c.b16 %v24, %v23
  %vm29 = vcmask 261120
  %v31 = vsel %vm29, %v12, 0
  %33 = vmatprep.subr.bf16.mxu0 0
  %34 = vmatpush1.bf16.msra.mxu0 %v25
  %35 = vmatprep.subr.bf16.mxu0 0
  %36 = vmatpush1.bf16.msra.mxu0 %v26
  %37 = vmatprep.subr.bf16.mxu0 0
  %38 = vmatpush1.bf16.msra.mxu0 0
  %39 = vmatprep.subr.bf16.mxu0 0
  %40 = vmatpush1.bf16.msra.mxu0 0
  %41 = vmatprep.subr.bf16.mxu0 0
  %42 = vmatpush1.bf16.msra.mxu0 0
  %43 = vmatprep.subr.bf16.mxu0 0
  %44 = vmatpush1.bf16.msra.mxu0 0
  %45 = vmatprep.subr.bf16.mxu0 0
  %46 = vmatpush1.bf16.msra.mxu0 0
  %47 = vmatprep.subr.bf16.mxu0 0
  %48 = vmatpush1.bf16.msra.mxu0 0
  %49 = vmatprep.subr.bf16.mxu0 0
  %50 = vmatpush1.bf16.msra.mxu0 0
  %51 = vmatprep.subr.bf16.mxu0 0
  %52 = vmatpush1.bf16.msra.mxu0 0
  %53 = vmatprep.subr.bf16.mxu0 0
  %54 = vmatpush1.bf16.msra.mxu0 0
  %55 = vmatprep.subr.bf16.mxu0 0
  %56 = vmatpush1.bf16.msra.mxu0 0
  %57 = vmatprep.subr.bf16.mxu0 0
  %58 = vmatpush1.bf16.msra.mxu0 0
  %59 = vmatprep.subr.bf16.mxu0 0
  %60 = vmatpush1.bf16.msra.mxu0 0
  %61 = vmatprep.subr.bf16.mxu0 0
  %62 = vmatpush1.bf16.msra.mxu0 0
  %63 = vmatprep.subr.bf16.mxu0 0
  %64 = vmatpush1.bf16.msra.mxu0 0
  %65 = vmatprep.mubr.bf16.mxu0 0
  %66 = vmatmul.mubr.bf16.gmra.mrb[0].mxu0 %v31
  %v67 = vpop.f32.mrb[0].mxu0
  %v68 = vadd.f32 0.0, %v67
  %v69 = vpop.f32.mrb[0].mxu0
  %v70 = vpop.f32.mrb[0].mxu0
  %v71 = vpop.f32.mrb[0].mxu0
  %72 = vdwg.mxu0
  %vm73 = vcmask 523264
  %74 = vst.msk [vmem:[%s2] sm:$0xff] %vm73, %v68
  // Predicated region
  $region10: #{_lambda_.57} parent=0 // pred_check
    _
  $region11: #{_lambda_.57} parent=0 // pred_check_branch
    %76 = sbr.rel (0) target = $region13
  $region12: #{_lambda_.57} parent=0 // pred_region
    _
  $region13: #{_lambda_.57} parent=0 // pred_fallthru
    _
  // Predicated region
  $region14: #{_lambda_.57} parent=0 // pred_check
    _
  $region15: #{_lambda_.57} parent=0 // pred_check_branch
    %78 = sbr.rel (0) target = $region17
  $region16: #{_lambda_.57} parent=0 // pred_region
    _
  $region17: #{_lambda_.57} parent=0 // pred_fallthru
    _

// kernel: _lambda_.56
$region0: #{_lambda_.56}
  #allocation0 [shape = 'u32[]', space=smem, size = 0x4, offset = 0x4, fixed_abs, tag = 'smem constant byte address 0x4 - core index']
  #allocation1 [shape = 'u32[144,128]{1,0:T(1,128)}', space=vmem, size = 0x12000, scoped, tag = 'internal scratch']
  %s0 = inlined_call_operand.vmem [shape: bf16[8,288], index: 0, kind: input, shape index: {}]
  %s1 = inlined_call_operand.vmem [shape: bf16[288,64], index: 1, kind: input, shape index: {}]
  %s2 = inlined_call_operand.vmem [shape: f32[8,64], index: 2, kind: output, shape index: {}]
  %s3 = sld [smem:[#allocation0]]
  $region18: #{_lambda_.56} parent=0
    _
  %s5 = ssub.s32 1, %s3
  %s6 = scalar_select 0, %s5, %s3
  // Predicated region
  $region2: #{_lambda_.56} parent=0 // pred_check
    _
  $region3: #{_lambda_.56} parent=0 // pred_check_branch
    %8 = sbr.rel (0) target = $region5
  $region4: #{_lambda_.56} parent=0 // pred_region
    _
  $region5: #{_lambda_.56} parent=0 // pred_fallthru
    _
  // Predicated region
  $region6: #{_lambda_.56} parent=0 // pred_check
    _
  $region7: #{_lambda_.56} parent=0 // pred_check_branch
    %10 = sbr.rel (0) target = $region9
  $region8: #{_lambda_.56} parent=0 // pred_region
    _
  $region9: #{_lambda_.56} parent=0 // pred_fallthru
    _
  %v12 = vld [vmem:[%s0] sm:$0xff]
  %v13 = vld [vmem:[%s0 + $0x8] sm:$0xf]
  %v14 = vld [vmem:[%s1] sm:$0xf]
  %v15 = vld [vmem:[%s1 + $0x4] sm:$0xf]
  %v16 = vld [vmem:[%s1 + $0x8] sm:$0xf]
  %v17 = vld [vmem:[%s1 + $0xc] sm:$0xf]
  %v18 = vld [vmem:[%s1 + $0x10] sm:$0xf]
  %v19 = vld [vmem:[%s1 + $0x14] sm:$0xf]
  %v20 = vld [vmem:[%s1 + $0x18] sm:$0xf]
  %v21 = vld [vmem:[%s1 + $0x1c] sm:$0xf]
  %v22 = vld [vmem:[%s1 + $0x20] sm:$0xf]
  %v23 = vld [vmem:[%s1 + $0x24] sm:$0xf]
  %v24 = vld [vmem:[%s1 + $0x28] sm:$0xf]
  %v25 = vld [vmem:[%s1 + $0x2c] sm:$0xf]
  %v26 = vld [vmem:[%s1 + $0x30] sm:$0xf]
  %v27 = vld [vmem:[%s1 + $0x34] sm:$0xf]
  %v28 = vld [vmem:[%s1 + $0x38] sm:$0xf]
  %v29 = vld [vmem:[%s1 + $0x3c] sm:$0xf]
  %v30 = vld [vmem:[%s1 + $0x40] sm:$0xf]
  %v31 = vld [vmem:[%s1 + $0x44] sm:$0xf]
  %v32 = vld [vmem:[%s1 + $0x48] sm:$0xf]
  %v33 = vld [vmem:[%s1 + $0x4c] sm:$0xf]
  %v34 = vld [vmem:[%s1 + $0x50] sm:$0xf]
  %v35 = vld [vmem:[%s1 + $0x54] sm:$0xf]
  %v36 = vld [vmem:[%s1 + $0x58] sm:$0xf]
  %v37 = vld [vmem:[%s1 + $0x5c] sm:$0xf]
  %v38 = vld [vmem:[%s1 + $0x60] sm:$0xf]
  %v39 = vld [vmem:[%s1 + $0x64] sm:$0xf]
  %v40 = vld [vmem:[%s1 + $0x68] sm:$0xf]
  %v41 = vld [vmem:[%s1 + $0x6c] sm:$0xf]
  %v42 = vld [vmem:[%s1 + $0x70] sm:$0xf]
  %v43 = vld [vmem:[%s1 + $0x74] sm:$0xf]
  %v44 = vld [vmem:[%s1 + $0x78] sm:$0xf]
  %v45 = vld [vmem:[%s1 + $0x7c] sm:$0xf]
  %v46 = vld [vmem:[%s1 + $0x80] sm:$0xf]
  %v47 = vld [vmem:[%s1 + $0x84] sm:$0xf]
  %v48 = vld [vmem:[%s1 + $0x88] sm:$0xf]
  %v49 = vld [vmem:[%s1 + $0x8c] sm:$0xf]
  %v52 = vunpack.c.l.b16 %v12
  %v53 = vunpack.c.h.b16 %v12
  %v54 = vunpack.c.l.b16 %v13
  %v55 = vpack.c.b16 %v52, %v52
  %v56 = vpack.c.b16 %v53, %v53
  %v57 = vpack.c.b16 %v54, %v54
  %v96 = vunpack.c.l.b16 %v14
  %v97 = vunpack.c.l.b16 %v15
  %v98 = vunpack.c.l.b16 %v16
  %v99 = vunpack.c.l.b16 %v17
  %v100 = vunpack.c.l.b16 %v18
  %v101 = vunpack.c.l.b16 %v19
  %v102 = vunpack.c.l.b16 %v20
  %v103 = vunpack.c.l.b16 %v21
  %v104 = vunpack.c.l.b16 %v22
  %v105 = vunpack.c.l.b16 %v23
  %v106 = vunpack.c.l.b16 %v24
  %v107 = vunpack.c.l.b16 %v25
  %v108 = vunpack.c.l.b16 %v26
  %v109 = vunpack.c.l.b16 %v27
  %v110 = vunpack.c.l.b16 %v28
  %v111 = vunpack.c.l.b16 %v29
  %v112 = vunpack.c.l.b16 %v30
  %v113 = vunpack.c.l.b16 %v31
  %v114 = vunpack.c.l.b16 %v32
  %v115 = vunpack.c.l.b16 %v33
  %v116 = vunpack.c.l.b16 %v34
  %v117 = vunpack.c.l.b16 %v35
  %v118 = vunpack.c.l.b16 %v36
  %v119 = vunpack.c.l.b16 %v37
  %v120 = vunpack.c.l.b16 %v38
  %v121 = vunpack.c.l.b16 %v39
  %v122 = vunpack.c.l.b16 %v40
  %v123 = vunpack.c.l.b16 %v41
  %v124 = vunpack.c.l.b16 %v42
  %v125 = vunpack.c.l.b16 %v43
  %v126 = vunpack.c.l.b16 %v44
  %v127 = vunpack.c.l.b16 %v45
  %v128 = vunpack.c.l.b16 %v46
  %v129 = vunpack.c.l.b16 %v47
  %v130 = vunpack.c.l.b16 %v48
  %v131 = vunpack.c.l.b16 %v49
  %v132 = vpack.c.b16 %v97, %v96
  %v133 = vpack.c.b16 %v99, %v98
  %v134 = vpack.c.b16 %v101, %v100
  %v135 = vpack.c.b16 %v103, %v102
  %v136 = vpack.c.b16 %v105, %v104
  %v137 = vpack.c.b16 %v107, %v106
  %v138 = vpack.c.b16 %v109, %v108
  %v139 = vpack.c.b16 %v111, %v110
  %v140 = vpack.c.b16 %v113, %v112
  %v141 = vpack.c.b16 %v115, %v114
  %v142 = vpack.c.b16 %v117, %v116
  %v143 = vpack.c.b16 %v119, %v118
  %v144 = vpack.c.b16 %v121, %v120
  %v145 = vpack.c.b16 %v123, %v122
  %v146 = vpack.c.b16 %v125, %v124
  %v147 = vpack.c.b16 %v127, %v126
  %v148 = vpack.c.b16 %v129, %v128
  %v149 = vpack.c.b16 %v131, %v130
  %vm168 = vcmask 261120
  %v170 = vsel %vm168, %v57, 0
  %172 = vmatprep.subr.bf16.mxu0 0
  %173 = vmatpush1.bf16.msra.mxu0 %v132
  %174 = vmatprep.subr.bf16.mxu0 0
  %175 = vmatpush1.bf16.msra.mxu0 %v133
  %176 = vmatprep.subr.bf16.mxu0 0
  %177 = vmatpush1.bf16.msra.mxu0 %v134
  %178 = vmatprep.subr.bf16.mxu0 0
  %179 = vmatpush1.bf16.msra.mxu0 %v135
  %180 = vmatprep.subr.bf16.mxu0 0
  %181 = vmatpush1.bf16.msra.mxu0 %v136
  %182 = vmatprep.subr.bf16.mxu0 0
  %183 = vmatpush1.bf16.msra.mxu0 %v137
  %184 = vmatprep.subr.bf16.mxu0 0
  %185 = vmatpush1.bf16.msra.mxu0 %v138
  %186 = vmatprep.subr.bf16.mxu0 0
  %187 = vmatpush1.bf16.msra.mxu0 %v139
  %188 = vmatprep.subr.bf16.mxu0 0
  %189 = vmatpush1.bf16.msra.mxu0 %v140
  %190 = vmatprep.subr.bf16.mxu0 0
  %191 = vmatpush1.bf16.msra.mxu0 %v141
  %192 = vmatprep.subr.bf16.mxu0 0
  %193 = vmatpush1.bf16.msra.mxu0 %v142
  %194 = vmatprep.subr.bf16.mxu0 0
  %195 = vmatpush1.bf16.msra.mxu0 %v143
  %196 = vmatprep.subr.bf16.mxu0 0
  %197 = vmatpush1.bf16.msra.mxu0 %v144
  %198 = vmatprep.subr.bf16.mxu0 0
  %199 = vmatpush1.bf16.msra.mxu0 %v145
  %200 = vmatprep.subr.bf16.mxu0 0
  %201 = vmatpush1.bf16.msra.mxu0 %v146
  %202 = vmatprep.subr.bf16.mxu0 0
  %203 = vmatpush1.bf16.msra.mxu0 %v147
  %204 = vmatprep.mubr.bf16.mxu0 %v56
  %205 = vmatmul.mubr.bf16.gmra.mrb[0].mxu0 %v55
  %v206 = vpop.f32.mrb[0].mxu0
  %v207 = vadd.f32 0.0, %v206
  %v208 = vpop.f32.mrb[0].mxu0
  %v209 = vpop.f32.mrb[0].mxu0
  %v210 = vpop.f32.mrb[0].mxu0
  %211 = vdwg.mxu0
  %212 = vmatprep.subr.bf16.mxu0 0
  %213 = vmatpush1.bf16.msra.mxu0 %v148
  %214 = vmatprep.subr.bf16.mxu0 0
  %215 = vmatpush1.bf16.msra.mxu0 %v149
  %216 = vmatprep.subr.bf16.mxu0 0
  %217 = vmatpush1.bf16.msra.mxu0 0
  %218 = vmatprep.subr.bf16.mxu0 0
  %219 = vmatpush1.bf16.msra.mxu0 0
  %220 = vmatprep.subr.bf16.mxu0 0
  %221 = vmatpush1.bf16.msra.mxu0 0
  %222 = vmatprep.subr.bf16.mxu0 0
  %223 = vmatpush1.bf16.msra.mxu0 0
  %224 = vmatprep.subr.bf16.mxu0 0
  %225 = vmatpush1.bf16.msra.mxu0 0
  %226 = vmatprep.subr.bf16.mxu0 0
  %227 = vmatpush1.bf16.msra.mxu0 0
  %228 = vmatprep.subr.bf16.mxu0 0
  %229 = vmatpush1.bf16.msra.mxu0 0
  %230 = vmatprep.subr.bf16.mxu0 0
  %231 = vmatpush1.bf16.msra.mxu0 0
  %232 = vmatprep.subr.bf16.mxu0 0
  %233 = vmatpush1.bf16.msra.mxu0 0
  %234 = vmatprep.subr.bf16.mxu0 0
  %235 = vmatpush1.bf16.msra.mxu0 0
  %236 = vmatprep.subr.bf16.mxu0 0
  %237 = vmatpush1.bf16.msra.mxu0 0
  %238 = vmatprep.subr.bf16.mxu0 0
  %239 = vmatpush1.bf16.msra.mxu0 0
  %240 = vmatprep.subr.bf16.mxu0 0
  %241 = vmatpush1.bf16.msra.mxu0 0
  %242 = vmatprep.subr.bf16.mxu0 0
  %243 = vmatpush1.bf16.msra.mxu0 0
  %244 = vmatprep.mubr.bf16.mxu0 0
  %245 = vmatmul.mubr.bf16.gmra.mrb[0].mxu0 %v170
  %v246 = vpop.f32.mrb[0].mxu0
  %v247 = vadd.f32 %v207, %v246
  %v248 = vpop.f32.mrb[0].mxu0
  %v249 = vpop.f32.mrb[0].mxu0
  %v250 = vpop.f32.mrb[0].mxu0
  %251 = vdwg.mxu0
  %v252 = vmax.f32 %v247, 0.0
  %vm253 = vcmask 523264
  %254 = vst.msk [vmem:[%s2] sm:$0xff] %vm253, %v252
  // Predicated region
  $region10: #{_lambda_.56} parent=0 // pred_check
    _
  $region11: #{_lambda_.56} parent=0 // pred_check_branch
    %256 = sbr.rel (0) target = $region13
  $region12: #{_lambda_.56} parent=0 // pred_region
    _
  $region13: #{_lambda_.56} parent=0 // pred_fallthru
    _
  // Predicated region
  $region14: #{_lambda_.56} parent=0 // pred_check
    _
  $region15: #{_lambda_.56} parent=0 // pred_check_branch
    %258 = sbr.rel (0) target = $region17
  $region16: #{_lambda_.56} parent=0 // pred_region
    _
  $region17: #{_lambda_.56} parent=0 // pred_fallthru
    _

// kernel: _lambda_.58
$region0: #{_lambda_.58}
  #allocation0 [shape = 'u32[]', space=smem, size = 0x4, offset = 0x4, fixed_abs, tag = 'smem constant byte address 0x4 - core index']
  #allocation1 [shape = 'u32[144,128]{1,0:T(1,128)}', space=vmem, size = 0x12000, scoped, tag = 'internal scratch']
  %s0 = inlined_call_operand.vmem [shape: bf16[8,576], index: 0, kind: input, shape index: {}]
  %s1 = inlined_call_operand.vmem [shape: bf16[576,64], index: 1, kind: input, shape index: {}]
  %s2 = inlined_call_operand.vmem [shape: f32[8,64], index: 2, kind: input, shape index: {}]
  %s3 = inlined_call_operand.vmem [shape: f32[8,64], index: 3, kind: output, shape index: {}]
  %s4 = sld [smem:[#allocation0]]
  $region22: #{_lambda_.58} parent=0
    _
  %s6 = ssub.s32 1, %s4
  %s7 = scalar_select 0, %s6, %s4
  // Predicated region
  $region2: #{_lambda_.58} parent=0 // pred_check
    _
  $region3: #{_lambda_.58} parent=0 // pred_check_branch
    %9 = sbr.rel (0) target = $region5
  $region4: #{_lambda_.58} parent=0 // pred_region
    _
  $region5: #{_lambda_.58} parent=0 // pred_fallthru
    _
  // Predicated region
  $region6: #{_lambda_.58} parent=0 // pred_check
    _
  $region7: #{_lambda_.58} parent=0 // pred_check_branch
    %11 = sbr.rel (0) target = $region9
  $region8: #{_lambda_.58} parent=0 // pred_region
    _
  $region9: #{_lambda_.58} parent=0 // pred_fallthru
    _
  // Predicated region
  $region10: #{_lambda_.58} parent=0 // pred_check
    _
  $region11: #{_lambda_.58} parent=0 // pred_check_branch
    %13 = sbr.rel (0) target = $region13
  $region12: #{_lambda_.58} parent=0 // pred_region
    _
  $region13: #{_lambda_.58} parent=0 // pred_fallthru
    _
  %v15 = vld [vmem:[%s0] sm:$0xff]
  %v16 = vld [vmem:[%s0 + $0x8] sm:$0xff]
  %v17 = vld [vmem:[%s0 + $0x10] sm:$0xf]
  %v18 = vld [vmem:[%s1] sm:$0xf]
  %v19 = vld [vmem:[%s1 + $0x4] sm:$0xf]
  %v20 = vld [vmem:[%s1 + $0x8] sm:$0xf]
  %v21 = vld [vmem:[%s1 + $0xc] sm:$0xf]
  %v22 = vld [vmem:[%s1 + $0x10] sm:$0xf]
  %v23 = vld [vmem:[%s1 + $0x14] sm:$0xf]
  %v24 = vld [vmem:[%s1 + $0x18] sm:$0xf]
  %v25 = vld [vmem:[%s1 + $0x1c] sm:$0xf]
  %v26 = vld [vmem:[%s1 + $0x20] sm:$0xf]
  %v27 = vld [vmem:[%s1 + $0x24] sm:$0xf]
  %v28 = vld [vmem:[%s1 + $0x28] sm:$0xf]
  %v29 = vld [vmem:[%s1 + $0x2c] sm:$0xf]
  %v30 = vld [vmem:[%s1 + $0x30] sm:$0xf]
  %v31 = vld [vmem:[%s1 + $0x34] sm:$0xf]
  %v32 = vld [vmem:[%s1 + $0x38] sm:$0xf]
  %v33 = vld [vmem:[%s1 + $0x3c] sm:$0xf]
  %v34 = vld [vmem:[%s1 + $0x40] sm:$0xf]
  %v35 = vld [vmem:[%s1 + $0x44] sm:$0xf]
  %v36 = vld [vmem:[%s1 + $0x48] sm:$0xf]
  %v37 = vld [vmem:[%s1 + $0x4c] sm:$0xf]
  %v38 = vld [vmem:[%s1 + $0x50] sm:$0xf]
  %v39 = vld [vmem:[%s1 + $0x54] sm:$0xf]
  %v40 = vld [vmem:[%s1 + $0x58] sm:$0xf]
  %v41 = vld [vmem:[%s1 + $0x5c] sm:$0xf]
  %v42 = vld [vmem:[%s1 + $0x60] sm:$0xf]
  %v43 = vld [vmem:[%s1 + $0x64] sm:$0xf]
  %v44 = vld [vmem:[%s1 + $0x68] sm:$0xf]
  %v45 = vld [vmem:[%s1 + $0x6c] sm:$0xf]
  %v46 = vld [vmem:[%s1 + $0x70] sm:$0xf]
  %v47 = vld [vmem:[%s1 + $0x74] sm:$0xf]
  %v48 = vld [vmem:[%s1 + $0x78] sm:$0xf]
  %v49 = vld [vmem:[%s1 + $0x7c] sm:$0xf]
  %v50 = vld [vmem:[%s1 + $0x80] sm:$0xf]
  %v51 = vld [vmem:[%s1 + $0x84] sm:$0xf]
  %v52 = vld [vmem:[%s1 + $0x88] sm:$0xf]
  %v53 = vld [vmem:[%s1 + $0x8c] sm:$0xf]
  %v54 = vld [vmem:[%s1 + $0x90] sm:$0xf]
  %v55 = vld [vmem:[%s1 + $0x94] sm:$0xf]
  %v56 = vld [vmem:[%s1 + $0x98] sm:$0xf]
  %v57 = vld [vmem:[%s1 + $0x9c] sm:$0xf]
  %v58 = vld [vmem:[%s1 + $0xa0] sm:$0xf]
  %v59 = vld [vmem:[%s1 + $0xa4] sm:$0xf]
  %v60 = vld [vmem:[%s1 + $0xa8] sm:$0xf]
  %v61 = vld [vmem:[%s1 + $0xac] sm:$0xf]
  %v62 = vld [vmem:[%s1 + $0xb0] sm:$0xf]
  %v63 = vld [vmem:[%s1 + $0xb4] sm:$0xf]
  %v64 = vld [vmem:[%s1 + $0xb8] sm:$0xf]
  %v65 = vld [vmem:[%s1 + $0xbc] sm:$0xf]
  %v66 = vld [vmem:[%s1 + $0xc0] sm:$0xf]
  %v67 = vld [vmem:[%s1 + $0xc4] sm:$0xf]
  %v68 = vld [vmem:[%s1 + $0xc8] sm:$0xf]
  %v69 = vld [vmem:[%s1 + $0xcc] sm:$0xf]
  %v70 = vld [vmem:[%s1 + $0xd0] sm:$0xf]
  %v71 = vld [vmem:[%s1 + $0xd4] sm:$0xf]
  %v72 = vld [vmem:[%s1 + $0xd8] sm:$0xf]
  %v73 = vld [vmem:[%s1 + $0xdc] sm:$0xf]
  %v74 = vld [vmem:[%s1 + $0xe0] sm:$0xf]
  %v75 = vld [vmem:[%s1 + $0xe4] sm:$0xf]
  %v76 = vld [vmem:[%s1 + $0xe8] sm:$0xf]
  %v77 = vld [vmem:[%s1 + $0xec] sm:$0xf]
  %v78 = vld [vmem:[%s1 + $0xf0] sm:$0xf]
  %v79 = vld [vmem:[%s1 + $0xf4] sm:$0xf]
  %v80 = vld [vmem:[%s1 + $0xf8] sm:$0xf]
  %v81 = vld [vmem:[%s1 + $0xfc] sm:$0xf]
  %v82 = vld [vmem:[%s1 + $0x100] sm:$0xf]
  %v83 = vld [vmem:[%s1 + $0x104] sm:$0xf]
  %v84 = vld [vmem:[%s1 + $0x108] sm:$0xf]
  %v85 = vld [vmem:[%s1 + $0x10c] sm:$0xf]
  %v86 = vld [vmem:[%s1 + $0x110] sm:$0xf]
  %v87 = vld [vmem:[%s1 + $0x114] sm:$0xf]
  %v88 = vld [vmem:[%s1 + $0x118] sm:$0xf]
  %v89 = vld [vmem:[%s1 + $0x11c] sm:$0xf]
  %v90 = vld [vmem:[%s2] sm:$0xff]
  %v94 = vunpack.c.l.b16 %v15
  %v95 = vunpack.c.h.b16 %v15
  %v96 = vunpack.c.l.b16 %v16
  %v97 = vunpack.c.h.b16 %v16
  %v98 = vunpack.c.l.b16 %v17
  %v99 = vpack.c.b16 %v94, %v94
  %v100 = vpack.c.b16 %v95, %v95
  %v101 = vpack.c.b16 %v96, %v96
  %v102 = vpack.c.b16 %v97, %v97
  %v103 = vpack.c.b16 %v98, %v98
  %v180 = vunpack.c.l.b16 %v18
  %v181 = vunpack.c.l.b16 %v19
  %v182 = vunpack.c.l.b16 %v20
  %v183 = vunpack.c.l.b16 %v21
  %v184 = vunpack.c.l.b16 %v22
  %v185 = vunpack.c.l.b16 %v23
  %v186 = vunpack.c.l.b16 %v24
  %v187 = vunpack.c.l.b16 %v25
  %v188 = vunpack.c.l.b16 %v26
  %v189 = vunpack.c.l.b16 %v27
  %v190 = vunpack.c.l.b16 %v28
  %v191 = vunpack.c.l.b16 %v29
  %v192 = vunpack.c.l.b16 %v30
  %v193 = vunpack.c.l.b16 %v31
  %v194 = vunpack.c.l.b16 %v32
  %v195 = vunpack.c.l.b16 %v33
  %v196 = vunpack.c.l.b16 %v34
  %v197 = vunpack.c.l.b16 %v35
  %v198 = vunpack.c.l.b16 %v36
  %v199 = vunpack.c.l.b16 %v37
  %v200 = vunpack.c.l.b16 %v38
  %v201 = vunpack.c.l.b16 %v39
  %v202 = vunpack.c.l.b16 %v40
  %v203 = vunpack.c.l.b16 %v41
  %v204 = vunpack.c.l.b16 %v42
  %v205 = vunpack.c.l.b16 %v43
  %v206 = vunpack.c.l.b16 %v44
  %v207 = vunpack.c.l.b16 %v45
  %v208 = vunpack.c.l.b16 %v46
  %v209 = vunpack.c.l.b16 %v47
  %v210 = vunpack.c.l.b16 %v48
  %v211 = vunpack.c.l.b16 %v49
  %v212 = vunpack.c.l.b16 %v50
  %v213 = vunpack.c.l.b16 %v51
  %v214 = vunpack.c.l.b16 %v52
  %v215 = vunpack.c.l.b16 %v53
  %v216 = vunpack.c.l.b16 %v54
  %v217 = vunpack.c.l.b16 %v55
  %v218 = vunpack.c.l.b16 %v56
  %v219 = vunpack.c.l.b16 %v57
  %v220 = vunpack.c.l.b16 %v58
  %v221 = vunpack.c.l.b16 %v59
  %v222 = vunpack.c.l.b16 %v60
  %v223 = vunpack.c.l.b16 %v61
  %v224 = vunpack.c.l.b16 %v62
  %v225 = vunpack.c.l.b16 %v63
  %v226 = vunpack.c.l.b16 %v64
  %v227 = vunpack.c.l.b16 %v65
  %v228 = vunpack.c.l.b16 %v66
  %v229 = vunpack.c.l.b16 %v67
  %v230 = vunpack.c.l.b16 %v68
  %v231 = vunpack.c.l.b16 %v69
  %v232 = vunpack.c.l.b16 %v70
  %v233 = vunpack.c.l.b16 %v71
  %v234 = vunpack.c.l.b16 %v72
  %v235 = vunpack.c.l.b16 %v73
  %v236 = vunpack.c.l.b16 %v74
  %v237 = vunpack.c.l.b16 %v75
  %v238 = vunpack.c.l.b16 %v76
  %v239 = vunpack.c.l.b16 %v77
  %v240 = vunpack.c.l.b16 %v78
  %v241 = vunpack.c.l.b16 %v79
  %v242 = vunpack.c.l.b16 %v80
  %v243 = vunpack.c.l.b16 %v81
  %v244 = vunpack.c.l.b16 %v82
  %v245 = vunpack.c.l.b16 %v83
  %v246 = vunpack.c.l.b16 %v84
  %v247 = vunpack.c.l.b16 %v85
  %v248 = vunpack.c.l.b16 %v86
  %v249 = vunpack.c.l.b16 %v87
  %v250 = vunpack.c.l.b16 %v88
  %v251 = vunpack.c.l.b16 %v89
  %v252 = vpack.c.b16 %v181, %v180
  %v253 = vpack.c.b16 %v183, %v182
  %v254 = vpack.c.b16 %v185, %v184
  %v255 = vpack.c.b16 %v187, %v186
  %v256 = vpack.c.b16 %v189, %v188
  %v257 = vpack.c.b16 %v191, %v190
  %v258 = vpack.c.b16 %v193, %v192
  %v259 = vpack.c.b16 %v195, %v194
  %v260 = vpack.c.b16 %v197, %v196
  %v261 = vpack.c.b16 %v199, %v198
  %v262 = vpack.c.b16 %v201, %v200
  %v263 = vpack.c.b16 %v203, %v202
  %v264 = vpack.c.b16 %v205, %v204
  %v265 = vpack.c.b16 %v207, %v206
  %v266 = vpack.c.b16 %v209, %v208
  %v267 = vpack.c.b16 %v211, %v210
  %v268 = vpack.c.b16 %v213, %v212
  %v269 = vpack.c.b16 %v215, %v214
  %v270 = vpack.c.b16 %v217, %v216
  %v271 = vpack.c.b16 %v219, %v218
  %v272 = vpack.c.b16 %v221, %v220
  %v273 = vpack.c.b16 %v223, %v222
  %v274 = vpack.c.b16 %v225, %v224
  %v275 = vpack.c.b16 %v227, %v226
  %v276 = vpack.c.b16 %v229, %v228
  %v277 = vpack.c.b16 %v231, %v230
  %v278 = vpack.c.b16 %v233, %v232
  %v279 = vpack.c.b16 %v235, %v234
  %v280 = vpack.c.b16 %v237, %v236
  %v281 = vpack.c.b16 %v239, %v238
  %v282 = vpack.c.b16 %v241, %v240
  %v283 = vpack.c.b16 %v243, %v242
  %v284 = vpack.c.b16 %v245, %v244
  %v285 = vpack.c.b16 %v247, %v246
  %v286 = vpack.c.b16 %v249, %v248
  %v287 = vpack.c.b16 %v251, %v250
  %vm324 = vcmask 523264
  %v326 = vsel %vm324, %v103, 0
  %328 = vmatprep.subr.bf16.mxu0 0
  %329 = vmatpush1.bf16.msra.mxu0 %v252
  %330 = vmatprep.subr.bf16.mxu0 0
  %331 = vmatpush1.bf16.msra.mxu0 %v253
  %332 = vmatprep.subr.bf16.mxu0 0
  %333 = vmatpush1.bf16.msra.mxu0 %v254
  %334 = vmatprep.subr.bf16.mxu0 0
  %335 = vmatpush1.bf16.msra.mxu0 %v255
  %336 = vmatprep.subr.bf16.mxu0 0
  %337 = vmatpush1.bf16.msra.mxu0 %v256
  %338 = vmatprep.subr.bf16.mxu0 0
  %339 = vmatpush1.bf16.msra.mxu0 %v257
  %340 = vmatprep.subr.bf16.mxu0 0
  %341 = vmatpush1.bf16.msra.mxu0 %v258
  %342 = vmatprep.subr.bf16.mxu0 0
  %343 = vmatpush1.bf16.msra.mxu0 %v259
  %344 = vmatprep.subr.bf16.mxu0 0
  %345 = vmatpush1.bf16.msra.mxu0 %v260
  %346 = vmatprep.subr.bf16.mxu0 0
  %347 = vmatpush1.bf16.msra.mxu0 %v261
  %348 = vmatprep.subr.bf16.mxu0 0
  %349 = vmatpush1.bf16.msra.mxu0 %v262
  %350 = vmatprep.subr.bf16.mxu0 0
  %351 = vmatpush1.bf16.msra.mxu0 %v263
  %352 = vmatprep.subr.bf16.mxu0 0
  %353 = vmatpush1.bf16.msra.mxu0 %v264
  %354 = vmatprep.subr.bf16.mxu0 0
  %355 = vmatpush1.bf16.msra.mxu0 %v265
  %356 = vmatprep.subr.bf16.mxu0 0
  %357 = vmatpush1.bf16.msra.mxu0 %v266
  %358 = vmatprep.subr.bf16.mxu0 0
  %359 = vmatpush1.bf16.msra.mxu0 %v267
  %360 = vmatprep.mubr.bf16.mxu0 %v100
  %361 = vmatmul.mubr.bf16.gmra.mrb[0].mxu0 %v99
  %v362 = vpop.f32.mrb[0].mxu0
  %v363 = vadd.f32 %v90, %v362
  %v364 = vpop.f32.mrb[0].mxu0
  %v365 = vpop.f32.mrb[0].mxu0
  %v366 = vpop.f32.mrb[0].mxu0
  %367 = vdwg.mxu0
  %368 = vmatprep.subr.bf16.mxu0 0
  %369 = vmatpush1.bf16.msra.mxu0 %v268
  %370 = vmatprep.subr.bf16.mxu0 0
  %371 = vmatpush1.bf16.msra.mxu0 %v269
  %372 = vmatprep.subr.bf16.mxu0 0
  %373 = vmatpush1.bf16.msra.mxu0 %v270
  %374 = vmatprep.subr.bf16.mxu0 0
  %375 = vmatpush1.bf16.msra.mxu0 %v271
  %376 = vmatprep.subr.bf16.mxu0 0
  %377 = vmatpush1.bf16.msra.mxu0 %v272
  %378 = vmatprep.subr.bf16.mxu0 0
  %379 = vmatpush1.bf16.msra.mxu0 %v273
  %380 = vmatprep.subr.bf16.mxu0 0
  %381 = vmatpush1.bf16.msra.mxu0 %v274
  %382 = vmatprep.subr.bf16.mxu0 0
  %383 = vmatpush1.bf16.msra.mxu0 %v275
  %384 = vmatprep.subr.bf16.mxu0 0
  %385 = vmatpush1.bf16.msra.mxu0 %v276
  %386 = vmatprep.subr.bf16.mxu0 0
  %387 = vmatpush1.bf16.msra.mxu0 %v277
  %388 = vmatprep.subr.bf16.mxu0 0
  %389 = vmatpush1.bf16.msra.mxu0 %v278
  %390 = vmatprep.subr.bf16.mxu0 0
  %391 = vmatpush1.bf16.msra.mxu0 %v279
  %392 = vmatprep.subr.bf16.mxu0 0
  %393 = vmatpush1.bf16.msra.mxu0 %v280
  %394 = vmatprep.subr.bf16.mxu0 0
  %395 = vmatpush1.bf16.msra.mxu0 %v281
  %396 = vmatprep.subr.bf16.mxu0 0
  %397 = vmatpush1.bf16.msra.mxu0 %v282
  %398 = vmatprep.subr.bf16.mxu0 0
  %399 = vmatpush1.bf16.msra.mxu0 %v283
  %400 = vmatprep.mubr.bf16.mxu0 %v102
  %401 = vmatmul.mubr.bf16.gmra.mrb[0].mxu0 %v101
  %v402 = vpop.f32.mrb[0].mxu0
  %v403 = vadd.f32 %v363, %v402
  %v404 = vpop.f32.mrb[0].mxu0
  %v405 = vpop.f32.mrb[0].mxu0
  %v406 = vpop.f32.mrb[0].mxu0
  %407 = vdwg.mxu0
  %408 = vmatprep.subr.bf16.mxu0 0
  %409 = vmatpush1.bf16.msra.mxu0 %v284
  %410 = vmatprep.subr.bf16.mxu0 0
  %411 = vmatpush1.bf16.msra.mxu0 %v285
  %412 = vmatprep.subr.bf16.mxu0 0
  %413 = vmatpush1.bf16.msra.mxu0 %v286
  %414 = vmatprep.subr.bf16.mxu0 0
  %415 = vmatpush1.bf16.msra.mxu0 %v287
  %416 = vmatprep.subr.bf16.mxu0 0
  %417 = vmatpush1.bf16.msra.mxu0 0
  %418 = vmatprep.subr.bf16.mxu0 0
  %419 = vmatpush1.bf16.msra.mxu0 0
  %420 = vmatprep.subr.bf16.mxu0 0
  %421 = vmatpush1.bf16.msra.mxu0 0
  %422 = vmatprep.subr.bf16.mxu0 0
  %423 = vmatpush1.bf16.msra.mxu0 0
  %424 = vmatprep.subr.bf16.mxu0 0
  %425 = vmatpush1.bf16.msra.mxu0 0
  %426 = vmatprep.subr.bf16.mxu0 0
  %427 = vmatpush1.bf16.msra.mxu0 0
  %428 = vmatprep.subr.bf16.mxu0 0
  %429 = vmatpush1.bf16.msra.mxu0 0
  %430 = vmatprep.subr.bf16.mxu0 0
  %431 = vmatpush1.bf16.msra.mxu0 0
  %432 = vmatprep.subr.bf16.mxu0 0
  %433 = vmatpush1.bf16.msra.mxu0 0
  %434 = vmatprep.subr.bf16.mxu0 0
  %435 = vmatpush1.bf16.msra.mxu0 0
  %436 = vmatprep.subr.bf16.mxu0 0
  %437 = vmatpush1.bf16.msra.mxu0 0
  %438 = vmatprep.subr.bf16.mxu0 0
  %439 = vmatpush1.bf16.msra.mxu0 0
  %440 = vmatprep.mubr.bf16.mxu0 0
  %441 = vmatmul.mubr.bf16.gmra.mrb[0].mxu0 %v326
  %v442 = vpop.f32.mrb[0].mxu0
  %v443 = vadd.f32 %v403, %v442
  %v444 = vpop.f32.mrb[0].mxu0
  %v445 = vpop.f32.mrb[0].mxu0
  %v446 = vpop.f32.mrb[0].mxu0
  %447 = vdwg.mxu0
  %v448 = vmax.f32 %v443, 0.0
  %449 = vst.msk [vmem:[%s3] sm:$0xff] %vm324, %v448
  // Predicated region
  $region14: #{_lambda_.58} parent=0 // pred_check
    _
  $region15: #{_lambda_.58} parent=0 // pred_check_branch
    %451 = sbr.rel (0) target = $region17
  $region16: #{_lambda_.58} parent=0 // pred_region
    _
  $region17: #{_lambda_.58} parent=0 // pred_fallthru
    _
  // Predicated region
  $region18: #{_lambda_.58} parent=0 // pred_check
    _
  $region19: #{_lambda_.58} parent=0 // pred_check_branch
    %453 = sbr.rel (0) target = $region21
  $region20: #{_lambda_.58} parent=0 // pred_region
    _
  $region21: #{_lambda_.58} parent=0 // pred_fallthru
    _

// kernel: _lambda_.62
$region0: #{_lambda_.62}
  #allocation0 [shape = 'u32[]', space=smem, size = 0x4, offset = 0x4, fixed_abs, tag = 'smem constant byte address 0x4 - core index']
  #allocation1 [shape = 'u32[144,128]{1,0:T(1,128)}', space=vmem, size = 0x12000, scoped, tag = 'internal scratch']
  %s0 = inlined_call_operand.vmem [shape: bf16[8,64], index: 0, kind: input, shape index: {}]
  %s1 = inlined_call_operand.vmem [shape: bf16[64,32], index: 1, kind: input, shape index: {}]
  %s2 = inlined_call_operand.vmem [shape: f32[8,32], index: 2, kind: output, shape index: {}]
  %s3 = sld [smem:[#allocation0]]
  $region18: #{_lambda_.62} parent=0
    _
  %s5 = ssub.s32 1, %s3
  %s6 = scalar_select 0, %s5, %s3
  // Predicated region
  $region2: #{_lambda_.62} parent=0 // pred_check
    _
  $region3: #{_lambda_.62} parent=0 // pred_check_branch
    %8 = sbr.rel (0) target = $region5
  $region4: #{_lambda_.62} parent=0 // pred_region
    _
  $region5: #{_lambda_.62} parent=0 // pred_fallthru
    _
  // Predicated region
  $region6: #{_lambda_.62} parent=0 // pred_check
    _
  $region7: #{_lambda_.62} parent=0 // pred_check_branch
    %10 = sbr.rel (0) target = $region9
  $region8: #{_lambda_.62} parent=0 // pred_region
    _
  $region9: #{_lambda_.62} parent=0 // pred_fallthru
    _
  %v12 = vld [vmem:[%s0] sm:$0xf]
  %v13 = vld [vmem:[%s1] sm:$0xf]
  %v14 = vld [vmem:[%s1 + $0x4] sm:$0xf]
  %v15 = vld [vmem:[%s1 + $0x8] sm:$0xf]
  %v16 = vld [vmem:[%s1 + $0xc] sm:$0xf]
  %v17 = vld [vmem:[%s1 + $0x10] sm:$0xf]
  %v18 = vld [vmem:[%s1 + $0x14] sm:$0xf]
  %v19 = vld [vmem:[%s1 + $0x18] sm:$0xf]
  %v20 = vld [vmem:[%s1 + $0x1c] sm:$0xf]
  %v29 = vunpack.c.l.b16 %v13
  %v30 = vunpack.c.l.b16 %v14
  %v31 = vunpack.c.l.b16 %v15
  %v32 = vunpack.c.l.b16 %v16
  %v33 = vunpack.c.l.b16 %v17
  %v34 = vunpack.c.l.b16 %v18
  %v35 = vunpack.c.l.b16 %v19
  %v36 = vunpack.c.l.b16 %v20
  %v37 = vpack.c.b16 %v30, %v29
  %v38 = vpack.c.b16 %v32, %v31
  %v39 = vpack.c.b16 %v34, %v33
  %v40 = vpack.c.b16 %v36, %v35
  %vm45 = vcmask 523264
  %v47 = vsel %vm45, %v12, 0
  %49 = vmatprep.subr.bf16.mxu0 0
  %50 = vmatpush1.bf16.msra.mxu0 %v37
  %51 = vmatprep.subr.bf16.mxu0 0
  %52 = vmatpush1.bf16.msra.mxu0 %v38
  %53 = vmatprep.subr.bf16.mxu0 0
  %54 = vmatpush1.bf16.msra.mxu0 %v39
  %55 = vmatprep.subr.bf16.mxu0 0
  %56 = vmatpush1.bf16.msra.mxu0 %v40
  %57 = vmatprep.subr.bf16.mxu0 0
  %58 = vmatpush1.bf16.msra.mxu0 0
  %59 = vmatprep.subr.bf16.mxu0 0
  %60 = vmatpush1.bf16.msra.mxu0 0
  %61 = vmatprep.subr.bf16.mxu0 0
  %62 = vmatpush1.bf16.msra.mxu0 0
  %63 = vmatprep.subr.bf16.mxu0 0
  %64 = vmatpush1.bf16.msra.mxu0 0
  %65 = vmatprep.subr.bf16.mxu0 0
  %66 = vmatpush1.bf16.msra.mxu0 0
  %67 = vmatprep.subr.bf16.mxu0 0
  %68 = vmatpush1.bf16.msra.mxu0 0
  %69 = vmatprep.subr.bf16.mxu0 0
  %70 = vmatpush1.bf16.msra.mxu0 0
  %71 = vmatprep.subr.bf16.mxu0 0
  %72 = vmatpush1.bf16.msra.mxu0 0
  %73 = vmatprep.subr.bf16.mxu0 0
  %74 = vmatpush1.bf16.msra.mxu0 0
  %75 = vmatprep.subr.bf16.mxu0 0
  %76 = vmatpush1.bf16.msra.mxu0 0
  %77 = vmatprep.subr.bf16.mxu0 0
  %78 = vmatpush1.bf16.msra.mxu0 0
  %79 = vmatprep.subr.bf16.mxu0 0
  %80 = vmatpush1.bf16.msra.mxu0 0
  %81 = vmatprep.mubr.bf16.mxu0 0
  %82 = vmatmul.mubr.bf16.gmra.mrb[0].mxu0 %v47
  %v83 = vpop.f32.mrb[0].mxu0
  %v84 = vadd.f32 0.0, %v83
  %v85 = vpop.f32.mrb[0].mxu0
  %v86 = vpop.f32.mrb[0].mxu0
  %v87 = vpop.f32.mrb[0].mxu0
  %88 = vdwg.mxu0
  %vm89 = vcmask 261120
  %90 = vst.msk [vmem:[%s2] sm:$0xff] %vm89, %v84
  // Predicated region
  $region10: #{_lambda_.62} parent=0 // pred_check
    _
  $region11: #{_lambda_.62} parent=0 // pred_check_branch
    %92 = sbr.rel (0) target = $region13
  $region12: #{_lambda_.62} parent=0 // pred_region
    _
  $region13: #{_lambda_.62} parent=0 // pred_fallthru
    _
  // Predicated region
  $region14: #{_lambda_.62} parent=0 // pred_check
    _
  $region15: #{_lambda_.62} parent=0 // pred_check_branch
    %94 = sbr.rel (0) target = $region17
  $region16: #{_lambda_.62} parent=0 // pred_region
    _
  $region17: #{_lambda_.62} parent=0 // pred_fallthru
    _

// kernel: _lambda_.59
$region0: #{_lambda_.59}
  #allocation0 [shape = 'u32[]', space=smem, size = 0x4, offset = 0x4, fixed_abs, tag = 'smem constant byte address 0x4 - core index']
  #allocation1 [shape = 'u32[144,128]{1,0:T(1,128)}', space=vmem, size = 0x12000, scoped, tag = 'internal scratch']
  %s0 = inlined_call_operand.vmem [shape: bf16[8,576], index: 0, kind: input, shape index: {}]
  %s1 = inlined_call_operand.vmem [shape: bf16[576,64], index: 1, kind: input, shape index: {}]
  %s2 = inlined_call_operand.vmem [shape: f32[8,64], index: 2, kind: output, shape index: {}]
  %s3 = sld [smem:[#allocation0]]
  $region18: #{_lambda_.59} parent=0
    _
  %s5 = ssub.s32 1, %s3
  %s6 = scalar_select 0, %s5, %s3
  // Predicated region
  $region2: #{_lambda_.59} parent=0 // pred_check
    _
  $region3: #{_lambda_.59} parent=0 // pred_check_branch
    %8 = sbr.rel (0) target = $region5
  $region4: #{_lambda_.59} parent=0 // pred_region
    _
  $region5: #{_lambda_.59} parent=0 // pred_fallthru
    _
  // Predicated region
  $region6: #{_lambda_.59} parent=0 // pred_check
    _
  $region7: #{_lambda_.59} parent=0 // pred_check_branch
    %10 = sbr.rel (0) target = $region9
  $region8: #{_lambda_.59} parent=0 // pred_region
    _
  $region9: #{_lambda_.59} parent=0 // pred_fallthru
    _
  %v12 = vld [vmem:[%s0] sm:$0xff]
  %v13 = vld [vmem:[%s0 + $0x8] sm:$0xff]
  %v14 = vld [vmem:[%s0 + $0x10] sm:$0xf]
  %v15 = vld [vmem:[%s1] sm:$0xf]
  %v16 = vld [vmem:[%s1 + $0x4] sm:$0xf]
  %v17 = vld [vmem:[%s1 + $0x8] sm:$0xf]
  %v18 = vld [vmem:[%s1 + $0xc] sm:$0xf]
  %v19 = vld [vmem:[%s1 + $0x10] sm:$0xf]
  %v20 = vld [vmem:[%s1 + $0x14] sm:$0xf]
  %v21 = vld [vmem:[%s1 + $0x18] sm:$0xf]
  %v22 = vld [vmem:[%s1 + $0x1c] sm:$0xf]
  %v23 = vld [vmem:[%s1 + $0x20] sm:$0xf]
  %v24 = vld [vmem:[%s1 + $0x24] sm:$0xf]
  %v25 = vld [vmem:[%s1 + $0x28] sm:$0xf]
  %v26 = vld [vmem:[%s1 + $0x2c] sm:$0xf]
  %v27 = vld [vmem:[%s1 + $0x30] sm:$0xf]
  %v28 = vld [vmem:[%s1 + $0x34] sm:$0xf]
  %v29 = vld [vmem:[%s1 + $0x38] sm:$0xf]
  %v30 = vld [vmem:[%s1 + $0x3c] sm:$0xf]
  %v31 = vld [vmem:[%s1 + $0x40] sm:$0xf]
  %v32 = vld [vmem:[%s1 + $0x44] sm:$0xf]
  %v33 = vld [vmem:[%s1 + $0x48] sm:$0xf]
  %v34 = vld [vmem:[%s1 + $0x4c] sm:$0xf]
  %v35 = vld [vmem:[%s1 + $0x50] sm:$0xf]
  %v36 = vld [vmem:[%s1 + $0x54] sm:$0xf]
  %v37 = vld [vmem:[%s1 + $0x58] sm:$0xf]
  %v38 = vld [vmem:[%s1 + $0x5c] sm:$0xf]
  %v39 = vld [vmem:[%s1 + $0x60] sm:$0xf]
  %v40 = vld [vmem:[%s1 + $0x64] sm:$0xf]
  %v41 = vld [vmem:[%s1 + $0x68] sm:$0xf]
  %v42 = vld [vmem:[%s1 + $0x6c] sm:$0xf]
  %v43 = vld [vmem:[%s1 + $0x70] sm:$0xf]
  %v44 = vld [vmem:[%s1 + $0x74] sm:$0xf]
  %v45 = vld [vmem:[%s1 + $0x78] sm:$0xf]
  %v46 = vld [vmem:[%s1 + $0x7c] sm:$0xf]
  %v47 = vld [vmem:[%s1 + $0x80] sm:$0xf]
  %v48 = vld [vmem:[%s1 + $0x84] sm:$0xf]
  %v49 = vld [vmem:[%s1 + $0x88] sm:$0xf]
  %v50 = vld [vmem:[%s1 + $0x8c] sm:$0xf]
  %v51 = vld [vmem:[%s1 + $0x90] sm:$0xf]
  %v52 = vld [vmem:[%s1 + $0x94] sm:$0xf]
  %v53 = vld [vmem:[%s1 + $0x98] sm:$0xf]
  %v54 = vld [vmem:[%s1 + $0x9c] sm:$0xf]
  %v55 = vld [vmem:[%s1 + $0xa0] sm:$0xf]
  %v56 = vld [vmem:[%s1 + $0xa4] sm:$0xf]
  %v57 = vld [vmem:[%s1 + $0xa8] sm:$0xf]
  %v58 = vld [vmem:[%s1 + $0xac] sm:$0xf]
  %v59 = vld [vmem:[%s1 + $0xb0] sm:$0xf]
  %v60 = vld [vmem:[%s1 + $0xb4] sm:$0xf]
  %v61 = vld [vmem:[%s1 + $0xb8] sm:$0xf]
  %v62 = vld [vmem:[%s1 + $0xbc] sm:$0xf]
  %v63 = vld [vmem:[%s1 + $0xc0] sm:$0xf]
  %v64 = vld [vmem:[%s1 + $0xc4] sm:$0xf]
  %v65 = vld [vmem:[%s1 + $0xc8] sm:$0xf]
  %v66 = vld [vmem:[%s1 + $0xcc] sm:$0xf]
  %v67 = vld [vmem:[%s1 + $0xd0] sm:$0xf]
  %v68 = vld [vmem:[%s1 + $0xd4] sm:$0xf]
  %v69 = vld [vmem:[%s1 + $0xd8] sm:$0xf]
  %v70 = vld [vmem:[%s1 + $0xdc] sm:$0xf]
  %v71 = vld [vmem:[%s1 + $0xe0] sm:$0xf]
  %v72 = vld [vmem:[%s1 + $0xe4] sm:$0xf]
  %v73 = vld [vmem:[%s1 + $0xe8] sm:$0xf]
  %v74 = vld [vmem:[%s1 + $0xec] sm:$0xf]
  %v75 = vld [vmem:[%s1 + $0xf0] sm:$0xf]
  %v76 = vld [vmem:[%s1 + $0xf4] sm:$0xf]
  %v77 = vld [vmem:[%s1 + $0xf8] sm:$0xf]
  %v78 = vld [vmem:[%s1 + $0xfc] sm:$0xf]
  %v79 = vld [vmem:[%s1 + $0x100] sm:$0xf]
  %v80 = vld [vmem:[%s1 + $0x104] sm:$0xf]
  %v81 = vld [vmem:[%s1 + $0x108] sm:$0xf]
  %v82 = vld [vmem:[%s1 + $0x10c] sm:$0xf]
  %v83 = vld [vmem:[%s1 + $0x110] sm:$0xf]
  %v84 = vld [vmem:[%s1 + $0x114] sm:$0xf]
  %v85 = vld [vmem:[%s1 + $0x118] sm:$0xf]
  %v86 = vld [vmem:[%s1 + $0x11c] sm:$0xf]
  %v90 = vunpack.c.l.b16 %v12
  %v91 = vunpack.c.h.b16 %v12
  %v92 = vunpack.c.l.b16 %v13
  %v93 = vunpack.c.h.b16 %v13
  %v94 = vunpack.c.l.b16 %v14
  %v95 = vpack.c.b16 %v90, %v90
  %v96 = vpack.c.b16 %v91, %v91
  %v97 = vpack.c.b16 %v92, %v92
  %v98 = vpack.c.b16 %v93, %v93
  %v99 = vpack.c.b16 %v94, %v94
  %v176 = vunpack.c.l.b16 %v15
  %v177 = vunpack.c.l.b16 %v16
  %v178 = vunpack.c.l.b16 %v17
  %v179 = vunpack.c.l.b16 %v18
  %v180 = vunpack.c.l.b16 %v19
  %v181 = vunpack.c.l.b16 %v20
  %v182 = vunpack.c.l.b16 %v21
  %v183 = vunpack.c.l.b16 %v22
  %v184 = vunpack.c.l.b16 %v23
  %v185 = vunpack.c.l.b16 %v24
  %v186 = vunpack.c.l.b16 %v25
  %v187 = vunpack.c.l.b16 %v26
  %v188 = vunpack.c.l.b16 %v27
  %v189 = vunpack.c.l.b16 %v28
  %v190 = vunpack.c.l.b16 %v29
  %v191 = vunpack.c.l.b16 %v30
  %v192 = vunpack.c.l.b16 %v31
  %v193 = vunpack.c.l.b16 %v32
  %v194 = vunpack.c.l.b16 %v33
  %v195 = vunpack.c.l.b16 %v34
  %v196 = vunpack.c.l.b16 %v35
  %v197 = vunpack.c.l.b16 %v36
  %v198 = vunpack.c.l.b16 %v37
  %v199 = vunpack.c.l.b16 %v38
  %v200 = vunpack.c.l.b16 %v39
  %v201 = vunpack.c.l.b16 %v40
  %v202 = vunpack.c.l.b16 %v41
  %v203 = vunpack.c.l.b16 %v42
  %v204 = vunpack.c.l.b16 %v43
  %v205 = vunpack.c.l.b16 %v44
  %v206 = vunpack.c.l.b16 %v45
  %v207 = vunpack.c.l.b16 %v46
  %v208 = vunpack.c.l.b16 %v47
  %v209 = vunpack.c.l.b16 %v48
  %v210 = vunpack.c.l.b16 %v49
  %v211 = vunpack.c.l.b16 %v50
  %v212 = vunpack.c.l.b16 %v51
  %v213 = vunpack.c.l.b16 %v52
  %v214 = vunpack.c.l.b16 %v53
  %v215 = vunpack.c.l.b16 %v54
  %v216 = vunpack.c.l.b16 %v55
  %v217 = vunpack.c.l.b16 %v56
  %v218 = vunpack.c.l.b16 %v57
  %v219 = vunpack.c.l.b16 %v58
  %v220 = vunpack.c.l.b16 %v59
  %v221 = vunpack.c.l.b16 %v60
  %v222 = vunpack.c.l.b16 %v61
  %v223 = vunpack.c.l.b16 %v62
  %v224 = vunpack.c.l.b16 %v63
  %v225 = vunpack.c.l.b16 %v64
  %v226 = vunpack.c.l.b16 %v65
  %v227 = vunpack.c.l.b16 %v66
  %v228 = vunpack.c.l.b16 %v67
  %v229 = vunpack.c.l.b16 %v68
  %v230 = vunpack.c.l.b16 %v69
  %v231 = vunpack.c.l.b16 %v70
  %v232 = vunpack.c.l.b16 %v71
  %v233 = vunpack.c.l.b16 %v72
  %v234 = vunpack.c.l.b16 %v73
  %v235 = vunpack.c.l.b16 %v74
  %v236 = vunpack.c.l.b16 %v75
  %v237 = vunpack.c.l.b16 %v76
  %v238 = vunpack.c.l.b16 %v77
  %v239 = vunpack.c.l.b16 %v78
  %v240 = vunpack.c.l.b16 %v79
  %v241 = vunpack.c.l.b16 %v80
  %v242 = vunpack.c.l.b16 %v81
  %v243 = vunpack.c.l.b16 %v82
  %v244 = vunpack.c.l.b16 %v83
  %v245 = vunpack.c.l.b16 %v84
  %v246 = vunpack.c.l.b16 %v85
  %v247 = vunpack.c.l.b16 %v86
  %v248 = vpack.c.b16 %v177, %v176
  %v249 = vpack.c.b16 %v179, %v178
  %v250 = vpack.c.b16 %v181, %v180
  %v251 = vpack.c.b16 %v183, %v182
  %v252 = vpack.c.b16 %v185, %v184
  %v253 = vpack.c.b16 %v187, %v186
  %v254 = vpack.c.b16 %v189, %v188
  %v255 = vpack.c.b16 %v191, %v190
  %v256 = vpack.c.b16 %v193, %v192
  %v257 = vpack.c.b16 %v195, %v194
  %v258 = vpack.c.b16 %v197, %v196
  %v259 = vpack.c.b16 %v199, %v198
  %v260 = vpack.c.b16 %v201, %v200
  %v261 = vpack.c.b16 %v203, %v202
  %v262 = vpack.c.b16 %v205, %v204
  %v263 = vpack.c.b16 %v207, %v206
  %v264 = vpack.c.b16 %v209, %v208
  %v265 = vpack.c.b16 %v211, %v210
  %v266 = vpack.c.b16 %v213, %v212
  %v267 = vpack.c.b16 %v215, %v214
  %v268 = vpack.c.b16 %v217, %v216
  %v269 = vpack.c.b16 %v219, %v218
  %v270 = vpack.c.b16 %v221, %v220
  %v271 = vpack.c.b16 %v223, %v222
  %v272 = vpack.c.b16 %v225, %v224
  %v273 = vpack.c.b16 %v227, %v226
  %v274 = vpack.c.b16 %v229, %v228
  %v275 = vpack.c.b16 %v231, %v230
  %v276 = vpack.c.b16 %v233, %v232
  %v277 = vpack.c.b16 %v235, %v234
  %v278 = vpack.c.b16 %v237, %v236
  %v279 = vpack.c.b16 %v239, %v238
  %v280 = vpack.c.b16 %v241, %v240
  %v281 = vpack.c.b16 %v243, %v242
  %v282 = vpack.c.b16 %v245, %v244
  %v283 = vpack.c.b16 %v247, %v246
  %vm320 = vcmask 523264
  %v322 = vsel %vm320, %v99, 0
  %324 = vmatprep.subr.bf16.mxu0 0
  %325 = vmatpush1.bf16.msra.mxu0 %v248
  %326 = vmatprep.subr.bf16.mxu0 0
  %327 = vmatpush1.bf16.msra.mxu0 %v249
  %328 = vmatprep.subr.bf16.mxu0 0
  %329 = vmatpush1.bf16.msra.mxu0 %v250
  %330 = vmatprep.subr.bf16.mxu0 0
  %331 = vmatpush1.bf16.msra.mxu0 %v251
  %332 = vmatprep.subr.bf16.mxu0 0
  %333 = vmatpush1.bf16.msra.mxu0 %v252
  %334 = vmatprep.subr.bf16.mxu0 0
  %335 = vmatpush1.bf16.msra.mxu0 %v253
  %336 = vmatprep.subr.bf16.mxu0 0
  %337 = vmatpush1.bf16.msra.mxu0 %v254
  %338 = vmatprep.subr.bf16.mxu0 0
  %339 = vmatpush1.bf16.msra.mxu0 %v255
  %340 = vmatprep.subr.bf16.mxu0 0
  %341 = vmatpush1.bf16.msra.mxu0 %v256
  %342 = vmatprep.subr.bf16.mxu0 0
  %343 = vmatpush1.bf16.msra.mxu0 %v257
  %344 = vmatprep.subr.bf16.mxu0 0
  %345 = vmatpush1.bf16.msra.mxu0 %v258
  %346 = vmatprep.subr.bf16.mxu0 0
  %347 = vmatpush1.bf16.msra.mxu0 %v259
  %348 = vmatprep.subr.bf16.mxu0 0
  %349 = vmatpush1.bf16.msra.mxu0 %v260
  %350 = vmatprep.subr.bf16.mxu0 0
  %351 = vmatpush1.bf16.msra.mxu0 %v261
  %352 = vmatprep.subr.bf16.mxu0 0
  %353 = vmatpush1.bf16.msra.mxu0 %v262
  %354 = vmatprep.subr.bf16.mxu0 0
  %355 = vmatpush1.bf16.msra.mxu0 %v263
  %356 = vmatprep.mubr.bf16.mxu0 %v96
  %357 = vmatmul.mubr.bf16.gmra.mrb[0].mxu0 %v95
  %v358 = vpop.f32.mrb[0].mxu0
  %v359 = vadd.f32 0.0, %v358
  %v360 = vpop.f32.mrb[0].mxu0
  %v361 = vpop.f32.mrb[0].mxu0
  %v362 = vpop.f32.mrb[0].mxu0
  %363 = vdwg.mxu0
  %364 = vmatprep.subr.bf16.mxu0 0
  %365 = vmatpush1.bf16.msra.mxu0 %v264
  %366 = vmatprep.subr.bf16.mxu0 0
  %367 = vmatpush1.bf16.msra.mxu0 %v265
  %368 = vmatprep.subr.bf16.mxu0 0
  %369 = vmatpush1.bf16.msra.mxu0 %v266
  %370 = vmatprep.subr.bf16.mxu0 0
  %371 = vmatpush1.bf16.msra.mxu0 %v267
  %372 = vmatprep.subr.bf16.mxu0 0
  %373 = vmatpush1.bf16.msra.mxu0 %v268
  %374 = vmatprep.subr.bf16.mxu0 0
  %375 = vmatpush1.bf16.msra.mxu0 %v269
  %376 = vmatprep.subr.bf16.mxu0 0
  %377 = vmatpush1.bf16.msra.mxu0 %v270
  %378 = vmatprep.subr.bf16.mxu0 0
  %379 = vmatpush1.bf16.msra.mxu0 %v271
  %380 = vmatprep.subr.bf16.mxu0 0
  %381 = vmatpush1.bf16.msra.mxu0 %v272
  %382 = vmatprep.subr.bf16.mxu0 0
  %383 = vmatpush1.bf16.msra.mxu0 %v273
  %384 = vmatprep.subr.bf16.mxu0 0
  %385 = vmatpush1.bf16.msra.mxu0 %v274
  %386 = vmatprep.subr.bf16.mxu0 0
  %387 = vmatpush1.bf16.msra.mxu0 %v275
  %388 = vmatprep.subr.bf16.mxu0 0
  %389 = vmatpush1.bf16.msra.mxu0 %v276
  %390 = vmatprep.subr.bf16.mxu0 0
  %391 = vmatpush1.bf16.msra.mxu0 %v277
  %392 = vmatprep.subr.bf16.mxu0 0
  %393 = vmatpush1.bf16.msra.mxu0 %v278
  %394 = vmatprep.subr.bf16.mxu0 0
  %395 = vmatpush1.bf16.msra.mxu0 %v279
  %396 = vmatprep.mubr.bf16.mxu0 %v98
  %397 = vmatmul.mubr.bf16.gmra.mrb[0].mxu0 %v97
  %v398 = vpop.f32.mrb[0].mxu0
  %v399 = vadd.f32 %v359, %v398
  %v400 = vpop.f32.mrb[0].mxu0
  %v401 = vpop.f32.mrb[0].mxu0
  %v402 = vpop.f32.mrb[0].mxu0
  %403 = vdwg.mxu0
  %404 = vmatprep.subr.bf16.mxu0 0
  %405 = vmatpush1.bf16.msra.mxu0 %v280
  %406 = vmatprep.subr.bf16.mxu0 0
  %407 = vmatpush1.bf16.msra.mxu0 %v281
  %408 = vmatprep.subr.bf16.mxu0 0
  %409 = vmatpush1.bf16.msra.mxu0 %v282
  %410 = vmatprep.subr.bf16.mxu0 0
  %411 = vmatpush1.bf16.msra.mxu0 %v283
  %412 = vmatprep.subr.bf16.mxu0 0
  %413 = vmatpush1.bf16.msra.mxu0 0
  %414 = vmatprep.subr.bf16.mxu0 0
  %415 = vmatpush1.bf16.msra.mxu0 0
  %416 = vmatprep.subr.bf16.mxu0 0
  %417 = vmatpush1.bf16.msra.mxu0 0
  %418 = vmatprep.subr.bf16.mxu0 0
  %419 = vmatpush1.bf16.msra.mxu0 0
  %420 = vmatprep.subr.bf16.mxu0 0
  %421 = vmatpush1.bf16.msra.mxu0 0
  %422 = vmatprep.subr.bf16.mxu0 0
  %423 = vmatpush1.bf16.msra.mxu0 0
  %424 = vmatprep.subr.bf16.mxu0 0
  %425 = vmatpush1.bf16.msra.mxu0 0
  %426 = vmatprep.subr.bf16.mxu0 0
  %427 = vmatpush1.bf16.msra.mxu0 0
  %428 = vmatprep.subr.bf16.mxu0 0
  %429 = vmatpush1.bf16.msra.mxu0 0
  %430 = vmatprep.subr.bf16.mxu0 0
  %431 = vmatpush1.bf16.msra.mxu0 0
  %432 = vmatprep.subr.bf16.mxu0 0
  %433 = vmatpush1.bf16.msra.mxu0 0
  %434 = vmatprep.subr.bf16.mxu0 0
  %435 = vmatpush1.bf16.msra.mxu0 0
  %436 = vmatprep.mubr.bf16.mxu0 0
  %437 = vmatmul.mubr.bf16.gmra.mrb[0].mxu0 %v322
  %v438 = vpop.f32.mrb[0].mxu0
  %v439 = vadd.f32 %v399, %v438
  %v440 = vpop.f32.mrb[0].mxu0
  %v441 = vpop.f32.mrb[0].mxu0
  %v442 = vpop.f32.mrb[0].mxu0
  %443 = vdwg.mxu0
  %v444 = vmax.f32 %v439, 0.0
  %445 = vst.msk [vmem:[%s2] sm:$0xff] %vm320, %v444
  // Predicated region
  $region10: #{_lambda_.59} parent=0 // pred_check
    _
  $region11: #{_lambda_.59} parent=0 // pred_check_branch
    %447 = sbr.rel (0) target = $region13
  $region12: #{_lambda_.59} parent=0 // pred_region
    _
  $region13: #{_lambda_.59} parent=0 // pred_fallthru
    _
  // Predicated region
  $region14: #{_lambda_.59} parent=0 // pred_check
    _
  $region15: #{_lambda_.59} parent=0 // pred_check_branch
    %449 = sbr.rel (0) target = $region17
  $region16: #{_lambda_.59} parent=0 // pred_region
    _
  $region17: #{_lambda_.59} parent=0 // pred_fallthru
    _

// kernel: _lambda_.67
$region0: #{_lambda_.67}
  #allocation0 [shape = 'u32[]', space=smem, size = 0x4, offset = 0x4, fixed_abs, tag = 'smem constant byte address 0x4 - core index']
  #allocation1 [shape = 'u32[144,128]{1,0:T(1,128)}', space=vmem, size = 0x12000, scoped, tag = 'internal scratch']
  %s0 = inlined_call_operand.vmem [shape: bf16[32,32], index: 0, kind: input, shape index: {}]
  %s1 = inlined_call_operand.vmem [shape: bf16[32,16], index: 1, kind: input, shape index: {}]
  %s2 = inlined_call_operand.vmem [shape: f32[32,16], index: 2, kind: output, shape index: {}]
  %s3 = sld [smem:[#allocation0]]
  $region41: #{_lambda_.67} parent=0
    _
  %s5 = ssub.s32 1, %s3
  %s6 = scalar_select 0, %s5, %s3
  loop: start=0, step=1, limit=4
  $region2: #{_lambda_.67} parent=0 // loop_pre_header
    _
  $region3: #{_lambda_.67} parent=0 // loop_header
    %s8 = sphi 0, %s12
    %p9 = scmp.ge.s32.totalorder %s8, 4
    %s18 = sphi 0, %s20
    %s21 = sphi 0, %s18
    %s22 = sphi 0, %s21
    %s38 = sphi 0, %s22
    %s42 = sphi 0, %s42
    %s44 = sphi 0, %s42
    %s45 = sphi 0, %s44
    %s59 = sphi 0, %s45
    %s65 = sphi 0, %s67
    %s68 = sphi 0, %s65
    %s69 = sphi 0, %s68
    %s85 = sphi 0, %s69
  $region4: #{_lambda_.67} parent=0 // loop_header_branch
    %11 = sbr.rel (%p9) target = $region8
  $region5: #{_lambda_.67} parent=0 // loop_body
    %s13 = ssub.s32 %s8, 1
    %s14 = ssub.s32 %s8, 2
    %s15 = sadd.s32 %s8, 1
    %s16 = ssub.s32 %s8, %s15
    %p17 = scmp.eq.s32.totalorder %s16, 0
    %s19 = sadd.s32 %s18, 1
    %s20 = scalar_select %p17, %s18, %s19
    %p23 = pneg %p17
    %p24 = scmp.eq.s32.totalorder %s8, 1
    %p25 = por %p23, %p24
    %p26 = scmp.ne.s32.totalorder %s18, %s21
    %p27 = scmp.eq.s32.totalorder %s8, 0
    %p28 = por %p26, %p27
    %p29 = scmp.ne.s32.totalorder %s18, %s21
    %p30 = scmp.eq.s32.totalorder %s13, 1
    %p31 = por %p29, %p30
    %p32 = scmp.ne.s32.totalorder %s21, %s22
    %p33 = scmp.eq.s32.totalorder %s13, 0
    %p34 = por %p32, %p33
    %p35 = scmp.ne.s32.totalorder %s21, %s22
    %p36 = scmp.eq.s32.totalorder %s14, 1
    %p37 = por %p35, %p36
    %p39 = scmp.ne.s32.totalorder %s22, %s38
    %p40 = scmp.eq.s32.totalorder %s14, 0
    %p41 = por %p39, %p40
    %s43 = sadd.s32 %s42, 1
    %p46 = scmp.eq.s32.totalorder %s8, 1
    %p47 = scmp.ne.s32.totalorder %s42, %s44
    %p48 = scmp.eq.s32.totalorder %s8, 0
    %p49 = por %p47, %p48
    %p50 = scmp.ne.s32.totalorder %s42, %s44
    %p51 = scmp.eq.s32.totalorder %s13, 1
    %p52 = por %p50, %p51
    %p53 = scmp.ne.s32.totalorder %s44, %s45
    %p54 = scmp.eq.s32.totalorder %s13, 0
    %p55 = por %p53, %p54
    %p56 = scmp.ne.s32.totalorder %s44, %s45
    %p57 = scmp.eq.s32.totalorder %s14, 1
    %p58 = por %p56, %p57
    %p60 = scmp.ne.s32.totalorder %s45, %s59
    %p61 = scmp.eq.s32.totalorder %s14, 0
    %p62 = por %p60, %p61
    %s63 = ssub.s32 %s8, %s15
    %p64 = scmp.eq.s32.totalorder %s63, 0
    %s66 = sadd.s32 %s65, 1
    %s67 = scalar_select %p64, %s65, %s66
    %p70 = pneg %p64
    %p71 = scmp.eq.s32.totalorder %s8, 1
    %p72 = por %p70, %p71
    %p73 = scmp.ne.s32.totalorder %s65, %s68
    %p74 = scmp.eq.s32.totalorder %s8, 0
    %p75 = por %p73, %p74
    %p76 = scmp.ne.s32.totalorder %s65, %s68
    %p77 = scmp.eq.s32.totalorder %s13, 1
    %p78 = por %p76, %p77
    %p79 = scmp.ne.s32.totalorder %s68, %s69
    %p80 = scmp.eq.s32.totalorder %s13, 0
    %p81 = por %p79, %p80
    %p82 = scmp.ne.s32.totalorder %s68, %s69
    %p83 = scmp.eq.s32.totalorder %s14, 1
    %p84 = por %p82, %p83
    %p86 = scmp.ne.s32.totalorder %s69, %s85
    %p87 = scmp.eq.s32.totalorder %s14, 0
    %p88 = por %p86, %p87
    %p89 = scmp.le.s32.totalorder 1, %s8
    %p90 = scmp.lt.s32.totalorder %s8, 3
    %p91 = pnand %p89, %p90
    %p92 = pneg %p91
    // Predicated region
    $region9: #{_lambda_.67} parent=5 // pred_check
      _
    $region10: #{_lambda_.67} parent=5 // pred_check_branch
      %94 = sbr.rel (%p91) target = $region12
    $region11: #{_lambda_.67} parent=5 // pred_region
      %s95 = ssub.s32 %s8, 1
      // Predicated region
      $region13: #{_lambda_.67} parent=11 // pred_check
        %p96 = pneg %p55
      $region14: #{_lambda_.67} parent=11 // pred_check_branch
        %98 = sbr.rel (%p96) target = $region16
      $region15: #{_lambda_.67} parent=11 // pred_region
        _
      $region16: #{_lambda_.67} parent=11 // pred_fallthru
        _
    $region12: #{_lambda_.67} parent=5 // pred_fallthru
      _
    %p99 = scmp.lt.s32.totalorder %s8, 2
    // Predicated region
    $region17: #{_lambda_.67} parent=5 // pred_check
      %p100 = pneg %p99
    $region18: #{_lambda_.67} parent=5 // pred_check_branch
      %102 = sbr.rel (%p100) target = $region20
    $region19: #{_lambda_.67} parent=5 // pred_region
      // Predicated region
      $region21: #{_lambda_.67} parent=19 // pred_check
        %p103 = pneg %p28
      $region22: #{_lambda_.67} parent=19 // pred_check_branch
        %105 = sbr.rel (%p103) target = $region24
      $region23: #{_lambda_.67} parent=19 // pred_region
        %s106 = smul.u32 2, %s8
        %p107 = scmp.lt.s32.totalorder %s106, 3
        %s108 = scalar_select %p107, %s106, 3
        %s109 = smul.addr %s108, 4
        %s110 = scalar_lea.vmem %s0, %s109
        %s111 = smul.u32 2, %s8
      $region24: #{_lambda_.67} parent=19 // pred_fallthru
        _
    $region20: #{_lambda_.67} parent=5 // pred_fallthru
      _
    %p112 = scmp.le.s32.totalorder 1, %s8
    %p113 = scmp.lt.s32.totalorder %s8, 3
    %p114 = pnand %p112, %p113
    %p115 = pneg %p114
    // Predicated region
    $region25: #{_lambda_.67} parent=5 // pred_check
      _
    $region26: #{_lambda_.67} parent=5 // pred_check_branch
      %117 = sbr.rel (%p114) target = $region28
    $region27: #{_lambda_.67} parent=5 // pred_region
      %s118 = ssub.s32 %s8, 1
      %s119 = smul.u32 2, %s13
      %p120 = scmp.lt.s32.totalorder %s119, 3
      %s121 = scalar_select %p120, %s119, 3
      %s122 = smul.addr %s121, 4
      %s123 = scalar_lea.vmem %s0, %s122
      %p124 = pneg %p34
      %p125 = pneg %p31
      %p126 = pneg %p55
      %p127 = pneg %p52
      %p128 = pneg %p81
      %p129 = pneg %p78
      %s130 = smul.u32 2, %s13
      %p131 = scmp.lt.s32.totalorder %s130, 3
      %s132 = scalar_select %p131, %s130, 3
      %s133 = smul.addr %s132, 8
      %s134 = scalar_lea.vmem %s2, %s133
      %s135 = smul.u32 2, %s13
      %p136 = scmp.lt.s32.totalorder %s135, 3
      %s137 = scalar_select %p136, %s135, 3
      %s138 = smul.addr %s137, 4
      %s139 = scalar_lea.vmem %s0, %s138
      %s140 = smul.u32 2, %s13
      %s141 = smul.u32 2, %s13
      %p142 = scmp.lt.s32.totalorder %s141, 3
      %s143 = scalar_select %p142, %s141, 3
      %s144 = smul.addr %s143, 8
      %s145 = scalar_lea.vmem %s2, %s144
      %s146 = smul.u32 2, %s13
      %v148 = vld [vmem:[%s139] sm:$0xf]
      %v149 = vld [vmem:[%s139 + $0x4] sm:$0xf]
      %v150 = vld [vmem:[%s1] sm:$0xf]
      %v151 = vld [vmem:[%s1 + $0x4] sm:$0xf]
      %v152 = vld [vmem:[%s1 + $0x8] sm:$0xf]
      %v153 = vld [vmem:[%s1 + $0xc] sm:$0xf]
      %v156 = vunpack.c.l.b16 %v148
      %v157 = vunpack.c.l.b16 %v149
      %v158 = vpack.c.b16 %v157, %v156
      %v163 = vunpack.c.l.b16 %v150
      %v164 = vunpack.c.l.b16 %v151
      %v165 = vunpack.c.l.b16 %v152
      %v166 = vunpack.c.l.b16 %v153
      %v167 = vpack.c.b16 %v164, %v163
      %v168 = vpack.c.b16 %v166, %v165
      %vm171 = vcmask 261120
      %v173 = vsel %vm171, %v158, 0
      %175 = vmatprep.subr.bf16.mxu0 0
      %176 = vmatpush1.bf16.msra.mxu0 %v167
      %177 = vmatprep.subr.bf16.mxu0 0
      %178 = vmatpush1.bf16.msra.mxu0 %v168
      %179 = vmatprep.subr.bf16.mxu0 0
      %180 = vmatpush1.bf16.msra.mxu0 0
      %181 = vmatprep.subr.bf16.mxu0 0
      %182 = vmatpush1.bf16.msra.mxu0 0
      %183 = vmatprep.subr.bf16.mxu0 0
      %184 = vmatpush1.bf16.msra.mxu0 0
      %185 = vmatprep.subr.bf16.mxu0 0
      %186 = vmatpush1.bf16.msra.mxu0 0
      %187 = vmatprep.subr.bf16.mxu0 0
      %188 = vmatpush1.bf16.msra.mxu0 0
      %189 = vmatprep.subr.bf16.mxu0 0
      %190 = vmatpush1.bf16.msra.mxu0 0
      %191 = vmatprep.subr.bf16.mxu0 0
      %192 = vmatpush1.bf16.msra.mxu0 0
      %193 = vmatprep.subr.bf16.mxu0 0
      %194 = vmatpush1.bf16.msra.mxu0 0
      %195 = vmatprep.subr.bf16.mxu0 0
      %196 = vmatpush1.bf16.msra.mxu0 0
      %197 = vmatprep.subr.bf16.mxu0 0
      %198 = vmatpush1.bf16.msra.mxu0 0
      %199 = vmatprep.subr.bf16.mxu0 0
      %200 = vmatpush1.bf16.msra.mxu0 0
      %201 = vmatprep.subr.bf16.mxu0 0
      %202 = vmatpush1.bf16.msra.mxu0 0
      %203 = vmatprep.subr.bf16.mxu0 0
      %204 = vmatpush1.bf16.msra.mxu0 0
      %205 = vmatprep.subr.bf16.mxu0 0
      %206 = vmatpush1.bf16.msra.mxu0 0
      %207 = vmatprep.mubr.bf16.mxu0 0
      %208 = vmatmul.mubr.bf16.gmra.mrb[0].mxu0 %v173
      %v209 = vpop.f32.mrb[0].mxu0
      %v210 = vadd.f32 0.0, %v209
      %v211 = vpop.f32.mrb[0].mxu0
      %v212 = vpop.f32.mrb[0].mxu0
      %v213 = vadd.f32 0.0, %v212
      %v214 = vpop.f32.mrb[0].mxu0
      %215 = vdwg.mxu0
      %vm216 = vcmask 130048
      %217 = vst.msk [vmem:[%s145] sm:$0xff] %vm216, %v210
      %218 = vst.msk [vmem:[%s145 + $0x8] sm:$0xff] %vm216, %v213
      %s219 = smul.u32 2, %s13
      %p220 = scmp.lt.s32.totalorder %s219, 3
      %s221 = scalar_select %p220, %s219, 3
      %s222 = smul.addr %s221, 8
      %s223 = scalar_lea.vmem %s2, %s222
      // Predicated region
      $region29: #{_lambda_.67} parent=27 // pred_check
        %p224 = pneg %p78
      $region30: #{_lambda_.67} parent=27 // pred_check_branch
        %226 = sbr.rel (%p224) target = $region32
      $region31: #{_lambda_.67} parent=27 // pred_region
        %s227 = smul.u32 2, %s13
      $region32: #{_lambda_.67} parent=27 // pred_fallthru
        _
    $region28: #{_lambda_.67} parent=5 // pred_fallthru
      _
    %p228 = scmp.le.s32.totalorder 2, %s8
    // Predicated region
    $region33: #{_lambda_.67} parent=5 // pred_check
      %p229 = pneg %p228
    $region34: #{_lambda_.67} parent=5 // pred_check_branch
      %231 = sbr.rel (%p229) target = $region36
    $region35: #{_lambda_.67} parent=5 // pred_region
      %s232 = ssub.s32 %s8, 2
      // Predicated region
      $region37: #{_lambda_.67} parent=35 // pred_check
        %p233 = pneg %p84
      $region38: #{_lambda_.67} parent=35 // pred_check_branch
        %235 = sbr.rel (%p233) target = $region40
      $region39: #{_lambda_.67} parent=35 // pred_region
        %s236 = smul.u32 2, %s14
        %p237 = scmp.lt.s32.totalorder %s236, 3
        %s238 = scalar_select %p237, %s236, 3
        %s239 = smul.addr %s238, 8
        %s240 = scalar_lea.vmem %s2, %s239
      $region40: #{_lambda_.67} parent=35 // pred_fallthru
        _
    $region36: #{_lambda_.67} parent=5 // pred_fallthru
      _
  $region6: #{_lambda_.67} parent=0 // loop_footer
    %s12 = sadd.s32 1, %s8
  $region7: #{_lambda_.67} parent=0 // loop_footer_branch
    %7 = sbr.rel target = $region3
  $region8: #{_lambda_.67} parent=0 // loop_exit
    _

// kernel: _lambda_.61
$region0: #{_lambda_.61}
  #allocation0 [shape = 'u32[]', space=smem, size = 0x4, offset = 0x4, fixed_abs, tag = 'smem constant byte address 0x4 - core index']
  #allocation1 [shape = 'u32[144,128]{1,0:T(1,128)}', space=vmem, size = 0x12000, scoped, tag = 'internal scratch']
  %s0 = inlined_call_operand.vmem [shape: bf16[8,576], index: 0, kind: input, shape index: {}]
  %s1 = inlined_call_operand.vmem [shape: bf16[576,32], index: 1, kind: input, shape index: {}]
  %s2 = inlined_call_operand.vmem [shape: f32[8,32], index: 2, kind: output, shape index: {}]
  %s3 = sld [smem:[#allocation0]]
  $region18: #{_lambda_.61} parent=0
    _
  %s5 = ssub.s32 1, %s3
  %s6 = scalar_select 0, %s5, %s3
  // Predicated region
  $region2: #{_lambda_.61} parent=0 // pred_check
    _
  $region3: #{_lambda_.61} parent=0 // pred_check_branch
    %8 = sbr.rel (0) target = $region5
  $region4: #{_lambda_.61} parent=0 // pred_region
    _
  $region5: #{_lambda_.61} parent=0 // pred_fallthru
    _
  // Predicated region
  $region6: #{_lambda_.61} parent=0 // pred_check
    _
  $region7: #{_lambda_.61} parent=0 // pred_check_branch
    %10 = sbr.rel (0) target = $region9
  $region8: #{_lambda_.61} parent=0 // pred_region
    _
  $region9: #{_lambda_.61} parent=0 // pred_fallthru
    _
  %v12 = vld [vmem:[%s0] sm:$0xff]
  %v13 = vld [vmem:[%s0 + $0x8] sm:$0xff]
  %v14 = vld [vmem:[%s0 + $0x10] sm:$0xf]
  %v15 = vld [vmem:[%s1] sm:$0xf]
  %v16 = vld [vmem:[%s1 + $0x4] sm:$0xf]
  %v17 = vld [vmem:[%s1 + $0x8] sm:$0xf]
  %v18 = vld [vmem:[%s1 + $0xc] sm:$0xf]
  %v19 = vld [vmem:[%s1 + $0x10] sm:$0xf]
  %v20 = vld [vmem:[%s1 + $0x14] sm:$0xf]
  %v21 = vld [vmem:[%s1 + $0x18] sm:$0xf]
  %v22 = vld [vmem:[%s1 + $0x1c] sm:$0xf]
  %v23 = vld [vmem:[%s1 + $0x20] sm:$0xf]
  %v24 = vld [vmem:[%s1 + $0x24] sm:$0xf]
  %v25 = vld [vmem:[%s1 + $0x28] sm:$0xf]
  %v26 = vld [vmem:[%s1 + $0x2c] sm:$0xf]
  %v27 = vld [vmem:[%s1 + $0x30] sm:$0xf]
  %v28 = vld [vmem:[%s1 + $0x34] sm:$0xf]
  %v29 = vld [vmem:[%s1 + $0x38] sm:$0xf]
  %v30 = vld [vmem:[%s1 + $0x3c] sm:$0xf]
  %v31 = vld [vmem:[%s1 + $0x40] sm:$0xf]
  %v32 = vld [vmem:[%s1 + $0x44] sm:$0xf]
  %v33 = vld [vmem:[%s1 + $0x48] sm:$0xf]
  %v34 = vld [vmem:[%s1 + $0x4c] sm:$0xf]
  %v35 = vld [vmem:[%s1 + $0x50] sm:$0xf]
  %v36 = vld [vmem:[%s1 + $0x54] sm:$0xf]
  %v37 = vld [vmem:[%s1 + $0x58] sm:$0xf]
  %v38 = vld [vmem:[%s1 + $0x5c] sm:$0xf]
  %v39 = vld [vmem:[%s1 + $0x60] sm:$0xf]
  %v40 = vld [vmem:[%s1 + $0x64] sm:$0xf]
  %v41 = vld [vmem:[%s1 + $0x68] sm:$0xf]
  %v42 = vld [vmem:[%s1 + $0x6c] sm:$0xf]
  %v43 = vld [vmem:[%s1 + $0x70] sm:$0xf]
  %v44 = vld [vmem:[%s1 + $0x74] sm:$0xf]
  %v45 = vld [vmem:[%s1 + $0x78] sm:$0xf]
  %v46 = vld [vmem:[%s1 + $0x7c] sm:$0xf]
  %v47 = vld [vmem:[%s1 + $0x80] sm:$0xf]
  %v48 = vld [vmem:[%s1 + $0x84] sm:$0xf]
  %v49 = vld [vmem:[%s1 + $0x88] sm:$0xf]
  %v50 = vld [vmem:[%s1 + $0x8c] sm:$0xf]
  %v51 = vld [vmem:[%s1 + $0x90] sm:$0xf]
  %v52 = vld [vmem:[%s1 + $0x94] sm:$0xf]
  %v53 = vld [vmem:[%s1 + $0x98] sm:$0xf]
  %v54 = vld [vmem:[%s1 + $0x9c] sm:$0xf]
  %v55 = vld [vmem:[%s1 + $0xa0] sm:$0xf]
  %v56 = vld [vmem:[%s1 + $0xa4] sm:$0xf]
  %v57 = vld [vmem:[%s1 + $0xa8] sm:$0xf]
  %v58 = vld [vmem:[%s1 + $0xac] sm:$0xf]
  %v59 = vld [vmem:[%s1 + $0xb0] sm:$0xf]
  %v60 = vld [vmem:[%s1 + $0xb4] sm:$0xf]
  %v61 = vld [vmem:[%s1 + $0xb8] sm:$0xf]
  %v62 = vld [vmem:[%s1 + $0xbc] sm:$0xf]
  %v63 = vld [vmem:[%s1 + $0xc0] sm:$0xf]
  %v64 = vld [vmem:[%s1 + $0xc4] sm:$0xf]
  %v65 = vld [vmem:[%s1 + $0xc8] sm:$0xf]
  %v66 = vld [vmem:[%s1 + $0xcc] sm:$0xf]
  %v67 = vld [vmem:[%s1 + $0xd0] sm:$0xf]
  %v68 = vld [vmem:[%s1 + $0xd4] sm:$0xf]
  %v69 = vld [vmem:[%s1 + $0xd8] sm:$0xf]
  %v70 = vld [vmem:[%s1 + $0xdc] sm:$0xf]
  %v71 = vld [vmem:[%s1 + $0xe0] sm:$0xf]
  %v72 = vld [vmem:[%s1 + $0xe4] sm:$0xf]
  %v73 = vld [vmem:[%s1 + $0xe8] sm:$0xf]
  %v74 = vld [vmem:[%s1 + $0xec] sm:$0xf]
  %v75 = vld [vmem:[%s1 + $0xf0] sm:$0xf]
  %v76 = vld [vmem:[%s1 + $0xf4] sm:$0xf]
  %v77 = vld [vmem:[%s1 + $0xf8] sm:$0xf]
  %v78 = vld [vmem:[%s1 + $0xfc] sm:$0xf]
  %v79 = vld [vmem:[%s1 + $0x100] sm:$0xf]
  %v80 = vld [vmem:[%s1 + $0x104] sm:$0xf]
  %v81 = vld [vmem:[%s1 + $0x108] sm:$0xf]
  %v82 = vld [vmem:[%s1 + $0x10c] sm:$0xf]
  %v83 = vld [vmem:[%s1 + $0x110] sm:$0xf]
  %v84 = vld [vmem:[%s1 + $0x114] sm:$0xf]
  %v85 = vld [vmem:[%s1 + $0x118] sm:$0xf]
  %v86 = vld [vmem:[%s1 + $0x11c] sm:$0xf]
  %v90 = vunpack.c.l.b16 %v12
  %v91 = vunpack.c.h.b16 %v12
  %v92 = vunpack.c.l.b16 %v13
  %v93 = vunpack.c.h.b16 %v13
  %v94 = vunpack.c.l.b16 %v14
  %v95 = vpack.c.b16 %v90, %v90
  %v96 = vpack.c.b16 %v91, %v91
  %v97 = vpack.c.b16 %v92, %v92
  %v98 = vpack.c.b16 %v93, %v93
  %v99 = vpack.c.b16 %v94, %v94
  %v176 = vunpack.c.l.b16 %v15
  %v177 = vunpack.c.l.b16 %v16
  %v178 = vunpack.c.l.b16 %v17
  %v179 = vunpack.c.l.b16 %v18
  %v180 = vunpack.c.l.b16 %v19
  %v181 = vunpack.c.l.b16 %v20
  %v182 = vunpack.c.l.b16 %v21
  %v183 = vunpack.c.l.b16 %v22
  %v184 = vunpack.c.l.b16 %v23
  %v185 = vunpack.c.l.b16 %v24
  %v186 = vunpack.c.l.b16 %v25
  %v187 = vunpack.c.l.b16 %v26
  %v188 = vunpack.c.l.b16 %v27
  %v189 = vunpack.c.l.b16 %v28
  %v190 = vunpack.c.l.b16 %v29
  %v191 = vunpack.c.l.b16 %v30
  %v192 = vunpack.c.l.b16 %v31
  %v193 = vunpack.c.l.b16 %v32
  %v194 = vunpack.c.l.b16 %v33
  %v195 = vunpack.c.l.b16 %v34
  %v196 = vunpack.c.l.b16 %v35
  %v197 = vunpack.c.l.b16 %v36
  %v198 = vunpack.c.l.b16 %v37
  %v199 = vunpack.c.l.b16 %v38
  %v200 = vunpack.c.l.b16 %v39
  %v201 = vunpack.c.l.b16 %v40
  %v202 = vunpack.c.l.b16 %v41
  %v203 = vunpack.c.l.b16 %v42
  %v204 = vunpack.c.l.b16 %v43
  %v205 = vunpack.c.l.b16 %v44
  %v206 = vunpack.c.l.b16 %v45
  %v207 = vunpack.c.l.b16 %v46
  %v208 = vunpack.c.l.b16 %v47
  %v209 = vunpack.c.l.b16 %v48
  %v210 = vunpack.c.l.b16 %v49
  %v211 = vunpack.c.l.b16 %v50
  %v212 = vunpack.c.l.b16 %v51
  %v213 = vunpack.c.l.b16 %v52
  %v214 = vunpack.c.l.b16 %v53
  %v215 = vunpack.c.l.b16 %v54
  %v216 = vunpack.c.l.b16 %v55
  %v217 = vunpack.c.l.b16 %v56
  %v218 = vunpack.c.l.b16 %v57
  %v219 = vunpack.c.l.b16 %v58
  %v220 = vunpack.c.l.b16 %v59
  %v221 = vunpack.c.l.b16 %v60
  %v222 = vunpack.c.l.b16 %v61
  %v223 = vunpack.c.l.b16 %v62
  %v224 = vunpack.c.l.b16 %v63
  %v225 = vunpack.c.l.b16 %v64
  %v226 = vunpack.c.l.b16 %v65
  %v227 = vunpack.c.l.b16 %v66
  %v228 = vunpack.c.l.b16 %v67
  %v229 = vunpack.c.l.b16 %v68
  %v230 = vunpack.c.l.b16 %v69
  %v231 = vunpack.c.l.b16 %v70
  %v232 = vunpack.c.l.b16 %v71
  %v233 = vunpack.c.l.b16 %v72
  %v234 = vunpack.c.l.b16 %v73
  %v235 = vunpack.c.l.b16 %v74
  %v236 = vunpack.c.l.b16 %v75
  %v237 = vunpack.c.l.b16 %v76
  %v238 = vunpack.c.l.b16 %v77
  %v239 = vunpack.c.l.b16 %v78
  %v240 = vunpack.c.l.b16 %v79
  %v241 = vunpack.c.l.b16 %v80
  %v242 = vunpack.c.l.b16 %v81
  %v243 = vunpack.c.l.b16 %v82
  %v244 = vunpack.c.l.b16 %v83
  %v245 = vunpack.c.l.b16 %v84
  %v246 = vunpack.c.l.b16 %v85
  %v247 = vunpack.c.l.b16 %v86
  %v248 = vpack.c.b16 %v177, %v176
  %v249 = vpack.c.b16 %v179, %v178
  %v250 = vpack.c.b16 %v181, %v180
  %v251 = vpack.c.b16 %v183, %v182
  %v252 = vpack.c.b16 %v185, %v184
  %v253 = vpack.c.b16 %v187, %v186
  %v254 = vpack.c.b16 %v189, %v188
  %v255 = vpack.c.b16 %v191, %v190
  %v256 = vpack.c.b16 %v193, %v192
  %v257 = vpack.c.b16 %v195, %v194
  %v258 = vpack.c.b16 %v197, %v196
  %v259 = vpack.c.b16 %v199, %v198
  %v260 = vpack.c.b16 %v201, %v200
  %v261 = vpack.c.b16 %v203, %v202
  %v262 = vpack.c.b16 %v205, %v204
  %v263 = vpack.c.b16 %v207, %v206
  %v264 = vpack.c.b16 %v209, %v208
  %v265 = vpack.c.b16 %v211, %v210
  %v266 = vpack.c.b16 %v213, %v212
  %v267 = vpack.c.b16 %v215, %v214
  %v268 = vpack.c.b16 %v217, %v216
  %v269 = vpack.c.b16 %v219, %v218
  %v270 = vpack.c.b16 %v221, %v220
  %v271 = vpack.c.b16 %v223, %v222
  %v272 = vpack.c.b16 %v225, %v224
  %v273 = vpack.c.b16 %v227, %v226
  %v274 = vpack.c.b16 %v229, %v228
  %v275 = vpack.c.b16 %v231, %v230
  %v276 = vpack.c.b16 %v233, %v232
  %v277 = vpack.c.b16 %v235, %v234
  %v278 = vpack.c.b16 %v237, %v236
  %v279 = vpack.c.b16 %v239, %v238
  %v280 = vpack.c.b16 %v241, %v240
  %v281 = vpack.c.b16 %v243, %v242
  %v282 = vpack.c.b16 %v245, %v244
  %v283 = vpack.c.b16 %v247, %v246
  %vm320 = vcmask 523264
  %v322 = vsel %vm320, %v99, 0
  %324 = vmatprep.subr.bf16.mxu0 0
  %325 = vmatpush1.bf16.msra.mxu0 %v248
  %326 = vmatprep.subr.bf16.mxu0 0
  %327 = vmatpush1.bf16.msra.mxu0 %v249
  %328 = vmatprep.subr.bf16.mxu0 0
  %329 = vmatpush1.bf16.msra.mxu0 %v250
  %330 = vmatprep.subr.bf16.mxu0 0
  %331 = vmatpush1.bf16.msra.mxu0 %v251
  %332 = vmatprep.subr.bf16.mxu0 0
  %333 = vmatpush1.bf16.msra.mxu0 %v252
  %334 = vmatprep.subr.bf16.mxu0 0
  %335 = vmatpush1.bf16.msra.mxu0 %v253
  %336 = vmatprep.subr.bf16.mxu0 0
  %337 = vmatpush1.bf16.msra.mxu0 %v254
  %338 = vmatprep.subr.bf16.mxu0 0
  %339 = vmatpush1.bf16.msra.mxu0 %v255
  %340 = vmatprep.subr.bf16.mxu0 0
  %341 = vmatpush1.bf16.msra.mxu0 %v256
  %342 = vmatprep.subr.bf16.mxu0 0
  %343 = vmatpush1.bf16.msra.mxu0 %v257
  %344 = vmatprep.subr.bf16.mxu0 0
  %345 = vmatpush1.bf16.msra.mxu0 %v258
  %346 = vmatprep.subr.bf16.mxu0 0
  %347 = vmatpush1.bf16.msra.mxu0 %v259
  %348 = vmatprep.subr.bf16.mxu0 0
  %349 = vmatpush1.bf16.msra.mxu0 %v260
  %350 = vmatprep.subr.bf16.mxu0 0
  %351 = vmatpush1.bf16.msra.mxu0 %v261
  %352 = vmatprep.subr.bf16.mxu0 0
  %353 = vmatpush1.bf16.msra.mxu0 %v262
  %354 = vmatprep.subr.bf16.mxu0 0
  %355 = vmatpush1.bf16.msra.mxu0 %v263
  %356 = vmatprep.mubr.bf16.mxu0 %v96
  %357 = vmatmul.mubr.bf16.gmra.mrb[0].mxu0 %v95
  %v358 = vpop.f32.mrb[0].mxu0
  %v359 = vadd.f32 0.0, %v358
  %v360 = vpop.f32.mrb[0].mxu0
  %v361 = vpop.f32.mrb[0].mxu0
  %v362 = vpop.f32.mrb[0].mxu0
  %363 = vdwg.mxu0
  %364 = vmatprep.subr.bf16.mxu0 0
  %365 = vmatpush1.bf16.msra.mxu0 %v264
  %366 = vmatprep.subr.bf16.mxu0 0
  %367 = vmatpush1.bf16.msra.mxu0 %v265
  %368 = vmatprep.subr.bf16.mxu0 0
  %369 = vmatpush1.bf16.msra.mxu0 %v266
  %370 = vmatprep.subr.bf16.mxu0 0
  %371 = vmatpush1.bf16.msra.mxu0 %v267
  %372 = vmatprep.subr.bf16.mxu0 0
  %373 = vmatpush1.bf16.msra.mxu0 %v268
  %374 = vmatprep.subr.bf16.mxu0 0
  %375 = vmatpush1.bf16.msra.mxu0 %v269
  %376 = vmatprep.subr.bf16.mxu0 0
  %377 = vmatpush1.bf16.msra.mxu0 %v270
  %378 = vmatprep.subr.bf16.mxu0 0
  %379 = vmatpush1.bf16.msra.mxu0 %v271
  %380 = vmatprep.subr.bf16.mxu0 0
  %381 = vmatpush1.bf16.msra.mxu0 %v272
  %382 = vmatprep.subr.bf16.mxu0 0
  %383 = vmatpush1.bf16.msra.mxu0 %v273
  %384 = vmatprep.subr.bf16.mxu0 0
  %385 = vmatpush1.bf16.msra.mxu0 %v274
  %386 = vmatprep.subr.bf16.mxu0 0
  %387 = vmatpush1.bf16.msra.mxu0 %v275
  %388 = vmatprep.subr.bf16.mxu0 0
  %389 = vmatpush1.bf16.msra.mxu0 %v276
  %390 = vmatprep.subr.bf16.mxu0 0
  %391 = vmatpush1.bf16.msra.mxu0 %v277
  %392 = vmatprep.subr.bf16.mxu0 0
  %393 = vmatpush1.bf16.msra.mxu0 %v278
  %394 = vmatprep.subr.bf16.mxu0 0
  %395 = vmatpush1.bf16.msra.mxu0 %v279
  %396 = vmatprep.mubr.bf16.mxu0 %v98
  %397 = vmatmul.mubr.bf16.gmra.mrb[0].mxu0 %v97
  %v398 = vpop.f32.mrb[0].mxu0
  %v399 = vadd.f32 %v359, %v398
  %v400 = vpop.f32.mrb[0].mxu0
  %v401 = vpop.f32.mrb[0].mxu0
  %v402 = vpop.f32.mrb[0].mxu0
  %403 = vdwg.mxu0
  %404 = vmatprep.subr.bf16.mxu0 0
  %405 = vmatpush1.bf16.msra.mxu0 %v280
  %406 = vmatprep.subr.bf16.mxu0 0
  %407 = vmatpush1.bf16.msra.mxu0 %v281
  %408 = vmatprep.subr.bf16.mxu0 0
  %409 = vmatpush1.bf16.msra.mxu0 %v282
  %410 = vmatprep.subr.bf16.mxu0 0
  %411 = vmatpush1.bf16.msra.mxu0 %v283
  %412 = vmatprep.subr.bf16.mxu0 0
  %413 = vmatpush1.bf16.msra.mxu0 0
  %414 = vmatprep.subr.bf16.mxu0 0
  %415 = vmatpush1.bf16.msra.mxu0 0
  %416 = vmatprep.subr.bf16.mxu0 0
  %417 = vmatpush1.bf16.msra.mxu0 0
  %418 = vmatprep.subr.bf16.mxu0 0
  %419 = vmatpush1.bf16.msra.mxu0 0
  %420 = vmatprep.subr.bf16.mxu0 0
  %421 = vmatpush1.bf16.msra.mxu0 0
  %422 = vmatprep.subr.bf16.mxu0 0
  %423 = vmatpush1.bf16.msra.mxu0 0
  %424 = vmatprep.subr.bf16.mxu0 0
  %425 = vmatpush1.bf16.msra.mxu0 0
  %426 = vmatprep.subr.bf16.mxu0 0
  %427 = vmatpush1.bf16.msra.mxu0 0
  %428 = vmatprep.subr.bf16.mxu0 0
  %429 = vmatpush1.bf16.msra.mxu0 0
  %430 = vmatprep.subr.bf16.mxu0 0
  %431 = vmatpush1.bf16.msra.mxu0 0
  %432 = vmatprep.subr.bf16.mxu0 0
  %433 = vmatpush1.bf16.msra.mxu0 0
  %434 = vmatprep.subr.bf16.mxu0 0
  %435 = vmatpush1.bf16.msra.mxu0 0
  %436 = vmatprep.mubr.bf16.mxu0 0
  %437 = vmatmul.mubr.bf16.gmra.mrb[0].mxu0 %v322
  %v438 = vpop.f32.mrb[0].mxu0
  %v439 = vadd.f32 %v399, %v438
  %v440 = vpop.f32.mrb[0].mxu0
  %v441 = vpop.f32.mrb[0].mxu0
  %v442 = vpop.f32.mrb[0].mxu0
  %443 = vdwg.mxu0
  %v444 = vmax.f32 %v439, 0.0
  %vm445 = vcmask 261120
  %446 = vst.msk [vmem:[%s2] sm:$0xff] %vm445, %v444
  // Predicated region
  $region10: #{_lambda_.61} parent=0 // pred_check
    _
  $region11: #{_lambda_.61} parent=0 // pred_check_branch
    %448 = sbr.rel (0) target = $region13
  $region12: #{_lambda_.61} parent=0 // pred_region
    _
  $region13: #{_lambda_.61} parent=0 // pred_fallthru
    _
  // Predicated region
  $region14: #{_lambda_.61} parent=0 // pred_check
    _
  $region15: #{_lambda_.61} parent=0 // pred_check_branch
    %450 = sbr.rel (0) target = $region17
  $region16: #{_lambda_.61} parent=0 // pred_region
    _
  $region17: #{_lambda_.61} parent=0 // pred_fallthru
    _

// kernel: _lambda_.66
$region0: #{_lambda_.66}
  #allocation0 [shape = 'u32[]', space=smem, size = 0x4, offset = 0x4, fixed_abs, tag = 'smem constant byte address 0x4 - core index']
  #allocation1 [shape = 'u32[144,128]{1,0:T(1,128)}', space=vmem, size = 0x12000, scoped, tag = 'internal scratch']
  %s0 = inlined_call_operand.vmem [shape: bf16[32,288], index: 0, kind: input, shape index: {}]
  %s1 = inlined_call_operand.vmem [shape: bf16[288,16], index: 1, kind: input, shape index: {}]
  %s2 = inlined_call_operand.vmem [shape: f32[32,16], index: 2, kind: output, shape index: {}]
  %s3 = sld [smem:[#allocation0]]
  $region41: #{_lambda_.66} parent=0
    _
  %s5 = ssub.s32 1, %s3
  %s6 = scalar_select 0, %s5, %s3
  loop: start=0, step=1, limit=4
  $region2: #{_lambda_.66} parent=0 // loop_pre_header
    _
  $region3: #{_lambda_.66} parent=0 // loop_header
    %s8 = sphi 0, %s12
    %p9 = scmp.ge.s32.totalorder %s8, 4
    %s18 = sphi 0, %s20
    %s21 = sphi 0, %s18
    %s22 = sphi 0, %s21
    %s38 = sphi 0, %s22
    %s42 = sphi 0, %s42
    %s44 = sphi 0, %s42
    %s45 = sphi 0, %s44
    %s59 = sphi 0, %s45
    %s65 = sphi 0, %s67
    %s68 = sphi 0, %s65
    %s69 = sphi 0, %s68
    %s85 = sphi 0, %s69
  $region4: #{_lambda_.66} parent=0 // loop_header_branch
    %11 = sbr.rel (%p9) target = $region8
  $region5: #{_lambda_.66} parent=0 // loop_body
    %s13 = ssub.s32 %s8, 1
    %s14 = ssub.s32 %s8, 2
    %s15 = sadd.s32 %s8, 1
    %s16 = ssub.s32 %s8, %s15
    %p17 = scmp.eq.s32.totalorder %s16, 0
    %s19 = sadd.s32 %s18, 1
    %s20 = scalar_select %p17, %s18, %s19
    %p23 = pneg %p17
    %p24 = scmp.eq.s32.totalorder %s8, 1
    %p25 = por %p23, %p24
    %p26 = scmp.ne.s32.totalorder %s18, %s21
    %p27 = scmp.eq.s32.totalorder %s8, 0
    %p28 = por %p26, %p27
    %p29 = scmp.ne.s32.totalorder %s18, %s21
    %p30 = scmp.eq.s32.totalorder %s13, 1
    %p31 = por %p29, %p30
    %p32 = scmp.ne.s32.totalorder %s21, %s22
    %p33 = scmp.eq.s32.totalorder %s13, 0
    %p34 = por %p32, %p33
    %p35 = scmp.ne.s32.totalorder %s21, %s22
    %p36 = scmp.eq.s32.totalorder %s14, 1
    %p37 = por %p35, %p36
    %p39 = scmp.ne.s32.totalorder %s22, %s38
    %p40 = scmp.eq.s32.totalorder %s14, 0
    %p41 = por %p39, %p40
    %s43 = sadd.s32 %s42, 1
    %p46 = scmp.eq.s32.totalorder %s8, 1
    %p47 = scmp.ne.s32.totalorder %s42, %s44
    %p48 = scmp.eq.s32.totalorder %s8, 0
    %p49 = por %p47, %p48
    %p50 = scmp.ne.s32.totalorder %s42, %s44
    %p51 = scmp.eq.s32.totalorder %s13, 1
    %p52 = por %p50, %p51
    %p53 = scmp.ne.s32.totalorder %s44, %s45
    %p54 = scmp.eq.s32.totalorder %s13, 0
    %p55 = por %p53, %p54
    %p56 = scmp.ne.s32.totalorder %s44, %s45
    %p57 = scmp.eq.s32.totalorder %s14, 1
    %p58 = por %p56, %p57
    %p60 = scmp.ne.s32.totalorder %s45, %s59
    %p61 = scmp.eq.s32.totalorder %s14, 0
    %p62 = por %p60, %p61
    %s63 = ssub.s32 %s8, %s15
    %p64 = scmp.eq.s32.totalorder %s63, 0
    %s66 = sadd.s32 %s65, 1
    %s67 = scalar_select %p64, %s65, %s66
    %p70 = pneg %p64
    %p71 = scmp.eq.s32.totalorder %s8, 1
    %p72 = por %p70, %p71
    %p73 = scmp.ne.s32.totalorder %s65, %s68
    %p74 = scmp.eq.s32.totalorder %s8, 0
    %p75 = por %p73, %p74
    %p76 = scmp.ne.s32.totalorder %s65, %s68
    %p77 = scmp.eq.s32.totalorder %s13, 1
    %p78 = por %p76, %p77
    %p79 = scmp.ne.s32.totalorder %s68, %s69
    %p80 = scmp.eq.s32.totalorder %s13, 0
    %p81 = por %p79, %p80
    %p82 = scmp.ne.s32.totalorder %s68, %s69
    %p83 = scmp.eq.s32.totalorder %s14, 1
    %p84 = por %p82, %p83
    %p86 = scmp.ne.s32.totalorder %s69, %s85
    %p87 = scmp.eq.s32.totalorder %s14, 0
    %p88 = por %p86, %p87
    %p89 = scmp.le.s32.totalorder 1, %s8
    %p90 = scmp.lt.s32.totalorder %s8, 3
    %p91 = pnand %p89, %p90
    %p92 = pneg %p91
    // Predicated region
    $region9: #{_lambda_.66} parent=5 // pred_check
      _
    $region10: #{_lambda_.66} parent=5 // pred_check_branch
      %94 = sbr.rel (%p91) target = $region12
    $region11: #{_lambda_.66} parent=5 // pred_region
      %s95 = ssub.s32 %s8, 1
      // Predicated region
      $region13: #{_lambda_.66} parent=11 // pred_check
        %p96 = pneg %p55
      $region14: #{_lambda_.66} parent=11 // pred_check_branch
        %98 = sbr.rel (%p96) target = $region16
      $region15: #{_lambda_.66} parent=11 // pred_region
        _
      $region16: #{_lambda_.66} parent=11 // pred_fallthru
        _
    $region12: #{_lambda_.66} parent=5 // pred_fallthru
      _
    %p99 = scmp.lt.s32.totalorder %s8, 2
    // Predicated region
    $region17: #{_lambda_.66} parent=5 // pred_check
      %p100 = pneg %p99
    $region18: #{_lambda_.66} parent=5 // pred_check_branch
      %102 = sbr.rel (%p100) target = $region20
    $region19: #{_lambda_.66} parent=5 // pred_region
      // Predicated region
      $region21: #{_lambda_.66} parent=19 // pred_check
        %p103 = pneg %p28
      $region22: #{_lambda_.66} parent=19 // pred_check_branch
        %105 = sbr.rel (%p103) target = $region24
      $region23: #{_lambda_.66} parent=19 // pred_region
        %s106 = smul.u32 2, %s8
        %p107 = scmp.lt.s32.totalorder %s106, 3
        %s108 = scalar_select %p107, %s106, 3
        %s109 = smul.addr %s108, 3
        %s110 = smul.addr %s109, 4
        %s111 = scalar_lea.vmem %s0, %s110
        %s112 = smul.u32 2, %s8
      $region24: #{_lambda_.66} parent=19 // pred_fallthru
        _
    $region20: #{_lambda_.66} parent=5 // pred_fallthru
      _
    %p113 = scmp.le.s32.totalorder 1, %s8
    %p114 = scmp.lt.s32.totalorder %s8, 3
    %p115 = pnand %p113, %p114
    %p116 = pneg %p115
    // Predicated region
    $region25: #{_lambda_.66} parent=5 // pred_check
      _
    $region26: #{_lambda_.66} parent=5 // pred_check_branch
      %118 = sbr.rel (%p115) target = $region28
    $region27: #{_lambda_.66} parent=5 // pred_region
      %s119 = ssub.s32 %s8, 1
      %s120 = smul.u32 2, %s13
      %p121 = scmp.lt.s32.totalorder %s120, 3
      %s122 = scalar_select %p121, %s120, 3
      %s123 = smul.addr %s122, 3
      %s124 = smul.addr %s123, 4
      %s125 = scalar_lea.vmem %s0, %s124
      %p126 = pneg %p34
      %p127 = pneg %p31
      %p128 = pneg %p55
      %p129 = pneg %p52
      %p130 = pneg %p81
      %p131 = pneg %p78
      %s132 = smul.u32 2, %s13
      %p133 = scmp.lt.s32.totalorder %s132, 3
      %s134 = scalar_select %p133, %s132, 3
      %s135 = smul.addr %s134, 8
      %s136 = scalar_lea.vmem %s2, %s135
      %s137 = smul.u32 2, %s13
      %p138 = scmp.lt.s32.totalorder %s137, 3
      %s139 = scalar_select %p138, %s137, 3
      %s140 = smul.addr %s139, 3
      %s141 = smul.addr %s140, 4
      %s142 = scalar_lea.vmem %s0, %s141
      %s143 = smul.u32 2, %s13
      %s144 = smul.u32 2, %s13
      %p145 = scmp.lt.s32.totalorder %s144, 3
      %s146 = scalar_select %p145, %s144, 3
      %s147 = smul.addr %s146, 8
      %s148 = scalar_lea.vmem %s2, %s147
      %s149 = smul.u32 2, %s13
      %v151 = vld [vmem:[%s142] sm:$0xff]
      %v152 = vld [vmem:[%s142 + $0x8] sm:$0xf]
      %v153 = vld [vmem:[%s142 + $0xc] sm:$0xff]
      %v154 = vld [vmem:[%s142 + $0x14] sm:$0xf]
      %v155 = vld [vmem:[%s1] sm:$0xf]
      %v156 = vld [vmem:[%s1 + $0x4] sm:$0xf]
      %v157 = vld [vmem:[%s1 + $0x8] sm:$0xf]
      %v158 = vld [vmem:[%s1 + $0xc] sm:$0xf]
      %v159 = vld [vmem:[%s1 + $0x10] sm:$0xf]
      %v160 = vld [vmem:[%s1 + $0x14] sm:$0xf]
      %v161 = vld [vmem:[%s1 + $0x18] sm:$0xf]
      %v162 = vld [vmem:[%s1 + $0x1c] sm:$0xf]
      %v163 = vld [vmem:[%s1 + $0x20] sm:$0xf]
      %v164 = vld [vmem:[%s1 + $0x24] sm:$0xf]
      %v165 = vld [vmem:[%s1 + $0x28] sm:$0xf]
      %v166 = vld [vmem:[%s1 + $0x2c] sm:$0xf]
      %v167 = vld [vmem:[%s1 + $0x30] sm:$0xf]
      %v168 = vld [vmem:[%s1 + $0x34] sm:$0xf]
      %v169 = vld [vmem:[%s1 + $0x38] sm:$0xf]
      %v170 = vld [vmem:[%s1 + $0x3c] sm:$0xf]
      %v171 = vld [vmem:[%s1 + $0x40] sm:$0xf]
      %v172 = vld [vmem:[%s1 + $0x44] sm:$0xf]
      %v173 = vld [vmem:[%s1 + $0x48] sm:$0xf]
      %v174 = vld [vmem:[%s1 + $0x4c] sm:$0xf]
      %v175 = vld [vmem:[%s1 + $0x50] sm:$0xf]
      %v176 = vld [vmem:[%s1 + $0x54] sm:$0xf]
      %v177 = vld [vmem:[%s1 + $0x58] sm:$0xf]
      %v178 = vld [vmem:[%s1 + $0x5c] sm:$0xf]
      %v179 = vld [vmem:[%s1 + $0x60] sm:$0xf]
      %v180 = vld [vmem:[%s1 + $0x64] sm:$0xf]
      %v181 = vld [vmem:[%s1 + $0x68] sm:$0xf]
      %v182 = vld [vmem:[%s1 + $0x6c] sm:$0xf]
      %v183 = vld [vmem:[%s1 + $0x70] sm:$0xf]
      %v184 = vld [vmem:[%s1 + $0x74] sm:$0xf]
      %v185 = vld [vmem:[%s1 + $0x78] sm:$0xf]
      %v186 = vld [vmem:[%s1 + $0x7c] sm:$0xf]
      %v187 = vld [vmem:[%s1 + $0x80] sm:$0xf]
      %v188 = vld [vmem:[%s1 + $0x84] sm:$0xf]
      %v189 = vld [vmem:[%s1 + $0x88] sm:$0xf]
      %v190 = vld [vmem:[%s1 + $0x8c] sm:$0xf]
      %v195 = vunpack.c.l.b16 %v151
      %v196 = vunpack.c.h.b16 %v151
      %v197 = vunpack.c.l.b16 %v152
      %v198 = vunpack.c.l.b16 %v153
      %v199 = vunpack.c.h.b16 %v153
      %v200 = vunpack.c.l.b16 %v154
      %v201 = vpack.c.b16 %v198, %v195
      %v202 = vpack.c.b16 %v199, %v196
      %v203 = vpack.c.b16 %v200, %v197
      %v242 = vunpack.c.l.b16 %v155
      %v243 = vunpack.c.l.b16 %v156
      %v244 = vunpack.c.l.b16 %v157
      %v245 = vunpack.c.l.b16 %v158
      %v246 = vunpack.c.l.b16 %v159
      %v247 = vunpack.c.l.b16 %v160
      %v248 = vunpack.c.l.b16 %v161
      %v249 = vunpack.c.l.b16 %v162
      %v250 = vunpack.c.l.b16 %v163
      %v251 = vunpack.c.l.b16 %v164
      %v252 = vunpack.c.l.b16 %v165
      %v253 = vunpack.c.l.b16 %v166
      %v254 = vunpack.c.l.b16 %v167
      %v255 = vunpack.c.l.b16 %v168
      %v256 = vunpack.c.l.b16 %v169
      %v257 = vunpack.c.l.b16 %v170
      %v258 = vunpack.c.l.b16 %v171
      %v259 = vunpack.c.l.b16 %v172
      %v260 = vunpack.c.l.b16 %v173
      %v261 = vunpack.c.l.b16 %v174
      %v262 = vunpack.c.l.b16 %v175
      %v263 = vunpack.c.l.b16 %v176
      %v264 = vunpack.c.l.b16 %v177
      %v265 = vunpack.c.l.b16 %v178
      %v266 = vunpack.c.l.b16 %v179
      %v267 = vunpack.c.l.b16 %v180
      %v268 = vunpack.c.l.b16 %v181
      %v269 = vunpack.c.l.b16 %v182
      %v270 = vunpack.c.l.b16 %v183
      %v271 = vunpack.c.l.b16 %v184
      %v272 = vunpack.c.l.b16 %v185
      %v273 = vunpack.c.l.b16 %v186
      %v274 = vunpack.c.l.b16 %v187
      %v275 = vunpack.c.l.b16 %v188
      %v276 = vunpack.c.l.b16 %v189
      %v277 = vunpack.c.l.b16 %v190
      %v278 = vpack.c.b16 %v243, %v242
      %v279 = vpack.c.b16 %v245, %v244
      %v280 = vpack.c.b16 %v247, %v246
      %v281 = vpack.c.b16 %v249, %v248
      %v282 = vpack.c.b16 %v251, %v250
      %v283 = vpack.c.b16 %v253, %v252
      %v284 = vpack.c.b16 %v255, %v254
      %v285 = vpack.c.b16 %v257, %v256
      %v286 = vpack.c.b16 %v259, %v258
      %v287 = vpack.c.b16 %v261, %v260
      %v288 = vpack.c.b16 %v263, %v262
      %v289 = vpack.c.b16 %v265, %v264
      %v290 = vpack.c.b16 %v267, %v266
      %v291 = vpack.c.b16 %v269, %v268
      %v292 = vpack.c.b16 %v271, %v270
      %v293 = vpack.c.b16 %v273, %v272
      %v294 = vpack.c.b16 %v275, %v274
      %v295 = vpack.c.b16 %v277, %v276
      %vm314 = vcmask 261120
      %v316 = vsel %vm314, %v203, 0
      %318 = vmatprep.subr.bf16.mxu0 0
      %319 = vmatpush1.bf16.msra.mxu0 %v278
      %320 = vmatprep.subr.bf16.mxu0 0
      %321 = vmatpush1.bf16.msra.mxu0 %v279
      %322 = vmatprep.subr.bf16.mxu0 0
      %323 = vmatpush1.bf16.msra.mxu0 %v280
      %324 = vmatprep.subr.bf16.mxu0 0
      %325 = vmatpush1.bf16.msra.mxu0 %v281
      %326 = vmatprep.subr.bf16.mxu0 0
      %327 = vmatpush1.bf16.msra.mxu0 %v282
      %328 = vmatprep.subr.bf16.mxu0 0
      %329 = vmatpush1.bf16.msra.mxu0 %v283
      %330 = vmatprep.subr.bf16.mxu0 0
      %331 = vmatpush1.bf16.msra.mxu0 %v284
      %332 = vmatprep.subr.bf16.mxu0 0
      %333 = vmatpush1.bf16.msra.mxu0 %v285
      %334 = vmatprep.subr.bf16.mxu0 0
      %335 = vmatpush1.bf16.msra.mxu0 %v286
      %336 = vmatprep.subr.bf16.mxu0 0
      %337 = vmatpush1.bf16.msra.mxu0 %v287
      %338 = vmatprep.subr.bf16.mxu0 0
      %339 = vmatpush1.bf16.msra.mxu0 %v288
      %340 = vmatprep.subr.bf16.mxu0 0
      %341 = vmatpush1.bf16.msra.mxu0 %v289
      %342 = vmatprep.subr.bf16.mxu0 0
      %343 = vmatpush1.bf16.msra.mxu0 %v290
      %344 = vmatprep.subr.bf16.mxu0 0
      %345 = vmatpush1.bf16.msra.mxu0 %v291
      %346 = vmatprep.subr.bf16.mxu0 0
      %347 = vmatpush1.bf16.msra.mxu0 %v292
      %348 = vmatprep.subr.bf16.mxu0 0
      %349 = vmatpush1.bf16.msra.mxu0 %v293
      %350 = vmatprep.mubr.bf16.mxu0 %v202
      %351 = vmatmul.mubr.bf16.gmra.mrb[0].mxu0 %v201
      %v352 = vpop.f32.mrb[0].mxu0
      %v353 = vadd.f32 0.0, %v352
      %v354 = vpop.f32.mrb[0].mxu0
      %v355 = vpop.f32.mrb[0].mxu0
      %v356 = vadd.f32 0.0, %v355
      %v357 = vpop.f32.mrb[0].mxu0
      %358 = vdwg.mxu0
      %359 = vmatprep.subr.bf16.mxu0 0
      %360 = vmatpush1.bf16.msra.mxu0 %v294
      %361 = vmatprep.subr.bf16.mxu0 0
      %362 = vmatpush1.bf16.msra.mxu0 %v295
      %363 = vmatprep.subr.bf16.mxu0 0
      %364 = vmatpush1.bf16.msra.mxu0 0
      %365 = vmatprep.subr.bf16.mxu0 0
      %366 = vmatpush1.bf16.msra.mxu0 0
      %367 = vmatprep.subr.bf16.mxu0 0
      %368 = vmatpush1.bf16.msra.mxu0 0
      %369 = vmatprep.subr.bf16.mxu0 0
      %370 = vmatpush1.bf16.msra.mxu0 0
      %371 = vmatprep.subr.bf16.mxu0 0
      %372 = vmatpush1.bf16.msra.mxu0 0
      %373 = vmatprep.subr.bf16.mxu0 0
      %374 = vmatpush1.bf16.msra.mxu0 0
      %375 = vmatprep.subr.bf16.mxu0 0
      %376 = vmatpush1.bf16.msra.mxu0 0
      %377 = vmatprep.subr.bf16.mxu0 0
      %378 = vmatpush1.bf16.msra.mxu0 0
      %379 = vmatprep.subr.bf16.mxu0 0
      %380 = vmatpush1.bf16.msra.mxu0 0
      %381 = vmatprep.subr.bf16.mxu0 0
      %382 = vmatpush1.bf16.msra.mxu0 0
      %383 = vmatprep.subr.bf16.mxu0 0
      %384 = vmatpush1.bf16.msra.mxu0 0
      %385 = vmatprep.subr.bf16.mxu0 0
      %386 = vmatpush1.bf16.msra.mxu0 0
      %387 = vmatprep.subr.bf16.mxu0 0
      %388 = vmatpush1.bf16.msra.mxu0 0
      %389 = vmatprep.subr.bf16.mxu0 0
      %390 = vmatpush1.bf16.msra.mxu0 0
      %391 = vmatprep.mubr.bf16.mxu0 0
      %392 = vmatmul.mubr.bf16.gmra.mrb[0].mxu0 %v316
      %v393 = vpop.f32.mrb[0].mxu0
      %v394 = vadd.f32 %v353, %v393
      %v395 = vpop.f32.mrb[0].mxu0
      %v396 = vpop.f32.mrb[0].mxu0
      %v397 = vadd.f32 %v356, %v396
      %v398 = vpop.f32.mrb[0].mxu0
      %399 = vdwg.mxu0
      %v400 = vmax.f32 %v394, 0.0
      %v401 = vmax.f32 %v397, 0.0
      %vm402 = vcmask 130048
      %403 = vst.msk [vmem:[%s148] sm:$0xff] %vm402, %v400
      %404 = vst.msk [vmem:[%s148 + $0x8] sm:$0xff] %vm402, %v401
      %s405 = smul.u32 2, %s13
      %p406 = scmp.lt.s32.totalorder %s405, 3
      %s407 = scalar_select %p406, %s405, 3
      %s408 = smul.addr %s407, 8
      %s409 = scalar_lea.vmem %s2, %s408
      // Predicated region
      $region29: #{_lambda_.66} parent=27 // pred_check
        %p410 = pneg %p78
      $region30: #{_lambda_.66} parent=27 // pred_check_branch
        %412 = sbr.rel (%p410) target = $region32
      $region31: #{_lambda_.66} parent=27 // pred_region
        %s413 = smul.u32 2, %s13
      $region32: #{_lambda_.66} parent=27 // pred_fallthru
        _
    $region28: #{_lambda_.66} parent=5 // pred_fallthru
      _
    %p414 = scmp.le.s32.totalorder 2, %s8
    // Predicated region
    $region33: #{_lambda_.66} parent=5 // pred_check
      %p415 = pneg %p414
    $region34: #{_lambda_.66} parent=5 // pred_check_branch
      %417 = sbr.rel (%p415) target = $region36
    $region35: #{_lambda_.66} parent=5 // pred_region
      %s418 = ssub.s32 %s8, 2
      // Predicated region
      $region37: #{_lambda_.66} parent=35 // pred_check
        %p419 = pneg %p84
      $region38: #{_lambda_.66} parent=35 // pred_check_branch
        %421 = sbr.rel (%p419) target = $region40
      $region39: #{_lambda_.66} parent=35 // pred_region
        %s422 = smul.u32 2, %s14
        %p423 = scmp.lt.s32.totalorder %s422, 3
        %s424 = scalar_select %p423, %s422, 3
        %s425 = smul.addr %s424, 8
        %s426 = scalar_lea.vmem %s2, %s425
      $region40: #{_lambda_.66} parent=35 // pred_fallthru
        _
    $region36: #{_lambda_.66} parent=5 // pred_fallthru
      _
  $region6: #{_lambda_.66} parent=0 // loop_footer
    %s12 = sadd.s32 1, %s8
  $region7: #{_lambda_.66} parent=0 // loop_footer_branch
    %7 = sbr.rel target = $region3
  $region8: #{_lambda_.66} parent=0 // loop_exit
    _

// kernel: _lambda_.72
$region0: #{_lambda_.72}
  #allocation0 [shape = 'u32[]', space=smem, size = 0x4, offset = 0x4, fixed_abs, tag = 'smem constant byte address 0x4 - core index']
  #allocation1 [shape = 'u32[144,128]{1,0:T(1,128)}', space=vmem, size = 0x12000, scoped, tag = 'internal scratch']
  %s0 = inlined_call_operand.vmem [shape: bf16[128,16], index: 0, kind: input, shape index: {}]
  %s1 = inlined_call_operand.vmem [shape: bf16[16,8], index: 1, kind: input, shape index: {}]
  %s2 = inlined_call_operand.vmem [shape: f32[128,8], index: 2, kind: output, shape index: {}]
  %s3 = sld [smem:[#allocation0]]
  $region41: #{_lambda_.72} parent=0
    _
  %s5 = ssub.s32 1, %s3
  %s6 = scalar_select 0, %s5, %s3
  loop: start=0, step=1, limit=4
  $region2: #{_lambda_.72} parent=0 // loop_pre_header
    _
  $region3: #{_lambda_.72} parent=0 // loop_header
    %s8 = sphi 0, %s12
    %p9 = scmp.ge.s32.totalorder %s8, 4
    %s18 = sphi 0, %s20
    %s21 = sphi 0, %s18
    %s22 = sphi 0, %s21
    %s38 = sphi 0, %s22
    %s42 = sphi 0, %s42
    %s44 = sphi 0, %s42
    %s45 = sphi 0, %s44
    %s59 = sphi 0, %s45
    %s65 = sphi 0, %s67
    %s68 = sphi 0, %s65
    %s69 = sphi 0, %s68
    %s85 = sphi 0, %s69
  $region4: #{_lambda_.72} parent=0 // loop_header_branch
    %11 = sbr.rel (%p9) target = $region8
  $region5: #{_lambda_.72} parent=0 // loop_body
    %s13 = ssub.s32 %s8, 1
    %s14 = ssub.s32 %s8, 2
    %s15 = sadd.s32 %s8, 1
    %s16 = ssub.s32 %s8, %s15
    %p17 = scmp.eq.s32.totalorder %s16, 0
    %s19 = sadd.s32 %s18, 1
    %s20 = scalar_select %p17, %s18, %s19
    %p23 = pneg %p17
    %p24 = scmp.eq.s32.totalorder %s8, 1
    %p25 = por %p23, %p24
    %p26 = scmp.ne.s32.totalorder %s18, %s21
    %p27 = scmp.eq.s32.totalorder %s8, 0
    %p28 = por %p26, %p27
    %p29 = scmp.ne.s32.totalorder %s18, %s21
    %p30 = scmp.eq.s32.totalorder %s13, 1
    %p31 = por %p29, %p30
    %p32 = scmp.ne.s32.totalorder %s21, %s22
    %p33 = scmp.eq.s32.totalorder %s13, 0
    %p34 = por %p32, %p33
    %p35 = scmp.ne.s32.totalorder %s21, %s22
    %p36 = scmp.eq.s32.totalorder %s14, 1
    %p37 = por %p35, %p36
    %p39 = scmp.ne.s32.totalorder %s22, %s38
    %p40 = scmp.eq.s32.totalorder %s14, 0
    %p41 = por %p39, %p40
    %s43 = sadd.s32 %s42, 1
    %p46 = scmp.eq.s32.totalorder %s8, 1
    %p47 = scmp.ne.s32.totalorder %s42, %s44
    %p48 = scmp.eq.s32.totalorder %s8, 0
    %p49 = por %p47, %p48
    %p50 = scmp.ne.s32.totalorder %s42, %s44
    %p51 = scmp.eq.s32.totalorder %s13, 1
    %p52 = por %p50, %p51
    %p53 = scmp.ne.s32.totalorder %s44, %s45
    %p54 = scmp.eq.s32.totalorder %s13, 0
    %p55 = por %p53, %p54
    %p56 = scmp.ne.s32.totalorder %s44, %s45
    %p57 = scmp.eq.s32.totalorder %s14, 1
    %p58 = por %p56, %p57
    %p60 = scmp.ne.s32.totalorder %s45, %s59
    %p61 = scmp.eq.s32.totalorder %s14, 0
    %p62 = por %p60, %p61
    %s63 = ssub.s32 %s8, %s15
    %p64 = scmp.eq.s32.totalorder %s63, 0
    %s66 = sadd.s32 %s65, 1
    %s67 = scalar_select %p64, %s65, %s66
    %p70 = pneg %p64
    %p71 = scmp.eq.s32.totalorder %s8, 1
    %p72 = por %p70, %p71
    %p73 = scmp.ne.s32.totalorder %s65, %s68
    %p74 = scmp.eq.s32.totalorder %s8, 0
    %p75 = por %p73, %p74
    %p76 = scmp.ne.s32.totalorder %s65, %s68
    %p77 = scmp.eq.s32.totalorder %s13, 1
    %p78 = por %p76, %p77
    %p79 = scmp.ne.s32.totalorder %s68, %s69
    %p80 = scmp.eq.s32.totalorder %s13, 0
    %p81 = por %p79, %p80
    %p82 = scmp.ne.s32.totalorder %s68, %s69
    %p83 = scmp.eq.s32.totalorder %s14, 1
    %p84 = por %p82, %p83
    %p86 = scmp.ne.s32.totalorder %s69, %s85
    %p87 = scmp.eq.s32.totalorder %s14, 0
    %p88 = por %p86, %p87
    %p89 = scmp.le.s32.totalorder 1, %s8
    %p90 = scmp.lt.s32.totalorder %s8, 3
    %p91 = pnand %p89, %p90
    %p92 = pneg %p91
    // Predicated region
    $region9: #{_lambda_.72} parent=5 // pred_check
      _
    $region10: #{_lambda_.72} parent=5 // pred_check_branch
      %94 = sbr.rel (%p91) target = $region12
    $region11: #{_lambda_.72} parent=5 // pred_region
      %s95 = ssub.s32 %s8, 1
      // Predicated region
      $region13: #{_lambda_.72} parent=11 // pred_check
        %p96 = pneg %p55
      $region14: #{_lambda_.72} parent=11 // pred_check_branch
        %98 = sbr.rel (%p96) target = $region16
      $region15: #{_lambda_.72} parent=11 // pred_region
        _
      $region16: #{_lambda_.72} parent=11 // pred_fallthru
        _
    $region12: #{_lambda_.72} parent=5 // pred_fallthru
      _
    %p99 = scmp.lt.s32.totalorder %s8, 2
    // Predicated region
    $region17: #{_lambda_.72} parent=5 // pred_check
      %p100 = pneg %p99
    $region18: #{_lambda_.72} parent=5 // pred_check_branch
      %102 = sbr.rel (%p100) target = $region20
    $region19: #{_lambda_.72} parent=5 // pred_region
      // Predicated region
      $region21: #{_lambda_.72} parent=19 // pred_check
        %p103 = pneg %p28
      $region22: #{_lambda_.72} parent=19 // pred_check_branch
        %105 = sbr.rel (%p103) target = $region24
      $region23: #{_lambda_.72} parent=19 // pred_region
        %s106 = smul.u32 8, %s8
        %p107 = scmp.lt.s32.totalorder %s106, 15
        %s108 = scalar_select %p107, %s106, 15
        %s109 = smul.addr %s108, 4
        %s110 = scalar_lea.vmem %s0, %s109
        %s111 = smul.u32 8, %s8
      $region24: #{_lambda_.72} parent=19 // pred_fallthru
        _
    $region20: #{_lambda_.72} parent=5 // pred_fallthru
      _
    %p112 = scmp.le.s32.totalorder 1, %s8
    %p113 = scmp.lt.s32.totalorder %s8, 3
    %p114 = pnand %p112, %p113
    %p115 = pneg %p114
    // Predicated region
    $region25: #{_lambda_.72} parent=5 // pred_check
      _
    $region26: #{_lambda_.72} parent=5 // pred_check_branch
      %117 = sbr.rel (%p114) target = $region28
    $region27: #{_lambda_.72} parent=5 // pred_region
      %s118 = ssub.s32 %s8, 1
      %s119 = smul.u32 8, %s13
      %p120 = scmp.lt.s32.totalorder %s119, 15
      %s121 = scalar_select %p120, %s119, 15
      %s122 = smul.addr %s121, 4
      %s123 = scalar_lea.vmem %s0, %s122
      %p124 = pneg %p34
      %p125 = pneg %p31
      %p126 = pneg %p55
      %p127 = pneg %p52
      %p128 = pneg %p81
      %p129 = pneg %p78
      %s130 = smul.u32 8, %s13
      %p131 = scmp.lt.s32.totalorder %s130, 15
      %s132 = scalar_select %p131, %s130, 15
      %s133 = smul.addr %s132, 8
      %s134 = scalar_lea.vmem %s2, %s133
      %s135 = smul.u32 8, %s13
      %p136 = scmp.lt.s32.totalorder %s135, 15
      %s137 = scalar_select %p136, %s135, 15
      %s138 = smul.addr %s137, 4
      %s139 = scalar_lea.vmem %s0, %s138
      %s140 = smul.u32 8, %s13
      %s141 = smul.u32 8, %s13
      %p142 = scmp.lt.s32.totalorder %s141, 15
      %s143 = scalar_select %p142, %s141, 15
      %s144 = smul.addr %s143, 8
      %s145 = scalar_lea.vmem %s2, %s144
      %s146 = smul.u32 8, %s13
      %v148 = vld [vmem:[%s139] sm:$0xf]
      %v149 = vld [vmem:[%s139 + $0x4] sm:$0xf]
      %v150 = vld [vmem:[%s139 + $0x8] sm:$0xf]
      %v151 = vld [vmem:[%s139 + $0xc] sm:$0xf]
      %v152 = vld [vmem:[%s139 + $0x10] sm:$0xf]
      %v153 = vld [vmem:[%s139 + $0x14] sm:$0xf]
      %v154 = vld [vmem:[%s139 + $0x18] sm:$0xf]
      %v155 = vld [vmem:[%s139 + $0x1c] sm:$0xf]
      %v156 = vld [vmem:[%s1] sm:$0xf]
      %v157 = vld [vmem:[%s1 + $0x4] sm:$0xf]
      %v166 = vunpack.c.l.b16 %v148
      %v167 = vunpack.c.l.b16 %v149
      %v168 = vunpack.c.l.b16 %v150
      %v169 = vunpack.c.l.b16 %v151
      %v170 = vunpack.c.l.b16 %v152
      %v171 = vunpack.c.l.b16 %v153
      %v172 = vunpack.c.l.b16 %v154
      %v173 = vunpack.c.l.b16 %v155
      %v174 = vpack.c.b16 %v167, %v166
      %v175 = vpack.c.b16 %v169, %v168
      %v176 = vpack.c.b16 %v171, %v170
      %v177 = vpack.c.b16 %v173, %v172
      %v180 = vunpack.c.l.b16 %v156
      %v181 = vunpack.c.l.b16 %v157
      %v182 = vpack.c.b16 %v181, %v180
      %vm184 = vcmask 130048
      %v186 = vsel %vm184, %v174, 0
      %v189 = vsel %vm184, %v175, 0
      %v192 = vsel %vm184, %v176, 0
      %v195 = vsel %vm184, %v177, 0
      %197 = vmatprep.subr.bf16.mxu0 0
      %198 = vmatpush1.bf16.msra.mxu0 %v182
      %199 = vmatprep.subr.bf16.mxu0 0
      %200 = vmatpush1.bf16.msra.mxu0 0
      %201 = vmatprep.subr.bf16.mxu0 0
      %202 = vmatpush1.bf16.msra.mxu0 0
      %203 = vmatprep.subr.bf16.mxu0 0
      %204 = vmatpush1.bf16.msra.mxu0 0
      %205 = vmatprep.subr.bf16.mxu0 0
      %206 = vmatpush1.bf16.msra.mxu0 0
      %207 = vmatprep.subr.bf16.mxu0 0
      %208 = vmatpush1.bf16.msra.mxu0 0
      %209 = vmatprep.subr.bf16.mxu0 0
      %210 = vmatpush1.bf16.msra.mxu0 0
      %211 = vmatprep.subr.bf16.mxu0 0
      %212 = vmatpush1.bf16.msra.mxu0 0
      %213 = vmatprep.subr.bf16.mxu0 0
      %214 = vmatpush1.bf16.msra.mxu0 0
      %215 = vmatprep.subr.bf16.mxu0 0
      %216 = vmatpush1.bf16.msra.mxu0 0
      %217 = vmatprep.subr.bf16.mxu0 0
      %218 = vmatpush1.bf16.msra.mxu0 0
      %219 = vmatprep.subr.bf16.mxu0 0
      %220 = vmatpush1.bf16.msra.mxu0 0
      %221 = vmatprep.subr.bf16.mxu0 0
      %222 = vmatpush1.bf16.msra.mxu0 0
      %223 = vmatprep.subr.bf16.mxu0 0
      %224 = vmatpush1.bf16.msra.mxu0 0
      %225 = vmatprep.subr.bf16.mxu0 0
      %226 = vmatpush1.bf16.msra.mxu0 0
      %227 = vmatprep.subr.bf16.mxu0 0
      %228 = vmatpush1.bf16.msra.mxu0 0
      %229 = vmatprep.mubr.bf16.mxu0 0
      %230 = vmatmul.mubr.bf16.gmra.mrb[0].mxu0 %v186
      %v231 = vpop.f32.mrb[0].mxu0
      %v232 = vadd.f32 0.0, %v231
      %v233 = vpop.f32.mrb[0].mxu0
      %v234 = vpop.f32.mrb[0].mxu0
      %v235 = vadd.f32 0.0, %v234
      %v236 = vpop.f32.mrb[0].mxu0
      %237 = vmatprep.mubr.bf16.mxu0 0
      %238 = vmatmul.mubr.bf16.gmra.mrb[0].mxu0 %v189
      %v239 = vpop.f32.mrb[0].mxu0
      %v240 = vadd.f32 0.0, %v239
      %v241 = vpop.f32.mrb[0].mxu0
      %v242 = vpop.f32.mrb[0].mxu0
      %v243 = vadd.f32 0.0, %v242
      %v244 = vpop.f32.mrb[0].mxu0
      %245 = vmatprep.mubr.bf16.mxu0 0
      %246 = vmatmul.mubr.bf16.gmra.mrb[0].mxu0 %v192
      %v247 = vpop.f32.mrb[0].mxu0
      %v248 = vadd.f32 0.0, %v247
      %v249 = vpop.f32.mrb[0].mxu0
      %v250 = vpop.f32.mrb[0].mxu0
      %v251 = vadd.f32 0.0, %v250
      %v252 = vpop.f32.mrb[0].mxu0
      %253 = vmatprep.mubr.bf16.mxu0 0
      %254 = vmatmul.mubr.bf16.gmra.mrb[0].mxu0 %v195
      %v255 = vpop.f32.mrb[0].mxu0
      %v256 = vadd.f32 0.0, %v255
      %v257 = vpop.f32.mrb[0].mxu0
      %v258 = vpop.f32.mrb[0].mxu0
      %v259 = vadd.f32 0.0, %v258
      %v260 = vpop.f32.mrb[0].mxu0
      %261 = vdwg.mxu0
      %vm262 = vcmask 64512
      %263 = vst.msk [vmem:[%s145] sm:$0xff] %vm262, %v232
      %264 = vst.msk [vmem:[%s145 + $0x8] sm:$0xff] %vm262, %v235
      %265 = vst.msk [vmem:[%s145 + $0x10] sm:$0xff] %vm262, %v240
      %266 = vst.msk [vmem:[%s145 + $0x18] sm:$0xff] %vm262, %v243
      %267 = vst.msk [vmem:[%s145 + $0x20] sm:$0xff] %vm262, %v248
      %268 = vst.msk [vmem:[%s145 + $0x28] sm:$0xff] %vm262, %v251
      %269 = vst.msk [vmem:[%s145 + $0x30] sm:$0xff] %vm262, %v256
      %270 = vst.msk [vmem:[%s145 + $0x38] sm:$0xff] %vm262, %v259
      %s271 = smul.u32 8, %s13
      %p272 = scmp.lt.s32.totalorder %s271, 15
      %s273 = scalar_select %p272, %s271, 15
      %s274 = smul.addr %s273, 8
      %s275 = scalar_lea.vmem %s2, %s274
      // Predicated region
      $region29: #{_lambda_.72} parent=27 // pred_check
        %p276 = pneg %p78
      $region30: #{_lambda_.72} parent=27 // pred_check_branch
        %278 = sbr.rel (%p276) target = $region32
      $region31: #{_lambda_.72} parent=27 // pred_region
        %s279 = smul.u32 8, %s13
      $region32: #{_lambda_.72} parent=27 // pred_fallthru
        _
    $region28: #{_lambda_.72} parent=5 // pred_fallthru
      _
    %p280 = scmp.le.s32.totalorder 2, %s8
    // Predicated region
    $region33: #{_lambda_.72} parent=5 // pred_check
      %p281 = pneg %p280
    $region34: #{_lambda_.72} parent=5 // pred_check_branch
      %283 = sbr.rel (%p281) target = $region36
    $region35: #{_lambda_.72} parent=5 // pred_region
      %s284 = ssub.s32 %s8, 2
      // Predicated region
      $region37: #{_lambda_.72} parent=35 // pred_check
        %p285 = pneg %p84
      $region38: #{_lambda_.72} parent=35 // pred_check_branch
        %287 = sbr.rel (%p285) target = $region40
      $region39: #{_lambda_.72} parent=35 // pred_region
        %s288 = smul.u32 8, %s14
        %p289 = scmp.lt.s32.totalorder %s288, 15
        %s290 = scalar_select %p289, %s288, 15
        %s291 = smul.addr %s290, 8
        %s292 = scalar_lea.vmem %s2, %s291
      $region40: #{_lambda_.72} parent=35 // pred_fallthru
        _
    $region36: #{_lambda_.72} parent=5 // pred_fallthru
      _
  $region6: #{_lambda_.72} parent=0 // loop_footer
    %s12 = sadd.s32 1, %s8
  $region7: #{_lambda_.72} parent=0 // loop_footer_branch
    %7 = sbr.rel target = $region3
  $region8: #{_lambda_.72} parent=0 // loop_exit
    _

// kernel: _lambda_.71
$region0: #{_lambda_.71}
  #allocation0 [shape = 'u32[]', space=smem, size = 0x4, offset = 0x4, fixed_abs, tag = 'smem constant byte address 0x4 - core index']
  #allocation1 [shape = 'u32[144,128]{1,0:T(1,128)}', space=vmem, size = 0x12000, scoped, tag = 'internal scratch']
  %s0 = inlined_call_operand.vmem [shape: bf16[128,144], index: 0, kind: input, shape index: {}]
  %s1 = inlined_call_operand.vmem [shape: bf16[144,8], index: 1, kind: input, shape index: {}]
  %s2 = inlined_call_operand.vmem [shape: f32[128,8], index: 2, kind: output, shape index: {}]
  %s3 = sld [smem:[#allocation0]]
  $region41: #{_lambda_.71} parent=0
    _
  %s5 = ssub.s32 1, %s3
  %s6 = scalar_select 0, %s5, %s3
  loop: start=0, step=1, limit=4
  $region2: #{_lambda_.71} parent=0 // loop_pre_header
    _
  $region3: #{_lambda_.71} parent=0 // loop_header
    %s8 = sphi 0, %s12
    %p9 = scmp.ge.s32.totalorder %s8, 4
    %s18 = sphi 0, %s20
    %s21 = sphi 0, %s18
    %s22 = sphi 0, %s21
    %s38 = sphi 0, %s22
    %s42 = sphi 0, %s42
    %s44 = sphi 0, %s42
    %s45 = sphi 0, %s44
    %s59 = sphi 0, %s45
    %s65 = sphi 0, %s67
    %s68 = sphi 0, %s65
    %s69 = sphi 0, %s68
    %s85 = sphi 0, %s69
  $region4: #{_lambda_.71} parent=0 // loop_header_branch
    %11 = sbr.rel (%p9) target = $region8
  $region5: #{_lambda_.71} parent=0 // loop_body
    %s13 = ssub.s32 %s8, 1
    %s14 = ssub.s32 %s8, 2
    %s15 = sadd.s32 %s8, 1
    %s16 = ssub.s32 %s8, %s15
    %p17 = scmp.eq.s32.totalorder %s16, 0
    %s19 = sadd.s32 %s18, 1
    %s20 = scalar_select %p17, %s18, %s19
    %p23 = pneg %p17
    %p24 = scmp.eq.s32.totalorder %s8, 1
    %p25 = por %p23, %p24
    %p26 = scmp.ne.s32.totalorder %s18, %s21
    %p27 = scmp.eq.s32.totalorder %s8, 0
    %p28 = por %p26, %p27
    %p29 = scmp.ne.s32.totalorder %s18, %s21
    %p30 = scmp.eq.s32.totalorder %s13, 1
    %p31 = por %p29, %p30
    %p32 = scmp.ne.s32.totalorder %s21, %s22
    %p33 = scmp.eq.s32.totalorder %s13, 0
    %p34 = por %p32, %p33
    %p35 = scmp.ne.s32.totalorder %s21, %s22
    %p36 = scmp.eq.s32.totalorder %s14, 1
    %p37 = por %p35, %p36
    %p39 = scmp.ne.s32.totalorder %s22, %s38
    %p40 = scmp.eq.s32.totalorder %s14, 0
    %p41 = por %p39, %p40
    %s43 = sadd.s32 %s42, 1
    %p46 = scmp.eq.s32.totalorder %s8, 1
    %p47 = scmp.ne.s32.totalorder %s42, %s44
    %p48 = scmp.eq.s32.totalorder %s8, 0
    %p49 = por %p47, %p48
    %p50 = scmp.ne.s32.totalorder %s42, %s44
    %p51 = scmp.eq.s32.totalorder %s13, 1
    %p52 = por %p50, %p51
    %p53 = scmp.ne.s32.totalorder %s44, %s45
    %p54 = scmp.eq.s32.totalorder %s13, 0
    %p55 = por %p53, %p54
    %p56 = scmp.ne.s32.totalorder %s44, %s45
    %p57 = scmp.eq.s32.totalorder %s14, 1
    %p58 = por %p56, %p57
    %p60 = scmp.ne.s32.totalorder %s45, %s59
    %p61 = scmp.eq.s32.totalorder %s14, 0
    %p62 = por %p60, %p61
    %s63 = ssub.s32 %s8, %s15
    %p64 = scmp.eq.s32.totalorder %s63, 0
    %s66 = sadd.s32 %s65, 1
    %s67 = scalar_select %p64, %s65, %s66
    %p70 = pneg %p64
    %p71 = scmp.eq.s32.totalorder %s8, 1
    %p72 = por %p70, %p71
    %p73 = scmp.ne.s32.totalorder %s65, %s68
    %p74 = scmp.eq.s32.totalorder %s8, 0
    %p75 = por %p73, %p74
    %p76 = scmp.ne.s32.totalorder %s65, %s68
    %p77 = scmp.eq.s32.totalorder %s13, 1
    %p78 = por %p76, %p77
    %p79 = scmp.ne.s32.totalorder %s68, %s69
    %p80 = scmp.eq.s32.totalorder %s13, 0
    %p81 = por %p79, %p80
    %p82 = scmp.ne.s32.totalorder %s68, %s69
    %p83 = scmp.eq.s32.totalorder %s14, 1
    %p84 = por %p82, %p83
    %p86 = scmp.ne.s32.totalorder %s69, %s85
    %p87 = scmp.eq.s32.totalorder %s14, 0
    %p88 = por %p86, %p87
    %p89 = scmp.le.s32.totalorder 1, %s8
    %p90 = scmp.lt.s32.totalorder %s8, 3
    %p91 = pnand %p89, %p90
    %p92 = pneg %p91
    // Predicated region
    $region9: #{_lambda_.71} parent=5 // pred_check
      _
    $region10: #{_lambda_.71} parent=5 // pred_check_branch
      %94 = sbr.rel (%p91) target = $region12
    $region11: #{_lambda_.71} parent=5 // pred_region
      %s95 = ssub.s32 %s8, 1
      // Predicated region
      $region13: #{_lambda_.71} parent=11 // pred_check
        %p96 = pneg %p55
      $region14: #{_lambda_.71} parent=11 // pred_check_branch
        %98 = sbr.rel (%p96) target = $region16
      $region15: #{_lambda_.71} parent=11 // pred_region
        _
      $region16: #{_lambda_.71} parent=11 // pred_fallthru
        _
    $region12: #{_lambda_.71} parent=5 // pred_fallthru
      _
    %p99 = scmp.lt.s32.totalorder %s8, 2
    // Predicated region
    $region17: #{_lambda_.71} parent=5 // pred_check
      %p100 = pneg %p99
    $region18: #{_lambda_.71} parent=5 // pred_check_branch
      %102 = sbr.rel (%p100) target = $region20
    $region19: #{_lambda_.71} parent=5 // pred_region
      // Predicated region
      $region21: #{_lambda_.71} parent=19 // pred_check
        %p103 = pneg %p28
      $region22: #{_lambda_.71} parent=19 // pred_check_branch
        %105 = sbr.rel (%p103) target = $region24
      $region23: #{_lambda_.71} parent=19 // pred_region
        %s106 = smul.u32 8, %s8
        %p107 = scmp.lt.s32.totalorder %s106, 15
        %s108 = scalar_select %p107, %s106, 15
        %s109 = smul.addr %s108, 2
        %s110 = smul.addr %s109, 4
        %s111 = scalar_lea.vmem %s0, %s110
        %s112 = smul.u32 8, %s8
      $region24: #{_lambda_.71} parent=19 // pred_fallthru
        _
    $region20: #{_lambda_.71} parent=5 // pred_fallthru
      _
    %p113 = scmp.le.s32.totalorder 1, %s8
    %p114 = scmp.lt.s32.totalorder %s8, 3
    %p115 = pnand %p113, %p114
    %p116 = pneg %p115
    // Predicated region
    $region25: #{_lambda_.71} parent=5 // pred_check
      _
    $region26: #{_lambda_.71} parent=5 // pred_check_branch
      %118 = sbr.rel (%p115) target = $region28
    $region27: #{_lambda_.71} parent=5 // pred_region
      %s119 = ssub.s32 %s8, 1
      %s120 = smul.u32 8, %s13
      %p121 = scmp.lt.s32.totalorder %s120, 15
      %s122 = scalar_select %p121, %s120, 15
      %s123 = smul.addr %s122, 2
      %s124 = smul.addr %s123, 4
      %s125 = scalar_lea.vmem %s0, %s124
      %p126 = pneg %p34
      %p127 = pneg %p31
      %p128 = pneg %p55
      %p129 = pneg %p52
      %p130 = pneg %p81
      %p131 = pneg %p78
      %s132 = smul.u32 8, %s13
      %p133 = scmp.lt.s32.totalorder %s132, 15
      %s134 = scalar_select %p133, %s132, 15
      %s135 = smul.addr %s134, 8
      %s136 = scalar_lea.vmem %s2, %s135
      %s137 = smul.u32 8, %s13
      %p138 = scmp.lt.s32.totalorder %s137, 15
      %s139 = scalar_select %p138, %s137, 15
      %s140 = smul.addr %s139, 2
      %s141 = smul.addr %s140, 4
      %s142 = scalar_lea.vmem %s0, %s141
      %s143 = smul.u32 8, %s13
      %s144 = smul.u32 8, %s13
      %p145 = scmp.lt.s32.totalorder %s144, 15
      %s146 = scalar_select %p145, %s144, 15
      %s147 = smul.addr %s146, 8
      %s148 = scalar_lea.vmem %s2, %s147
      %s149 = smul.u32 8, %s13
      %v151 = vld [vmem:[%s142] sm:$0xff]
      %v152 = vld [vmem:[%s142 + $0x8] sm:$0xff]
      %v153 = vld [vmem:[%s142 + $0x10] sm:$0xff]
      %v154 = vld [vmem:[%s142 + $0x18] sm:$0xff]
      %v155 = vld [vmem:[%s142 + $0x20] sm:$0xff]
      %v156 = vld [vmem:[%s142 + $0x28] sm:$0xff]
      %v157 = vld [vmem:[%s142 + $0x30] sm:$0xff]
      %v158 = vld [vmem:[%s142 + $0x38] sm:$0xff]
      %v159 = vld [vmem:[%s1] sm:$0xf]
      %v160 = vld [vmem:[%s1 + $0x4] sm:$0xf]
      %v161 = vld [vmem:[%s1 + $0x8] sm:$0xf]
      %v162 = vld [vmem:[%s1 + $0xc] sm:$0xf]
      %v163 = vld [vmem:[%s1 + $0x10] sm:$0xf]
      %v164 = vld [vmem:[%s1 + $0x14] sm:$0xf]
      %v165 = vld [vmem:[%s1 + $0x18] sm:$0xf]
      %v166 = vld [vmem:[%s1 + $0x1c] sm:$0xf]
      %v167 = vld [vmem:[%s1 + $0x20] sm:$0xf]
      %v168 = vld [vmem:[%s1 + $0x24] sm:$0xf]
      %v169 = vld [vmem:[%s1 + $0x28] sm:$0xf]
      %v170 = vld [vmem:[%s1 + $0x2c] sm:$0xf]
      %v171 = vld [vmem:[%s1 + $0x30] sm:$0xf]
      %v172 = vld [vmem:[%s1 + $0x34] sm:$0xf]
      %v173 = vld [vmem:[%s1 + $0x38] sm:$0xf]
      %v174 = vld [vmem:[%s1 + $0x3c] sm:$0xf]
      %v175 = vld [vmem:[%s1 + $0x40] sm:$0xf]
      %v176 = vld [vmem:[%s1 + $0x44] sm:$0xf]
      %v185 = vunpack.c.l.b16 %v151
      %v186 = vunpack.c.h.b16 %v151
      %v187 = vunpack.c.l.b16 %v152
      %v188 = vunpack.c.h.b16 %v152
      %v189 = vunpack.c.l.b16 %v153
      %v190 = vunpack.c.h.b16 %v153
      %v191 = vunpack.c.l.b16 %v154
      %v192 = vunpack.c.h.b16 %v154
      %v193 = vunpack.c.l.b16 %v155
      %v194 = vunpack.c.h.b16 %v155
      %v195 = vunpack.c.l.b16 %v156
      %v196 = vunpack.c.h.b16 %v156
      %v197 = vunpack.c.l.b16 %v157
      %v198 = vunpack.c.h.b16 %v157
      %v199 = vunpack.c.l.b16 %v158
      %v200 = vunpack.c.h.b16 %v158
      %v201 = vpack.c.b16 %v187, %v185
      %v202 = vpack.c.b16 %v188, %v186
      %v203 = vpack.c.b16 %v191, %v189
      %v204 = vpack.c.b16 %v192, %v190
      %v205 = vpack.c.b16 %v195, %v193
      %v206 = vpack.c.b16 %v196, %v194
      %v207 = vpack.c.b16 %v199, %v197
      %v208 = vpack.c.b16 %v200, %v198
      %v231 = vunpack.c.l.b16 %v159
      %v232 = vunpack.c.l.b16 %v160
      %v233 = vunpack.c.l.b16 %v161
      %v234 = vunpack.c.l.b16 %v162
      %v235 = vunpack.c.l.b16 %v163
      %v236 = vunpack.c.l.b16 %v164
      %v237 = vunpack.c.l.b16 %v165
      %v238 = vunpack.c.l.b16 %v166
      %v239 = vunpack.c.l.b16 %v167
      %v240 = vunpack.c.l.b16 %v168
      %v241 = vunpack.c.l.b16 %v169
      %v242 = vunpack.c.l.b16 %v170
      %v243 = vunpack.c.l.b16 %v171
      %v244 = vunpack.c.l.b16 %v172
      %v245 = vunpack.c.l.b16 %v173
      %v246 = vunpack.c.l.b16 %v174
      %v247 = vunpack.c.l.b16 %v175
      %v248 = vunpack.c.l.b16 %v176
      %v249 = vpack.c.b16 %v232, %v231
      %v250 = vpack.c.b16 %v234, %v233
      %v251 = vpack.c.b16 %v236, %v235
      %v252 = vpack.c.b16 %v238, %v237
      %v253 = vpack.c.b16 %v240, %v239
      %v254 = vpack.c.b16 %v242, %v241
      %v255 = vpack.c.b16 %v244, %v243
      %v256 = vpack.c.b16 %v246, %v245
      %v257 = vpack.c.b16 %v248, %v247
      %vm267 = vcmask 130048
      %v269 = vsel %vm267, %v202, 0
      %v272 = vsel %vm267, %v204, 0
      %v275 = vsel %vm267, %v206, 0
      %v278 = vsel %vm267, %v208, 0
      %280 = vmatprep.subr.bf16.mxu0 0
      %281 = vmatpush1.bf16.msra.mxu0 %v249
      %282 = vmatprep.subr.bf16.mxu0 0
      %283 = vmatpush1.bf16.msra.mxu0 %v250
      %284 = vmatprep.subr.bf16.mxu0 0
      %285 = vmatpush1.bf16.msra.mxu0 %v251
      %286 = vmatprep.subr.bf16.mxu0 0
      %287 = vmatpush1.bf16.msra.mxu0 %v252
      %288 = vmatprep.subr.bf16.mxu0 0
      %289 = vmatpush1.bf16.msra.mxu0 %v253
      %290 = vmatprep.subr.bf16.mxu0 0
      %291 = vmatpush1.bf16.msra.mxu0 %v254
      %292 = vmatprep.subr.bf16.mxu0 0
      %293 = vmatpush1.bf16.msra.mxu0 %v255
      %294 = vmatprep.subr.bf16.mxu0 0
      %295 = vmatpush1.bf16.msra.mxu0 %v256
      %296 = vmatprep.subr.bf16.mxu0 0
      %297 = vmatpush1.bf16.msra.mxu0 %v257
      %298 = vmatprep.subr.bf16.mxu0 0
      %299 = vmatpush1.bf16.msra.mxu0 0
      %300 = vmatprep.subr.bf16.mxu0 0
      %301 = vmatpush1.bf16.msra.mxu0 0
      %302 = vmatprep.subr.bf16.mxu0 0
      %303 = vmatpush1.bf16.msra.mxu0 0
      %304 = vmatprep.subr.bf16.mxu0 0
      %305 = vmatpush1.bf16.msra.mxu0 0
      %306 = vmatprep.subr.bf16.mxu0 0
      %307 = vmatpush1.bf16.msra.mxu0 0
      %308 = vmatprep.subr.bf16.mxu0 0
      %309 = vmatpush1.bf16.msra.mxu0 0
      %310 = vmatprep.subr.bf16.mxu0 0
      %311 = vmatpush1.bf16.msra.mxu0 0
      %312 = vmatprep.mubr.bf16.mxu0 %v269
      %313 = vmatmul.mubr.bf16.gmra.mrb[0].mxu0 %v201
      %v314 = vpop.f32.mrb[0].mxu0
      %v315 = vadd.f32 0.0, %v314
      %v316 = vpop.f32.mrb[0].mxu0
      %v317 = vpop.f32.mrb[0].mxu0
      %v318 = vadd.f32 0.0, %v317
      %v319 = vpop.f32.mrb[0].mxu0
      %320 = vmatprep.mubr.bf16.mxu0 %v272
      %321 = vmatmul.mubr.bf16.gmra.mrb[0].mxu0 %v203
      %v322 = vpop.f32.mrb[0].mxu0
      %v323 = vadd.f32 0.0, %v322
      %v324 = vpop.f32.mrb[0].mxu0
      %v325 = vpop.f32.mrb[0].mxu0
      %v326 = vadd.f32 0.0, %v325
      %v327 = vpop.f32.mrb[0].mxu0
      %328 = vmatprep.mubr.bf16.mxu0 %v275
      %329 = vmatmul.mubr.bf16.gmra.mrb[0].mxu0 %v205
      %v330 = vpop.f32.mrb[0].mxu0
      %v331 = vadd.f32 0.0, %v330
      %v332 = vpop.f32.mrb[0].mxu0
      %v333 = vpop.f32.mrb[0].mxu0
      %v334 = vadd.f32 0.0, %v333
      %v335 = vpop.f32.mrb[0].mxu0
      %336 = vmatprep.mubr.bf16.mxu0 %v278
      %337 = vmatmul.mubr.bf16.gmra.mrb[0].mxu0 %v207
      %v338 = vpop.f32.mrb[0].mxu0
      %v339 = vadd.f32 0.0, %v338
      %v340 = vpop.f32.mrb[0].mxu0
      %v341 = vpop.f32.mrb[0].mxu0
      %v342 = vadd.f32 0.0, %v341
      %v343 = vpop.f32.mrb[0].mxu0
      %344 = vdwg.mxu0
      %v345 = vmax.f32 %v315, 0.0
      %v346 = vmax.f32 %v318, 0.0
      %v347 = vmax.f32 %v323, 0.0
      %v348 = vmax.f32 %v326, 0.0
      %v349 = vmax.f32 %v331, 0.0
      %v350 = vmax.f32 %v334, 0.0
      %v351 = vmax.f32 %v339, 0.0
      %v352 = vmax.f32 %v342, 0.0
      %vm353 = vcmask 64512
      %354 = vst.msk [vmem:[%s148] sm:$0xff] %vm353, %v345
      %355 = vst.msk [vmem:[%s148 + $0x8] sm:$0xff] %vm353, %v346
      %356 = vst.msk [vmem:[%s148 + $0x10] sm:$0xff] %vm353, %v347
      %357 = vst.msk [vmem:[%s148 + $0x18] sm:$0xff] %vm353, %v348
      %358 = vst.msk [vmem:[%s148 + $0x20] sm:$0xff] %vm353, %v349
      %359 = vst.msk [vmem:[%s148 + $0x28] sm:$0xff] %vm353, %v350
      %360 = vst.msk [vmem:[%s148 + $0x30] sm:$0xff] %vm353, %v351
      %361 = vst.msk [vmem:[%s148 + $0x38] sm:$0xff] %vm353, %v352
      %s362 = smul.u32 8, %s13
      %p363 = scmp.lt.s32.totalorder %s362, 15
      %s364 = scalar_select %p363, %s362, 15
      %s365 = smul.addr %s364, 8
      %s366 = scalar_lea.vmem %s2, %s365
      // Predicated region
      $region29: #{_lambda_.71} parent=27 // pred_check
        %p367 = pneg %p78
      $region30: #{_lambda_.71} parent=27 // pred_check_branch
        %369 = sbr.rel (%p367) target = $region32
      $region31: #{_lambda_.71} parent=27 // pred_region
        %s370 = smul.u32 8, %s13
      $region32: #{_lambda_.71} parent=27 // pred_fallthru
        _
    $region28: #{_lambda_.71} parent=5 // pred_fallthru
      _
    %p371 = scmp.le.s32.totalorder 2, %s8
    // Predicated region
    $region33: #{_lambda_.71} parent=5 // pred_check
      %p372 = pneg %p371
    $region34: #{_lambda_.71} parent=5 // pred_check_branch
      %374 = sbr.rel (%p372) target = $region36
    $region35: #{_lambda_.71} parent=5 // pred_region
      %s375 = ssub.s32 %s8, 2
      // Predicated region
      $region37: #{_lambda_.71} parent=35 // pred_check
        %p376 = pneg %p84
      $region38: #{_lambda_.71} parent=35 // pred_check_branch
        %378 = sbr.rel (%p376) target = $region40
      $region39: #{_lambda_.71} parent=35 // pred_region
        %s379 = smul.u32 8, %s14
        %p380 = scmp.lt.s32.totalorder %s379, 15
        %s381 = scalar_select %p380, %s379, 15
        %s382 = smul.addr %s381, 8
        %s383 = scalar_lea.vmem %s2, %s382
      $region40: #{_lambda_.71} parent=35 // pred_fallthru
        _
    $region36: #{_lambda_.71} parent=5 // pred_fallthru
      _
  $region6: #{_lambda_.71} parent=0 // loop_footer
    %s12 = sadd.s32 1, %s8
  $region7: #{_lambda_.71} parent=0 // loop_footer_branch
    %7 = sbr.rel target = $region3
  $region8: #{_lambda_.71} parent=0 // loop_exit
    _

// kernel: _lambda_.77
$region0: #{_lambda_.77}
  #allocation0 [shape = 'u32[]', space=smem, size = 0x4, offset = 0x4, fixed_abs, tag = 'smem constant byte address 0x4 - core index']
  #allocation1 [shape = 'u32[144,128]{1,0:T(1,128)}', space=vmem, size = 0x12000, scoped, tag = 'internal scratch']
  %s0 = inlined_call_operand.vmem [shape: bf16[512,8], index: 0, kind: input, shape index: {}]
  %s1 = inlined_call_operand.vmem [shape: bf16[8,8], index: 1, kind: input, shape index: {}]
  %s2 = inlined_call_operand.vmem [shape: f32[512,8], index: 2, kind: output, shape index: {}]
  %s3 = sld [smem:[#allocation0]]
  $region41: #{_lambda_.77} parent=0
    _
  %s5 = ssub.s32 1, %s3
  %s6 = scalar_select 0, %s5, %s3
  loop: start=0, step=1, limit=6
  $region2: #{_lambda_.77} parent=0 // loop_pre_header
    _
  $region3: #{_lambda_.77} parent=0 // loop_header
    %s8 = sphi 0, %s12
    %p9 = scmp.ge.s32.totalorder %s8, 6
    %s18 = sphi 0, %s20
    %s21 = sphi 0, %s18
    %s22 = sphi 0, %s21
    %s38 = sphi 0, %s22
    %s42 = sphi 0, %s42
    %s44 = sphi 0, %s42
    %s45 = sphi 0, %s44
    %s59 = sphi 0, %s45
    %s65 = sphi 0, %s67
    %s68 = sphi 0, %s65
    %s69 = sphi 0, %s68
    %s85 = sphi 0, %s69
  $region4: #{_lambda_.77} parent=0 // loop_header_branch
    %11 = sbr.rel (%p9) target = $region8
  $region5: #{_lambda_.77} parent=0 // loop_body
    %s13 = ssub.s32 %s8, 1
    %s14 = ssub.s32 %s8, 2
    %s15 = sadd.s32 %s8, 1
    %s16 = ssub.s32 %s8, %s15
    %p17 = scmp.eq.s32.totalorder %s16, 0
    %s19 = sadd.s32 %s18, 1
    %s20 = scalar_select %p17, %s18, %s19
    %p23 = pneg %p17
    %p24 = scmp.eq.s32.totalorder %s8, 3
    %p25 = por %p23, %p24
    %p26 = scmp.ne.s32.totalorder %s18, %s21
    %p27 = scmp.eq.s32.totalorder %s8, 0
    %p28 = por %p26, %p27
    %p29 = scmp.ne.s32.totalorder %s18, %s21
    %p30 = scmp.eq.s32.totalorder %s13, 3
    %p31 = por %p29, %p30
    %p32 = scmp.ne.s32.totalorder %s21, %s22
    %p33 = scmp.eq.s32.totalorder %s13, 0
    %p34 = por %p32, %p33
    %p35 = scmp.ne.s32.totalorder %s21, %s22
    %p36 = scmp.eq.s32.totalorder %s14, 3
    %p37 = por %p35, %p36
    %p39 = scmp.ne.s32.totalorder %s22, %s38
    %p40 = scmp.eq.s32.totalorder %s14, 0
    %p41 = por %p39, %p40
    %s43 = sadd.s32 %s42, 1
    %p46 = scmp.eq.s32.totalorder %s8, 3
    %p47 = scmp.ne.s32.totalorder %s42, %s44
    %p48 = scmp.eq.s32.totalorder %s8, 0
    %p49 = por %p47, %p48
    %p50 = scmp.ne.s32.totalorder %s42, %s44
    %p51 = scmp.eq.s32.totalorder %s13, 3
    %p52 = por %p50, %p51
    %p53 = scmp.ne.s32.totalorder %s44, %s45
    %p54 = scmp.eq.s32.totalorder %s13, 0
    %p55 = por %p53, %p54
    %p56 = scmp.ne.s32.totalorder %s44, %s45
    %p57 = scmp.eq.s32.totalorder %s14, 3
    %p58 = por %p56, %p57
    %p60 = scmp.ne.s32.totalorder %s45, %s59
    %p61 = scmp.eq.s32.totalorder %s14, 0
    %p62 = por %p60, %p61
    %s63 = ssub.s32 %s8, %s15
    %p64 = scmp.eq.s32.totalorder %s63, 0
    %s66 = sadd.s32 %s65, 1
    %s67 = scalar_select %p64, %s65, %s66
    %p70 = pneg %p64
    %p71 = scmp.eq.s32.totalorder %s8, 3
    %p72 = por %p70, %p71
    %p73 = scmp.ne.s32.totalorder %s65, %s68
    %p74 = scmp.eq.s32.totalorder %s8, 0
    %p75 = por %p73, %p74
    %p76 = scmp.ne.s32.totalorder %s65, %s68
    %p77 = scmp.eq.s32.totalorder %s13, 3
    %p78 = por %p76, %p77
    %p79 = scmp.ne.s32.totalorder %s68, %s69
    %p80 = scmp.eq.s32.totalorder %s13, 0
    %p81 = por %p79, %p80
    %p82 = scmp.ne.s32.totalorder %s68, %s69
    %p83 = scmp.eq.s32.totalorder %s14, 3
    %p84 = por %p82, %p83
    %p86 = scmp.ne.s32.totalorder %s69, %s85
    %p87 = scmp.eq.s32.totalorder %s14, 0
    %p88 = por %p86, %p87
    %p89 = scmp.le.s32.totalorder 1, %s8
    %p90 = scmp.lt.s32.totalorder %s8, 5
    %p91 = pnand %p89, %p90
    %p92 = pneg %p91
    // Predicated region
    $region9: #{_lambda_.77} parent=5 // pred_check
      _
    $region10: #{_lambda_.77} parent=5 // pred_check_branch
      %94 = sbr.rel (%p91) target = $region12
    $region11: #{_lambda_.77} parent=5 // pred_region
      %s95 = ssub.s32 %s8, 1
      // Predicated region
      $region13: #{_lambda_.77} parent=11 // pred_check
        %p96 = pneg %p55
      $region14: #{_lambda_.77} parent=11 // pred_check_branch
        %98 = sbr.rel (%p96) target = $region16
      $region15: #{_lambda_.77} parent=11 // pred_region
        _
      $region16: #{_lambda_.77} parent=11 // pred_fallthru
        _
    $region12: #{_lambda_.77} parent=5 // pred_fallthru
      _
    %p99 = scmp.lt.s32.totalorder %s8, 4
    // Predicated region
    $region17: #{_lambda_.77} parent=5 // pred_check
      %p100 = pneg %p99
    $region18: #{_lambda_.77} parent=5 // pred_check_branch
      %102 = sbr.rel (%p100) target = $region20
    $region19: #{_lambda_.77} parent=5 // pred_region
      // Predicated region
      $region21: #{_lambda_.77} parent=19 // pred_check
        %p103 = pneg %p28
      $region22: #{_lambda_.77} parent=19 // pred_check_branch
        %105 = sbr.rel (%p103) target = $region24
      $region23: #{_lambda_.77} parent=19 // pred_region
        %s106 = smul.u32 16, %s8
        %p107 = scmp.lt.s32.totalorder %s106, 63
        %s108 = scalar_select %p107, %s106, 63
        %s109 = smul.addr %s108, 4
        %s110 = scalar_lea.vmem %s0, %s109
        %s111 = smul.u32 16, %s8
      $region24: #{_lambda_.77} parent=19 // pred_fallthru
        _
    $region20: #{_lambda_.77} parent=5 // pred_fallthru
      _
    %p112 = scmp.le.s32.totalorder 1, %s8
    %p113 = scmp.lt.s32.totalorder %s8, 5
    %p114 = pnand %p112, %p113
    %p115 = pneg %p114
    // Predicated region
    $region25: #{_lambda_.77} parent=5 // pred_check
      _
    $region26: #{_lambda_.77} parent=5 // pred_check_branch
      %117 = sbr.rel (%p114) target = $region28
    $region27: #{_lambda_.77} parent=5 // pred_region
      %s118 = ssub.s32 %s8, 1
      %s119 = smul.u32 16, %s13
      %p120 = scmp.lt.s32.totalorder %s119, 63
      %s121 = scalar_select %p120, %s119, 63
      %s122 = smul.addr %s121, 4
      %s123 = scalar_lea.vmem %s0, %s122
      %p124 = pneg %p34
      %p125 = pneg %p31
      %p126 = pneg %p55
      %p127 = pneg %p52
      %p128 = pneg %p81
      %p129 = pneg %p78
      %s130 = smul.u32 16, %s13
      %p131 = scmp.lt.s32.totalorder %s130, 63
      %s132 = scalar_select %p131, %s130, 63
      %s133 = smul.addr %s132, 8
      %s134 = scalar_lea.vmem %s2, %s133
      %s135 = smul.u32 16, %s13
      %p136 = scmp.lt.s32.totalorder %s135, 63
      %s137 = scalar_select %p136, %s135, 63
      %s138 = smul.addr %s137, 4
      %s139 = scalar_lea.vmem %s0, %s138
      %s140 = smul.u32 16, %s13
      %s141 = smul.u32 16, %s13
      %p142 = scmp.lt.s32.totalorder %s141, 63
      %s143 = scalar_select %p142, %s141, 63
      %s144 = smul.addr %s143, 8
      %s145 = scalar_lea.vmem %s2, %s144
      %s146 = smul.u32 16, %s13
      %v148 = vld [vmem:[%s139] sm:$0xf]
      %v149 = vld [vmem:[%s139 + $0x4] sm:$0xf]
      %v150 = vld [vmem:[%s139 + $0x8] sm:$0xf]
      %v151 = vld [vmem:[%s139 + $0xc] sm:$0xf]
      %v152 = vld [vmem:[%s139 + $0x10] sm:$0xf]
      %v153 = vld [vmem:[%s139 + $0x14] sm:$0xf]
      %v154 = vld [vmem:[%s139 + $0x18] sm:$0xf]
      %v155 = vld [vmem:[%s139 + $0x1c] sm:$0xf]
      %v156 = vld [vmem:[%s139 + $0x20] sm:$0xf]
      %v157 = vld [vmem:[%s139 + $0x24] sm:$0xf]
      %v158 = vld [vmem:[%s139 + $0x28] sm:$0xf]
      %v159 = vld [vmem:[%s139 + $0x2c] sm:$0xf]
      %v160 = vld [vmem:[%s139 + $0x30] sm:$0xf]
      %v161 = vld [vmem:[%s139 + $0x34] sm:$0xf]
      %v162 = vld [vmem:[%s139 + $0x38] sm:$0xf]
      %v163 = vld [vmem:[%s139 + $0x3c] sm:$0xf]
      %v164 = vld [vmem:[%s1] sm:$0xf]
      %v181 = vunpack.c.l.b16 %v148
      %v182 = vunpack.c.l.b16 %v149
      %v183 = vunpack.c.l.b16 %v150
      %v184 = vunpack.c.l.b16 %v151
      %v185 = vunpack.c.l.b16 %v152
      %v186 = vunpack.c.l.b16 %v153
      %v187 = vunpack.c.l.b16 %v154
      %v188 = vunpack.c.l.b16 %v155
      %v189 = vunpack.c.l.b16 %v156
      %v190 = vunpack.c.l.b16 %v157
      %v191 = vunpack.c.l.b16 %v158
      %v192 = vunpack.c.l.b16 %v159
      %v193 = vunpack.c.l.b16 %v160
      %v194 = vunpack.c.l.b16 %v161
      %v195 = vunpack.c.l.b16 %v162
      %v196 = vunpack.c.l.b16 %v163
      %v197 = vpack.c.b16 %v182, %v181
      %v198 = vpack.c.b16 %v184, %v183
      %v199 = vpack.c.b16 %v186, %v185
      %v200 = vpack.c.b16 %v188, %v187
      %v201 = vpack.c.b16 %v190, %v189
      %v202 = vpack.c.b16 %v192, %v191
      %v203 = vpack.c.b16 %v194, %v193
      %v204 = vpack.c.b16 %v196, %v195
      %vm205 = vcmask 64512
      %v207 = vsel %vm205, %v197, 0
      %v210 = vsel %vm205, %v198, 0
      %v213 = vsel %vm205, %v199, 0
      %v216 = vsel %vm205, %v200, 0
      %v219 = vsel %vm205, %v201, 0
      %v222 = vsel %vm205, %v202, 0
      %v225 = vsel %vm205, %v203, 0
      %v228 = vsel %vm205, %v204, 0
      %vm230 = vcmask 1043456
      %v232 = vsel %vm230, %v164, 0
      %234 = vmatprep.subr.bf16.mxu0 0
      %235 = vmatpush1.bf16.msra.mxu0 %v232
      %236 = vmatprep.subr.bf16.mxu0 0
      %237 = vmatpush1.bf16.msra.mxu0 0
      %238 = vmatprep.subr.bf16.mxu0 0
      %239 = vmatpush1.bf16.msra.mxu0 0
      %240 = vmatprep.subr.bf16.mxu0 0
      %241 = vmatpush1.bf16.msra.mxu0 0
      %242 = vmatprep.subr.bf16.mxu0 0
      %243 = vmatpush1.bf16.msra.mxu0 0
      %244 = vmatprep.subr.bf16.mxu0 0
      %245 = vmatpush1.bf16.msra.mxu0 0
      %246 = vmatprep.subr.bf16.mxu0 0
      %247 = vmatpush1.bf16.msra.mxu0 0
      %248 = vmatprep.subr.bf16.mxu0 0
      %249 = vmatpush1.bf16.msra.mxu0 0
      %250 = vmatprep.subr.bf16.mxu0 0
      %251 = vmatpush1.bf16.msra.mxu0 0
      %252 = vmatprep.subr.bf16.mxu0 0
      %253 = vmatpush1.bf16.msra.mxu0 0
      %254 = vmatprep.subr.bf16.mxu0 0
      %255 = vmatpush1.bf16.msra.mxu0 0
      %256 = vmatprep.subr.bf16.mxu0 0
      %257 = vmatpush1.bf16.msra.mxu0 0
      %258 = vmatprep.subr.bf16.mxu0 0
      %259 = vmatpush1.bf16.msra.mxu0 0
      %260 = vmatprep.subr.bf16.mxu0 0
      %261 = vmatpush1.bf16.msra.mxu0 0
      %262 = vmatprep.subr.bf16.mxu0 0
      %263 = vmatpush1.bf16.msra.mxu0 0
      %264 = vmatprep.subr.bf16.mxu0 0
      %265 = vmatpush1.bf16.msra.mxu0 0
      %266 = vmatprep.mubr.bf16.mxu0 0
      %267 = vmatmul.mubr.bf16.gmra.mrb[0].mxu0 %v207
      %v268 = vpop.f32.mrb[0].mxu0
      %v269 = vadd.f32 0.0, %v268
      %v270 = vpop.f32.mrb[0].mxu0
      %v271 = vpop.f32.mrb[0].mxu0
      %v272 = vadd.f32 0.0, %v271
      %v273 = vpop.f32.mrb[0].mxu0
      %274 = vmatprep.mubr.bf16.mxu0 0
      %275 = vmatmul.mubr.bf16.gmra.mrb[0].mxu0 %v210
      %v276 = vpop.f32.mrb[0].mxu0
      %v277 = vadd.f32 0.0, %v276
      %v278 = vpop.f32.mrb[0].mxu0
      %v279 = vpop.f32.mrb[0].mxu0
      %v280 = vadd.f32 0.0, %v279
      %v281 = vpop.f32.mrb[0].mxu0
      %282 = vmatprep.mubr.bf16.mxu0 0
      %283 = vmatmul.mubr.bf16.gmra.mrb[0].mxu0 %v213
      %v284 = vpop.f32.mrb[0].mxu0
      %v285 = vadd.f32 0.0, %v284
      %v286 = vpop.f32.mrb[0].mxu0
      %v287 = vpop.f32.mrb[0].mxu0
      %v288 = vadd.f32 0.0, %v287
      %v289 = vpop.f32.mrb[0].mxu0
      %290 = vmatprep.mubr.bf16.mxu0 0
      %291 = vmatmul.mubr.bf16.gmra.mrb[0].mxu0 %v216
      %v292 = vpop.f32.mrb[0].mxu0
      %v293 = vadd.f32 0.0, %v292
      %v294 = vpop.f32.mrb[0].mxu0
      %v295 = vpop.f32.mrb[0].mxu0
      %v296 = vadd.f32 0.0, %v295
      %v297 = vpop.f32.mrb[0].mxu0
      %298 = vmatprep.mubr.bf16.mxu0 0
      %299 = vmatmul.mubr.bf16.gmra.mrb[0].mxu0 %v219
      %v300 = vpop.f32.mrb[0].mxu0
      %v301 = vadd.f32 0.0, %v300
      %v302 = vpop.f32.mrb[0].mxu0
      %v303 = vpop.f32.mrb[0].mxu0
      %v304 = vadd.f32 0.0, %v303
      %v305 = vpop.f32.mrb[0].mxu0
      %306 = vmatprep.mubr.bf16.mxu0 0
      %307 = vmatmul.mubr.bf16.gmra.mrb[0].mxu0 %v222
      %v308 = vpop.f32.mrb[0].mxu0
      %v309 = vadd.f32 0.0, %v308
      %v310 = vpop.f32.mrb[0].mxu0
      %v311 = vpop.f32.mrb[0].mxu0
      %v312 = vadd.f32 0.0, %v311
      %v313 = vpop.f32.mrb[0].mxu0
      %314 = vmatprep.mubr.bf16.mxu0 0
      %315 = vmatmul.mubr.bf16.gmra.mrb[0].mxu0 %v225
      %v316 = vpop.f32.mrb[0].mxu0
      %v317 = vadd.f32 0.0, %v316
      %v318 = vpop.f32.mrb[0].mxu0
      %v319 = vpop.f32.mrb[0].mxu0
      %v320 = vadd.f32 0.0, %v319
      %v321 = vpop.f32.mrb[0].mxu0
      %322 = vmatprep.mubr.bf16.mxu0 0
      %323 = vmatmul.mubr.bf16.gmra.mrb[0].mxu0 %v228
      %v324 = vpop.f32.mrb[0].mxu0
      %v325 = vadd.f32 0.0, %v324
      %v326 = vpop.f32.mrb[0].mxu0
      %v327 = vpop.f32.mrb[0].mxu0
      %v328 = vadd.f32 0.0, %v327
      %v329 = vpop.f32.mrb[0].mxu0
      %330 = vdwg.mxu0
      %331 = vst.msk [vmem:[%s145] sm:$0xff] %vm205, %v269
      %332 = vst.msk [vmem:[%s145 + $0x8] sm:$0xff] %vm205, %v272
      %333 = vst.msk [vmem:[%s145 + $0x10] sm:$0xff] %vm205, %v277
      %334 = vst.msk [vmem:[%s145 + $0x18] sm:$0xff] %vm205, %v280
      %335 = vst.msk [vmem:[%s145 + $0x20] sm:$0xff] %vm205, %v285
      %336 = vst.msk [vmem:[%s145 + $0x28] sm:$0xff] %vm205, %v288
      %337 = vst.msk [vmem:[%s145 + $0x30] sm:$0xff] %vm205, %v293
      %338 = vst.msk [vmem:[%s145 + $0x38] sm:$0xff] %vm205, %v296
      %339 = vst.msk [vmem:[%s145 + $0x40] sm:$0xff] %vm205, %v301
      %340 = vst.msk [vmem:[%s145 + $0x48] sm:$0xff] %vm205, %v304
      %341 = vst.msk [vmem:[%s145 + $0x50] sm:$0xff] %vm205, %v309
      %342 = vst.msk [vmem:[%s145 + $0x58] sm:$0xff] %vm205, %v312
      %343 = vst.msk [vmem:[%s145 + $0x60] sm:$0xff] %vm205, %v317
      %344 = vst.msk [vmem:[%s145 + $0x68] sm:$0xff] %vm205, %v320
      %345 = vst.msk [vmem:[%s145 + $0x70] sm:$0xff] %vm205, %v325
      %346 = vst.msk [vmem:[%s145 + $0x78] sm:$0xff] %vm205, %v328
      %s347 = smul.u32 16, %s13
      %p348 = scmp.lt.s32.totalorder %s347, 63
      %s349 = scalar_select %p348, %s347, 63
      %s350 = smul.addr %s349, 8
      %s351 = scalar_lea.vmem %s2, %s350
      // Predicated region
      $region29: #{_lambda_.77} parent=27 // pred_check
        %p352 = pneg %p78
      $region30: #{_lambda_.77} parent=27 // pred_check_branch
        %354 = sbr.rel (%p352) target = $region32
      $region31: #{_lambda_.77} parent=27 // pred_region
        %s355 = smul.u32 16, %s13
      $region32: #{_lambda_.77} parent=27 // pred_fallthru
        _
    $region28: #{_lambda_.77} parent=5 // pred_fallthru
      _
    %p356 = scmp.le.s32.totalorder 2, %s8
    // Predicated region
    $region33: #{_lambda_.77} parent=5 // pred_check
      %p357 = pneg %p356
    $region34: #{_lambda_.77} parent=5 // pred_check_branch
      %359 = sbr.rel (%p357) target = $region36
    $region35: #{_lambda_.77} parent=5 // pred_region
      %s360 = ssub.s32 %s8, 2
      // Predicated region
      $region37: #{_lambda_.77} parent=35 // pred_check
        %p361 = pneg %p84
      $region38: #{_lambda_.77} parent=35 // pred_check_branch
        %363 = sbr.rel (%p361) target = $region40
      $region39: #{_lambda_.77} parent=35 // pred_region
        %s364 = smul.u32 16, %s14
        %p365 = scmp.lt.s32.totalorder %s364, 63
        %s366 = scalar_select %p365, %s364, 63
        %s367 = smul.addr %s366, 8
        %s368 = scalar_lea.vmem %s2, %s367
      $region40: #{_lambda_.77} parent=35 // pred_fallthru
        _
    $region36: #{_lambda_.77} parent=5 // pred_fallthru
      _
  $region6: #{_lambda_.77} parent=0 // loop_footer
    %s12 = sadd.s32 1, %s8
  $region7: #{_lambda_.77} parent=0 // loop_footer_branch
    %7 = sbr.rel target = $region3
  $region8: #{_lambda_.77} parent=0 // loop_exit
    _

// kernel: _lambda_.76
$region0: #{_lambda_.76}
  #allocation0 [shape = 'u32[]', space=smem, size = 0x4, offset = 0x4, fixed_abs, tag = 'smem constant byte address 0x4 - core index']
  #allocation1 [shape = 'u32[144,128]{1,0:T(1,128)}', space=vmem, size = 0x12000, scoped, tag = 'internal scratch']
  %s0 = inlined_call_operand.vmem [shape: bf16[512,72], index: 0, kind: input, shape index: {}]
  %s1 = inlined_call_operand.vmem [shape: bf16[72,8], index: 1, kind: input, shape index: {}]
  %s2 = inlined_call_operand.vmem [shape: f32[512,8], index: 2, kind: output, shape index: {}]
  %s3 = sld [smem:[#allocation0]]
  $region41: #{_lambda_.76} parent=0
    _
  %s5 = ssub.s32 1, %s3
  %s6 = scalar_select 0, %s5, %s3
  loop: start=0, step=1, limit=6
  $region2: #{_lambda_.76} parent=0 // loop_pre_header
    _
  $region3: #{_lambda_.76} parent=0 // loop_header
    %s8 = sphi 0, %s12
    %p9 = scmp.ge.s32.totalorder %s8, 6
    %s18 = sphi 0, %s20
    %s21 = sphi 0, %s18
    %s22 = sphi 0, %s21
    %s38 = sphi 0, %s22
    %s42 = sphi 0, %s42
    %s44 = sphi 0, %s42
    %s45 = sphi 0, %s44
    %s59 = sphi 0, %s45
    %s65 = sphi 0, %s67
    %s68 = sphi 0, %s65
    %s69 = sphi 0, %s68
    %s85 = sphi 0, %s69
  $region4: #{_lambda_.76} parent=0 // loop_header_branch
    %11 = sbr.rel (%p9) target = $region8
  $region5: #{_lambda_.76} parent=0 // loop_body
    %s13 = ssub.s32 %s8, 1
    %s14 = ssub.s32 %s8, 2
    %s15 = sadd.s32 %s8, 1
    %s16 = ssub.s32 %s8, %s15
    %p17 = scmp.eq.s32.totalorder %s16, 0
    %s19 = sadd.s32 %s18, 1
    %s20 = scalar_select %p17, %s18, %s19
    %p23 = pneg %p17
    %p24 = scmp.eq.s32.totalorder %s8, 3
    %p25 = por %p23, %p24
    %p26 = scmp.ne.s32.totalorder %s18, %s21
    %p27 = scmp.eq.s32.totalorder %s8, 0
    %p28 = por %p26, %p27
    %p29 = scmp.ne.s32.totalorder %s18, %s21
    %p30 = scmp.eq.s32.totalorder %s13, 3
    %p31 = por %p29, %p30
    %p32 = scmp.ne.s32.totalorder %s21, %s22
    %p33 = scmp.eq.s32.totalorder %s13, 0
    %p34 = por %p32, %p33
    %p35 = scmp.ne.s32.totalorder %s21, %s22
    %p36 = scmp.eq.s32.totalorder %s14, 3
    %p37 = por %p35, %p36
    %p39 = scmp.ne.s32.totalorder %s22, %s38
    %p40 = scmp.eq.s32.totalorder %s14, 0
    %p41 = por %p39, %p40
    %s43 = sadd.s32 %s42, 1
    %p46 = scmp.eq.s32.totalorder %s8, 3
    %p47 = scmp.ne.s32.totalorder %s42, %s44
    %p48 = scmp.eq.s32.totalorder %s8, 0
    %p49 = por %p47, %p48
    %p50 = scmp.ne.s32.totalorder %s42, %s44
    %p51 = scmp.eq.s32.totalorder %s13, 3
    %p52 = por %p50, %p51
    %p53 = scmp.ne.s32.totalorder %s44, %s45
    %p54 = scmp.eq.s32.totalorder %s13, 0
    %p55 = por %p53, %p54
    %p56 = scmp.ne.s32.totalorder %s44, %s45
    %p57 = scmp.eq.s32.totalorder %s14, 3
    %p58 = por %p56, %p57
    %p60 = scmp.ne.s32.totalorder %s45, %s59
    %p61 = scmp.eq.s32.totalorder %s14, 0
    %p62 = por %p60, %p61
    %s63 = ssub.s32 %s8, %s15
    %p64 = scmp.eq.s32.totalorder %s63, 0
    %s66 = sadd.s32 %s65, 1
    %s67 = scalar_select %p64, %s65, %s66
    %p70 = pneg %p64
    %p71 = scmp.eq.s32.totalorder %s8, 3
    %p72 = por %p70, %p71
    %p73 = scmp.ne.s32.totalorder %s65, %s68
    %p74 = scmp.eq.s32.totalorder %s8, 0
    %p75 = por %p73, %p74
    %p76 = scmp.ne.s32.totalorder %s65, %s68
    %p77 = scmp.eq.s32.totalorder %s13, 3
    %p78 = por %p76, %p77
    %p79 = scmp.ne.s32.totalorder %s68, %s69
    %p80 = scmp.eq.s32.totalorder %s13, 0
    %p81 = por %p79, %p80
    %p82 = scmp.ne.s32.totalorder %s68, %s69
    %p83 = scmp.eq.s32.totalorder %s14, 3
    %p84 = por %p82, %p83
    %p86 = scmp.ne.s32.totalorder %s69, %s85
    %p87 = scmp.eq.s32.totalorder %s14, 0
    %p88 = por %p86, %p87
    %p89 = scmp.le.s32.totalorder 1, %s8
    %p90 = scmp.lt.s32.totalorder %s8, 5
    %p91 = pnand %p89, %p90
    %p92 = pneg %p91
    // Predicated region
    $region9: #{_lambda_.76} parent=5 // pred_check
      _
    $region10: #{_lambda_.76} parent=5 // pred_check_branch
      %94 = sbr.rel (%p91) target = $region12
    $region11: #{_lambda_.76} parent=5 // pred_region
      %s95 = ssub.s32 %s8, 1
      // Predicated region
      $region13: #{_lambda_.76} parent=11 // pred_check
        %p96 = pneg %p55
      $region14: #{_lambda_.76} parent=11 // pred_check_branch
        %98 = sbr.rel (%p96) target = $region16
      $region15: #{_lambda_.76} parent=11 // pred_region
        _
      $region16: #{_lambda_.76} parent=11 // pred_fallthru
        _
    $region12: #{_lambda_.76} parent=5 // pred_fallthru
      _
    %p99 = scmp.lt.s32.totalorder %s8, 4
    // Predicated region
    $region17: #{_lambda_.76} parent=5 // pred_check
      %p100 = pneg %p99
    $region18: #{_lambda_.76} parent=5 // pred_check_branch
      %102 = sbr.rel (%p100) target = $region20
    $region19: #{_lambda_.76} parent=5 // pred_region
      // Predicated region
      $region21: #{_lambda_.76} parent=19 // pred_check
        %p103 = pneg %p28
      $region22: #{_lambda_.76} parent=19 // pred_check_branch
        %105 = sbr.rel (%p103) target = $region24
      $region23: #{_lambda_.76} parent=19 // pred_region
        %s106 = smul.u32 16, %s8
        %p107 = scmp.lt.s32.totalorder %s106, 63
        %s108 = scalar_select %p107, %s106, 63
        %s109 = smul.addr %s108, 4
        %s110 = scalar_lea.vmem %s0, %s109
        %s111 = smul.u32 16, %s8
      $region24: #{_lambda_.76} parent=19 // pred_fallthru
        _
    $region20: #{_lambda_.76} parent=5 // pred_fallthru
      _
    %p112 = scmp.le.s32.totalorder 1, %s8
    %p113 = scmp.lt.s32.totalorder %s8, 5
    %p114 = pnand %p112, %p113
    %p115 = pneg %p114
    // Predicated region
    $region25: #{_lambda_.76} parent=5 // pred_check
      _
    $region26: #{_lambda_.76} parent=5 // pred_check_branch
      %117 = sbr.rel (%p114) target = $region28
    $region27: #{_lambda_.76} parent=5 // pred_region
      %s118 = ssub.s32 %s8, 1
      %s119 = smul.u32 16, %s13
      %p120 = scmp.lt.s32.totalorder %s119, 63
      %s121 = scalar_select %p120, %s119, 63
      %s122 = smul.addr %s121, 4
      %s123 = scalar_lea.vmem %s0, %s122
      %p124 = pneg %p34
      %p125 = pneg %p31
      %p126 = pneg %p55
      %p127 = pneg %p52
      %p128 = pneg %p81
      %p129 = pneg %p78
      %s130 = smul.u32 16, %s13
      %p131 = scmp.lt.s32.totalorder %s130, 63
      %s132 = scalar_select %p131, %s130, 63
      %s133 = smul.addr %s132, 8
      %s134 = scalar_lea.vmem %s2, %s133
      %s135 = smul.u32 16, %s13
      %p136 = scmp.lt.s32.totalorder %s135, 63
      %s137 = scalar_select %p136, %s135, 63
      %s138 = smul.addr %s137, 4
      %s139 = scalar_lea.vmem %s0, %s138
      %s140 = smul.u32 16, %s13
      %s141 = smul.u32 16, %s13
      %p142 = scmp.lt.s32.totalorder %s141, 63
      %s143 = scalar_select %p142, %s141, 63
      %s144 = smul.addr %s143, 8
      %s145 = scalar_lea.vmem %s2, %s144
      %s146 = smul.u32 16, %s13
      %v148 = vld [vmem:[%s139] sm:$0xf]
      %v149 = vld [vmem:[%s139 + $0x4] sm:$0xf]
      %v150 = vld [vmem:[%s139 + $0x8] sm:$0xf]
      %v151 = vld [vmem:[%s139 + $0xc] sm:$0xf]
      %v152 = vld [vmem:[%s139 + $0x10] sm:$0xf]
      %v153 = vld [vmem:[%s139 + $0x14] sm:$0xf]
      %v154 = vld [vmem:[%s139 + $0x18] sm:$0xf]
      %v155 = vld [vmem:[%s139 + $0x1c] sm:$0xf]
      %v156 = vld [vmem:[%s139 + $0x20] sm:$0xf]
      %v157 = vld [vmem:[%s139 + $0x24] sm:$0xf]
      %v158 = vld [vmem:[%s139 + $0x28] sm:$0xf]
      %v159 = vld [vmem:[%s139 + $0x2c] sm:$0xf]
      %v160 = vld [vmem:[%s139 + $0x30] sm:$0xf]
      %v161 = vld [vmem:[%s139 + $0x34] sm:$0xf]
      %v162 = vld [vmem:[%s139 + $0x38] sm:$0xf]
      %v163 = vld [vmem:[%s139 + $0x3c] sm:$0xf]
      %v164 = vld [vmem:[%s1] sm:$0xf]
      %v165 = vld [vmem:[%s1 + $0x4] sm:$0xf]
      %v166 = vld [vmem:[%s1 + $0x8] sm:$0xf]
      %v167 = vld [vmem:[%s1 + $0xc] sm:$0xf]
      %v168 = vld [vmem:[%s1 + $0x10] sm:$0xf]
      %v169 = vld [vmem:[%s1 + $0x14] sm:$0xf]
      %v170 = vld [vmem:[%s1 + $0x18] sm:$0xf]
      %v171 = vld [vmem:[%s1 + $0x1c] sm:$0xf]
      %v172 = vld [vmem:[%s1 + $0x20] sm:$0xf]
      %v189 = vunpack.c.l.b16 %v148
      %v190 = vunpack.c.l.b16 %v149
      %v191 = vunpack.c.l.b16 %v150
      %v192 = vunpack.c.l.b16 %v151
      %v193 = vunpack.c.l.b16 %v152
      %v194 = vunpack.c.l.b16 %v153
      %v195 = vunpack.c.l.b16 %v154
      %v196 = vunpack.c.l.b16 %v155
      %v197 = vunpack.c.l.b16 %v156
      %v198 = vunpack.c.l.b16 %v157
      %v199 = vunpack.c.l.b16 %v158
      %v200 = vunpack.c.l.b16 %v159
      %v201 = vunpack.c.l.b16 %v160
      %v202 = vunpack.c.l.b16 %v161
      %v203 = vunpack.c.l.b16 %v162
      %v204 = vunpack.c.l.b16 %v163
      %v205 = vpack.c.b16 %v190, %v189
      %v206 = vpack.c.b16 %v192, %v191
      %v207 = vpack.c.b16 %v194, %v193
      %v208 = vpack.c.b16 %v196, %v195
      %v209 = vpack.c.b16 %v198, %v197
      %v210 = vpack.c.b16 %v200, %v199
      %v211 = vpack.c.b16 %v202, %v201
      %v212 = vpack.c.b16 %v204, %v203
      %v222 = vunpack.c.l.b16 %v164
      %v223 = vunpack.c.l.b16 %v165
      %v224 = vunpack.c.l.b16 %v166
      %v225 = vunpack.c.l.b16 %v167
      %v226 = vunpack.c.l.b16 %v168
      %v227 = vunpack.c.l.b16 %v169
      %v228 = vunpack.c.l.b16 %v170
      %v229 = vunpack.c.l.b16 %v171
      %v230 = vunpack.c.l.b16 %v172
      %v231 = vpack.c.b16 %v223, %v222
      %v232 = vpack.c.b16 %v225, %v224
      %v233 = vpack.c.b16 %v227, %v226
      %v234 = vpack.c.b16 %v229, %v228
      %v235 = vpack.c.b16 %v230, %v230
      %vm240 = vcmask 588800
      %v242 = vsel %vm240, %v205, 0
      %v245 = vsel %vm240, %v206, 0
      %v248 = vsel %vm240, %v207, 0
      %v251 = vsel %vm240, %v208, 0
      %v254 = vsel %vm240, %v209, 0
      %v257 = vsel %vm240, %v210, 0
      %v260 = vsel %vm240, %v211, 0
      %v263 = vsel %vm240, %v212, 0
      %vm265 = vcmask 1043456
      %v267 = vsel %vm265, %v235, 0
      %269 = vmatprep.subr.bf16.mxu0 0
      %270 = vmatpush1.bf16.msra.mxu0 %v231
      %271 = vmatprep.subr.bf16.mxu0 0
      %272 = vmatpush1.bf16.msra.mxu0 %v232
      %273 = vmatprep.subr.bf16.mxu0 0
      %274 = vmatpush1.bf16.msra.mxu0 %v233
      %275 = vmatprep.subr.bf16.mxu0 0
      %276 = vmatpush1.bf16.msra.mxu0 %v234
      %277 = vmatprep.subr.bf16.mxu0 0
      %278 = vmatpush1.bf16.msra.mxu0 %v267
      %279 = vmatprep.subr.bf16.mxu0 0
      %280 = vmatpush1.bf16.msra.mxu0 0
      %281 = vmatprep.subr.bf16.mxu0 0
      %282 = vmatpush1.bf16.msra.mxu0 0
      %283 = vmatprep.subr.bf16.mxu0 0
      %284 = vmatpush1.bf16.msra.mxu0 0
      %285 = vmatprep.subr.bf16.mxu0 0
      %286 = vmatpush1.bf16.msra.mxu0 0
      %287 = vmatprep.subr.bf16.mxu0 0
      %288 = vmatpush1.bf16.msra.mxu0 0
      %289 = vmatprep.subr.bf16.mxu0 0
      %290 = vmatpush1.bf16.msra.mxu0 0
      %291 = vmatprep.subr.bf16.mxu0 0
      %292 = vmatpush1.bf16.msra.mxu0 0
      %293 = vmatprep.subr.bf16.mxu0 0
      %294 = vmatpush1.bf16.msra.mxu0 0
      %295 = vmatprep.subr.bf16.mxu0 0
      %296 = vmatpush1.bf16.msra.mxu0 0
      %297 = vmatprep.subr.bf16.mxu0 0
      %298 = vmatpush1.bf16.msra.mxu0 0
      %299 = vmatprep.subr.bf16.mxu0 0
      %300 = vmatpush1.bf16.msra.mxu0 0
      %301 = vmatprep.mubr.bf16.mxu0 0
      %302 = vmatmul.mubr.bf16.gmra.mrb[0].mxu0 %v242
      %v303 = vpop.f32.mrb[0].mxu0
      %v304 = vadd.f32 0.0, %v303
      %v305 = vpop.f32.mrb[0].mxu0
      %v306 = vpop.f32.mrb[0].mxu0
      %v307 = vadd.f32 0.0, %v306
      %v308 = vpop.f32.mrb[0].mxu0
      %309 = vmatprep.mubr.bf16.mxu0 0
      %310 = vmatmul.mubr.bf16.gmra.mrb[0].mxu0 %v245
      %v311 = vpop.f32.mrb[0].mxu0
      %v312 = vadd.f32 0.0, %v311
      %v313 = vpop.f32.mrb[0].mxu0
      %v314 = vpop.f32.mrb[0].mxu0
      %v315 = vadd.f32 0.0, %v314
      %v316 = vpop.f32.mrb[0].mxu0
      %317 = vmatprep.mubr.bf16.mxu0 0
      %318 = vmatmul.mubr.bf16.gmra.mrb[0].mxu0 %v248
      %v319 = vpop.f32.mrb[0].mxu0
      %v320 = vadd.f32 0.0, %v319
      %v321 = vpop.f32.mrb[0].mxu0
      %v322 = vpop.f32.mrb[0].mxu0
      %v323 = vadd.f32 0.0, %v322
      %v324 = vpop.f32.mrb[0].mxu0
      %325 = vmatprep.mubr.bf16.mxu0 0
      %326 = vmatmul.mubr.bf16.gmra.mrb[0].mxu0 %v251
      %v327 = vpop.f32.mrb[0].mxu0
      %v328 = vadd.f32 0.0, %v327
      %v329 = vpop.f32.mrb[0].mxu0
      %v330 = vpop.f32.mrb[0].mxu0
      %v331 = vadd.f32 0.0, %v330
      %v332 = vpop.f32.mrb[0].mxu0
      %333 = vmatprep.mubr.bf16.mxu0 0
      %334 = vmatmul.mubr.bf16.gmra.mrb[0].mxu0 %v254
      %v335 = vpop.f32.mrb[0].mxu0
      %v336 = vadd.f32 0.0, %v335
      %v337 = vpop.f32.mrb[0].mxu0
      %v338 = vpop.f32.mrb[0].mxu0
      %v339 = vadd.f32 0.0, %v338
      %v340 = vpop.f32.mrb[0].mxu0
      %341 = vmatprep.mubr.bf16.mxu0 0
      %342 = vmatmul.mubr.bf16.gmra.mrb[0].mxu0 %v257
      %v343 = vpop.f32.mrb[0].mxu0
      %v344 = vadd.f32 0.0, %v343
      %v345 = vpop.f32.mrb[0].mxu0
      %v346 = vpop.f32.mrb[0].mxu0
      %v347 = vadd.f32 0.0, %v346
      %v348 = vpop.f32.mrb[0].mxu0
      %349 = vmatprep.mubr.bf16.mxu0 0
      %350 = vmatmul.mubr.bf16.gmra.mrb[0].mxu0 %v260
      %v351 = vpop.f32.mrb[0].mxu0
      %v352 = vadd.f32 0.0, %v351
      %v353 = vpop.f32.mrb[0].mxu0
      %v354 = vpop.f32.mrb[0].mxu0
      %v355 = vadd.f32 0.0, %v354
      %v356 = vpop.f32.mrb[0].mxu0
      %357 = vmatprep.mubr.bf16.mxu0 0
      %358 = vmatmul.mubr.bf16.gmra.mrb[0].mxu0 %v263
      %v359 = vpop.f32.mrb[0].mxu0
      %v360 = vadd.f32 0.0, %v359
      %v361 = vpop.f32.mrb[0].mxu0
      %v362 = vpop.f32.mrb[0].mxu0
      %v363 = vadd.f32 0.0, %v362
      %v364 = vpop.f32.mrb[0].mxu0
      %365 = vdwg.mxu0
      %v366 = vmax.f32 %v304, 0.0
      %v367 = vmax.f32 %v307, 0.0
      %v368 = vmax.f32 %v312, 0.0
      %v369 = vmax.f32 %v315, 0.0
      %v370 = vmax.f32 %v320, 0.0
      %v371 = vmax.f32 %v323, 0.0
      %v372 = vmax.f32 %v328, 0.0
      %v373 = vmax.f32 %v331, 0.0
      %v374 = vmax.f32 %v336, 0.0
      %v375 = vmax.f32 %v339, 0.0
      %v376 = vmax.f32 %v344, 0.0
      %v377 = vmax.f32 %v347, 0.0
      %v378 = vmax.f32 %v352, 0.0
      %v379 = vmax.f32 %v355, 0.0
      %v380 = vmax.f32 %v360, 0.0
      %v381 = vmax.f32 %v363, 0.0
      %vm382 = vcmask 64512
      %383 = vst.msk [vmem:[%s145] sm:$0xff] %vm382, %v366
      %384 = vst.msk [vmem:[%s145 + $0x8] sm:$0xff] %vm382, %v367
      %385 = vst.msk [vmem:[%s145 + $0x10] sm:$0xff] %vm382, %v368
      %386 = vst.msk [vmem:[%s145 + $0x18] sm:$0xff] %vm382, %v369
      %387 = vst.msk [vmem:[%s145 + $0x20] sm:$0xff] %vm382, %v370
      %388 = vst.msk [vmem:[%s145 + $0x28] sm:$0xff] %vm382, %v371
      %389 = vst.msk [vmem:[%s145 + $0x30] sm:$0xff] %vm382, %v372
      %390 = vst.msk [vmem:[%s145 + $0x38] sm:$0xff] %vm382, %v373
      %391 = vst.msk [vmem:[%s145 + $0x40] sm:$0xff] %vm382, %v374
      %392 = vst.msk [vmem:[%s145 + $0x48] sm:$0xff] %vm382, %v375
      %393 = vst.msk [vmem:[%s145 + $0x50] sm:$0xff] %vm382, %v376
      %394 = vst.msk [vmem:[%s145 + $0x58] sm:$0xff] %vm382, %v377
      %395 = vst.msk [vmem:[%s145 + $0x60] sm:$0xff] %vm382, %v378
      %396 = vst.msk [vmem:[%s145 + $0x68] sm:$0xff] %vm382, %v379
      %397 = vst.msk [vmem:[%s145 + $0x70] sm:$0xff] %vm382, %v380
      %398 = vst.msk [vmem:[%s145 + $0x78] sm:$0xff] %vm382, %v381
      %s399 = smul.u32 16, %s13
      %p400 = scmp.lt.s32.totalorder %s399, 63
      %s401 = scalar_select %p400, %s399, 63
      %s402 = smul.addr %s401, 8
      %s403 = scalar_lea.vmem %s2, %s402
      // Predicated region
      $region29: #{_lambda_.76} parent=27 // pred_check
        %p404 = pneg %p78
      $region30: #{_lambda_.76} parent=27 // pred_check_branch
        %406 = sbr.rel (%p404) target = $region32
      $region31: #{_lambda_.76} parent=27 // pred_region
        %s407 = smul.u32 16, %s13
      $region32: #{_lambda_.76} parent=27 // pred_fallthru
        _
    $region28: #{_lambda_.76} parent=5 // pred_fallthru
      _
    %p408 = scmp.le.s32.totalorder 2, %s8
    // Predicated region
    $region33: #{_lambda_.76} parent=5 // pred_check
      %p409 = pneg %p408
    $region34: #{_lambda_.76} parent=5 // pred_check_branch
      %411 = sbr.rel (%p409) target = $region36
    $region35: #{_lambda_.76} parent=5 // pred_region
      %s412 = ssub.s32 %s8, 2
      // Predicated region
      $region37: #{_lambda_.76} parent=35 // pred_check
        %p413 = pneg %p84
      $region38: #{_lambda_.76} parent=35 // pred_check_branch
        %415 = sbr.rel (%p413) target = $region40
      $region39: #{_lambda_.76} parent=35 // pred_region
        %s416 = smul.u32 16, %s14
        %p417 = scmp.lt.s32.totalorder %s416, 63
        %s418 = scalar_select %p417, %s416, 63
        %s419 = smul.addr %s418, 8
        %s420 = scalar_lea.vmem %s2, %s419
      $region40: #{_lambda_.76} parent=35 // pred_fallthru
        _
    $region36: #{_lambda_.76} parent=5 // pred_fallthru
      _
  $region6: #{_lambda_.76} parent=0 // loop_footer
    %s12 = sadd.s32 1, %s8
  $region7: #{_lambda_.76} parent=0 // loop_footer_branch
    %7 = sbr.rel target = $region3
  $region8: #{_lambda_.76} parent=0 // loop_exit
    _

// kernel: _lambda_.78
$region0: #{_lambda_.78}
  #allocation0 [shape = 'u32[]', space=smem, size = 0x4, offset = 0x4, fixed_abs, tag = 'smem constant byte address 0x4 - core index']
  #allocation1 [shape = 'u32[144,128]{1,0:T(1,128)}', space=vmem, size = 0x12000, scoped, tag = 'internal scratch']
  %s0 = inlined_call_operand.vmem [shape: bf16[512,72], index: 0, kind: input, shape index: {}]
  %s1 = inlined_call_operand.vmem [shape: bf16[72,8], index: 1, kind: input, shape index: {}]
  %s2 = inlined_call_operand.vmem [shape: f32[512,8], index: 2, kind: input, shape index: {}]
  %s3 = inlined_call_operand.vmem [shape: f32[512,8], index: 3, kind: output, shape index: {}]
  %s4 = sld [smem:[#allocation0]]
  $region45: #{_lambda_.78} parent=0
    _
  %s6 = ssub.s32 1, %s4
  %s7 = scalar_select 0, %s6, %s4
  loop: start=0, step=1, limit=6
  $region2: #{_lambda_.78} parent=0 // loop_pre_header
    _
  $region3: #{_lambda_.78} parent=0 // loop_header
    %s9 = sphi 0, %s13
    %p10 = scmp.ge.s32.totalorder %s9, 6
    %s19 = sphi 0, %s21
    %s22 = sphi 0, %s19
    %s23 = sphi 0, %s22
    %s39 = sphi 0, %s23
    %s43 = sphi 0, %s43
    %s45 = sphi 0, %s43
    %s46 = sphi 0, %s45
    %s60 = sphi 0, %s46
    %s66 = sphi 0, %s68
    %s69 = sphi 0, %s66
    %s70 = sphi 0, %s69
    %s86 = sphi 0, %s70
    %s92 = sphi 0, %s94
    %s95 = sphi 0, %s92
    %s96 = sphi 0, %s95
    %s112 = sphi 0, %s96
  $region4: #{_lambda_.78} parent=0 // loop_header_branch
    %12 = sbr.rel (%p10) target = $region8
  $region5: #{_lambda_.78} parent=0 // loop_body
    %s14 = ssub.s32 %s9, 1
    %s15 = ssub.s32 %s9, 2
    %s16 = sadd.s32 %s9, 1
    %s17 = ssub.s32 %s9, %s16
    %p18 = scmp.eq.s32.totalorder %s17, 0
    %s20 = sadd.s32 %s19, 1
    %s21 = scalar_select %p18, %s19, %s20
    %p24 = pneg %p18
    %p25 = scmp.eq.s32.totalorder %s9, 3
    %p26 = por %p24, %p25
    %p27 = scmp.ne.s32.totalorder %s19, %s22
    %p28 = scmp.eq.s32.totalorder %s9, 0
    %p29 = por %p27, %p28
    %p30 = scmp.ne.s32.totalorder %s19, %s22
    %p31 = scmp.eq.s32.totalorder %s14, 3
    %p32 = por %p30, %p31
    %p33 = scmp.ne.s32.totalorder %s22, %s23
    %p34 = scmp.eq.s32.totalorder %s14, 0
    %p35 = por %p33, %p34
    %p36 = scmp.ne.s32.totalorder %s22, %s23
    %p37 = scmp.eq.s32.totalorder %s15, 3
    %p38 = por %p36, %p37
    %p40 = scmp.ne.s32.totalorder %s23, %s39
    %p41 = scmp.eq.s32.totalorder %s15, 0
    %p42 = por %p40, %p41
    %s44 = sadd.s32 %s43, 1
    %p47 = scmp.eq.s32.totalorder %s9, 3
    %p48 = scmp.ne.s32.totalorder %s43, %s45
    %p49 = scmp.eq.s32.totalorder %s9, 0
    %p50 = por %p48, %p49
    %p51 = scmp.ne.s32.totalorder %s43, %s45
    %p52 = scmp.eq.s32.totalorder %s14, 3
    %p53 = por %p51, %p52
    %p54 = scmp.ne.s32.totalorder %s45, %s46
    %p55 = scmp.eq.s32.totalorder %s14, 0
    %p56 = por %p54, %p55
    %p57 = scmp.ne.s32.totalorder %s45, %s46
    %p58 = scmp.eq.s32.totalorder %s15, 3
    %p59 = por %p57, %p58
    %p61 = scmp.ne.s32.totalorder %s46, %s60
    %p62 = scmp.eq.s32.totalorder %s15, 0
    %p63 = por %p61, %p62
    %s64 = ssub.s32 %s9, %s16
    %p65 = scmp.eq.s32.totalorder %s64, 0
    %s67 = sadd.s32 %s66, 1
    %s68 = scalar_select %p65, %s66, %s67
    %p71 = pneg %p65
    %p72 = scmp.eq.s32.totalorder %s9, 3
    %p73 = por %p71, %p72
    %p74 = scmp.ne.s32.totalorder %s66, %s69
    %p75 = scmp.eq.s32.totalorder %s9, 0
    %p76 = por %p74, %p75
    %p77 = scmp.ne.s32.totalorder %s66, %s69
    %p78 = scmp.eq.s32.totalorder %s14, 3
    %p79 = por %p77, %p78
    %p80 = scmp.ne.s32.totalorder %s69, %s70
    %p81 = scmp.eq.s32.totalorder %s14, 0
    %p82 = por %p80, %p81
    %p83 = scmp.ne.s32.totalorder %s69, %s70
    %p84 = scmp.eq.s32.totalorder %s15, 3
    %p85 = por %p83, %p84
    %p87 = scmp.ne.s32.totalorder %s70, %s86
    %p88 = scmp.eq.s32.totalorder %s15, 0
    %p89 = por %p87, %p88
    %s90 = ssub.s32 %s9, %s16
    %p91 = scmp.eq.s32.totalorder %s90, 0
    %s93 = sadd.s32 %s92, 1
    %s94 = scalar_select %p91, %s92, %s93
    %p97 = pneg %p91
    %p98 = scmp.eq.s32.totalorder %s9, 3
    %p99 = por %p97, %p98
    %p100 = scmp.ne.s32.totalorder %s92, %s95
    %p101 = scmp.eq.s32.totalorder %s9, 0
    %p102 = por %p100, %p101
    %p103 = scmp.ne.s32.totalorder %s92, %s95
    %p104 = scmp.eq.s32.totalorder %s14, 3
    %p105 = por %p103, %p104
    %p106 = scmp.ne.s32.totalorder %s95, %s96
    %p107 = scmp.eq.s32.totalorder %s14, 0
    %p108 = por %p106, %p107
    %p109 = scmp.ne.s32.totalorder %s95, %s96
    %p110 = scmp.eq.s32.totalorder %s15, 3
    %p111 = por %p109, %p110
    %p113 = scmp.ne.s32.totalorder %s96, %s112
    %p114 = scmp.eq.s32.totalorder %s15, 0
    %p115 = por %p113, %p114
    %p116 = scmp.le.s32.totalorder 1, %s9
    %p117 = scmp.lt.s32.totalorder %s9, 5
    %p118 = pnand %p116, %p117
    %p119 = pneg %p118
    // Predicated region
    $region9: #{_lambda_.78} parent=5 // pred_check
      _
    $region10: #{_lambda_.78} parent=5 // pred_check_branch
      %121 = sbr.rel (%p118) target = $region12
    $region11: #{_lambda_.78} parent=5 // pred_region
      %s122 = ssub.s32 %s9, 1
      // Predicated region
      $region13: #{_lambda_.78} parent=11 // pred_check
        %p123 = pneg %p56
      $region14: #{_lambda_.78} parent=11 // pred_check_branch
        %125 = sbr.rel (%p123) target = $region16
      $region15: #{_lambda_.78} parent=11 // pred_region
        _
      $region16: #{_lambda_.78} parent=11 // pred_fallthru
        _
    $region12: #{_lambda_.78} parent=5 // pred_fallthru
      _
    %p126 = scmp.lt.s32.totalorder %s9, 4
    // Predicated region
    $region17: #{_lambda_.78} parent=5 // pred_check
      %p127 = pneg %p126
    $region18: #{_lambda_.78} parent=5 // pred_check_branch
      %129 = sbr.rel (%p127) target = $region20
    $region19: #{_lambda_.78} parent=5 // pred_region
      // Predicated region
      $region21: #{_lambda_.78} parent=19 // pred_check
        %p130 = pneg %p29
      $region22: #{_lambda_.78} parent=19 // pred_check_branch
        %132 = sbr.rel (%p130) target = $region24
      $region23: #{_lambda_.78} parent=19 // pred_region
        %s133 = smul.u32 16, %s9
        %p134 = scmp.lt.s32.totalorder %s133, 63
        %s135 = scalar_select %p134, %s133, 63
        %s136 = smul.addr %s135, 4
        %s137 = scalar_lea.vmem %s0, %s136
        %s138 = smul.u32 16, %s9
      $region24: #{_lambda_.78} parent=19 // pred_fallthru
        _
      // Predicated region
      $region25: #{_lambda_.78} parent=19 // pred_check
        %p139 = pneg %p76
      $region26: #{_lambda_.78} parent=19 // pred_check_branch
        %141 = sbr.rel (%p139) target = $region28
      $region27: #{_lambda_.78} parent=19 // pred_region
        %s142 = smul.u32 16, %s9
        %p143 = scmp.lt.s32.totalorder %s142, 63
        %s144 = scalar_select %p143, %s142, 63
        %s145 = smul.addr %s144, 8
        %s146 = scalar_lea.vmem %s2, %s145
        %s147 = smul.u32 16, %s9
      $region28: #{_lambda_.78} parent=19 // pred_fallthru
        _
    $region20: #{_lambda_.78} parent=5 // pred_fallthru
      _
    %p148 = scmp.le.s32.totalorder 1, %s9
    %p149 = scmp.lt.s32.totalorder %s9, 5
    %p150 = pnand %p148, %p149
    %p151 = pneg %p150
    // Predicated region
    $region29: #{_lambda_.78} parent=5 // pred_check
      _
    $region30: #{_lambda_.78} parent=5 // pred_check_branch
      %153 = sbr.rel (%p150) target = $region32
    $region31: #{_lambda_.78} parent=5 // pred_region
      %s154 = ssub.s32 %s9, 1
      %s155 = smul.u32 16, %s14
      %p156 = scmp.lt.s32.totalorder %s155, 63
      %s157 = scalar_select %p156, %s155, 63
      %s158 = smul.addr %s157, 4
      %s159 = scalar_lea.vmem %s0, %s158
      %p160 = pneg %p35
      %p161 = pneg %p32
      %p162 = pneg %p56
      %p163 = pneg %p53
      %s164 = smul.u32 16, %s14
      %p165 = scmp.lt.s32.totalorder %s164, 63
      %s166 = scalar_select %p165, %s164, 63
      %s167 = smul.addr %s166, 8
      %s168 = scalar_lea.vmem %s2, %s167
      %p169 = pneg %p82
      %p170 = pneg %p79
      %p171 = pneg %p108
      %p172 = pneg %p105
      %s173 = smul.u32 16, %s14
      %p174 = scmp.lt.s32.totalorder %s173, 63
      %s175 = scalar_select %p174, %s173, 63
      %s176 = smul.addr %s175, 8
      %s177 = scalar_lea.vmem %s3, %s176
      %s178 = smul.u32 16, %s14
      %p179 = scmp.lt.s32.totalorder %s178, 63
      %s180 = scalar_select %p179, %s178, 63
      %s181 = smul.addr %s180, 4
      %s182 = scalar_lea.vmem %s0, %s181
      %s183 = smul.u32 16, %s14
      %s184 = smul.u32 16, %s14
      %p185 = scmp.lt.s32.totalorder %s184, 63
      %s186 = scalar_select %p185, %s184, 63
      %s187 = smul.addr %s186, 8
      %s188 = scalar_lea.vmem %s2, %s187
      %s189 = smul.u32 16, %s14
      %s190 = smul.u32 16, %s14
      %p191 = scmp.lt.s32.totalorder %s190, 63
      %s192 = scalar_select %p191, %s190, 63
      %s193 = smul.addr %s192, 8
      %s194 = scalar_lea.vmem %s3, %s193
      %s195 = smul.u32 16, %s14
      %v197 = vld [vmem:[%s182] sm:$0xf]
      %v198 = vld [vmem:[%s182 + $0x4] sm:$0xf]
      %v199 = vld [vmem:[%s182 + $0x8] sm:$0xf]
      %v200 = vld [vmem:[%s182 + $0xc] sm:$0xf]
      %v201 = vld [vmem:[%s182 + $0x10] sm:$0xf]
      %v202 = vld [vmem:[%s182 + $0x14] sm:$0xf]
      %v203 = vld [vmem:[%s182 + $0x18] sm:$0xf]
      %v204 = vld [vmem:[%s182 + $0x1c] sm:$0xf]
      %v205 = vld [vmem:[%s182 + $0x20] sm:$0xf]
      %v206 = vld [vmem:[%s182 + $0x24] sm:$0xf]
      %v207 = vld [vmem:[%s182 + $0x28] sm:$0xf]
      %v208 = vld [vmem:[%s182 + $0x2c] sm:$0xf]
      %v209 = vld [vmem:[%s182 + $0x30] sm:$0xf]
      %v210 = vld [vmem:[%s182 + $0x34] sm:$0xf]
      %v211 = vld [vmem:[%s182 + $0x38] sm:$0xf]
      %v212 = vld [vmem:[%s182 + $0x3c] sm:$0xf]
      %v213 = vld [vmem:[%s1] sm:$0xf]
      %v214 = vld [vmem:[%s1 + $0x4] sm:$0xf]
      %v215 = vld [vmem:[%s1 + $0x8] sm:$0xf]
      %v216 = vld [vmem:[%s1 + $0xc] sm:$0xf]
      %v217 = vld [vmem:[%s1 + $0x10] sm:$0xf]
      %v218 = vld [vmem:[%s1 + $0x14] sm:$0xf]
      %v219 = vld [vmem:[%s1 + $0x18] sm:$0xf]
      %v220 = vld [vmem:[%s1 + $0x1c] sm:$0xf]
      %v221 = vld [vmem:[%s1 + $0x20] sm:$0xf]
      %v222 = vld [vmem:[%s188] sm:$0xff]
      %v223 = vld [vmem:[%s188 + $0x8] sm:$0xff]
      %v224 = vld [vmem:[%s188 + $0x10] sm:$0xff]
      %v225 = vld [vmem:[%s188 + $0x18] sm:$0xff]
      %v226 = vld [vmem:[%s188 + $0x20] sm:$0xff]
      %v227 = vld [vmem:[%s188 + $0x28] sm:$0xff]
      %v228 = vld [vmem:[%s188 + $0x30] sm:$0xff]
      %v229 = vld [vmem:[%s188 + $0x38] sm:$0xff]
      %v230 = vld [vmem:[%s188 + $0x40] sm:$0xff]
      %v231 = vld [vmem:[%s188 + $0x48] sm:$0xff]
      %v232 = vld [vmem:[%s188 + $0x50] sm:$0xff]
      %v233 = vld [vmem:[%s188 + $0x58] sm:$0xff]
      %v234 = vld [vmem:[%s188 + $0x60] sm:$0xff]
      %v235 = vld [vmem:[%s188 + $0x68] sm:$0xff]
      %v236 = vld [vmem:[%s188 + $0x70] sm:$0xff]
      %v237 = vld [vmem:[%s188 + $0x78] sm:$0xff]
      %v254 = vunpack.c.l.b16 %v197
      %v255 = vunpack.c.l.b16 %v198
      %v256 = vunpack.c.l.b16 %v199
      %v257 = vunpack.c.l.b16 %v200
      %v258 = vunpack.c.l.b16 %v201
      %v259 = vunpack.c.l.b16 %v202
      %v260 = vunpack.c.l.b16 %v203
      %v261 = vunpack.c.l.b16 %v204
      %v262 = vunpack.c.l.b16 %v205
      %v263 = vunpack.c.l.b16 %v206
      %v264 = vunpack.c.l.b16 %v207
      %v265 = vunpack.c.l.b16 %v208
      %v266 = vunpack.c.l.b16 %v209
      %v267 = vunpack.c.l.b16 %v210
      %v268 = vunpack.c.l.b16 %v211
      %v269 = vunpack.c.l.b16 %v212
      %v270 = vpack.c.b16 %v255, %v254
      %v271 = vpack.c.b16 %v257, %v256
      %v272 = vpack.c.b16 %v259, %v258
      %v273 = vpack.c.b16 %v261, %v260
      %v274 = vpack.c.b16 %v263, %v262
      %v275 = vpack.c.b16 %v265, %v264
      %v276 = vpack.c.b16 %v267, %v266
      %v277 = vpack.c.b16 %v269, %v268
      %v287 = vunpack.c.l.b16 %v213
      %v288 = vunpack.c.l.b16 %v214
      %v289 = vunpack.c.l.b16 %v215
      %v290 = vunpack.c.l.b16 %v216
      %v291 = vunpack.c.l.b16 %v217
      %v292 = vunpack.c.l.b16 %v218
      %v293 = vunpack.c.l.b16 %v219
      %v294 = vunpack.c.l.b16 %v220
      %v295 = vunpack.c.l.b16 %v221
      %v296 = vpack.c.b16 %v288, %v287
      %v297 = vpack.c.b16 %v290, %v289
      %v298 = vpack.c.b16 %v292, %v291
      %v299 = vpack.c.b16 %v294, %v293
      %v300 = vpack.c.b16 %v295, %v295
      %vm305 = vcmask 588800
      %v307 = vsel %vm305, %v270, 0
      %v310 = vsel %vm305, %v271, 0
      %v313 = vsel %vm305, %v272, 0
      %v316 = vsel %vm305, %v273, 0
      %v319 = vsel %vm305, %v274, 0
      %v322 = vsel %vm305, %v275, 0
      %v325 = vsel %vm305, %v276, 0
      %v328 = vsel %vm305, %v277, 0
      %vm330 = vcmask 1043456
      %v332 = vsel %vm330, %v300, 0
      %334 = vmatprep.subr.bf16.mxu0 0
      %335 = vmatpush1.bf16.msra.mxu0 %v296
      %336 = vmatprep.subr.bf16.mxu0 0
      %337 = vmatpush1.bf16.msra.mxu0 %v297
      %338 = vmatprep.subr.bf16.mxu0 0
      %339 = vmatpush1.bf16.msra.mxu0 %v298
      %340 = vmatprep.subr.bf16.mxu0 0
      %341 = vmatpush1.bf16.msra.mxu0 %v299
      %342 = vmatprep.subr.bf16.mxu0 0
      %343 = vmatpush1.bf16.msra.mxu0 %v332
      %344 = vmatprep.subr.bf16.mxu0 0
      %345 = vmatpush1.bf16.msra.mxu0 0
      %346 = vmatprep.subr.bf16.mxu0 0
      %347 = vmatpush1.bf16.msra.mxu0 0
      %348 = vmatprep.subr.bf16.mxu0 0
      %349 = vmatpush1.bf16.msra.mxu0 0
      %350 = vmatprep.subr.bf16.mxu0 0
      %351 = vmatpush1.bf16.msra.mxu0 0
      %352 = vmatprep.subr.bf16.mxu0 0
      %353 = vmatpush1.bf16.msra.mxu0 0
      %354 = vmatprep.subr.bf16.mxu0 0
      %355 = vmatpush1.bf16.msra.mxu0 0
      %356 = vmatprep.subr.bf16.mxu0 0
      %357 = vmatpush1.bf16.msra.mxu0 0
      %358 = vmatprep.subr.bf16.mxu0 0
      %359 = vmatpush1.bf16.msra.mxu0 0
      %360 = vmatprep.subr.bf16.mxu0 0
      %361 = vmatpush1.bf16.msra.mxu0 0
      %362 = vmatprep.subr.bf16.mxu0 0
      %363 = vmatpush1.bf16.msra.mxu0 0
      %364 = vmatprep.subr.bf16.mxu0 0
      %365 = vmatpush1.bf16.msra.mxu0 0
      %366 = vmatprep.mubr.bf16.mxu0 0
      %367 = vmatmul.mubr.bf16.gmra.mrb[0].mxu0 %v307
      %v368 = vpop.f32.mrb[0].mxu0
      %v369 = vadd.f32 %v222, %v368
      %v370 = vpop.f32.mrb[0].mxu0
      %v371 = vpop.f32.mrb[0].mxu0
      %v372 = vadd.f32 %v223, %v371
      %v373 = vpop.f32.mrb[0].mxu0
      %374 = vmatprep.mubr.bf16.mxu0 0
      %375 = vmatmul.mubr.bf16.gmra.mrb[0].mxu0 %v310
      %v376 = vpop.f32.mrb[0].mxu0
      %v377 = vadd.f32 %v224, %v376
      %v378 = vpop.f32.mrb[0].mxu0
      %v379 = vpop.f32.mrb[0].mxu0
      %v380 = vadd.f32 %v225, %v379
      %v381 = vpop.f32.mrb[0].mxu0
      %382 = vmatprep.mubr.bf16.mxu0 0
      %383 = vmatmul.mubr.bf16.gmra.mrb[0].mxu0 %v313
      %v384 = vpop.f32.mrb[0].mxu0
      %v385 = vadd.f32 %v226, %v384
      %v386 = vpop.f32.mrb[0].mxu0
      %v387 = vpop.f32.mrb[0].mxu0
      %v388 = vadd.f32 %v227, %v387
      %v389 = vpop.f32.mrb[0].mxu0
      %390 = vmatprep.mubr.bf16.mxu0 0
      %391 = vmatmul.mubr.bf16.gmra.mrb[0].mxu0 %v316
      %v392 = vpop.f32.mrb[0].mxu0
      %v393 = vadd.f32 %v228, %v392
      %v394 = vpop.f32.mrb[0].mxu0
      %v395 = vpop.f32.mrb[0].mxu0
      %v396 = vadd.f32 %v229, %v395
      %v397 = vpop.f32.mrb[0].mxu0
      %398 = vmatprep.mubr.bf16.mxu0 0
      %399 = vmatmul.mubr.bf16.gmra.mrb[0].mxu0 %v319
      %v400 = vpop.f32.mrb[0].mxu0
      %v401 = vadd.f32 %v230, %v400
      %v402 = vpop.f32.mrb[0].mxu0
      %v403 = vpop.f32.mrb[0].mxu0
      %v404 = vadd.f32 %v231, %v403
      %v405 = vpop.f32.mrb[0].mxu0
      %406 = vmatprep.mubr.bf16.mxu0 0
      %407 = vmatmul.mubr.bf16.gmra.mrb[0].mxu0 %v322
      %v408 = vpop.f32.mrb[0].mxu0
      %v409 = vadd.f32 %v232, %v408
      %v410 = vpop.f32.mrb[0].mxu0
      %v411 = vpop.f32.mrb[0].mxu0
      %v412 = vadd.f32 %v233, %v411
      %v413 = vpop.f32.mrb[0].mxu0
      %414 = vmatprep.mubr.bf16.mxu0 0
      %415 = vmatmul.mubr.bf16.gmra.mrb[0].mxu0 %v325
      %v416 = vpop.f32.mrb[0].mxu0
      %v417 = vadd.f32 %v234, %v416
      %v418 = vpop.f32.mrb[0].mxu0
      %v419 = vpop.f32.mrb[0].mxu0
      %v420 = vadd.f32 %v235, %v419
      %v421 = vpop.f32.mrb[0].mxu0
      %422 = vmatprep.mubr.bf16.mxu0 0
      %423 = vmatmul.mubr.bf16.gmra.mrb[0].mxu0 %v328
      %v424 = vpop.f32.mrb[0].mxu0
      %v425 = vadd.f32 %v236, %v424
      %v426 = vpop.f32.mrb[0].mxu0
      %v427 = vpop.f32.mrb[0].mxu0
      %v428 = vadd.f32 %v237, %v427
      %v429 = vpop.f32.mrb[0].mxu0
      %430 = vdwg.mxu0
      %v431 = vmax.f32 %v369, 0.0
      %v432 = vmax.f32 %v372, 0.0
      %v433 = vmax.f32 %v377, 0.0
      %v434 = vmax.f32 %v380, 0.0
      %v435 = vmax.f32 %v385, 0.0
      %v436 = vmax.f32 %v388, 0.0
      %v437 = vmax.f32 %v393, 0.0
      %v438 = vmax.f32 %v396, 0.0
      %v439 = vmax.f32 %v401, 0.0
      %v440 = vmax.f32 %v404, 0.0
      %v441 = vmax.f32 %v409, 0.0
      %v442 = vmax.f32 %v412, 0.0
      %v443 = vmax.f32 %v417, 0.0
      %v444 = vmax.f32 %v420, 0.0
      %v445 = vmax.f32 %v425, 0.0
      %v446 = vmax.f32 %v428, 0.0
      %vm447 = vcmask 64512
      %448 = vst.msk [vmem:[%s194] sm:$0xff] %vm447, %v431
      %449 = vst.msk [vmem:[%s194 + $0x8] sm:$0xff] %vm447, %v432
      %450 = vst.msk [vmem:[%s194 + $0x10] sm:$0xff] %vm447, %v433
      %451 = vst.msk [vmem:[%s194 + $0x18] sm:$0xff] %vm447, %v434
      %452 = vst.msk [vmem:[%s194 + $0x20] sm:$0xff] %vm447, %v435
      %453 = vst.msk [vmem:[%s194 + $0x28] sm:$0xff] %vm447, %v436
      %454 = vst.msk [vmem:[%s194 + $0x30] sm:$0xff] %vm447, %v437
      %455 = vst.msk [vmem:[%s194 + $0x38] sm:$0xff] %vm447, %v438
      %456 = vst.msk [vmem:[%s194 + $0x40] sm:$0xff] %vm447, %v439
      %457 = vst.msk [vmem:[%s194 + $0x48] sm:$0xff] %vm447, %v440
      %458 = vst.msk [vmem:[%s194 + $0x50] sm:$0xff] %vm447, %v441
      %459 = vst.msk [vmem:[%s194 + $0x58] sm:$0xff] %vm447, %v442
      %460 = vst.msk [vmem:[%s194 + $0x60] sm:$0xff] %vm447, %v443
      %461 = vst.msk [vmem:[%s194 + $0x68] sm:$0xff] %vm447, %v444
      %462 = vst.msk [vmem:[%s194 + $0x70] sm:$0xff] %vm447, %v445
      %463 = vst.msk [vmem:[%s194 + $0x78] sm:$0xff] %vm447, %v446
      %s464 = smul.u32 16, %s14
      %p465 = scmp.lt.s32.totalorder %s464, 63
      %s466 = scalar_select %p465, %s464, 63
      %s467 = smul.addr %s466, 8
      %s468 = scalar_lea.vmem %s3, %s467
      // Predicated region
      $region33: #{_lambda_.78} parent=31 // pred_check
        %p469 = pneg %p105
      $region34: #{_lambda_.78} parent=31 // pred_check_branch
        %471 = sbr.rel (%p469) target = $region36
      $region35: #{_lambda_.78} parent=31 // pred_region
        %s472 = smul.u32 16, %s14
      $region36: #{_lambda_.78} parent=31 // pred_fallthru
        _
    $region32: #{_lambda_.78} parent=5 // pred_fallthru
      _
    %p473 = scmp.le.s32.totalorder 2, %s9
    // Predicated region
    $region37: #{_lambda_.78} parent=5 // pred_check
      %p474 = pneg %p473
    $region38: #{_lambda_.78} parent=5 // pred_check_branch
      %476 = sbr.rel (%p474) target = $region40
    $region39: #{_lambda_.78} parent=5 // pred_region
      %s477 = ssub.s32 %s9, 2
      // Predicated region
      $region41: #{_lambda_.78} parent=39 // pred_check
        %p478 = pneg %p111
      $region42: #{_lambda_.78} parent=39 // pred_check_branch
        %480 = sbr.rel (%p478) target = $region44
      $region43: #{_lambda_.78} parent=39 // pred_region
        %s481 = smul.u32 16, %s15
        %p482 = scmp.lt.s32.totalorder %s481, 63
        %s483 = scalar_select %p482, %s481, 63
        %s484 = smul.addr %s483, 8
        %s485 = scalar_lea.vmem %s3, %s484
      $region44: #{_lambda_.78} parent=39 // pred_fallthru
        _
    $region40: #{_lambda_.78} parent=5 // pred_fallthru
      _
  $region6: #{_lambda_.78} parent=0 // loop_footer
    %s13 = sadd.s32 1, %s9
  $region7: #{_lambda_.78} parent=0 // loop_footer_branch
    %8 = sbr.rel target = $region3
  $region8: #{_lambda_.78} parent=0 // loop_exit
    _

// kernel: _lambda_.81
$region0: #{_lambda_.81}
  #allocation0 [shape = 'u32[]', space=smem, size = 0x4, offset = 0x4, fixed_abs, tag = 'smem constant byte address 0x4 - core index']
  #allocation1 [shape = 'u32[144,128]{1,0:T(1,128)}', space=vmem, size = 0x12000, scoped, tag = 'internal scratch']
  %s0 = inlined_call_operand.vmem [shape: bf16[512,72], index: 0, kind: input, shape index: {}]
  %s1 = inlined_call_operand.vmem [shape: bf16[72,4], index: 1, kind: input, shape index: {}]
  %s2 = inlined_call_operand.vmem [shape: f32[512,4], index: 2, kind: output, shape index: {}]
  %s3 = sld [smem:[#allocation0]]
  $region41: #{_lambda_.81} parent=0
    _
  %s5 = ssub.s32 1, %s3
  %s6 = scalar_select 0, %s5, %s3
  loop: start=0, step=1, limit=6
  $region2: #{_lambda_.81} parent=0 // loop_pre_header
    _
  $region3: #{_lambda_.81} parent=0 // loop_header
    %s8 = sphi 0, %s12
    %p9 = scmp.ge.s32.totalorder %s8, 6
    %s18 = sphi 0, %s20
    %s21 = sphi 0, %s18
    %s22 = sphi 0, %s21
    %s38 = sphi 0, %s22
    %s42 = sphi 0, %s42
    %s44 = sphi 0, %s42
    %s45 = sphi 0, %s44
    %s59 = sphi 0, %s45
    %s65 = sphi 0, %s67
    %s68 = sphi 0, %s65
    %s69 = sphi 0, %s68
    %s85 = sphi 0, %s69
  $region4: #{_lambda_.81} parent=0 // loop_header_branch
    %11 = sbr.rel (%p9) target = $region8
  $region5: #{_lambda_.81} parent=0 // loop_body
    %s13 = ssub.s32 %s8, 1
    %s14 = ssub.s32 %s8, 2
    %s15 = sadd.s32 %s8, 1
    %s16 = ssub.s32 %s8, %s15
    %p17 = scmp.eq.s32.totalorder %s16, 0
    %s19 = sadd.s32 %s18, 1
    %s20 = scalar_select %p17, %s18, %s19
    %p23 = pneg %p17
    %p24 = scmp.eq.s32.totalorder %s8, 3
    %p25 = por %p23, %p24
    %p26 = scmp.ne.s32.totalorder %s18, %s21
    %p27 = scmp.eq.s32.totalorder %s8, 0
    %p28 = por %p26, %p27
    %p29 = scmp.ne.s32.totalorder %s18, %s21
    %p30 = scmp.eq.s32.totalorder %s13, 3
    %p31 = por %p29, %p30
    %p32 = scmp.ne.s32.totalorder %s21, %s22
    %p33 = scmp.eq.s32.totalorder %s13, 0
    %p34 = por %p32, %p33
    %p35 = scmp.ne.s32.totalorder %s21, %s22
    %p36 = scmp.eq.s32.totalorder %s14, 3
    %p37 = por %p35, %p36
    %p39 = scmp.ne.s32.totalorder %s22, %s38
    %p40 = scmp.eq.s32.totalorder %s14, 0
    %p41 = por %p39, %p40
    %s43 = sadd.s32 %s42, 1
    %p46 = scmp.eq.s32.totalorder %s8, 3
    %p47 = scmp.ne.s32.totalorder %s42, %s44
    %p48 = scmp.eq.s32.totalorder %s8, 0
    %p49 = por %p47, %p48
    %p50 = scmp.ne.s32.totalorder %s42, %s44
    %p51 = scmp.eq.s32.totalorder %s13, 3
    %p52 = por %p50, %p51
    %p53 = scmp.ne.s32.totalorder %s44, %s45
    %p54 = scmp.eq.s32.totalorder %s13, 0
    %p55 = por %p53, %p54
    %p56 = scmp.ne.s32.totalorder %s44, %s45
    %p57 = scmp.eq.s32.totalorder %s14, 3
    %p58 = por %p56, %p57
    %p60 = scmp.ne.s32.totalorder %s45, %s59
    %p61 = scmp.eq.s32.totalorder %s14, 0
    %p62 = por %p60, %p61
    %s63 = ssub.s32 %s8, %s15
    %p64 = scmp.eq.s32.totalorder %s63, 0
    %s66 = sadd.s32 %s65, 1
    %s67 = scalar_select %p64, %s65, %s66
    %p70 = pneg %p64
    %p71 = scmp.eq.s32.totalorder %s8, 3
    %p72 = por %p70, %p71
    %p73 = scmp.ne.s32.totalorder %s65, %s68
    %p74 = scmp.eq.s32.totalorder %s8, 0
    %p75 = por %p73, %p74
    %p76 = scmp.ne.s32.totalorder %s65, %s68
    %p77 = scmp.eq.s32.totalorder %s13, 3
    %p78 = por %p76, %p77
    %p79 = scmp.ne.s32.totalorder %s68, %s69
    %p80 = scmp.eq.s32.totalorder %s13, 0
    %p81 = por %p79, %p80
    %p82 = scmp.ne.s32.totalorder %s68, %s69
    %p83 = scmp.eq.s32.totalorder %s14, 3
    %p84 = por %p82, %p83
    %p86 = scmp.ne.s32.totalorder %s69, %s85
    %p87 = scmp.eq.s32.totalorder %s14, 0
    %p88 = por %p86, %p87
    %p89 = scmp.le.s32.totalorder 1, %s8
    %p90 = scmp.lt.s32.totalorder %s8, 5
    %p91 = pnand %p89, %p90
    %p92 = pneg %p91
    // Predicated region
    $region9: #{_lambda_.81} parent=5 // pred_check
      _
    $region10: #{_lambda_.81} parent=5 // pred_check_branch
      %94 = sbr.rel (%p91) target = $region12
    $region11: #{_lambda_.81} parent=5 // pred_region
      %s95 = ssub.s32 %s8, 1
      // Predicated region
      $region13: #{_lambda_.81} parent=11 // pred_check
        %p96 = pneg %p55
      $region14: #{_lambda_.81} parent=11 // pred_check_branch
        %98 = sbr.rel (%p96) target = $region16
      $region15: #{_lambda_.81} parent=11 // pred_region
        _
      $region16: #{_lambda_.81} parent=11 // pred_fallthru
        _
    $region12: #{_lambda_.81} parent=5 // pred_fallthru
      _
    %p99 = scmp.lt.s32.totalorder %s8, 4
    // Predicated region
    $region17: #{_lambda_.81} parent=5 // pred_check
      %p100 = pneg %p99
    $region18: #{_lambda_.81} parent=5 // pred_check_branch
      %102 = sbr.rel (%p100) target = $region20
    $region19: #{_lambda_.81} parent=5 // pred_region
      // Predicated region
      $region21: #{_lambda_.81} parent=19 // pred_check
        %p103 = pneg %p28
      $region22: #{_lambda_.81} parent=19 // pred_check_branch
        %105 = sbr.rel (%p103) target = $region24
      $region23: #{_lambda_.81} parent=19 // pred_region
        %s106 = smul.u32 16, %s8
        %p107 = scmp.lt.s32.totalorder %s106, 63
        %s108 = scalar_select %p107, %s106, 63
        %s109 = smul.addr %s108, 4
        %s110 = scalar_lea.vmem %s0, %s109
        %s111 = smul.u32 16, %s8
      $region24: #{_lambda_.81} parent=19 // pred_fallthru
        _
    $region20: #{_lambda_.81} parent=5 // pred_fallthru
      _
    %p112 = scmp.le.s32.totalorder 1, %s8
    %p113 = scmp.lt.s32.totalorder %s8, 5
    %p114 = pnand %p112, %p113
    %p115 = pneg %p114
    // Predicated region
    $region25: #{_lambda_.81} parent=5 // pred_check
      _
    $region26: #{_lambda_.81} parent=5 // pred_check_branch
      %117 = sbr.rel (%p114) target = $region28
    $region27: #{_lambda_.81} parent=5 // pred_region
      %s118 = ssub.s32 %s8, 1
      %s119 = smul.u32 16, %s13
      %p120 = scmp.lt.s32.totalorder %s119, 63
      %s121 = scalar_select %p120, %s119, 63
      %s122 = smul.addr %s121, 4
      %s123 = scalar_lea.vmem %s0, %s122
      %p124 = pneg %p34
      %p125 = pneg %p31
      %p126 = pneg %p55
      %p127 = pneg %p52
      %p128 = pneg %p81
      %p129 = pneg %p78
      %s130 = smul.u32 16, %s13
      %p131 = scmp.lt.s32.totalorder %s130, 63
      %s132 = scalar_select %p131, %s130, 63
      %s133 = smul.addr %s132, 8
      %s134 = scalar_lea.vmem %s2, %s133
      %s135 = smul.u32 16, %s13
      %p136 = scmp.lt.s32.totalorder %s135, 63
      %s137 = scalar_select %p136, %s135, 63
      %s138 = smul.addr %s137, 4
      %s139 = scalar_lea.vmem %s0, %s138
      %s140 = smul.u32 16, %s13
      %s141 = smul.u32 16, %s13
      %p142 = scmp.lt.s32.totalorder %s141, 63
      %s143 = scalar_select %p142, %s141, 63
      %s144 = smul.addr %s143, 8
      %s145 = scalar_lea.vmem %s2, %s144
      %s146 = smul.u32 16, %s13
      %v148 = vld [vmem:[%s139] sm:$0xf]
      %v149 = vld [vmem:[%s139 + $0x4] sm:$0xf]
      %v150 = vld [vmem:[%s139 + $0x8] sm:$0xf]
      %v151 = vld [vmem:[%s139 + $0xc] sm:$0xf]
      %v152 = vld [vmem:[%s139 + $0x10] sm:$0xf]
      %v153 = vld [vmem:[%s139 + $0x14] sm:$0xf]
      %v154 = vld [vmem:[%s139 + $0x18] sm:$0xf]
      %v155 = vld [vmem:[%s139 + $0x1c] sm:$0xf]
      %v156 = vld [vmem:[%s139 + $0x20] sm:$0xf]
      %v157 = vld [vmem:[%s139 + $0x24] sm:$0xf]
      %v158 = vld [vmem:[%s139 + $0x28] sm:$0xf]
      %v159 = vld [vmem:[%s139 + $0x2c] sm:$0xf]
      %v160 = vld [vmem:[%s139 + $0x30] sm:$0xf]
      %v161 = vld [vmem:[%s139 + $0x34] sm:$0xf]
      %v162 = vld [vmem:[%s139 + $0x38] sm:$0xf]
      %v163 = vld [vmem:[%s139 + $0x3c] sm:$0xf]
      %v164 = vld [vmem:[%s1] sm:$0xf]
      %v165 = vld [vmem:[%s1 + $0x4] sm:$0xf]
      %v166 = vld [vmem:[%s1 + $0x8] sm:$0xf]
      %v167 = vld [vmem:[%s1 + $0xc] sm:$0xf]
      %v168 = vld [vmem:[%s1 + $0x10] sm:$0xf]
      %v169 = vld [vmem:[%s1 + $0x14] sm:$0xf]
      %v170 = vld [vmem:[%s1 + $0x18] sm:$0xf]
      %v171 = vld [vmem:[%s1 + $0x1c] sm:$0xf]
      %v172 = vld [vmem:[%s1 + $0x20] sm:$0xf]
      %v189 = vunpack.c.l.b16 %v148
      %v190 = vunpack.c.l.b16 %v149
      %v191 = vunpack.c.l.b16 %v150
      %v192 = vunpack.c.l.b16 %v151
      %v193 = vunpack.c.l.b16 %v152
      %v194 = vunpack.c.l.b16 %v153
      %v195 = vunpack.c.l.b16 %v154
      %v196 = vunpack.c.l.b16 %v155
      %v197 = vunpack.c.l.b16 %v156
      %v198 = vunpack.c.l.b16 %v157
      %v199 = vunpack.c.l.b16 %v158
      %v200 = vunpack.c.l.b16 %v159
      %v201 = vunpack.c.l.b16 %v160
      %v202 = vunpack.c.l.b16 %v161
      %v203 = vunpack.c.l.b16 %v162
      %v204 = vunpack.c.l.b16 %v163
      %v205 = vpack.c.b16 %v190, %v189
      %v206 = vpack.c.b16 %v192, %v191
      %v207 = vpack.c.b16 %v194, %v193
      %v208 = vpack.c.b16 %v196, %v195
      %v209 = vpack.c.b16 %v198, %v197
      %v210 = vpack.c.b16 %v200, %v199
      %v211 = vpack.c.b16 %v202, %v201
      %v212 = vpack.c.b16 %v204, %v203
      %v222 = vunpack.c.l.b16 %v164
      %v223 = vunpack.c.l.b16 %v165
      %v224 = vunpack.c.l.b16 %v166
      %v225 = vunpack.c.l.b16 %v167
      %v226 = vunpack.c.l.b16 %v168
      %v227 = vunpack.c.l.b16 %v169
      %v228 = vunpack.c.l.b16 %v170
      %v229 = vunpack.c.l.b16 %v171
      %v230 = vunpack.c.l.b16 %v172
      %v231 = vpack.c.b16 %v223, %v222
      %v232 = vpack.c.b16 %v225, %v224
      %v233 = vpack.c.b16 %v227, %v226
      %v234 = vpack.c.b16 %v229, %v228
      %v235 = vpack.c.b16 %v230, %v230
      %vm240 = vcmask 588800
      %v242 = vsel %vm240, %v205, 0
      %v245 = vsel %vm240, %v206, 0
      %v248 = vsel %vm240, %v207, 0
      %v251 = vsel %vm240, %v208, 0
      %v254 = vsel %vm240, %v209, 0
      %v257 = vsel %vm240, %v210, 0
      %v260 = vsel %vm240, %v211, 0
      %v263 = vsel %vm240, %v212, 0
      %vm265 = vcmask 1043456
      %v267 = vsel %vm265, %v235, 0
      %269 = vmatprep.subr.bf16.mxu0 0
      %270 = vmatpush1.bf16.msra.mxu0 %v231
      %271 = vmatprep.subr.bf16.mxu0 0
      %272 = vmatpush1.bf16.msra.mxu0 %v232
      %273 = vmatprep.subr.bf16.mxu0 0
      %274 = vmatpush1.bf16.msra.mxu0 %v233
      %275 = vmatprep.subr.bf16.mxu0 0
      %276 = vmatpush1.bf16.msra.mxu0 %v234
      %277 = vmatprep.subr.bf16.mxu0 0
      %278 = vmatpush1.bf16.msra.mxu0 %v267
      %279 = vmatprep.subr.bf16.mxu0 0
      %280 = vmatpush1.bf16.msra.mxu0 0
      %281 = vmatprep.subr.bf16.mxu0 0
      %282 = vmatpush1.bf16.msra.mxu0 0
      %283 = vmatprep.subr.bf16.mxu0 0
      %284 = vmatpush1.bf16.msra.mxu0 0
      %285 = vmatprep.subr.bf16.mxu0 0
      %286 = vmatpush1.bf16.msra.mxu0 0
      %287 = vmatprep.subr.bf16.mxu0 0
      %288 = vmatpush1.bf16.msra.mxu0 0
      %289 = vmatprep.subr.bf16.mxu0 0
      %290 = vmatpush1.bf16.msra.mxu0 0
      %291 = vmatprep.subr.bf16.mxu0 0
      %292 = vmatpush1.bf16.msra.mxu0 0
      %293 = vmatprep.subr.bf16.mxu0 0
      %294 = vmatpush1.bf16.msra.mxu0 0
      %295 = vmatprep.subr.bf16.mxu0 0
      %296 = vmatpush1.bf16.msra.mxu0 0
      %297 = vmatprep.subr.bf16.mxu0 0
      %298 = vmatpush1.bf16.msra.mxu0 0
      %299 = vmatprep.subr.bf16.mxu0 0
      %300 = vmatpush1.bf16.msra.mxu0 0
      %301 = vmatprep.mubr.bf16.mxu0 0
      %302 = vmatmul.mubr.bf16.gmra.mrb[0].mxu0 %v242
      %v303 = vpop.f32.mrb[0].mxu0
      %v304 = vadd.f32 0.0, %v303
      %v305 = vpop.f32.mrb[0].mxu0
      %v306 = vpop.f32.mrb[0].mxu0
      %v307 = vadd.f32 0.0, %v306
      %v308 = vpop.f32.mrb[0].mxu0
      %309 = vmatprep.mubr.bf16.mxu0 0
      %310 = vmatmul.mubr.bf16.gmra.mrb[0].mxu0 %v245
      %v311 = vpop.f32.mrb[0].mxu0
      %v312 = vadd.f32 0.0, %v311
      %v313 = vpop.f32.mrb[0].mxu0
      %v314 = vpop.f32.mrb[0].mxu0
      %v315 = vadd.f32 0.0, %v314
      %v316 = vpop.f32.mrb[0].mxu0
      %317 = vmatprep.mubr.bf16.mxu0 0
      %318 = vmatmul.mubr.bf16.gmra.mrb[0].mxu0 %v248
      %v319 = vpop.f32.mrb[0].mxu0
      %v320 = vadd.f32 0.0, %v319
      %v321 = vpop.f32.mrb[0].mxu0
      %v322 = vpop.f32.mrb[0].mxu0
      %v323 = vadd.f32 0.0, %v322
      %v324 = vpop.f32.mrb[0].mxu0
      %325 = vmatprep.mubr.bf16.mxu0 0
      %326 = vmatmul.mubr.bf16.gmra.mrb[0].mxu0 %v251
      %v327 = vpop.f32.mrb[0].mxu0
      %v328 = vadd.f32 0.0, %v327
      %v329 = vpop.f32.mrb[0].mxu0
      %v330 = vpop.f32.mrb[0].mxu0
      %v331 = vadd.f32 0.0, %v330
      %v332 = vpop.f32.mrb[0].mxu0
      %333 = vmatprep.mubr.bf16.mxu0 0
      %334 = vmatmul.mubr.bf16.gmra.mrb[0].mxu0 %v254
      %v335 = vpop.f32.mrb[0].mxu0
      %v336 = vadd.f32 0.0, %v335
      %v337 = vpop.f32.mrb[0].mxu0
      %v338 = vpop.f32.mrb[0].mxu0
      %v339 = vadd.f32 0.0, %v338
      %v340 = vpop.f32.mrb[0].mxu0
      %341 = vmatprep.mubr.bf16.mxu0 0
      %342 = vmatmul.mubr.bf16.gmra.mrb[0].mxu0 %v257
      %v343 = vpop.f32.mrb[0].mxu0
      %v344 = vadd.f32 0.0, %v343
      %v345 = vpop.f32.mrb[0].mxu0
      %v346 = vpop.f32.mrb[0].mxu0
      %v347 = vadd.f32 0.0, %v346
      %v348 = vpop.f32.mrb[0].mxu0
      %349 = vmatprep.mubr.bf16.mxu0 0
      %350 = vmatmul.mubr.bf16.gmra.mrb[0].mxu0 %v260
      %v351 = vpop.f32.mrb[0].mxu0
      %v352 = vadd.f32 0.0, %v351
      %v353 = vpop.f32.mrb[0].mxu0
      %v354 = vpop.f32.mrb[0].mxu0
      %v355 = vadd.f32 0.0, %v354
      %v356 = vpop.f32.mrb[0].mxu0
      %357 = vmatprep.mubr.bf16.mxu0 0
      %358 = vmatmul.mubr.bf16.gmra.mrb[0].mxu0 %v263
      %v359 = vpop.f32.mrb[0].mxu0
      %v360 = vadd.f32 0.0, %v359
      %v361 = vpop.f32.mrb[0].mxu0
      %v362 = vpop.f32.mrb[0].mxu0
      %v363 = vadd.f32 0.0, %v362
      %v364 = vpop.f32.mrb[0].mxu0
      %365 = vdwg.mxu0
      %v366 = vsub.f32 0.0, %v304
      %v367 = vsub.f32 0.0, %v307
      %v368 = vsub.f32 0.0, %v312
      %v369 = vsub.f32 0.0, %v315
      %v370 = vsub.f32 0.0, %v320
      %v371 = vsub.f32 0.0, %v323
      %v372 = vsub.f32 0.0, %v328
      %v373 = vsub.f32 0.0, %v331
      %v374 = vsub.f32 0.0, %v336
      %v375 = vsub.f32 0.0, %v339
      %v376 = vsub.f32 0.0, %v344
      %v377 = vsub.f32 0.0, %v347
      %v378 = vsub.f32 0.0, %v352
      %v379 = vsub.f32 0.0, %v355
      %v380 = vsub.f32 0.0, %v360
      %v381 = vsub.f32 0.0, %v363
      %v382 = vmul.f32 %v366, 1.442695
      %v383 = vpow.pop %v382
      %v384 = vmul.f32 %v367, 1.442695
      %v385 = vpow.pop %v384
      %v386 = vmul.f32 %v368, 1.442695
      %v387 = vpow.pop %v386
      %v388 = vmul.f32 %v369, 1.442695
      %v389 = vpow.pop %v388
      %v390 = vmul.f32 %v370, 1.442695
      %v391 = vpow.pop %v390
      %v392 = vmul.f32 %v371, 1.442695
      %v393 = vpow.pop %v392
      %v394 = vmul.f32 %v372, 1.442695
      %v395 = vpow.pop %v394
      %v396 = vmul.f32 %v373, 1.442695
      %v397 = vpow.pop %v396
      %v398 = vmul.f32 %v374, 1.442695
      %v399 = vpow.pop %v398
      %v400 = vmul.f32 %v375, 1.442695
      %v401 = vpow.pop %v400
      %v402 = vmul.f32 %v376, 1.442695
      %v403 = vpow.pop %v402
      %v404 = vmul.f32 %v377, 1.442695
      %v405 = vpow.pop %v404
      %v406 = vmul.f32 %v378, 1.442695
      %v407 = vpow.pop %v406
      %v408 = vmul.f32 %v379, 1.442695
      %v409 = vpow.pop %v408
      %v410 = vmul.f32 %v380, 1.442695
      %v411 = vpow.pop %v410
      %v412 = vmul.f32 %v381, 1.442695
      %v413 = vpow.pop %v412
      %v414 = vadd.f32 %v383, 1.0
      %v415 = vadd.f32 %v385, 1.0
      %v416 = vadd.f32 %v387, 1.0
      %v417 = vadd.f32 %v389, 1.0
      %v418 = vadd.f32 %v391, 1.0
      %v419 = vadd.f32 %v393, 1.0
      %v420 = vadd.f32 %v395, 1.0
      %v421 = vadd.f32 %v397, 1.0
      %v422 = vadd.f32 %v399, 1.0
      %v423 = vadd.f32 %v401, 1.0
      %v424 = vadd.f32 %v403, 1.0
      %v425 = vadd.f32 %v405, 1.0
      %v426 = vadd.f32 %v407, 1.0
      %v427 = vadd.f32 %v409, 1.0
      %v428 = vadd.f32 %v411, 1.0
      %v429 = vadd.f32 %v413, 1.0
      %v430 = vrcp.pop %v414
      %v431 = vrcp.pop %v415
      %v432 = vrcp.pop %v416
      %v433 = vrcp.pop %v417
      %v434 = vrcp.pop %v418
      %v435 = vrcp.pop %v419
      %v436 = vrcp.pop %v420
      %v437 = vrcp.pop %v421
      %v438 = vrcp.pop %v422
      %v439 = vrcp.pop %v423
      %v440 = vrcp.pop %v424
      %v441 = vrcp.pop %v425
      %v442 = vrcp.pop %v426
      %v443 = vrcp.pop %v427
      %v444 = vrcp.pop %v428
      %v445 = vrcp.pop %v429
      %v446 = vmin.f32 %v430, 1.0
      %v447 = vmin.f32 %v431, 1.0
      %v448 = vmin.f32 %v432, 1.0
      %v449 = vmin.f32 %v433, 1.0
      %v450 = vmin.f32 %v434, 1.0
      %v451 = vmin.f32 %v435, 1.0
      %v452 = vmin.f32 %v436, 1.0
      %v453 = vmin.f32 %v437, 1.0
      %v454 = vmin.f32 %v438, 1.0
      %v455 = vmin.f32 %v439, 1.0
      %v456 = vmin.f32 %v440, 1.0
      %v457 = vmin.f32 %v441, 1.0
      %v458 = vmin.f32 %v442, 1.0
      %v459 = vmin.f32 %v443, 1.0
      %v460 = vmin.f32 %v444, 1.0
      %v461 = vmin.f32 %v445, 1.0
      %vm462 = vcmask 31744
      %463 = vst.msk [vmem:[%s145] sm:$0xff] %vm462, %v446
      %464 = vst.msk [vmem:[%s145 + $0x8] sm:$0xff] %vm462, %v447
      %465 = vst.msk [vmem:[%s145 + $0x10] sm:$0xff] %vm462, %v448
      %466 = vst.msk [vmem:[%s145 + $0x18] sm:$0xff] %vm462, %v449
      %467 = vst.msk [vmem:[%s145 + $0x20] sm:$0xff] %vm462, %v450
      %468 = vst.msk [vmem:[%s145 + $0x28] sm:$0xff] %vm462, %v451
      %469 = vst.msk [vmem:[%s145 + $0x30] sm:$0xff] %vm462, %v452
      %470 = vst.msk [vmem:[%s145 + $0x38] sm:$0xff] %vm462, %v453
      %471 = vst.msk [vmem:[%s145 + $0x40] sm:$0xff] %vm462, %v454
      %472 = vst.msk [vmem:[%s145 + $0x48] sm:$0xff] %vm462, %v455
      %473 = vst.msk [vmem:[%s145 + $0x50] sm:$0xff] %vm462, %v456
      %474 = vst.msk [vmem:[%s145 + $0x58] sm:$0xff] %vm462, %v457
      %475 = vst.msk [vmem:[%s145 + $0x60] sm:$0xff] %vm462, %v458
      %476 = vst.msk [vmem:[%s145 + $0x68] sm:$0xff] %vm462, %v459
      %477 = vst.msk [vmem:[%s145 + $0x70] sm:$0xff] %vm462, %v460
      %478 = vst.msk [vmem:[%s145 + $0x78] sm:$0xff] %vm462, %v461
      %s479 = smul.u32 16, %s13
      %p480 = scmp.lt.s32.totalorder %s479, 63
      %s481 = scalar_select %p480, %s479, 63
      %s482 = smul.addr %s481, 8
      %s483 = scalar_lea.vmem %s2, %s482
      // Predicated region
      $region29: #{_lambda_.81} parent=27 // pred_check
        %p484 = pneg %p78
      $region30: #{_lambda_.81} parent=27 // pred_check_branch
        %486 = sbr.rel (%p484) target = $region32
      $region31: #{_lambda_.81} parent=27 // pred_region
        %s487 = smul.u32 16, %s13
      $region32: #{_lambda_.81} parent=27 // pred_fallthru
        _
    $region28: #{_lambda_.81} parent=5 // pred_fallthru
      _
    %p488 = scmp.le.s32.totalorder 2, %s8
    // Predicated region
    $region33: #{_lambda_.81} parent=5 // pred_check
      %p489 = pneg %p488
    $region34: #{_lambda_.81} parent=5 // pred_check_branch
      %491 = sbr.rel (%p489) target = $region36
    $region35: #{_lambda_.81} parent=5 // pred_region
      %s492 = ssub.s32 %s8, 2
      // Predicated region
      $region37: #{_lambda_.81} parent=35 // pred_check
        %p493 = pneg %p84
      $region38: #{_lambda_.81} parent=35 // pred_check_branch
        %495 = sbr.rel (%p493) target = $region40
      $region39: #{_lambda_.81} parent=35 // pred_region
        %s496 = smul.u32 16, %s14
        %p497 = scmp.lt.s32.totalorder %s496, 63
        %s498 = scalar_select %p497, %s496, 63
        %s499 = smul.addr %s498, 8
        %s500 = scalar_lea.vmem %s2, %s499
      $region40: #{_lambda_.81} parent=35 // pred_fallthru
        _
    $region36: #{_lambda_.81} parent=5 // pred_fallthru
      _
  $region6: #{_lambda_.81} parent=0 // loop_footer
    %s12 = sadd.s32 1, %s8
  $region7: #{_lambda_.81} parent=0 // loop_footer_branch
    %7 = sbr.rel target = $region3
  $region8: #{_lambda_.81} parent=0 // loop_exit
    _

</llo_original>
